<compile_context>
chip_gen: v7x
topology: tpu7x:2x2x1
jax: 0.10.0
libtpu: 0.0.40
codegen_flags: <defaults>
</compile_context>

<pallas_src>
import functools

import jax
import jax.numpy as jnp
from jax import lax
from jax.experimental import pallas as pl
from jax.experimental.pallas import tpu as pltpu


# ----------------------------------------------------------------------------
# Fused kernel: L attention layers + 1x1 conv + output Linear, single step
# ----------------------------------------------------------------------------
def _fused_kernel(x_ref, wqkv_ref, bqkv_ref, wo_ref, bo_ref,
                  mask_ref, sel_ref, wout_ref, hbias_ref, out_ref,
                  *, num_heads):
    E = x_ref.shape[-1]
    hd = E // num_heads
    n_layers = wqkv_ref.shape[0]
    scale = 1.0 / (hd ** 0.5)

    mask_bias = mask_ref[...]              # (B*S, B*S): 0 same-batch, -1e30 cross
    x = x_ref[...]                         # (B*S, E) f32, lives in registers

    for l in range(n_layers):              # static trip count -> straight line
        # Merged QKV projection: bf16 x bf16 operands, f32 accumulation.
        qkv = jnp.dot(x.astype(jnp.bfloat16), wqkv_ref[l],
                      preferred_element_type=jnp.float32) + bqkv_ref[l]
        q = qkv[:, :E]                     # lane-aligned head blocks
        k = qkv[:, E:2 * E]
        v = qkv[:, 2 * E:]

        # Per-head attention over all B*S rows at once; the block-diagonal
        # mask removes cross-batch interaction (no per-batch micro-matmuls,
        # no q/k/v relayout).  2 small matmuls per head instead of 6.
        heads = []
        for h in range(num_heads):
            c = h * hd
            qh = q[:, c:c + hd]
            kh = k[:, c:c + hd]
            vh = v[:, c:c + hd]
            # scores = qh @ kh^T without an explicit transpose.
            s = lax.dot_general(qh, kh, (((1,), (1,)), ((), ())),
                                preferred_element_type=jnp.float32)
            s = s * scale + mask_bias
            s = s - jnp.max(s, axis=-1, keepdims=True)
            p = jnp.exp(s)
            p = p / jnp.sum(p, axis=-1, keepdims=True)      # softmax over keys
            heads.append(jnp.dot(p, vh, preferred_element_type=jnp.float32))

        # Heads along lanes -> ONE full-width output projection per layer.
        o = jnp.concatenate(heads, axis=-1)                 # (B*S, E)
        x = jnp.dot(o.astype(jnp.bfloat16), wo_ref[l],
                    preferred_element_type=jnp.float32) + bo_ref[l]

    # Head: 1x1 conv over channels as a tiny selection matmul (conv_w baked
    # into sel) followed by the output Linear; conv bias folded into hbias.
    y = jnp.dot(sel_ref[...], x, preferred_element_type=jnp.float32)   # (B, E)
    out_ref[...] = (jnp.dot(y, wout_ref[...],
                            preferred_element_type=jnp.float32)
                    + hbias_ref[...])


# ----------------------------------------------------------------------------
# Full forward (matches SelfAttentionLayer.forward)
# ----------------------------------------------------------------------------
def self_attention_layer_forward(x_nchw, params, *, num_heads):
    B, C, H, W = x_nchw.shape
    E = H * W
    S = C                                        # seq = channels
    L = params["wqkv"].shape[0]
    OUT = params["wout_t"].shape[1]

    # TODO(synk): self.input_logits / self.attn_weights are .detach().cpu()
    # bookkeeping attributes with no effect on the returned value; not modeled.

    x_tokens = x_nchw.reshape(B * S, E)          # batch folded into sublanes

    # Block-diagonal additive mask: token (b, s) attends only within batch b.
    ids = jnp.arange(B * S) // S
    mask_bias = jnp.where(ids[:, None] == ids[None, :], 0.0, -1e30
                          ).astype(jnp.float32)                    # (B*S, B*S)

    # Selection matrix with the 1x1-conv weights baked in: y = sel @ x_tokens.
    sel = jnp.kron(jnp.eye(B, dtype=jnp.float32),
                   params["conv_w"].reshape(1, S))                 # (B, B*S)

    # Fold conv bias into the output-linear bias: (y + b*1) @ W + bout.
    head_bias = (params["bout"]
                 + params["conv_b"][0] * jnp.sum(params["wout_t"], axis=0)
                 ).reshape(1, OUT)

    kernel = functools.partial(_fused_kernel, num_heads=num_heads)

    def spec(shape):
        return pl.BlockSpec(shape, lambda i: (0,) * len(shape))

    return pl.pallas_call(
        kernel,
        out_shape=jax.ShapeDtypeStruct((B, OUT), jnp.float32),
        grid=(1,),                               # collapsed: one step, all weights resident
        in_specs=[
            spec((B * S, E)),                    # input tokens
            spec((L, E, 3 * E)),                 # merged QKV weight stack (bf16)
            spec((L, 1, 3 * E)),                 # merged QKV bias stack
            spec((L, E, E)),                     # output-proj weight stack (bf16)
            spec((L, 1, E)),                     # output-proj bias stack
            spec((B * S, B * S)),                # block-diagonal attention mask
            spec((B, B * S)),                    # conv1x1 selection matrix
            spec((E, OUT)),                      # out_project weight
            spec((1, OUT)),                      # out_project bias (+conv bias)
        ],
        out_specs=spec((B, OUT)),
        compiler_params=pltpu.CompilerParams(
            dimension_semantics=("arbitrary",)),
    )(x_tokens, params["wqkv"], params["bqkv"], params["wo"], params["bo"],
      mask_bias, sel, params["wout_t"], head_bias)


# ----------------------------------------------------------------------------
# Deterministic parameter init (PyTorch shapes, synthetic values)
# ----------------------------------------------------------------------------
def init_params(key, embed_dim, num_heads, output_dim, num_layers, channels):
    E = embed_dim
    wqkv, bqkv, wo, bo = [], [], [], []
    for _ in range(num_layers):
        key, k1, k2, k3, k4 = jax.random.split(key, 5)
        in_proj_w = 0.05 * jax.random.normal(k1, (3 * E, E), jnp.float32)
        in_proj_b = 0.05 * jax.random.normal(k2, (3 * E,), jnp.float32)
        out_proj_w = 0.05 * jax.random.normal(k3, (E, E), jnp.float32)
        out_proj_b = 0.05 * jax.random.normal(k4, (E,), jnp.float32)
        # torch Linear computes x @ W.T + b, so pre-transpose; columns = [q|k|v].
        wqkv.append(in_proj_w.T)
        bqkv.append(in_proj_b.reshape(1, 3 * E))
        wo.append(out_proj_w.T)
        bo.append(out_proj_b.reshape(1, E))
    key, k1, k2, k3, k4 = jax.random.split(key, 5)
    return {
        # Attention weights stored in bf16 (fed straight to the MXU); biases f32.
        "wqkv": jnp.stack(wqkv).astype(jnp.bfloat16),      # (L, E, 3E)
        "bqkv": jnp.stack(bqkv),                           # (L, 1, 3E)
        "wo":   jnp.stack(wo).astype(jnp.bfloat16),        # (L, E, E)
        "bo":   jnp.stack(bo),                             # (L, 1, E)
        "conv_w": 0.05 * jax.random.normal(k1, (1, channels), jnp.float32),
        "conv_b": 0.05 * jax.random.normal(k2, (1,), jnp.float32),
        "wout_t": 0.05 * jax.random.normal(k3, (E, output_dim), jnp.float32),
        "bout":   0.05 * jax.random.normal(k4, (output_dim,), jnp.float32),
    }


# ----------------------------------------------------------------------------
# Pure-JAX reference for validation (same precision policy: bf16 matmul
# operands for the projection weights, f32 accumulation and softmax math)
# ----------------------------------------------------------------------------
def _ref_forward(x_nchw, params, num_heads):
    B, C, H, W = x_nchw.shape
    E = H * W
    D = E // num_heads
    x = x_nchw.reshape(B, C, E)
    L = params["wqkv"].shape[0]
    for l in range(L):
        qkv = jnp.einsum("bce,ef->bcf", x.astype(jnp.bfloat16),
                         params["wqkv"][l],
                         preferred_element_type=jnp.float32) + params["bqkv"][l][0]
        q, k, v = qkv[..., :E], qkv[..., E:2 * E], qkv[..., 2 * E:]
        q = q.reshape(B, C, num_heads, D).transpose(0, 2, 1, 3)
        k = k.reshape(B, C, num_heads, D).transpose(0, 2, 1, 3)
        v = v.reshape(B, C, num_heads, D).transpose(0, 2, 1, 3)
        s = jnp.einsum("bhqd,bhkd->bhqk", q, k) / jnp.sqrt(jnp.float32(D))
        p = jax.nn.softmax(s, axis=-1)
        o = jnp.einsum("bhqk,bhkd->bhqd", p, v).transpose(0, 2, 1, 3).reshape(B, C, E)
        x = jnp.einsum("bce,ef->bcf", o.astype(jnp.bfloat16), params["wo"][l],
                       preferred_element_type=jnp.float32) + params["bo"][l][0]
    y = jnp.einsum("oc,bce->boe", params["conv_w"], x) + params["conv_b"]
    y = y.reshape(B, E)
    return y @ params["wout_t"] + params["bout"]


if __name__ == "__main__":
    batch, channels, height, width = 2, 4, 16, 16
    embed_dim = height * width            # 256 (forward flattens spatial dims)
    num_heads = 4
    output_dim = 32
    num_layers = 5

    key = jax.random.PRNGKey(0)
    key, xkey = jax.random.split(key)
    x = jax.random.normal(xkey, (batch, channels, height, width), jnp.float32)
    params = init_params(key, embed_dim, num_heads, output_dim, num_layers,
                         channels)

    fwd = jax.jit(functools.partial(self_attention_layer_forward,
                                    num_heads=num_heads))
    out = jax.block_until_ready(fwd(x, params))

    ref = _ref_forward(x, params, num_heads)
    assert out.shape == (batch, output_dim)
    max_diff = float(jnp.max(jnp.abs(out - ref)))
    assert jnp.allclose(out, ref, rtol=1e-3, atol=1e-3), (
        f"max abs diff {max_diff}")

    print("KERNEL_OK")
</pallas_src>

<mosaic_0001>
module attributes {stable_mosaic.version = 11 : i64} {
  func.func @_fused_kernel(%arg0: i32, %arg1: memref<8x256xf32, #tpu.memory_space<vmem>>, %arg2: memref<5x256x768xbf16, #tpu.memory_space<vmem>>, %arg3: memref<5x1x768xf32, #tpu.memory_space<vmem>>, %arg4: memref<5x256x256xbf16, #tpu.memory_space<vmem>>, %arg5: memref<5x1x256xf32, #tpu.memory_space<vmem>>, %arg6: memref<8x8xf32, #tpu.memory_space<vmem>>, %arg7: memref<2x8xf32, #tpu.memory_space<vmem>>, %arg8: memref<256x32xf32, #tpu.memory_space<vmem>>, %arg9: memref<1x32xf32, #tpu.memory_space<vmem>>, %arg10: memref<2x32xf32, #tpu.memory_space<vmem>>) attributes {dimension_semantics = [#tpu.dimension_semantics<arbitrary>], iteration_bounds = array<i64: 1>, scalar_prefetch = 0 : i64, scratch_operands = 0 : i64, tpu.core_type = #tpu.core_type<tc>, window_params = [{pipeline_mode = #tpu.pipeline_mode<synchronous>, transform_indices = @transform_0, window_bounds = array<i64: 8, 256>}, {pipeline_mode = #tpu.pipeline_mode<synchronous>, transform_indices = @transform_1, window_bounds = array<i64: 5, 256, 768>}, {pipeline_mode = #tpu.pipeline_mode<synchronous>, transform_indices = @transform_2, window_bounds = array<i64: 5, 1, 768>}, {pipeline_mode = #tpu.pipeline_mode<synchronous>, transform_indices = @transform_3, window_bounds = array<i64: 5, 256, 256>}, {pipeline_mode = #tpu.pipeline_mode<synchronous>, transform_indices = @transform_4, window_bounds = array<i64: 5, 1, 256>}, {pipeline_mode = #tpu.pipeline_mode<synchronous>, transform_indices = @transform_5, window_bounds = array<i64: 8, 8>}, {pipeline_mode = #tpu.pipeline_mode<synchronous>, transform_indices = @transform_6, window_bounds = array<i64: 2, 8>}, {pipeline_mode = #tpu.pipeline_mode<synchronous>, transform_indices = @transform_7, window_bounds = array<i64: 256, 32>}, {pipeline_mode = #tpu.pipeline_mode<synchronous>, transform_indices = @transform_8, window_bounds = array<i64: 1, 32>}, {pipeline_mode = #tpu.pipeline_mode<synchronous>, transform_indices = @transform_9, window_bounds = array<i64: 2, 32>}]} {
    %c0 = arith.constant 0 : index
    %c0_0 = arith.constant 0 : index
    %0 = vector.load %arg6[%c0, %c0_0] : memref<8x8xf32, #tpu.memory_space<vmem>>, vector<8x8xf32>
    %c0_1 = arith.constant 0 : index
    %c0_2 = arith.constant 0 : index
    %1 = vector.load %arg1[%c0_1, %c0_2] : memref<8x256xf32, #tpu.memory_space<vmem>>, vector<8x256xf32>
    %2 = arith.truncf %1 : vector<8x256xf32> to vector<8x256xbf16>
    %c0_3 = arith.constant 0 : index
    %c0_4 = arith.constant 0 : index
    %c0_5 = arith.constant 0 : index
    %3 = vector.load %arg2[%c0_3, %c0_4, %c0_5] : memref<5x256x768xbf16, #tpu.memory_space<vmem>>, vector<1x256x768xbf16>
    %4 = vector.shape_cast %3 : vector<1x256x768xbf16> to vector<256x768xbf16>
    %cst = arith.constant dense<0.000000e+00> : vector<8x768xf32>
    %5 = tpu.matmul %2, %4, %cst {dimension_numbers = #tpu.dot_dimension_numbers<[1], [0], [0], [1], [0, 0, 1, 1], [], []>} : vector<8x256xbf16>, vector<256x768xbf16>, vector<8x768xf32> -> vector<8x768xf32>
    %c0_6 = arith.constant 0 : index
    %c0_7 = arith.constant 0 : index
    %c0_8 = arith.constant 0 : index
    %6 = vector.load %arg3[%c0_6, %c0_7, %c0_8] : memref<5x1x768xf32, #tpu.memory_space<vmem>>, vector<1x1x768xf32>
    %7 = vector.shape_cast %6 : vector<1x1x768xf32> to vector<1x768xf32>
    %8 = vector.broadcast %7 : vector<1x768xf32> to vector<8x768xf32>
    %9 = arith.addf %5, %8 : vector<8x768xf32>
    %10 = vector.extract_strided_slice %9 {offsets = [0, 0], sizes = [8, 256], strides = [1, 1]} : vector<8x768xf32> to vector<8x256xf32>
    %11 = vector.extract_strided_slice %9 {offsets = [0, 256], sizes = [8, 256], strides = [1, 1]} : vector<8x768xf32> to vector<8x256xf32>
    %12 = vector.extract_strided_slice %9 {offsets = [0, 512], sizes = [8, 256], strides = [1, 1]} : vector<8x768xf32> to vector<8x256xf32>
    %13 = vector.extract_strided_slice %10 {offsets = [0, 0], sizes = [8, 64], strides = [1, 1]} : vector<8x256xf32> to vector<8x64xf32>
    %14 = vector.extract_strided_slice %11 {offsets = [0, 0], sizes = [8, 64], strides = [1, 1]} : vector<8x256xf32> to vector<8x64xf32>
    %15 = vector.extract_strided_slice %12 {offsets = [0, 0], sizes = [8, 64], strides = [1, 1]} : vector<8x256xf32> to vector<8x64xf32>
    %cst_9 = arith.constant dense<0.000000e+00> : vector<8x8xf32>
    %16 = tpu.matmul %13, %14, %cst_9 {dimension_numbers = #tpu.dot_dimension_numbers<[1], [1], [0], [0], [0, 0, 1, 0], [], []>} : vector<8x64xf32>, vector<8x64xf32>, vector<8x8xf32> -> vector<8x8xf32>
    %cst_10 = arith.constant 1.250000e-01 : f32
    %17 = vector.broadcast %cst_10 : f32 to vector<8x8xf32>
    %18 = arith.mulf %16, %17 : vector<8x8xf32>
    %19 = arith.addf %18, %0 : vector<8x8xf32>
    %cst_11 = arith.constant dense<0xFF800000> : vector<8xf32>
    %20 = vector.multi_reduction <maximumf>, %19, %cst_11 [1] : vector<8x8xf32> to vector<8xf32>
    %21 = vector.shape_cast %20 : vector<8xf32> to vector<8x1xf32>
    %22 = vector.broadcast %21 : vector<8x1xf32> to vector<8x8xf32>
    %23 = arith.subf %19, %22 : vector<8x8xf32>
    %24 = math.exp %23 : vector<8x8xf32>
    %cst_12 = arith.constant dense<0.000000e+00> : vector<8xf32>
    %25 = vector.multi_reduction <add>, %24, %cst_12 [1] : vector<8x8xf32> to vector<8xf32>
    %26 = vector.shape_cast %25 : vector<8xf32> to vector<8x1xf32>
    %27 = vector.broadcast %26 : vector<8x1xf32> to vector<8x8xf32>
    %28 = arith.divf %24, %27 : vector<8x8xf32>
    %cst_13 = arith.constant dense<0.000000e+00> : vector<8x64xf32>
    %29 = tpu.matmul %28, %15, %cst_13 {dimension_numbers = #tpu.dot_dimension_numbers<[1], [0], [0], [1], [0, 0, 1, 1], [], []>} : vector<8x8xf32>, vector<8x64xf32>, vector<8x64xf32> -> vector<8x64xf32>
    %30 = vector.extract_strided_slice %10 {offsets = [0, 64], sizes = [8, 64], strides = [1, 1]} : vector<8x256xf32> to vector<8x64xf32>
    %31 = vector.extract_strided_slice %11 {offsets = [0, 64], sizes = [8, 64], strides = [1, 1]} : vector<8x256xf32> to vector<8x64xf32>
    %32 = vector.extract_strided_slice %12 {offsets = [0, 64], sizes = [8, 64], strides = [1, 1]} : vector<8x256xf32> to vector<8x64xf32>
    %cst_14 = arith.constant dense<0.000000e+00> : vector<8x8xf32>
    %33 = tpu.matmul %30, %31, %cst_14 {dimension_numbers = #tpu.dot_dimension_numbers<[1], [1], [0], [0], [0, 0, 1, 0], [], []>} : vector<8x64xf32>, vector<8x64xf32>, vector<8x8xf32> -> vector<8x8xf32>
    %cst_15 = arith.constant 1.250000e-01 : f32
    %34 = vector.broadcast %cst_15 : f32 to vector<8x8xf32>
    %35 = arith.mulf %33, %34 : vector<8x8xf32>
    %36 = arith.addf %35, %0 : vector<8x8xf32>
    %cst_16 = arith.constant dense<0xFF800000> : vector<8xf32>
    %37 = vector.multi_reduction <maximumf>, %36, %cst_16 [1] : vector<8x8xf32> to vector<8xf32>
    %38 = vector.shape_cast %37 : vector<8xf32> to vector<8x1xf32>
    %39 = vector.broadcast %38 : vector<8x1xf32> to vector<8x8xf32>
    %40 = arith.subf %36, %39 : vector<8x8xf32>
    %41 = math.exp %40 : vector<8x8xf32>
    %cst_17 = arith.constant dense<0.000000e+00> : vector<8xf32>
    %42 = vector.multi_reduction <add>, %41, %cst_17 [1] : vector<8x8xf32> to vector<8xf32>
    %43 = vector.shape_cast %42 : vector<8xf32> to vector<8x1xf32>
    %44 = vector.broadcast %43 : vector<8x1xf32> to vector<8x8xf32>
    %45 = arith.divf %41, %44 : vector<8x8xf32>
    %cst_18 = arith.constant dense<0.000000e+00> : vector<8x64xf32>
    %46 = tpu.matmul %45, %32, %cst_18 {dimension_numbers = #tpu.dot_dimension_numbers<[1], [0], [0], [1], [0, 0, 1, 1], [], []>} : vector<8x8xf32>, vector<8x64xf32>, vector<8x64xf32> -> vector<8x64xf32>
    %47 = vector.extract_strided_slice %10 {offsets = [0, 128], sizes = [8, 64], strides = [1, 1]} : vector<8x256xf32> to vector<8x64xf32>
    %48 = vector.extract_strided_slice %11 {offsets = [0, 128], sizes = [8, 64], strides = [1, 1]} : vector<8x256xf32> to vector<8x64xf32>
    %49 = vector.extract_strided_slice %12 {offsets = [0, 128], sizes = [8, 64], strides = [1, 1]} : vector<8x256xf32> to vector<8x64xf32>
    %cst_19 = arith.constant dense<0.000000e+00> : vector<8x8xf32>
    %50 = tpu.matmul %47, %48, %cst_19 {dimension_numbers = #tpu.dot_dimension_numbers<[1], [1], [0], [0], [0, 0, 1, 0], [], []>} : vector<8x64xf32>, vector<8x64xf32>, vector<8x8xf32> -> vector<8x8xf32>
    %cst_20 = arith.constant 1.250000e-01 : f32
    %51 = vector.broadcast %cst_20 : f32 to vector<8x8xf32>
    %52 = arith.mulf %50, %51 : vector<8x8xf32>
    %53 = arith.addf %52, %0 : vector<8x8xf32>
    %cst_21 = arith.constant dense<0xFF800000> : vector<8xf32>
    %54 = vector.multi_reduction <maximumf>, %53, %cst_21 [1] : vector<8x8xf32> to vector<8xf32>
    %55 = vector.shape_cast %54 : vector<8xf32> to vector<8x1xf32>
    %56 = vector.broadcast %55 : vector<8x1xf32> to vector<8x8xf32>
    %57 = arith.subf %53, %56 : vector<8x8xf32>
    %58 = math.exp %57 : vector<8x8xf32>
    %cst_22 = arith.constant dense<0.000000e+00> : vector<8xf32>
    %59 = vector.multi_reduction <add>, %58, %cst_22 [1] : vector<8x8xf32> to vector<8xf32>
    %60 = vector.shape_cast %59 : vector<8xf32> to vector<8x1xf32>
    %61 = vector.broadcast %60 : vector<8x1xf32> to vector<8x8xf32>
    %62 = arith.divf %58, %61 : vector<8x8xf32>
    %cst_23 = arith.constant dense<0.000000e+00> : vector<8x64xf32>
    %63 = tpu.matmul %62, %49, %cst_23 {dimension_numbers = #tpu.dot_dimension_numbers<[1], [0], [0], [1], [0, 0, 1, 1], [], []>} : vector<8x8xf32>, vector<8x64xf32>, vector<8x64xf32> -> vector<8x64xf32>
    %64 = vector.extract_strided_slice %10 {offsets = [0, 192], sizes = [8, 64], strides = [1, 1]} : vector<8x256xf32> to vector<8x64xf32>
    %65 = vector.extract_strided_slice %11 {offsets = [0, 192], sizes = [8, 64], strides = [1, 1]} : vector<8x256xf32> to vector<8x64xf32>
    %66 = vector.extract_strided_slice %12 {offsets = [0, 192], sizes = [8, 64], strides = [1, 1]} : vector<8x256xf32> to vector<8x64xf32>
    %cst_24 = arith.constant dense<0.000000e+00> : vector<8x8xf32>
    %67 = tpu.matmul %64, %65, %cst_24 {dimension_numbers = #tpu.dot_dimension_numbers<[1], [1], [0], [0], [0, 0, 1, 0], [], []>} : vector<8x64xf32>, vector<8x64xf32>, vector<8x8xf32> -> vector<8x8xf32>
    %cst_25 = arith.constant 1.250000e-01 : f32
    %68 = vector.broadcast %cst_25 : f32 to vector<8x8xf32>
    %69 = arith.mulf %67, %68 : vector<8x8xf32>
    %70 = arith.addf %69, %0 : vector<8x8xf32>
    %cst_26 = arith.constant dense<0xFF800000> : vector<8xf32>
    %71 = vector.multi_reduction <maximumf>, %70, %cst_26 [1] : vector<8x8xf32> to vector<8xf32>
    %72 = vector.shape_cast %71 : vector<8xf32> to vector<8x1xf32>
    %73 = vector.broadcast %72 : vector<8x1xf32> to vector<8x8xf32>
    %74 = arith.subf %70, %73 : vector<8x8xf32>
    %75 = math.exp %74 : vector<8x8xf32>
    %cst_27 = arith.constant dense<0.000000e+00> : vector<8xf32>
    %76 = vector.multi_reduction <add>, %75, %cst_27 [1] : vector<8x8xf32> to vector<8xf32>
    %77 = vector.shape_cast %76 : vector<8xf32> to vector<8x1xf32>
    %78 = vector.broadcast %77 : vector<8x1xf32> to vector<8x8xf32>
    %79 = arith.divf %75, %78 : vector<8x8xf32>
    %cst_28 = arith.constant dense<0.000000e+00> : vector<8x64xf32>
    %80 = tpu.matmul %79, %66, %cst_28 {dimension_numbers = #tpu.dot_dimension_numbers<[1], [0], [0], [1], [0, 0, 1, 1], [], []>} : vector<8x8xf32>, vector<8x64xf32>, vector<8x64xf32> -> vector<8x64xf32>
    %81 = tpu.concatenate %29, %46, %63, %80 in 1 : vector<8x64xf32>, vector<8x64xf32>, vector<8x64xf32>, vector<8x64xf32> -> vector<8x256xf32>
    %82 = arith.truncf %81 : vector<8x256xf32> to vector<8x256xbf16>
    %c0_29 = arith.constant 0 : index
    %c0_30 = arith.constant 0 : index
    %c0_31 = arith.constant 0 : index
    %83 = vector.load %arg4[%c0_29, %c0_30, %c0_31] : memref<5x256x256xbf16, #tpu.memory_space<vmem>>, vector<1x256x256xbf16>
    %84 = vector.shape_cast %83 : vector<1x256x256xbf16> to vector<256x256xbf16>
    %cst_32 = arith.constant dense<0.000000e+00> : vector<8x256xf32>
    %85 = tpu.matmul %82, %84, %cst_32 {dimension_numbers = #tpu.dot_dimension_numbers<[1], [0], [0], [1], [0, 0, 1, 1], [], []>} : vector<8x256xbf16>, vector<256x256xbf16>, vector<8x256xf32> -> vector<8x256xf32>
    %c0_33 = arith.constant 0 : index
    %c0_34 = arith.constant 0 : index
    %c0_35 = arith.constant 0 : index
    %86 = vector.load %arg5[%c0_33, %c0_34, %c0_35] : memref<5x1x256xf32, #tpu.memory_space<vmem>>, vector<1x1x256xf32>
    %87 = vector.shape_cast %86 : vector<1x1x256xf32> to vector<1x256xf32>
    %88 = vector.broadcast %87 : vector<1x256xf32> to vector<8x256xf32>
    %89 = arith.addf %85, %88 : vector<8x256xf32>
    %90 = arith.truncf %89 : vector<8x256xf32> to vector<8x256xbf16>
    %c1 = arith.constant 1 : index
    %c0_36 = arith.constant 0 : index
    %c0_37 = arith.constant 0 : index
    %91 = vector.load %arg2[%c1, %c0_36, %c0_37] : memref<5x256x768xbf16, #tpu.memory_space<vmem>>, vector<1x256x768xbf16>
    %92 = vector.shape_cast %91 : vector<1x256x768xbf16> to vector<256x768xbf16>
    %cst_38 = arith.constant dense<0.000000e+00> : vector<8x768xf32>
    %93 = tpu.matmul %90, %92, %cst_38 {dimension_numbers = #tpu.dot_dimension_numbers<[1], [0], [0], [1], [0, 0, 1, 1], [], []>} : vector<8x256xbf16>, vector<256x768xbf16>, vector<8x768xf32> -> vector<8x768xf32>
    %c1_39 = arith.constant 1 : index
    %c0_40 = arith.constant 0 : index
    %c0_41 = arith.constant 0 : index
    %94 = vector.load %arg3[%c1_39, %c0_40, %c0_41] : memref<5x1x768xf32, #tpu.memory_space<vmem>>, vector<1x1x768xf32>
    %95 = vector.shape_cast %94 : vector<1x1x768xf32> to vector<1x768xf32>
    %96 = vector.broadcast %95 : vector<1x768xf32> to vector<8x768xf32>
    %97 = arith.addf %93, %96 : vector<8x768xf32>
    %98 = vector.extract_strided_slice %97 {offsets = [0, 0], sizes = [8, 256], strides = [1, 1]} : vector<8x768xf32> to vector<8x256xf32>
    %99 = vector.extract_strided_slice %97 {offsets = [0, 256], sizes = [8, 256], strides = [1, 1]} : vector<8x768xf32> to vector<8x256xf32>
    %100 = vector.extract_strided_slice %97 {offsets = [0, 512], sizes = [8, 256], strides = [1, 1]} : vector<8x768xf32> to vector<8x256xf32>
    %101 = vector.extract_strided_slice %98 {offsets = [0, 0], sizes = [8, 64], strides = [1, 1]} : vector<8x256xf32> to vector<8x64xf32>
    %102 = vector.extract_strided_slice %99 {offsets = [0, 0], sizes = [8, 64], strides = [1, 1]} : vector<8x256xf32> to vector<8x64xf32>
    %103 = vector.extract_strided_slice %100 {offsets = [0, 0], sizes = [8, 64], strides = [1, 1]} : vector<8x256xf32> to vector<8x64xf32>
    %cst_42 = arith.constant dense<0.000000e+00> : vector<8x8xf32>
    %104 = tpu.matmul %101, %102, %cst_42 {dimension_numbers = #tpu.dot_dimension_numbers<[1], [1], [0], [0], [0, 0, 1, 0], [], []>} : vector<8x64xf32>, vector<8x64xf32>, vector<8x8xf32> -> vector<8x8xf32>
    %cst_43 = arith.constant 1.250000e-01 : f32
    %105 = vector.broadcast %cst_43 : f32 to vector<8x8xf32>
    %106 = arith.mulf %104, %105 : vector<8x8xf32>
    %107 = arith.addf %106, %0 : vector<8x8xf32>
    %cst_44 = arith.constant dense<0xFF800000> : vector<8xf32>
    %108 = vector.multi_reduction <maximumf>, %107, %cst_44 [1] : vector<8x8xf32> to vector<8xf32>
    %109 = vector.shape_cast %108 : vector<8xf32> to vector<8x1xf32>
    %110 = vector.broadcast %109 : vector<8x1xf32> to vector<8x8xf32>
    %111 = arith.subf %107, %110 : vector<8x8xf32>
    %112 = math.exp %111 : vector<8x8xf32>
    %cst_45 = arith.constant dense<0.000000e+00> : vector<8xf32>
    %113 = vector.multi_reduction <add>, %112, %cst_45 [1] : vector<8x8xf32> to vector<8xf32>
    %114 = vector.shape_cast %113 : vector<8xf32> to vector<8x1xf32>
    %115 = vector.broadcast %114 : vector<8x1xf32> to vector<8x8xf32>
    %116 = arith.divf %112, %115 : vector<8x8xf32>
    %cst_46 = arith.constant dense<0.000000e+00> : vector<8x64xf32>
    %117 = tpu.matmul %116, %103, %cst_46 {dimension_numbers = #tpu.dot_dimension_numbers<[1], [0], [0], [1], [0, 0, 1, 1], [], []>} : vector<8x8xf32>, vector<8x64xf32>, vector<8x64xf32> -> vector<8x64xf32>
    %118 = vector.extract_strided_slice %98 {offsets = [0, 64], sizes = [8, 64], strides = [1, 1]} : vector<8x256xf32> to vector<8x64xf32>
    %119 = vector.extract_strided_slice %99 {offsets = [0, 64], sizes = [8, 64], strides = [1, 1]} : vector<8x256xf32> to vector<8x64xf32>
    %120 = vector.extract_strided_slice %100 {offsets = [0, 64], sizes = [8, 64], strides = [1, 1]} : vector<8x256xf32> to vector<8x64xf32>
    %cst_47 = arith.constant dense<0.000000e+00> : vector<8x8xf32>
    %121 = tpu.matmul %118, %119, %cst_47 {dimension_numbers = #tpu.dot_dimension_numbers<[1], [1], [0], [0], [0, 0, 1, 0], [], []>} : vector<8x64xf32>, vector<8x64xf32>, vector<8x8xf32> -> vector<8x8xf32>
    %cst_48 = arith.constant 1.250000e-01 : f32
    %122 = vector.broadcast %cst_48 : f32 to vector<8x8xf32>
    %123 = arith.mulf %121, %122 : vector<8x8xf32>
    %124 = arith.addf %123, %0 : vector<8x8xf32>
    %cst_49 = arith.constant dense<0xFF800000> : vector<8xf32>
    %125 = vector.multi_reduction <maximumf>, %124, %cst_49 [1] : vector<8x8xf32> to vector<8xf32>
    %126 = vector.shape_cast %125 : vector<8xf32> to vector<8x1xf32>
    %127 = vector.broadcast %126 : vector<8x1xf32> to vector<8x8xf32>
    %128 = arith.subf %124, %127 : vector<8x8xf32>
    %129 = math.exp %128 : vector<8x8xf32>
    %cst_50 = arith.constant dense<0.000000e+00> : vector<8xf32>
    %130 = vector.multi_reduction <add>, %129, %cst_50 [1] : vector<8x8xf32> to vector<8xf32>
    %131 = vector.shape_cast %130 : vector<8xf32> to vector<8x1xf32>
    %132 = vector.broadcast %131 : vector<8x1xf32> to vector<8x8xf32>
    %133 = arith.divf %129, %132 : vector<8x8xf32>
    %cst_51 = arith.constant dense<0.000000e+00> : vector<8x64xf32>
    %134 = tpu.matmul %133, %120, %cst_51 {dimension_numbers = #tpu.dot_dimension_numbers<[1], [0], [0], [1], [0, 0, 1, 1], [], []>} : vector<8x8xf32>, vector<8x64xf32>, vector<8x64xf32> -> vector<8x64xf32>
    %135 = vector.extract_strided_slice %98 {offsets = [0, 128], sizes = [8, 64], strides = [1, 1]} : vector<8x256xf32> to vector<8x64xf32>
    %136 = vector.extract_strided_slice %99 {offsets = [0, 128], sizes = [8, 64], strides = [1, 1]} : vector<8x256xf32> to vector<8x64xf32>
    %137 = vector.extract_strided_slice %100 {offsets = [0, 128], sizes = [8, 64], strides = [1, 1]} : vector<8x256xf32> to vector<8x64xf32>
    %cst_52 = arith.constant dense<0.000000e+00> : vector<8x8xf32>
    %138 = tpu.matmul %135, %136, %cst_52 {dimension_numbers = #tpu.dot_dimension_numbers<[1], [1], [0], [0], [0, 0, 1, 0], [], []>} : vector<8x64xf32>, vector<8x64xf32>, vector<8x8xf32> -> vector<8x8xf32>
    %cst_53 = arith.constant 1.250000e-01 : f32
    %139 = vector.broadcast %cst_53 : f32 to vector<8x8xf32>
    %140 = arith.mulf %138, %139 : vector<8x8xf32>
    %141 = arith.addf %140, %0 : vector<8x8xf32>
    %cst_54 = arith.constant dense<0xFF800000> : vector<8xf32>
    %142 = vector.multi_reduction <maximumf>, %141, %cst_54 [1] : vector<8x8xf32> to vector<8xf32>
    %143 = vector.shape_cast %142 : vector<8xf32> to vector<8x1xf32>
    %144 = vector.broadcast %143 : vector<8x1xf32> to vector<8x8xf32>
    %145 = arith.subf %141, %144 : vector<8x8xf32>
    %146 = math.exp %145 : vector<8x8xf32>
    %cst_55 = arith.constant dense<0.000000e+00> : vector<8xf32>
    %147 = vector.multi_reduction <add>, %146, %cst_55 [1] : vector<8x8xf32> to vector<8xf32>
    %148 = vector.shape_cast %147 : vector<8xf32> to vector<8x1xf32>
    %149 = vector.broadcast %148 : vector<8x1xf32> to vector<8x8xf32>
    %150 = arith.divf %146, %149 : vector<8x8xf32>
    %cst_56 = arith.constant dense<0.000000e+00> : vector<8x64xf32>
    %151 = tpu.matmul %150, %137, %cst_56 {dimension_numbers = #tpu.dot_dimension_numbers<[1], [0], [0], [1], [0, 0, 1, 1], [], []>} : vector<8x8xf32>, vector<8x64xf32>, vector<8x64xf32> -> vector<8x64xf32>
    %152 = vector.extract_strided_slice %98 {offsets = [0, 192], sizes = [8, 64], strides = [1, 1]} : vector<8x256xf32> to vector<8x64xf32>
    %153 = vector.extract_strided_slice %99 {offsets = [0, 192], sizes = [8, 64], strides = [1, 1]} : vector<8x256xf32> to vector<8x64xf32>
    %154 = vector.extract_strided_slice %100 {offsets = [0, 192], sizes = [8, 64], strides = [1, 1]} : vector<8x256xf32> to vector<8x64xf32>
    %cst_57 = arith.constant dense<0.000000e+00> : vector<8x8xf32>
    %155 = tpu.matmul %152, %153, %cst_57 {dimension_numbers = #tpu.dot_dimension_numbers<[1], [1], [0], [0], [0, 0, 1, 0], [], []>} : vector<8x64xf32>, vector<8x64xf32>, vector<8x8xf32> -> vector<8x8xf32>
    %cst_58 = arith.constant 1.250000e-01 : f32
    %156 = vector.broadcast %cst_58 : f32 to vector<8x8xf32>
    %157 = arith.mulf %155, %156 : vector<8x8xf32>
    %158 = arith.addf %157, %0 : vector<8x8xf32>
    %cst_59 = arith.constant dense<0xFF800000> : vector<8xf32>
    %159 = vector.multi_reduction <maximumf>, %158, %cst_59 [1] : vector<8x8xf32> to vector<8xf32>
    %160 = vector.shape_cast %159 : vector<8xf32> to vector<8x1xf32>
    %161 = vector.broadcast %160 : vector<8x1xf32> to vector<8x8xf32>
    %162 = arith.subf %158, %161 : vector<8x8xf32>
    %163 = math.exp %162 : vector<8x8xf32>
    %cst_60 = arith.constant dense<0.000000e+00> : vector<8xf32>
    %164 = vector.multi_reduction <add>, %163, %cst_60 [1] : vector<8x8xf32> to vector<8xf32>
    %165 = vector.shape_cast %164 : vector<8xf32> to vector<8x1xf32>
    %166 = vector.broadcast %165 : vector<8x1xf32> to vector<8x8xf32>
    %167 = arith.divf %163, %166 : vector<8x8xf32>
    %cst_61 = arith.constant dense<0.000000e+00> : vector<8x64xf32>
    %168 = tpu.matmul %167, %154, %cst_61 {dimension_numbers = #tpu.dot_dimension_numbers<[1], [0], [0], [1], [0, 0, 1, 1], [], []>} : vector<8x8xf32>, vector<8x64xf32>, vector<8x64xf32> -> vector<8x64xf32>
    %169 = tpu.concatenate %117, %134, %151, %168 in 1 : vector<8x64xf32>, vector<8x64xf32>, vector<8x64xf32>, vector<8x64xf32> -> vector<8x256xf32>
    %170 = arith.truncf %169 : vector<8x256xf32> to vector<8x256xbf16>
    %c1_62 = arith.constant 1 : index
    %c0_63 = arith.constant 0 : index
    %c0_64 = arith.constant 0 : index
    %171 = vector.load %arg4[%c1_62, %c0_63, %c0_64] : memref<5x256x256xbf16, #tpu.memory_space<vmem>>, vector<1x256x256xbf16>
    %172 = vector.shape_cast %171 : vector<1x256x256xbf16> to vector<256x256xbf16>
    %cst_65 = arith.constant dense<0.000000e+00> : vector<8x256xf32>
    %173 = tpu.matmul %170, %172, %cst_65 {dimension_numbers = #tpu.dot_dimension_numbers<[1], [0], [0], [1], [0, 0, 1, 1], [], []>} : vector<8x256xbf16>, vector<256x256xbf16>, vector<8x256xf32> -> vector<8x256xf32>
    %c1_66 = arith.constant 1 : index
    %c0_67 = arith.constant 0 : index
    %c0_68 = arith.constant 0 : index
    %174 = vector.load %arg5[%c1_66, %c0_67, %c0_68] : memref<5x1x256xf32, #tpu.memory_space<vmem>>, vector<1x1x256xf32>
    %175 = vector.shape_cast %174 : vector<1x1x256xf32> to vector<1x256xf32>
    %176 = vector.broadcast %175 : vector<1x256xf32> to vector<8x256xf32>
    %177 = arith.addf %173, %176 : vector<8x256xf32>
    %178 = arith.truncf %177 : vector<8x256xf32> to vector<8x256xbf16>
    %c2 = arith.constant 2 : index
    %c0_69 = arith.constant 0 : index
    %c0_70 = arith.constant 0 : index
    %179 = vector.load %arg2[%c2, %c0_69, %c0_70] : memref<5x256x768xbf16, #tpu.memory_space<vmem>>, vector<1x256x768xbf16>
    %180 = vector.shape_cast %179 : vector<1x256x768xbf16> to vector<256x768xbf16>
    %cst_71 = arith.constant dense<0.000000e+00> : vector<8x768xf32>
    %181 = tpu.matmul %178, %180, %cst_71 {dimension_numbers = #tpu.dot_dimension_numbers<[1], [0], [0], [1], [0, 0, 1, 1], [], []>} : vector<8x256xbf16>, vector<256x768xbf16>, vector<8x768xf32> -> vector<8x768xf32>
    %c2_72 = arith.constant 2 : index
    %c0_73 = arith.constant 0 : index
    %c0_74 = arith.constant 0 : index
    %182 = vector.load %arg3[%c2_72, %c0_73, %c0_74] : memref<5x1x768xf32, #tpu.memory_space<vmem>>, vector<1x1x768xf32>
    %183 = vector.shape_cast %182 : vector<1x1x768xf32> to vector<1x768xf32>
    %184 = vector.broadcast %183 : vector<1x768xf32> to vector<8x768xf32>
    %185 = arith.addf %181, %184 : vector<8x768xf32>
    %186 = vector.extract_strided_slice %185 {offsets = [0, 0], sizes = [8, 256], strides = [1, 1]} : vector<8x768xf32> to vector<8x256xf32>
    %187 = vector.extract_strided_slice %185 {offsets = [0, 256], sizes = [8, 256], strides = [1, 1]} : vector<8x768xf32> to vector<8x256xf32>
    %188 = vector.extract_strided_slice %185 {offsets = [0, 512], sizes = [8, 256], strides = [1, 1]} : vector<8x768xf32> to vector<8x256xf32>
    %189 = vector.extract_strided_slice %186 {offsets = [0, 0], sizes = [8, 64], strides = [1, 1]} : vector<8x256xf32> to vector<8x64xf32>
    %190 = vector.extract_strided_slice %187 {offsets = [0, 0], sizes = [8, 64], strides = [1, 1]} : vector<8x256xf32> to vector<8x64xf32>
    %191 = vector.extract_strided_slice %188 {offsets = [0, 0], sizes = [8, 64], strides = [1, 1]} : vector<8x256xf32> to vector<8x64xf32>
    %cst_75 = arith.constant dense<0.000000e+00> : vector<8x8xf32>
    %192 = tpu.matmul %189, %190, %cst_75 {dimension_numbers = #tpu.dot_dimension_numbers<[1], [1], [0], [0], [0, 0, 1, 0], [], []>} : vector<8x64xf32>, vector<8x64xf32>, vector<8x8xf32> -> vector<8x8xf32>
    %cst_76 = arith.constant 1.250000e-01 : f32
    %193 = vector.broadcast %cst_76 : f32 to vector<8x8xf32>
    %194 = arith.mulf %192, %193 : vector<8x8xf32>
    %195 = arith.addf %194, %0 : vector<8x8xf32>
    %cst_77 = arith.constant dense<0xFF800000> : vector<8xf32>
    %196 = vector.multi_reduction <maximumf>, %195, %cst_77 [1] : vector<8x8xf32> to vector<8xf32>
    %197 = vector.shape_cast %196 : vector<8xf32> to vector<8x1xf32>
    %198 = vector.broadcast %197 : vector<8x1xf32> to vector<8x8xf32>
    %199 = arith.subf %195, %198 : vector<8x8xf32>
    %200 = math.exp %199 : vector<8x8xf32>
    %cst_78 = arith.constant dense<0.000000e+00> : vector<8xf32>
    %201 = vector.multi_reduction <add>, %200, %cst_78 [1] : vector<8x8xf32> to vector<8xf32>
    %202 = vector.shape_cast %201 : vector<8xf32> to vector<8x1xf32>
    %203 = vector.broadcast %202 : vector<8x1xf32> to vector<8x8xf32>
    %204 = arith.divf %200, %203 : vector<8x8xf32>
    %cst_79 = arith.constant dense<0.000000e+00> : vector<8x64xf32>
    %205 = tpu.matmul %204, %191, %cst_79 {dimension_numbers = #tpu.dot_dimension_numbers<[1], [0], [0], [1], [0, 0, 1, 1], [], []>} : vector<8x8xf32>, vector<8x64xf32>, vector<8x64xf32> -> vector<8x64xf32>
    %206 = vector.extract_strided_slice %186 {offsets = [0, 64], sizes = [8, 64], strides = [1, 1]} : vector<8x256xf32> to vector<8x64xf32>
    %207 = vector.extract_strided_slice %187 {offsets = [0, 64], sizes = [8, 64], strides = [1, 1]} : vector<8x256xf32> to vector<8x64xf32>
    %208 = vector.extract_strided_slice %188 {offsets = [0, 64], sizes = [8, 64], strides = [1, 1]} : vector<8x256xf32> to vector<8x64xf32>
    %cst_80 = arith.constant dense<0.000000e+00> : vector<8x8xf32>
    %209 = tpu.matmul %206, %207, %cst_80 {dimension_numbers = #tpu.dot_dimension_numbers<[1], [1], [0], [0], [0, 0, 1, 0], [], []>} : vector<8x64xf32>, vector<8x64xf32>, vector<8x8xf32> -> vector<8x8xf32>
    %cst_81 = arith.constant 1.250000e-01 : f32
    %210 = vector.broadcast %cst_81 : f32 to vector<8x8xf32>
    %211 = arith.mulf %209, %210 : vector<8x8xf32>
    %212 = arith.addf %211, %0 : vector<8x8xf32>
    %cst_82 = arith.constant dense<0xFF800000> : vector<8xf32>
    %213 = vector.multi_reduction <maximumf>, %212, %cst_82 [1] : vector<8x8xf32> to vector<8xf32>
    %214 = vector.shape_cast %213 : vector<8xf32> to vector<8x1xf32>
    %215 = vector.broadcast %214 : vector<8x1xf32> to vector<8x8xf32>
    %216 = arith.subf %212, %215 : vector<8x8xf32>
    %217 = math.exp %216 : vector<8x8xf32>
    %cst_83 = arith.constant dense<0.000000e+00> : vector<8xf32>
    %218 = vector.multi_reduction <add>, %217, %cst_83 [1] : vector<8x8xf32> to vector<8xf32>
    %219 = vector.shape_cast %218 : vector<8xf32> to vector<8x1xf32>
    %220 = vector.broadcast %219 : vector<8x1xf32> to vector<8x8xf32>
    %221 = arith.divf %217, %220 : vector<8x8xf32>
    %cst_84 = arith.constant dense<0.000000e+00> : vector<8x64xf32>
    %222 = tpu.matmul %221, %208, %cst_84 {dimension_numbers = #tpu.dot_dimension_numbers<[1], [0], [0], [1], [0, 0, 1, 1], [], []>} : vector<8x8xf32>, vector<8x64xf32>, vector<8x64xf32> -> vector<8x64xf32>
    %223 = vector.extract_strided_slice %186 {offsets = [0, 128], sizes = [8, 64], strides = [1, 1]} : vector<8x256xf32> to vector<8x64xf32>
    %224 = vector.extract_strided_slice %187 {offsets = [0, 128], sizes = [8, 64], strides = [1, 1]} : vector<8x256xf32> to vector<8x64xf32>
    %225 = vector.extract_strided_slice %188 {offsets = [0, 128], sizes = [8, 64], strides = [1, 1]} : vector<8x256xf32> to vector<8x64xf32>
    %cst_85 = arith.constant dense<0.000000e+00> : vector<8x8xf32>
    %226 = tpu.matmul %223, %224, %cst_85 {dimension_numbers = #tpu.dot_dimension_numbers<[1], [1], [0], [0], [0, 0, 1, 0], [], []>} : vector<8x64xf32>, vector<8x64xf32>, vector<8x8xf32> -> vector<8x8xf32>
    %cst_86 = arith.constant 1.250000e-01 : f32
    %227 = vector.broadcast %cst_86 : f32 to vector<8x8xf32>
    %228 = arith.mulf %226, %227 : vector<8x8xf32>
    %229 = arith.addf %228, %0 : vector<8x8xf32>
    %cst_87 = arith.constant dense<0xFF800000> : vector<8xf32>
    %230 = vector.multi_reduction <maximumf>, %229, %cst_87 [1] : vector<8x8xf32> to vector<8xf32>
    %231 = vector.shape_cast %230 : vector<8xf32> to vector<8x1xf32>
    %232 = vector.broadcast %231 : vector<8x1xf32> to vector<8x8xf32>
    %233 = arith.subf %229, %232 : vector<8x8xf32>
    %234 = math.exp %233 : vector<8x8xf32>
    %cst_88 = arith.constant dense<0.000000e+00> : vector<8xf32>
    %235 = vector.multi_reduction <add>, %234, %cst_88 [1] : vector<8x8xf32> to vector<8xf32>
    %236 = vector.shape_cast %235 : vector<8xf32> to vector<8x1xf32>
    %237 = vector.broadcast %236 : vector<8x1xf32> to vector<8x8xf32>
    %238 = arith.divf %234, %237 : vector<8x8xf32>
    %cst_89 = arith.constant dense<0.000000e+00> : vector<8x64xf32>
    %239 = tpu.matmul %238, %225, %cst_89 {dimension_numbers = #tpu.dot_dimension_numbers<[1], [0], [0], [1], [0, 0, 1, 1], [], []>} : vector<8x8xf32>, vector<8x64xf32>, vector<8x64xf32> -> vector<8x64xf32>
    %240 = vector.extract_strided_slice %186 {offsets = [0, 192], sizes = [8, 64], strides = [1, 1]} : vector<8x256xf32> to vector<8x64xf32>
    %241 = vector.extract_strided_slice %187 {offsets = [0, 192], sizes = [8, 64], strides = [1, 1]} : vector<8x256xf32> to vector<8x64xf32>
    %242 = vector.extract_strided_slice %188 {offsets = [0, 192], sizes = [8, 64], strides = [1, 1]} : vector<8x256xf32> to vector<8x64xf32>
    %cst_90 = arith.constant dense<0.000000e+00> : vector<8x8xf32>
    %243 = tpu.matmul %240, %241, %cst_90 {dimension_numbers = #tpu.dot_dimension_numbers<[1], [1], [0], [0], [0, 0, 1, 0], [], []>} : vector<8x64xf32>, vector<8x64xf32>, vector<8x8xf32> -> vector<8x8xf32>
    %cst_91 = arith.constant 1.250000e-01 : f32
    %244 = vector.broadcast %cst_91 : f32 to vector<8x8xf32>
    %245 = arith.mulf %243, %244 : vector<8x8xf32>
    %246 = arith.addf %245, %0 : vector<8x8xf32>
    %cst_92 = arith.constant dense<0xFF800000> : vector<8xf32>
    %247 = vector.multi_reduction <maximumf>, %246, %cst_92 [1] : vector<8x8xf32> to vector<8xf32>
    %248 = vector.shape_cast %247 : vector<8xf32> to vector<8x1xf32>
    %249 = vector.broadcast %248 : vector<8x1xf32> to vector<8x8xf32>
    %250 = arith.subf %246, %249 : vector<8x8xf32>
    %251 = math.exp %250 : vector<8x8xf32>
    %cst_93 = arith.constant dense<0.000000e+00> : vector<8xf32>
    %252 = vector.multi_reduction <add>, %251, %cst_93 [1] : vector<8x8xf32> to vector<8xf32>
    %253 = vector.shape_cast %252 : vector<8xf32> to vector<8x1xf32>
    %254 = vector.broadcast %253 : vector<8x1xf32> to vector<8x8xf32>
    %255 = arith.divf %251, %254 : vector<8x8xf32>
    %cst_94 = arith.constant dense<0.000000e+00> : vector<8x64xf32>
    %256 = tpu.matmul %255, %242, %cst_94 {dimension_numbers = #tpu.dot_dimension_numbers<[1], [0], [0], [1], [0, 0, 1, 1], [], []>} : vector<8x8xf32>, vector<8x64xf32>, vector<8x64xf32> -> vector<8x64xf32>
    %257 = tpu.concatenate %205, %222, %239, %256 in 1 : vector<8x64xf32>, vector<8x64xf32>, vector<8x64xf32>, vector<8x64xf32> -> vector<8x256xf32>
    %258 = arith.truncf %257 : vector<8x256xf32> to vector<8x256xbf16>
    %c2_95 = arith.constant 2 : index
    %c0_96 = arith.constant 0 : index
    %c0_97 = arith.constant 0 : index
    %259 = vector.load %arg4[%c2_95, %c0_96, %c0_97] : memref<5x256x256xbf16, #tpu.memory_space<vmem>>, vector<1x256x256xbf16>
    %260 = vector.shape_cast %259 : vector<1x256x256xbf16> to vector<256x256xbf16>
    %cst_98 = arith.constant dense<0.000000e+00> : vector<8x256xf32>
    %261 = tpu.matmul %258, %260, %cst_98 {dimension_numbers = #tpu.dot_dimension_numbers<[1], [0], [0], [1], [0, 0, 1, 1], [], []>} : vector<8x256xbf16>, vector<256x256xbf16>, vector<8x256xf32> -> vector<8x256xf32>
    %c2_99 = arith.constant 2 : index
    %c0_100 = arith.constant 0 : index
    %c0_101 = arith.constant 0 : index
    %262 = vector.load %arg5[%c2_99, %c0_100, %c0_101] : memref<5x1x256xf32, #tpu.memory_space<vmem>>, vector<1x1x256xf32>
    %263 = vector.shape_cast %262 : vector<1x1x256xf32> to vector<1x256xf32>
    %264 = vector.broadcast %263 : vector<1x256xf32> to vector<8x256xf32>
    %265 = arith.addf %261, %264 : vector<8x256xf32>
    %266 = arith.truncf %265 : vector<8x256xf32> to vector<8x256xbf16>
    %c3 = arith.constant 3 : index
    %c0_102 = arith.constant 0 : index
    %c0_103 = arith.constant 0 : index
    %267 = vector.load %arg2[%c3, %c0_102, %c0_103] : memref<5x256x768xbf16, #tpu.memory_space<vmem>>, vector<1x256x768xbf16>
    %268 = vector.shape_cast %267 : vector<1x256x768xbf16> to vector<256x768xbf16>
    %cst_104 = arith.constant dense<0.000000e+00> : vector<8x768xf32>
    %269 = tpu.matmul %266, %268, %cst_104 {dimension_numbers = #tpu.dot_dimension_numbers<[1], [0], [0], [1], [0, 0, 1, 1], [], []>} : vector<8x256xbf16>, vector<256x768xbf16>, vector<8x768xf32> -> vector<8x768xf32>
    %c3_105 = arith.constant 3 : index
    %c0_106 = arith.constant 0 : index
    %c0_107 = arith.constant 0 : index
    %270 = vector.load %arg3[%c3_105, %c0_106, %c0_107] : memref<5x1x768xf32, #tpu.memory_space<vmem>>, vector<1x1x768xf32>
    %271 = vector.shape_cast %270 : vector<1x1x768xf32> to vector<1x768xf32>
    %272 = vector.broadcast %271 : vector<1x768xf32> to vector<8x768xf32>
    %273 = arith.addf %269, %272 : vector<8x768xf32>
    %274 = vector.extract_strided_slice %273 {offsets = [0, 0], sizes = [8, 256], strides = [1, 1]} : vector<8x768xf32> to vector<8x256xf32>
    %275 = vector.extract_strided_slice %273 {offsets = [0, 256], sizes = [8, 256], strides = [1, 1]} : vector<8x768xf32> to vector<8x256xf32>
    %276 = vector.extract_strided_slice %273 {offsets = [0, 512], sizes = [8, 256], strides = [1, 1]} : vector<8x768xf32> to vector<8x256xf32>
    %277 = vector.extract_strided_slice %274 {offsets = [0, 0], sizes = [8, 64], strides = [1, 1]} : vector<8x256xf32> to vector<8x64xf32>
    %278 = vector.extract_strided_slice %275 {offsets = [0, 0], sizes = [8, 64], strides = [1, 1]} : vector<8x256xf32> to vector<8x64xf32>
    %279 = vector.extract_strided_slice %276 {offsets = [0, 0], sizes = [8, 64], strides = [1, 1]} : vector<8x256xf32> to vector<8x64xf32>
    %cst_108 = arith.constant dense<0.000000e+00> : vector<8x8xf32>
    %280 = tpu.matmul %277, %278, %cst_108 {dimension_numbers = #tpu.dot_dimension_numbers<[1], [1], [0], [0], [0, 0, 1, 0], [], []>} : vector<8x64xf32>, vector<8x64xf32>, vector<8x8xf32> -> vector<8x8xf32>
    %cst_109 = arith.constant 1.250000e-01 : f32
    %281 = vector.broadcast %cst_109 : f32 to vector<8x8xf32>
    %282 = arith.mulf %280, %281 : vector<8x8xf32>
    %283 = arith.addf %282, %0 : vector<8x8xf32>
    %cst_110 = arith.constant dense<0xFF800000> : vector<8xf32>
    %284 = vector.multi_reduction <maximumf>, %283, %cst_110 [1] : vector<8x8xf32> to vector<8xf32>
    %285 = vector.shape_cast %284 : vector<8xf32> to vector<8x1xf32>
    %286 = vector.broadcast %285 : vector<8x1xf32> to vector<8x8xf32>
    %287 = arith.subf %283, %286 : vector<8x8xf32>
    %288 = math.exp %287 : vector<8x8xf32>
    %cst_111 = arith.constant dense<0.000000e+00> : vector<8xf32>
    %289 = vector.multi_reduction <add>, %288, %cst_111 [1] : vector<8x8xf32> to vector<8xf32>
    %290 = vector.shape_cast %289 : vector<8xf32> to vector<8x1xf32>
    %291 = vector.broadcast %290 : vector<8x1xf32> to vector<8x8xf32>
    %292 = arith.divf %288, %291 : vector<8x8xf32>
    %cst_112 = arith.constant dense<0.000000e+00> : vector<8x64xf32>
    %293 = tpu.matmul %292, %279, %cst_112 {dimension_numbers = #tpu.dot_dimension_numbers<[1], [0], [0], [1], [0, 0, 1, 1], [], []>} : vector<8x8xf32>, vector<8x64xf32>, vector<8x64xf32> -> vector<8x64xf32>
    %294 = vector.extract_strided_slice %274 {offsets = [0, 64], sizes = [8, 64], strides = [1, 1]} : vector<8x256xf32> to vector<8x64xf32>
    %295 = vector.extract_strided_slice %275 {offsets = [0, 64], sizes = [8, 64], strides = [1, 1]} : vector<8x256xf32> to vector<8x64xf32>
    %296 = vector.extract_strided_slice %276 {offsets = [0, 64], sizes = [8, 64], strides = [1, 1]} : vector<8x256xf32> to vector<8x64xf32>
    %cst_113 = arith.constant dense<0.000000e+00> : vector<8x8xf32>
    %297 = tpu.matmul %294, %295, %cst_113 {dimension_numbers = #tpu.dot_dimension_numbers<[1], [1], [0], [0], [0, 0, 1, 0], [], []>} : vector<8x64xf32>, vector<8x64xf32>, vector<8x8xf32> -> vector<8x8xf32>
    %cst_114 = arith.constant 1.250000e-01 : f32
    %298 = vector.broadcast %cst_114 : f32 to vector<8x8xf32>
    %299 = arith.mulf %297, %298 : vector<8x8xf32>
    %300 = arith.addf %299, %0 : vector<8x8xf32>
    %cst_115 = arith.constant dense<0xFF800000> : vector<8xf32>
    %301 = vector.multi_reduction <maximumf>, %300, %cst_115 [1] : vector<8x8xf32> to vector<8xf32>
    %302 = vector.shape_cast %301 : vector<8xf32> to vector<8x1xf32>
    %303 = vector.broadcast %302 : vector<8x1xf32> to vector<8x8xf32>
    %304 = arith.subf %300, %303 : vector<8x8xf32>
    %305 = math.exp %304 : vector<8x8xf32>
    %cst_116 = arith.constant dense<0.000000e+00> : vector<8xf32>
    %306 = vector.multi_reduction <add>, %305, %cst_116 [1] : vector<8x8xf32> to vector<8xf32>
    %307 = vector.shape_cast %306 : vector<8xf32> to vector<8x1xf32>
    %308 = vector.broadcast %307 : vector<8x1xf32> to vector<8x8xf32>
    %309 = arith.divf %305, %308 : vector<8x8xf32>
    %cst_117 = arith.constant dense<0.000000e+00> : vector<8x64xf32>
    %310 = tpu.matmul %309, %296, %cst_117 {dimension_numbers = #tpu.dot_dimension_numbers<[1], [0], [0], [1], [0, 0, 1, 1], [], []>} : vector<8x8xf32>, vector<8x64xf32>, vector<8x64xf32> -> vector<8x64xf32>
    %311 = vector.extract_strided_slice %274 {offsets = [0, 128], sizes = [8, 64], strides = [1, 1]} : vector<8x256xf32> to vector<8x64xf32>
    %312 = vector.extract_strided_slice %275 {offsets = [0, 128], sizes = [8, 64], strides = [1, 1]} : vector<8x256xf32> to vector<8x64xf32>
    %313 = vector.extract_strided_slice %276 {offsets = [0, 128], sizes = [8, 64], strides = [1, 1]} : vector<8x256xf32> to vector<8x64xf32>
    %cst_118 = arith.constant dense<0.000000e+00> : vector<8x8xf32>
    %314 = tpu.matmul %311, %312, %cst_118 {dimension_numbers = #tpu.dot_dimension_numbers<[1], [1], [0], [0], [0, 0, 1, 0], [], []>} : vector<8x64xf32>, vector<8x64xf32>, vector<8x8xf32> -> vector<8x8xf32>
    %cst_119 = arith.constant 1.250000e-01 : f32
    %315 = vector.broadcast %cst_119 : f32 to vector<8x8xf32>
    %316 = arith.mulf %314, %315 : vector<8x8xf32>
    %317 = arith.addf %316, %0 : vector<8x8xf32>
    %cst_120 = arith.constant dense<0xFF800000> : vector<8xf32>
    %318 = vector.multi_reduction <maximumf>, %317, %cst_120 [1] : vector<8x8xf32> to vector<8xf32>
    %319 = vector.shape_cast %318 : vector<8xf32> to vector<8x1xf32>
    %320 = vector.broadcast %319 : vector<8x1xf32> to vector<8x8xf32>
    %321 = arith.subf %317, %320 : vector<8x8xf32>
    %322 = math.exp %321 : vector<8x8xf32>
    %cst_121 = arith.constant dense<0.000000e+00> : vector<8xf32>
    %323 = vector.multi_reduction <add>, %322, %cst_121 [1] : vector<8x8xf32> to vector<8xf32>
    %324 = vector.shape_cast %323 : vector<8xf32> to vector<8x1xf32>
    %325 = vector.broadcast %324 : vector<8x1xf32> to vector<8x8xf32>
    %326 = arith.divf %322, %325 : vector<8x8xf32>
    %cst_122 = arith.constant dense<0.000000e+00> : vector<8x64xf32>
    %327 = tpu.matmul %326, %313, %cst_122 {dimension_numbers = #tpu.dot_dimension_numbers<[1], [0], [0], [1], [0, 0, 1, 1], [], []>} : vector<8x8xf32>, vector<8x64xf32>, vector<8x64xf32> -> vector<8x64xf32>
    %328 = vector.extract_strided_slice %274 {offsets = [0, 192], sizes = [8, 64], strides = [1, 1]} : vector<8x256xf32> to vector<8x64xf32>
    %329 = vector.extract_strided_slice %275 {offsets = [0, 192], sizes = [8, 64], strides = [1, 1]} : vector<8x256xf32> to vector<8x64xf32>
    %330 = vector.extract_strided_slice %276 {offsets = [0, 192], sizes = [8, 64], strides = [1, 1]} : vector<8x256xf32> to vector<8x64xf32>
    %cst_123 = arith.constant dense<0.000000e+00> : vector<8x8xf32>
    %331 = tpu.matmul %328, %329, %cst_123 {dimension_numbers = #tpu.dot_dimension_numbers<[1], [1], [0], [0], [0, 0, 1, 0], [], []>} : vector<8x64xf32>, vector<8x64xf32>, vector<8x8xf32> -> vector<8x8xf32>
    %cst_124 = arith.constant 1.250000e-01 : f32
    %332 = vector.broadcast %cst_124 : f32 to vector<8x8xf32>
    %333 = arith.mulf %331, %332 : vector<8x8xf32>
    %334 = arith.addf %333, %0 : vector<8x8xf32>
    %cst_125 = arith.constant dense<0xFF800000> : vector<8xf32>
    %335 = vector.multi_reduction <maximumf>, %334, %cst_125 [1] : vector<8x8xf32> to vector<8xf32>
    %336 = vector.shape_cast %335 : vector<8xf32> to vector<8x1xf32>
    %337 = vector.broadcast %336 : vector<8x1xf32> to vector<8x8xf32>
    %338 = arith.subf %334, %337 : vector<8x8xf32>
    %339 = math.exp %338 : vector<8x8xf32>
    %cst_126 = arith.constant dense<0.000000e+00> : vector<8xf32>
    %340 = vector.multi_reduction <add>, %339, %cst_126 [1] : vector<8x8xf32> to vector<8xf32>
    %341 = vector.shape_cast %340 : vector<8xf32> to vector<8x1xf32>
    %342 = vector.broadcast %341 : vector<8x1xf32> to vector<8x8xf32>
    %343 = arith.divf %339, %342 : vector<8x8xf32>
    %cst_127 = arith.constant dense<0.000000e+00> : vector<8x64xf32>
    %344 = tpu.matmul %343, %330, %cst_127 {dimension_numbers = #tpu.dot_dimension_numbers<[1], [0], [0], [1], [0, 0, 1, 1], [], []>} : vector<8x8xf32>, vector<8x64xf32>, vector<8x64xf32> -> vector<8x64xf32>
    %345 = tpu.concatenate %293, %310, %327, %344 in 1 : vector<8x64xf32>, vector<8x64xf32>, vector<8x64xf32>, vector<8x64xf32> -> vector<8x256xf32>
    %346 = arith.truncf %345 : vector<8x256xf32> to vector<8x256xbf16>
    %c3_128 = arith.constant 3 : index
    %c0_129 = arith.constant 0 : index
    %c0_130 = arith.constant 0 : index
    %347 = vector.load %arg4[%c3_128, %c0_129, %c0_130] : memref<5x256x256xbf16, #tpu.memory_space<vmem>>, vector<1x256x256xbf16>
    %348 = vector.shape_cast %347 : vector<1x256x256xbf16> to vector<256x256xbf16>
    %cst_131 = arith.constant dense<0.000000e+00> : vector<8x256xf32>
    %349 = tpu.matmul %346, %348, %cst_131 {dimension_numbers = #tpu.dot_dimension_numbers<[1], [0], [0], [1], [0, 0, 1, 1], [], []>} : vector<8x256xbf16>, vector<256x256xbf16>, vector<8x256xf32> -> vector<8x256xf32>
    %c3_132 = arith.constant 3 : index
    %c0_133 = arith.constant 0 : index
    %c0_134 = arith.constant 0 : index
    %350 = vector.load %arg5[%c3_132, %c0_133, %c0_134] : memref<5x1x256xf32, #tpu.memory_space<vmem>>, vector<1x1x256xf32>
    %351 = vector.shape_cast %350 : vector<1x1x256xf32> to vector<1x256xf32>
    %352 = vector.broadcast %351 : vector<1x256xf32> to vector<8x256xf32>
    %353 = arith.addf %349, %352 : vector<8x256xf32>
    %354 = arith.truncf %353 : vector<8x256xf32> to vector<8x256xbf16>
    %c4 = arith.constant 4 : index
    %c0_135 = arith.constant 0 : index
    %c0_136 = arith.constant 0 : index
    %355 = vector.load %arg2[%c4, %c0_135, %c0_136] : memref<5x256x768xbf16, #tpu.memory_space<vmem>>, vector<1x256x768xbf16>
    %356 = vector.shape_cast %355 : vector<1x256x768xbf16> to vector<256x768xbf16>
    %cst_137 = arith.constant dense<0.000000e+00> : vector<8x768xf32>
    %357 = tpu.matmul %354, %356, %cst_137 {dimension_numbers = #tpu.dot_dimension_numbers<[1], [0], [0], [1], [0, 0, 1, 1], [], []>} : vector<8x256xbf16>, vector<256x768xbf16>, vector<8x768xf32> -> vector<8x768xf32>
    %c4_138 = arith.constant 4 : index
    %c0_139 = arith.constant 0 : index
    %c0_140 = arith.constant 0 : index
    %358 = vector.load %arg3[%c4_138, %c0_139, %c0_140] : memref<5x1x768xf32, #tpu.memory_space<vmem>>, vector<1x1x768xf32>
    %359 = vector.shape_cast %358 : vector<1x1x768xf32> to vector<1x768xf32>
    %360 = vector.broadcast %359 : vector<1x768xf32> to vector<8x768xf32>
    %361 = arith.addf %357, %360 : vector<8x768xf32>
    %362 = vector.extract_strided_slice %361 {offsets = [0, 0], sizes = [8, 256], strides = [1, 1]} : vector<8x768xf32> to vector<8x256xf32>
    %363 = vector.extract_strided_slice %361 {offsets = [0, 256], sizes = [8, 256], strides = [1, 1]} : vector<8x768xf32> to vector<8x256xf32>
    %364 = vector.extract_strided_slice %361 {offsets = [0, 512], sizes = [8, 256], strides = [1, 1]} : vector<8x768xf32> to vector<8x256xf32>
    %365 = vector.extract_strided_slice %362 {offsets = [0, 0], sizes = [8, 64], strides = [1, 1]} : vector<8x256xf32> to vector<8x64xf32>
    %366 = vector.extract_strided_slice %363 {offsets = [0, 0], sizes = [8, 64], strides = [1, 1]} : vector<8x256xf32> to vector<8x64xf32>
    %367 = vector.extract_strided_slice %364 {offsets = [0, 0], sizes = [8, 64], strides = [1, 1]} : vector<8x256xf32> to vector<8x64xf32>
    %cst_141 = arith.constant dense<0.000000e+00> : vector<8x8xf32>
    %368 = tpu.matmul %365, %366, %cst_141 {dimension_numbers = #tpu.dot_dimension_numbers<[1], [1], [0], [0], [0, 0, 1, 0], [], []>} : vector<8x64xf32>, vector<8x64xf32>, vector<8x8xf32> -> vector<8x8xf32>
    %cst_142 = arith.constant 1.250000e-01 : f32
    %369 = vector.broadcast %cst_142 : f32 to vector<8x8xf32>
    %370 = arith.mulf %368, %369 : vector<8x8xf32>
    %371 = arith.addf %370, %0 : vector<8x8xf32>
    %cst_143 = arith.constant dense<0xFF800000> : vector<8xf32>
    %372 = vector.multi_reduction <maximumf>, %371, %cst_143 [1] : vector<8x8xf32> to vector<8xf32>
    %373 = vector.shape_cast %372 : vector<8xf32> to vector<8x1xf32>
    %374 = vector.broadcast %373 : vector<8x1xf32> to vector<8x8xf32>
    %375 = arith.subf %371, %374 : vector<8x8xf32>
    %376 = math.exp %375 : vector<8x8xf32>
    %cst_144 = arith.constant dense<0.000000e+00> : vector<8xf32>
    %377 = vector.multi_reduction <add>, %376, %cst_144 [1] : vector<8x8xf32> to vector<8xf32>
    %378 = vector.shape_cast %377 : vector<8xf32> to vector<8x1xf32>
    %379 = vector.broadcast %378 : vector<8x1xf32> to vector<8x8xf32>
    %380 = arith.divf %376, %379 : vector<8x8xf32>
    %cst_145 = arith.constant dense<0.000000e+00> : vector<8x64xf32>
    %381 = tpu.matmul %380, %367, %cst_145 {dimension_numbers = #tpu.dot_dimension_numbers<[1], [0], [0], [1], [0, 0, 1, 1], [], []>} : vector<8x8xf32>, vector<8x64xf32>, vector<8x64xf32> -> vector<8x64xf32>
    %382 = vector.extract_strided_slice %362 {offsets = [0, 64], sizes = [8, 64], strides = [1, 1]} : vector<8x256xf32> to vector<8x64xf32>
    %383 = vector.extract_strided_slice %363 {offsets = [0, 64], sizes = [8, 64], strides = [1, 1]} : vector<8x256xf32> to vector<8x64xf32>
    %384 = vector.extract_strided_slice %364 {offsets = [0, 64], sizes = [8, 64], strides = [1, 1]} : vector<8x256xf32> to vector<8x64xf32>
    %cst_146 = arith.constant dense<0.000000e+00> : vector<8x8xf32>
    %385 = tpu.matmul %382, %383, %cst_146 {dimension_numbers = #tpu.dot_dimension_numbers<[1], [1], [0], [0], [0, 0, 1, 0], [], []>} : vector<8x64xf32>, vector<8x64xf32>, vector<8x8xf32> -> vector<8x8xf32>
    %cst_147 = arith.constant 1.250000e-01 : f32
    %386 = vector.broadcast %cst_147 : f32 to vector<8x8xf32>
    %387 = arith.mulf %385, %386 : vector<8x8xf32>
    %388 = arith.addf %387, %0 : vector<8x8xf32>
    %cst_148 = arith.constant dense<0xFF800000> : vector<8xf32>
    %389 = vector.multi_reduction <maximumf>, %388, %cst_148 [1] : vector<8x8xf32> to vector<8xf32>
    %390 = vector.shape_cast %389 : vector<8xf32> to vector<8x1xf32>
    %391 = vector.broadcast %390 : vector<8x1xf32> to vector<8x8xf32>
    %392 = arith.subf %388, %391 : vector<8x8xf32>
    %393 = math.exp %392 : vector<8x8xf32>
    %cst_149 = arith.constant dense<0.000000e+00> : vector<8xf32>
    %394 = vector.multi_reduction <add>, %393, %cst_149 [1] : vector<8x8xf32> to vector<8xf32>
    %395 = vector.shape_cast %394 : vector<8xf32> to vector<8x1xf32>
    %396 = vector.broadcast %395 : vector<8x1xf32> to vector<8x8xf32>
    %397 = arith.divf %393, %396 : vector<8x8xf32>
    %cst_150 = arith.constant dense<0.000000e+00> : vector<8x64xf32>
    %398 = tpu.matmul %397, %384, %cst_150 {dimension_numbers = #tpu.dot_dimension_numbers<[1], [0], [0], [1], [0, 0, 1, 1], [], []>} : vector<8x8xf32>, vector<8x64xf32>, vector<8x64xf32> -> vector<8x64xf32>
    %399 = vector.extract_strided_slice %362 {offsets = [0, 128], sizes = [8, 64], strides = [1, 1]} : vector<8x256xf32> to vector<8x64xf32>
    %400 = vector.extract_strided_slice %363 {offsets = [0, 128], sizes = [8, 64], strides = [1, 1]} : vector<8x256xf32> to vector<8x64xf32>
    %401 = vector.extract_strided_slice %364 {offsets = [0, 128], sizes = [8, 64], strides = [1, 1]} : vector<8x256xf32> to vector<8x64xf32>
    %cst_151 = arith.constant dense<0.000000e+00> : vector<8x8xf32>
    %402 = tpu.matmul %399, %400, %cst_151 {dimension_numbers = #tpu.dot_dimension_numbers<[1], [1], [0], [0], [0, 0, 1, 0], [], []>} : vector<8x64xf32>, vector<8x64xf32>, vector<8x8xf32> -> vector<8x8xf32>
    %cst_152 = arith.constant 1.250000e-01 : f32
    %403 = vector.broadcast %cst_152 : f32 to vector<8x8xf32>
    %404 = arith.mulf %402, %403 : vector<8x8xf32>
    %405 = arith.addf %404, %0 : vector<8x8xf32>
    %cst_153 = arith.constant dense<0xFF800000> : vector<8xf32>
    %406 = vector.multi_reduction <maximumf>, %405, %cst_153 [1] : vector<8x8xf32> to vector<8xf32>
    %407 = vector.shape_cast %406 : vector<8xf32> to vector<8x1xf32>
    %408 = vector.broadcast %407 : vector<8x1xf32> to vector<8x8xf32>
    %409 = arith.subf %405, %408 : vector<8x8xf32>
    %410 = math.exp %409 : vector<8x8xf32>
    %cst_154 = arith.constant dense<0.000000e+00> : vector<8xf32>
    %411 = vector.multi_reduction <add>, %410, %cst_154 [1] : vector<8x8xf32> to vector<8xf32>
    %412 = vector.shape_cast %411 : vector<8xf32> to vector<8x1xf32>
    %413 = vector.broadcast %412 : vector<8x1xf32> to vector<8x8xf32>
    %414 = arith.divf %410, %413 : vector<8x8xf32>
    %cst_155 = arith.constant dense<0.000000e+00> : vector<8x64xf32>
    %415 = tpu.matmul %414, %401, %cst_155 {dimension_numbers = #tpu.dot_dimension_numbers<[1], [0], [0], [1], [0, 0, 1, 1], [], []>} : vector<8x8xf32>, vector<8x64xf32>, vector<8x64xf32> -> vector<8x64xf32>
    %416 = vector.extract_strided_slice %362 {offsets = [0, 192], sizes = [8, 64], strides = [1, 1]} : vector<8x256xf32> to vector<8x64xf32>
    %417 = vector.extract_strided_slice %363 {offsets = [0, 192], sizes = [8, 64], strides = [1, 1]} : vector<8x256xf32> to vector<8x64xf32>
    %418 = vector.extract_strided_slice %364 {offsets = [0, 192], sizes = [8, 64], strides = [1, 1]} : vector<8x256xf32> to vector<8x64xf32>
    %cst_156 = arith.constant dense<0.000000e+00> : vector<8x8xf32>
    %419 = tpu.matmul %416, %417, %cst_156 {dimension_numbers = #tpu.dot_dimension_numbers<[1], [1], [0], [0], [0, 0, 1, 0], [], []>} : vector<8x64xf32>, vector<8x64xf32>, vector<8x8xf32> -> vector<8x8xf32>
    %cst_157 = arith.constant 1.250000e-01 : f32
    %420 = vector.broadcast %cst_157 : f32 to vector<8x8xf32>
    %421 = arith.mulf %419, %420 : vector<8x8xf32>
    %422 = arith.addf %421, %0 : vector<8x8xf32>
    %cst_158 = arith.constant dense<0xFF800000> : vector<8xf32>
    %423 = vector.multi_reduction <maximumf>, %422, %cst_158 [1] : vector<8x8xf32> to vector<8xf32>
    %424 = vector.shape_cast %423 : vector<8xf32> to vector<8x1xf32>
    %425 = vector.broadcast %424 : vector<8x1xf32> to vector<8x8xf32>
    %426 = arith.subf %422, %425 : vector<8x8xf32>
    %427 = math.exp %426 : vector<8x8xf32>
    %cst_159 = arith.constant dense<0.000000e+00> : vector<8xf32>
    %428 = vector.multi_reduction <add>, %427, %cst_159 [1] : vector<8x8xf32> to vector<8xf32>
    %429 = vector.shape_cast %428 : vector<8xf32> to vector<8x1xf32>
    %430 = vector.broadcast %429 : vector<8x1xf32> to vector<8x8xf32>
    %431 = arith.divf %427, %430 : vector<8x8xf32>
    %cst_160 = arith.constant dense<0.000000e+00> : vector<8x64xf32>
    %432 = tpu.matmul %431, %418, %cst_160 {dimension_numbers = #tpu.dot_dimension_numbers<[1], [0], [0], [1], [0, 0, 1, 1], [], []>} : vector<8x8xf32>, vector<8x64xf32>, vector<8x64xf32> -> vector<8x64xf32>
    %433 = tpu.concatenate %381, %398, %415, %432 in 1 : vector<8x64xf32>, vector<8x64xf32>, vector<8x64xf32>, vector<8x64xf32> -> vector<8x256xf32>
    %434 = arith.truncf %433 : vector<8x256xf32> to vector<8x256xbf16>
    %c4_161 = arith.constant 4 : index
    %c0_162 = arith.constant 0 : index
    %c0_163 = arith.constant 0 : index
    %435 = vector.load %arg4[%c4_161, %c0_162, %c0_163] : memref<5x256x256xbf16, #tpu.memory_space<vmem>>, vector<1x256x256xbf16>
    %436 = vector.shape_cast %435 : vector<1x256x256xbf16> to vector<256x256xbf16>
    %cst_164 = arith.constant dense<0.000000e+00> : vector<8x256xf32>
    %437 = tpu.matmul %434, %436, %cst_164 {dimension_numbers = #tpu.dot_dimension_numbers<[1], [0], [0], [1], [0, 0, 1, 1], [], []>} : vector<8x256xbf16>, vector<256x256xbf16>, vector<8x256xf32> -> vector<8x256xf32>
    %c4_165 = arith.constant 4 : index
    %c0_166 = arith.constant 0 : index
    %c0_167 = arith.constant 0 : index
    %438 = vector.load %arg5[%c4_165, %c0_166, %c0_167] : memref<5x1x256xf32, #tpu.memory_space<vmem>>, vector<1x1x256xf32>
    %439 = vector.shape_cast %438 : vector<1x1x256xf32> to vector<1x256xf32>
    %440 = vector.broadcast %439 : vector<1x256xf32> to vector<8x256xf32>
    %441 = arith.addf %437, %440 : vector<8x256xf32>
    %c0_168 = arith.constant 0 : index
    %c0_169 = arith.constant 0 : index
    %442 = vector.load %arg7[%c0_168, %c0_169] : memref<2x8xf32, #tpu.memory_space<vmem>>, vector<2x8xf32>
    %cst_170 = arith.constant dense<0.000000e+00> : vector<2x256xf32>
    %443 = tpu.matmul %442, %441, %cst_170 {dimension_numbers = #tpu.dot_dimension_numbers<[1], [0], [0], [1], [0, 0, 1, 1], [], []>} : vector<2x8xf32>, vector<8x256xf32>, vector<2x256xf32> -> vector<2x256xf32>
    %c0_171 = arith.constant 0 : index
    %c0_172 = arith.constant 0 : index
    %444 = vector.load %arg8[%c0_171, %c0_172] : memref<256x32xf32, #tpu.memory_space<vmem>>, vector<256x32xf32>
    %cst_173 = arith.constant dense<0.000000e+00> : vector<2x32xf32>
    %445 = tpu.matmul %443, %444, %cst_173 {dimension_numbers = #tpu.dot_dimension_numbers<[1], [0], [0], [1], [0, 0, 1, 1], [], []>} : vector<2x256xf32>, vector<256x32xf32>, vector<2x32xf32> -> vector<2x32xf32>
    %c0_174 = arith.constant 0 : index
    %c0_175 = arith.constant 0 : index
    %446 = vector.load %arg9[%c0_174, %c0_175] : memref<1x32xf32, #tpu.memory_space<vmem>>, vector<1x32xf32>
    %447 = vector.broadcast %446 : vector<1x32xf32> to vector<2x32xf32>
    %448 = arith.addf %445, %447 : vector<2x32xf32>
    %c0_176 = arith.constant 0 : index
    %c0_177 = arith.constant 0 : index
    %449 = vector.load %arg10[%c0_176, %c0_177] : memref<2x32xf32, #tpu.memory_space<vmem>>, vector<2x32xf32>
    tpu.vector_store %arg10[%c0_176, %c0_177], %448 {strides = array<i32>} : memref<2x32xf32, #tpu.memory_space<vmem>>, vector<2x32xf32>,
    return
  }
  func.func @transform_0(%arg0: i32) -> (i32, i32) {
    %c0_i32 = arith.constant 0 : i32
    %c0_i32_0 = arith.constant 0 : i32
    %c0_i32_1 = arith.constant 0 : i32
    return %c0_i32, %c0_i32_0 : i32, i32
  }
  func.func @transform_1(%arg0: i32) -> (i32, i32, i32) {
    %c0_i32 = arith.constant 0 : i32
    %c0_i32_0 = arith.constant 0 : i32
    %c0_i32_1 = arith.constant 0 : i32
    %c0_i32_2 = arith.constant 0 : i32
    return %c0_i32, %c0_i32_0, %c0_i32_1 : i32, i32, i32
  }
  func.func @transform_2(%arg0: i32) -> (i32, i32, i32) {
    %c0_i32 = arith.constant 0 : i32
    %c0_i32_0 = arith.constant 0 : i32
    %c0_i32_1 = arith.constant 0 : i32
    %c0_i32_2 = arith.constant 0 : i32
    return %c0_i32, %c0_i32_0, %c0_i32_1 : i32, i32, i32
  }
  func.func @transform_3(%arg0: i32) -> (i32, i32, i32) {
    %c0_i32 = arith.constant 0 : i32
    %c0_i32_0 = arith.constant 0 : i32
    %c0_i32_1 = arith.constant 0 : i32
    %c0_i32_2 = arith.constant 0 : i32
    return %c0_i32, %c0_i32_0, %c0_i32_1 : i32, i32, i32
  }
  func.func @transform_4(%arg0: i32) -> (i32, i32, i32) {
    %c0_i32 = arith.constant 0 : i32
    %c0_i32_0 = arith.constant 0 : i32
    %c0_i32_1 = arith.constant 0 : i32
    %c0_i32_2 = arith.constant 0 : i32
    return %c0_i32, %c0_i32_0, %c0_i32_1 : i32, i32, i32
  }
  func.func @transform_5(%arg0: i32) -> (i32, i32) {
    %c0_i32 = arith.constant 0 : i32
    %c0_i32_0 = arith.constant 0 : i32
    %c0_i32_1 = arith.constant 0 : i32
    return %c0_i32, %c0_i32_0 : i32, i32
  }
  func.func @transform_6(%arg0: i32) -> (i32, i32) {
    %c0_i32 = arith.constant 0 : i32
    %c0_i32_0 = arith.constant 0 : i32
    %c0_i32_1 = arith.constant 0 : i32
    return %c0_i32, %c0_i32_0 : i32, i32
  }
  func.func @transform_7(%arg0: i32) -> (i32, i32) {
    %c0_i32 = arith.constant 0 : i32
    %c0_i32_0 = arith.constant 0 : i32
    %c0_i32_1 = arith.constant 0 : i32
    return %c0_i32, %c0_i32_0 : i32, i32
  }
  func.func @transform_8(%arg0: i32) -> (i32, i32) {
    %c0_i32 = arith.constant 0 : i32
    %c0_i32_0 = arith.constant 0 : i32
    %c0_i32_1 = arith.constant 0 : i32
    return %c0_i32, %c0_i32_0 : i32, i32
  }
  func.func @transform_9(%arg0: i32) -> (i32, i32) {
    %c0_i32 = arith.constant 0 : i32
    %c0_i32_0 = arith.constant 0 : i32
    %c0_i32_1 = arith.constant 0 : i32
    return %c0_i32, %c0_i32_0 : i32, i32
  }
}

</mosaic_0001>

<llo_original>
// kernel: self_attention_layer_forward.1
$region0: #{self_attention_layer_forward.1}
  #allocation0 [shape = 'u32[]', space=smem, size = 0x4, offset = 0x4, fixed_abs, tag = 'smem constant byte address 0x4 - core index']
  #allocation1 [shape = 'u32[144,128]{1,0:T(1,128)}', space=vmem, size = 0x12000, scoped, tag = 'internal scratch']
  %s0 = inlined_call_operand.vmem [shape: f32[8,256], index: 0, kind: input, shape index: {}]
  %s1 = inlined_call_operand.hbm [shape: bf16[5,256,768], index: 1, kind: input, shape index: {}]
  %s2 = inlined_call_operand.hbm [shape: f32[5,1,768], index: 2, kind: input, shape index: {}]
  %s3 = inlined_call_operand.hbm [shape: bf16[5,256,256], index: 3, kind: input, shape index: {}]
  %s4 = inlined_call_operand.hbm [shape: f32[5,1,256], index: 4, kind: input, shape index: {}]
  %s5 = inlined_call_operand.vmem [shape: f32[8,8], index: 5, kind: input, shape index: {}]
  %s6 = inlined_call_operand.vmem [shape: f32[2,8], index: 6, kind: input, shape index: {}]
  %s7 = inlined_call_operand.vmem [shape: f32[256,32], index: 7, kind: input, shape index: {}]
  %s8 = inlined_call_operand.vmem [shape: f32[1,32], index: 8, kind: input, shape index: {}]
  %s9 = inlined_call_operand.hbm [shape: f32[2,32], index: 9, kind: output, shape index: {}]
  %s10 = sld [smem:[#allocation0]]
  $region62: #{self_attention_layer_forward.1} parent=0
    _
  %s12 = ssub.s32 1, %s10
  %s13 = scalar_select 0, %s12, %s10
  $region1: #{self_attention_layer_forward.1} parent=0
    #allocation2 [shape = 'u8[1966080]{0}', space=vmem, size = 0x1e0000, scoped, tag = 'input window, operand 1, single buffered']
    #allocation3 [shape = 's32[1]{0}', space=sflag, size = 0x4, scoped, tag = 'scoped memory for self_attention_layer_forward.1']
    #allocation4 [shape = 's32[1]{0}', space=sflag, size = 0x4, scoped, tag = 'scoped memory for self_attention_layer_forward.1']
    #allocation5 [shape = 'u8[15360]{0}', space=vmem, size = 0x3c00, scoped, tag = 'input window, operand 2, single buffered']
    #allocation6 [shape = 's32[1]{0}', space=sflag, size = 0x4, scoped, tag = 'scoped memory for self_attention_layer_forward.1']
    #allocation7 [shape = 'u8[655360]{0}', space=vmem, size = 0xa0000, scoped, tag = 'input window, operand 3, single buffered']
    #allocation8 [shape = 'u8[5120]{0}', space=vmem, size = 0x1400, scoped, tag = 'input window, operand 4, single buffered']
    #allocation9 [shape = 's32[1]{0}', space=sflag, size = 0x4, scoped, tag = 'scoped memory for self_attention_layer_forward.1']
    #allocation10 [shape = 'u8[1024]{0}', space=vmem, size = 0x400, scoped, tag = 'output window, operand 0, single buffered']
    %14 = vsyncpa [#allocation3], 0
    %15 = vsyncpa [#allocation6], 0
    %16 = vsyncpa [#allocation9], 0
    %17 = vsyncpa [#allocation4], 0
    // Predicated region
    $region2: #{self_attention_layer_forward.1} parent=1 // pred_check
      _
    $region3: #{self_attention_layer_forward.1} parent=1 // pred_check_branch
      %19 = sbr.rel (0) target = $region5
    $region4: #{self_attention_layer_forward.1} parent=1 // pred_region
      _
    $region5: #{self_attention_layer_forward.1} parent=1 // pred_fallthru
      _
    // Predicated region
    $region6: #{self_attention_layer_forward.1} parent=1 // pred_check
      _
    $region7: #{self_attention_layer_forward.1} parent=1 // pred_check_branch
      %21 = sbr.rel (0) target = $region9
    $region8: #{self_attention_layer_forward.1} parent=1 // pred_region
      %s23 = ssub.s32 61440, 61440
      %24 = vsyncadd [#allocation3], %s23
      %s25 = sshll.u32 [#allocation2], 4
      %s26 = int_to_ptr.vmem [resolvable:$true] %s25
      %31 = dma.hbm_to_vmem [thread:$0]  %s1, 61440, %s26, [#allocation3], 384, 384, 24
    $region9: #{self_attention_layer_forward.1} parent=1 // pred_fallthru
      _
    // Predicated region
    $region10: #{self_attention_layer_forward.1} parent=1 // pred_check
      _
    $region11: #{self_attention_layer_forward.1} parent=1 // pred_check_branch
      %33 = sbr.rel (0) target = $region13
    $region12: #{self_attention_layer_forward.1} parent=1 // pred_region
      %s35 = ssub.s32 480, 480
      %36 = vsyncadd [#allocation6], %s35
      %s37 = sshll.u32 [#allocation5], 4
      %s38 = int_to_ptr.vmem [resolvable:$true] %s37
      %43 = dma.hbm_to_vmem [thread:$0]  %s2, 480, %s38, [#allocation6], 96, 96, 6
    $region13: #{self_attention_layer_forward.1} parent=1 // pred_fallthru
      _
    // Predicated region
    $region14: #{self_attention_layer_forward.1} parent=1 // pred_check
      _
    $region15: #{self_attention_layer_forward.1} parent=1 // pred_check_branch
      %45 = sbr.rel (0) target = $region17
    $region16: #{self_attention_layer_forward.1} parent=1 // pred_region
      %s47 = ssub.s32 20480, 20480
      %48 = vsyncadd [#allocation6], %s47
      %s49 = sshll.u32 [#allocation7], 4
      %s50 = int_to_ptr.vmem [resolvable:$true] %s49
      %55 = dma.hbm_to_vmem [thread:$0]  %s3, 20480, %s50, [#allocation6], 128, 128, 8
    $region17: #{self_attention_layer_forward.1} parent=1 // pred_fallthru
      _
    // Predicated region
    $region18: #{self_attention_layer_forward.1} parent=1 // pred_check
      _
    $region19: #{self_attention_layer_forward.1} parent=1 // pred_check_branch
      %57 = sbr.rel (0) target = $region21
    $region20: #{self_attention_layer_forward.1} parent=1 // pred_region
      %s59 = ssub.s32 160, 160
      %60 = vsyncadd [#allocation9], %s59
      %s61 = sshll.u32 [#allocation8], 4
      %s62 = int_to_ptr.vmem [resolvable:$true] %s61
      %67 = dma.hbm_to_vmem [thread:$0]  %s4, 160, %s62, [#allocation9], 32, 32, 2
    $region21: #{self_attention_layer_forward.1} parent=1 // pred_fallthru
      _
    // Predicated region
    $region22: #{self_attention_layer_forward.1} parent=1 // pred_check
      _
    $region23: #{self_attention_layer_forward.1} parent=1 // pred_check_branch
      %69 = sbr.rel (0) target = $region25
    $region24: #{self_attention_layer_forward.1} parent=1 // pred_region
      _
    $region25: #{self_attention_layer_forward.1} parent=1 // pred_fallthru
      _
    // Predicated region
    $region26: #{self_attention_layer_forward.1} parent=1 // pred_check
      _
    $region27: #{self_attention_layer_forward.1} parent=1 // pred_check_branch
      %71 = sbr.rel (0) target = $region29
    $region28: #{self_attention_layer_forward.1} parent=1 // pred_region
      _
    $region29: #{self_attention_layer_forward.1} parent=1 // pred_fallthru
      _
    // Predicated region
    $region30: #{self_attention_layer_forward.1} parent=1 // pred_check
      _
    $region31: #{self_attention_layer_forward.1} parent=1 // pred_check_branch
      %73 = sbr.rel (0) target = $region33
    $region32: #{self_attention_layer_forward.1} parent=1 // pred_region
      _
    $region33: #{self_attention_layer_forward.1} parent=1 // pred_fallthru
      _
    // Predicated region
    $region34: #{self_attention_layer_forward.1} parent=1 // pred_check
      _
    $region35: #{self_attention_layer_forward.1} parent=1 // pred_check_branch
      %75 = sbr.rel (0) target = $region37
    $region36: #{self_attention_layer_forward.1} parent=1 // pred_region
      _
    $region37: #{self_attention_layer_forward.1} parent=1 // pred_fallthru
      _
    // Predicated region
    $region38: #{self_attention_layer_forward.1} parent=1 // pred_check
      _
    $region39: #{self_attention_layer_forward.1} parent=1 // pred_check_branch
      %77 = sbr.rel (0) target = $region41
    $region40: #{self_attention_layer_forward.1} parent=1 // pred_region
      %78 = dma.done [#allocation3], 61440
    $region41: #{self_attention_layer_forward.1} parent=1 // pred_fallthru
      _
    // Predicated region
    $region42: #{self_attention_layer_forward.1} parent=1 // pred_check
      _
    $region43: #{self_attention_layer_forward.1} parent=1 // pred_check_branch
      %80 = sbr.rel (0) target = $region45
    $region44: #{self_attention_layer_forward.1} parent=1 // pred_region
      %81 = dma.done [#allocation6], 480
    $region45: #{self_attention_layer_forward.1} parent=1 // pred_fallthru
      _
    // Predicated region
    $region46: #{self_attention_layer_forward.1} parent=1 // pred_check
      _
    $region47: #{self_attention_layer_forward.1} parent=1 // pred_check_branch
      %83 = sbr.rel (0) target = $region49
    $region48: #{self_attention_layer_forward.1} parent=1 // pred_region
      %84 = dma.done [#allocation6], 20480
    $region49: #{self_attention_layer_forward.1} parent=1 // pred_fallthru
      _
    // Predicated region
    $region50: #{self_attention_layer_forward.1} parent=1 // pred_check
      _
    $region51: #{self_attention_layer_forward.1} parent=1 // pred_check_branch
      %86 = sbr.rel (0) target = $region53
    $region52: #{self_attention_layer_forward.1} parent=1 // pred_region
      %87 = dma.done [#allocation9], 160
    $region53: #{self_attention_layer_forward.1} parent=1 // pred_fallthru
      _
    %v88 = vld [vmem:[%s5] sm:$0xff]
    %v89 = vld [vmem:[%s0] sm:$0xff]
    %v90 = vld [vmem:[%s0 + $0x8] sm:$0xff]
    %v91 = vpack.c.bf16 %v89, %v89
    %v92 = vpack.c.bf16 %v90, %v90
    %v93 = vld [vmem:[#allocation2] sm:$0xff]
    %v94 = vld [vmem:[#allocation2 + $0x8] sm:$0xff]
    %v95 = vld [vmem:[#allocation2 + $0x10] sm:$0xff]
    %v96 = vld [vmem:[#allocation2 + $0x18] sm:$0xff]
    %v97 = vld [vmem:[#allocation2 + $0x20] sm:$0xff]
    %v98 = vld [vmem:[#allocation2 + $0x28] sm:$0xff]
    %v99 = vld [vmem:[#allocation2 + $0x30] sm:$0xff]
    %v100 = vld [vmem:[#allocation2 + $0x38] sm:$0xff]
    %v101 = vld [vmem:[#allocation2 + $0x40] sm:$0xff]
    %v102 = vld [vmem:[#allocation2 + $0x48] sm:$0xff]
    %v103 = vld [vmem:[#allocation2 + $0x50] sm:$0xff]
    %v104 = vld [vmem:[#allocation2 + $0x58] sm:$0xff]
    %v105 = vld [vmem:[#allocation2 + $0x60] sm:$0xff]
    %v106 = vld [vmem:[#allocation2 + $0x68] sm:$0xff]
    %v107 = vld [vmem:[#allocation2 + $0x70] sm:$0xff]
    %v108 = vld [vmem:[#allocation2 + $0x78] sm:$0xff]
    %v109 = vld [vmem:[#allocation2 + $0x80] sm:$0xff]
    %v110 = vld [vmem:[#allocation2 + $0x88] sm:$0xff]
    %v111 = vld [vmem:[#allocation2 + $0x90] sm:$0xff]
    %v112 = vld [vmem:[#allocation2 + $0x98] sm:$0xff]
    %v113 = vld [vmem:[#allocation2 + $0xa0] sm:$0xff]
    %v114 = vld [vmem:[#allocation2 + $0xa8] sm:$0xff]
    %v115 = vld [vmem:[#allocation2 + $0xb0] sm:$0xff]
    %v116 = vld [vmem:[#allocation2 + $0xb8] sm:$0xff]
    %v117 = vld [vmem:[#allocation2 + $0xc0] sm:$0xff]
    %v118 = vld [vmem:[#allocation2 + $0xc8] sm:$0xff]
    %v119 = vld [vmem:[#allocation2 + $0xd0] sm:$0xff]
    %v120 = vld [vmem:[#allocation2 + $0xd8] sm:$0xff]
    %v121 = vld [vmem:[#allocation2 + $0xe0] sm:$0xff]
    %v122 = vld [vmem:[#allocation2 + $0xe8] sm:$0xff]
    %v123 = vld [vmem:[#allocation2 + $0xf0] sm:$0xff]
    %v124 = vld [vmem:[#allocation2 + $0xf8] sm:$0xff]
    %v125 = vld [vmem:[#allocation2 + $0x100] sm:$0xff]
    %v126 = vld [vmem:[#allocation2 + $0x108] sm:$0xff]
    %v127 = vld [vmem:[#allocation2 + $0x110] sm:$0xff]
    %v128 = vld [vmem:[#allocation2 + $0x118] sm:$0xff]
    %v129 = vld [vmem:[#allocation2 + $0x120] sm:$0xff]
    %v130 = vld [vmem:[#allocation2 + $0x128] sm:$0xff]
    %v131 = vld [vmem:[#allocation2 + $0x130] sm:$0xff]
    %v132 = vld [vmem:[#allocation2 + $0x138] sm:$0xff]
    %v133 = vld [vmem:[#allocation2 + $0x140] sm:$0xff]
    %v134 = vld [vmem:[#allocation2 + $0x148] sm:$0xff]
    %v135 = vld [vmem:[#allocation2 + $0x150] sm:$0xff]
    %v136 = vld [vmem:[#allocation2 + $0x158] sm:$0xff]
    %v137 = vld [vmem:[#allocation2 + $0x160] sm:$0xff]
    %v138 = vld [vmem:[#allocation2 + $0x168] sm:$0xff]
    %v139 = vld [vmem:[#allocation2 + $0x170] sm:$0xff]
    %v140 = vld [vmem:[#allocation2 + $0x178] sm:$0xff]
    %v141 = vld [vmem:[#allocation2 + $0x180] sm:$0xff]
    %v142 = vld [vmem:[#allocation2 + $0x188] sm:$0xff]
    %v143 = vld [vmem:[#allocation2 + $0x190] sm:$0xff]
    %v144 = vld [vmem:[#allocation2 + $0x198] sm:$0xff]
    %v145 = vld [vmem:[#allocation2 + $0x1a0] sm:$0xff]
    %v146 = vld [vmem:[#allocation2 + $0x1a8] sm:$0xff]
    %v147 = vld [vmem:[#allocation2 + $0x1b0] sm:$0xff]
    %v148 = vld [vmem:[#allocation2 + $0x1b8] sm:$0xff]
    %v149 = vld [vmem:[#allocation2 + $0x1c0] sm:$0xff]
    %v150 = vld [vmem:[#allocation2 + $0x1c8] sm:$0xff]
    %v151 = vld [vmem:[#allocation2 + $0x1d0] sm:$0xff]
    %v152 = vld [vmem:[#allocation2 + $0x1d8] sm:$0xff]
    %v153 = vld [vmem:[#allocation2 + $0x1e0] sm:$0xff]
    %v154 = vld [vmem:[#allocation2 + $0x1e8] sm:$0xff]
    %v155 = vld [vmem:[#allocation2 + $0x1f0] sm:$0xff]
    %v156 = vld [vmem:[#allocation2 + $0x1f8] sm:$0xff]
    %v157 = vld [vmem:[#allocation2 + $0x200] sm:$0xff]
    %v158 = vld [vmem:[#allocation2 + $0x208] sm:$0xff]
    %v159 = vld [vmem:[#allocation2 + $0x210] sm:$0xff]
    %v160 = vld [vmem:[#allocation2 + $0x218] sm:$0xff]
    %v161 = vld [vmem:[#allocation2 + $0x220] sm:$0xff]
    %v162 = vld [vmem:[#allocation2 + $0x228] sm:$0xff]
    %v163 = vld [vmem:[#allocation2 + $0x230] sm:$0xff]
    %v164 = vld [vmem:[#allocation2 + $0x238] sm:$0xff]
    %v165 = vld [vmem:[#allocation2 + $0x240] sm:$0xff]
    %v166 = vld [vmem:[#allocation2 + $0x248] sm:$0xff]
    %v167 = vld [vmem:[#allocation2 + $0x250] sm:$0xff]
    %v168 = vld [vmem:[#allocation2 + $0x258] sm:$0xff]
    %v169 = vld [vmem:[#allocation2 + $0x260] sm:$0xff]
    %v170 = vld [vmem:[#allocation2 + $0x268] sm:$0xff]
    %v171 = vld [vmem:[#allocation2 + $0x270] sm:$0xff]
    %v172 = vld [vmem:[#allocation2 + $0x278] sm:$0xff]
    %v173 = vld [vmem:[#allocation2 + $0x280] sm:$0xff]
    %v174 = vld [vmem:[#allocation2 + $0x288] sm:$0xff]
    %v175 = vld [vmem:[#allocation2 + $0x290] sm:$0xff]
    %v176 = vld [vmem:[#allocation2 + $0x298] sm:$0xff]
    %v177 = vld [vmem:[#allocation2 + $0x2a0] sm:$0xff]
    %v178 = vld [vmem:[#allocation2 + $0x2a8] sm:$0xff]
    %v179 = vld [vmem:[#allocation2 + $0x2b0] sm:$0xff]
    %v180 = vld [vmem:[#allocation2 + $0x2b8] sm:$0xff]
    %v181 = vld [vmem:[#allocation2 + $0x2c0] sm:$0xff]
    %v182 = vld [vmem:[#allocation2 + $0x2c8] sm:$0xff]
    %v183 = vld [vmem:[#allocation2 + $0x2d0] sm:$0xff]
    %v184 = vld [vmem:[#allocation2 + $0x2d8] sm:$0xff]
    %v185 = vld [vmem:[#allocation2 + $0x2e0] sm:$0xff]
    %v186 = vld [vmem:[#allocation2 + $0x2e8] sm:$0xff]
    %v187 = vld [vmem:[#allocation2 + $0x2f0] sm:$0xff]
    %v188 = vld [vmem:[#allocation2 + $0x2f8] sm:$0xff]
    %v189 = vld [vmem:[#allocation5] sm:$0x3f]
    %v191 = vlaneseq
    %v192 = vshrl.u32 %v191, 7
    %v193 = vsub.s32 0, %v192
    %v194 = vrot.slane %v189, %v193
    %v195 = vlaneseq
    %v196 = vshrl.u32 %v195, 7
    %v197 = vsub.s32 1, %v196
    %v198 = vrot.slane %v189, %v197
    %v199 = vlaneseq
    %v200 = vshrl.u32 %v199, 7
    %v201 = vsub.s32 2, %v200
    %v202 = vrot.slane %v189, %v201
    %v203 = vlaneseq
    %v204 = vshrl.u32 %v203, 7
    %v205 = vsub.s32 3, %v204
    %v206 = vrot.slane %v189, %v205
    %v207 = vlaneseq
    %v208 = vshrl.u32 %v207, 7
    %v209 = vsub.s32 4, %v208
    %v210 = vrot.slane %v189, %v209
    %v211 = vlaneseq
    %v212 = vshrl.u32 %v211, 7
    %v213 = vsub.s32 5, %v212
    %v214 = vrot.slane %v189, %v213
    %v317 = vunpack.c.l.b16 %v93
    %v318 = vunpack.c.h.b16 %v93
    %v319 = vunpack.c.l.b16 %v94
    %v320 = vunpack.c.h.b16 %v94
    %v321 = vunpack.c.l.b16 %v95
    %v322 = vunpack.c.h.b16 %v95
    %v323 = vunpack.c.l.b16 %v96
    %v324 = vunpack.c.h.b16 %v96
    %v325 = vunpack.c.l.b16 %v97
    %v326 = vunpack.c.h.b16 %v97
    %v327 = vunpack.c.l.b16 %v98
    %v328 = vunpack.c.h.b16 %v98
    %v329 = vunpack.c.l.b16 %v99
    %v330 = vunpack.c.h.b16 %v99
    %v331 = vunpack.c.l.b16 %v100
    %v332 = vunpack.c.h.b16 %v100
    %v333 = vunpack.c.l.b16 %v101
    %v334 = vunpack.c.h.b16 %v101
    %v335 = vunpack.c.l.b16 %v102
    %v336 = vunpack.c.h.b16 %v102
    %v337 = vunpack.c.l.b16 %v103
    %v338 = vunpack.c.h.b16 %v103
    %v339 = vunpack.c.l.b16 %v104
    %v340 = vunpack.c.h.b16 %v104
    %v341 = vunpack.c.l.b16 %v105
    %v342 = vunpack.c.h.b16 %v105
    %v343 = vunpack.c.l.b16 %v106
    %v344 = vunpack.c.h.b16 %v106
    %v345 = vunpack.c.l.b16 %v107
    %v346 = vunpack.c.h.b16 %v107
    %v347 = vunpack.c.l.b16 %v108
    %v348 = vunpack.c.h.b16 %v108
    %v349 = vunpack.c.l.b16 %v109
    %v350 = vunpack.c.h.b16 %v109
    %v351 = vunpack.c.l.b16 %v110
    %v352 = vunpack.c.h.b16 %v110
    %v353 = vunpack.c.l.b16 %v111
    %v354 = vunpack.c.h.b16 %v111
    %v355 = vunpack.c.l.b16 %v112
    %v356 = vunpack.c.h.b16 %v112
    %v357 = vunpack.c.l.b16 %v113
    %v358 = vunpack.c.h.b16 %v113
    %v359 = vunpack.c.l.b16 %v114
    %v360 = vunpack.c.h.b16 %v114
    %v361 = vunpack.c.l.b16 %v115
    %v362 = vunpack.c.h.b16 %v115
    %v363 = vunpack.c.l.b16 %v116
    %v364 = vunpack.c.h.b16 %v116
    %v365 = vunpack.c.l.b16 %v117
    %v366 = vunpack.c.h.b16 %v117
    %v367 = vunpack.c.l.b16 %v118
    %v368 = vunpack.c.h.b16 %v118
    %v369 = vunpack.c.l.b16 %v119
    %v370 = vunpack.c.h.b16 %v119
    %v371 = vunpack.c.l.b16 %v120
    %v372 = vunpack.c.h.b16 %v120
    %v373 = vunpack.c.l.b16 %v121
    %v374 = vunpack.c.h.b16 %v121
    %v375 = vunpack.c.l.b16 %v122
    %v376 = vunpack.c.h.b16 %v122
    %v377 = vunpack.c.l.b16 %v123
    %v378 = vunpack.c.h.b16 %v123
    %v379 = vunpack.c.l.b16 %v124
    %v380 = vunpack.c.h.b16 %v124
    %v381 = vunpack.c.l.b16 %v125
    %v382 = vunpack.c.h.b16 %v125
    %v383 = vunpack.c.l.b16 %v126
    %v384 = vunpack.c.h.b16 %v126
    %v385 = vunpack.c.l.b16 %v127
    %v386 = vunpack.c.h.b16 %v127
    %v387 = vunpack.c.l.b16 %v128
    %v388 = vunpack.c.h.b16 %v128
    %v389 = vunpack.c.l.b16 %v129
    %v390 = vunpack.c.h.b16 %v129
    %v391 = vunpack.c.l.b16 %v130
    %v392 = vunpack.c.h.b16 %v130
    %v393 = vunpack.c.l.b16 %v131
    %v394 = vunpack.c.h.b16 %v131
    %v395 = vunpack.c.l.b16 %v132
    %v396 = vunpack.c.h.b16 %v132
    %v397 = vunpack.c.l.b16 %v133
    %v398 = vunpack.c.h.b16 %v133
    %v399 = vunpack.c.l.b16 %v134
    %v400 = vunpack.c.h.b16 %v134
    %v401 = vunpack.c.l.b16 %v135
    %v402 = vunpack.c.h.b16 %v135
    %v403 = vunpack.c.l.b16 %v136
    %v404 = vunpack.c.h.b16 %v136
    %v405 = vunpack.c.l.b16 %v137
    %v406 = vunpack.c.h.b16 %v137
    %v407 = vunpack.c.l.b16 %v138
    %v408 = vunpack.c.h.b16 %v138
    %v409 = vunpack.c.l.b16 %v139
    %v410 = vunpack.c.h.b16 %v139
    %v411 = vunpack.c.l.b16 %v140
    %v412 = vunpack.c.h.b16 %v140
    %v413 = vunpack.c.l.b16 %v141
    %v414 = vunpack.c.h.b16 %v141
    %v415 = vunpack.c.l.b16 %v142
    %v416 = vunpack.c.h.b16 %v142
    %v417 = vunpack.c.l.b16 %v143
    %v418 = vunpack.c.h.b16 %v143
    %v419 = vunpack.c.l.b16 %v144
    %v420 = vunpack.c.h.b16 %v144
    %v421 = vunpack.c.l.b16 %v145
    %v422 = vunpack.c.h.b16 %v145
    %v423 = vunpack.c.l.b16 %v146
    %v424 = vunpack.c.h.b16 %v146
    %v425 = vunpack.c.l.b16 %v147
    %v426 = vunpack.c.h.b16 %v147
    %v427 = vunpack.c.l.b16 %v148
    %v428 = vunpack.c.h.b16 %v148
    %v429 = vunpack.c.l.b16 %v149
    %v430 = vunpack.c.h.b16 %v149
    %v431 = vunpack.c.l.b16 %v150
    %v432 = vunpack.c.h.b16 %v150
    %v433 = vunpack.c.l.b16 %v151
    %v434 = vunpack.c.h.b16 %v151
    %v435 = vunpack.c.l.b16 %v152
    %v436 = vunpack.c.h.b16 %v152
    %v437 = vunpack.c.l.b16 %v153
    %v438 = vunpack.c.h.b16 %v153
    %v439 = vunpack.c.l.b16 %v154
    %v440 = vunpack.c.h.b16 %v154
    %v441 = vunpack.c.l.b16 %v155
    %v442 = vunpack.c.h.b16 %v155
    %v443 = vunpack.c.l.b16 %v156
    %v444 = vunpack.c.h.b16 %v156
    %v445 = vunpack.c.l.b16 %v157
    %v446 = vunpack.c.h.b16 %v157
    %v447 = vunpack.c.l.b16 %v158
    %v448 = vunpack.c.h.b16 %v158
    %v449 = vunpack.c.l.b16 %v159
    %v450 = vunpack.c.h.b16 %v159
    %v451 = vunpack.c.l.b16 %v160
    %v452 = vunpack.c.h.b16 %v160
    %v453 = vunpack.c.l.b16 %v161
    %v454 = vunpack.c.h.b16 %v161
    %v455 = vunpack.c.l.b16 %v162
    %v456 = vunpack.c.h.b16 %v162
    %v457 = vunpack.c.l.b16 %v163
    %v458 = vunpack.c.h.b16 %v163
    %v459 = vunpack.c.l.b16 %v164
    %v460 = vunpack.c.h.b16 %v164
    %v461 = vunpack.c.l.b16 %v165
    %v462 = vunpack.c.h.b16 %v165
    %v463 = vunpack.c.l.b16 %v166
    %v464 = vunpack.c.h.b16 %v166
    %v465 = vunpack.c.l.b16 %v167
    %v466 = vunpack.c.h.b16 %v167
    %v467 = vunpack.c.l.b16 %v168
    %v468 = vunpack.c.h.b16 %v168
    %v469 = vunpack.c.l.b16 %v169
    %v470 = vunpack.c.h.b16 %v169
    %v471 = vunpack.c.l.b16 %v170
    %v472 = vunpack.c.h.b16 %v170
    %v473 = vunpack.c.l.b16 %v171
    %v474 = vunpack.c.h.b16 %v171
    %v475 = vunpack.c.l.b16 %v172
    %v476 = vunpack.c.h.b16 %v172
    %v477 = vunpack.c.l.b16 %v173
    %v478 = vunpack.c.h.b16 %v173
    %v479 = vunpack.c.l.b16 %v174
    %v480 = vunpack.c.h.b16 %v174
    %v481 = vunpack.c.l.b16 %v175
    %v482 = vunpack.c.h.b16 %v175
    %v483 = vunpack.c.l.b16 %v176
    %v484 = vunpack.c.h.b16 %v176
    %v485 = vunpack.c.l.b16 %v177
    %v486 = vunpack.c.h.b16 %v177
    %v487 = vunpack.c.l.b16 %v178
    %v488 = vunpack.c.h.b16 %v178
    %v489 = vunpack.c.l.b16 %v179
    %v490 = vunpack.c.h.b16 %v179
    %v491 = vunpack.c.l.b16 %v180
    %v492 = vunpack.c.h.b16 %v180
    %v493 = vunpack.c.l.b16 %v181
    %v494 = vunpack.c.h.b16 %v181
    %v495 = vunpack.c.l.b16 %v182
    %v496 = vunpack.c.h.b16 %v182
    %v497 = vunpack.c.l.b16 %v183
    %v498 = vunpack.c.h.b16 %v183
    %v499 = vunpack.c.l.b16 %v184
    %v500 = vunpack.c.h.b16 %v184
    %v501 = vunpack.c.l.b16 %v185
    %v502 = vunpack.c.h.b16 %v185
    %v503 = vunpack.c.l.b16 %v186
    %v504 = vunpack.c.h.b16 %v186
    %v505 = vunpack.c.l.b16 %v187
    %v506 = vunpack.c.h.b16 %v187
    %v507 = vunpack.c.l.b16 %v188
    %v508 = vunpack.c.h.b16 %v188
    %v509 = vpack.c.b16 %v323, %v317
    %v510 = vpack.c.b16 %v324, %v318
    %v511 = vpack.c.b16 %v325, %v319
    %v512 = vpack.c.b16 %v326, %v320
    %v513 = vpack.c.b16 %v327, %v321
    %v514 = vpack.c.b16 %v328, %v322
    %v515 = vpack.c.b16 %v335, %v329
    %v516 = vpack.c.b16 %v336, %v330
    %v517 = vpack.c.b16 %v337, %v331
    %v518 = vpack.c.b16 %v338, %v332
    %v519 = vpack.c.b16 %v339, %v333
    %v520 = vpack.c.b16 %v340, %v334
    %v521 = vpack.c.b16 %v347, %v341
    %v522 = vpack.c.b16 %v348, %v342
    %v523 = vpack.c.b16 %v349, %v343
    %v524 = vpack.c.b16 %v350, %v344
    %v525 = vpack.c.b16 %v351, %v345
    %v526 = vpack.c.b16 %v352, %v346
    %v527 = vpack.c.b16 %v359, %v353
    %v528 = vpack.c.b16 %v360, %v354
    %v529 = vpack.c.b16 %v361, %v355
    %v530 = vpack.c.b16 %v362, %v356
    %v531 = vpack.c.b16 %v363, %v357
    %v532 = vpack.c.b16 %v364, %v358
    %v533 = vpack.c.b16 %v371, %v365
    %v534 = vpack.c.b16 %v372, %v366
    %v535 = vpack.c.b16 %v373, %v367
    %v536 = vpack.c.b16 %v374, %v368
    %v537 = vpack.c.b16 %v375, %v369
    %v538 = vpack.c.b16 %v376, %v370
    %v539 = vpack.c.b16 %v383, %v377
    %v540 = vpack.c.b16 %v384, %v378
    %v541 = vpack.c.b16 %v385, %v379
    %v542 = vpack.c.b16 %v386, %v380
    %v543 = vpack.c.b16 %v387, %v381
    %v544 = vpack.c.b16 %v388, %v382
    %v545 = vpack.c.b16 %v395, %v389
    %v546 = vpack.c.b16 %v396, %v390
    %v547 = vpack.c.b16 %v397, %v391
    %v548 = vpack.c.b16 %v398, %v392
    %v549 = vpack.c.b16 %v399, %v393
    %v550 = vpack.c.b16 %v400, %v394
    %v551 = vpack.c.b16 %v407, %v401
    %v552 = vpack.c.b16 %v408, %v402
    %v553 = vpack.c.b16 %v409, %v403
    %v554 = vpack.c.b16 %v410, %v404
    %v555 = vpack.c.b16 %v411, %v405
    %v556 = vpack.c.b16 %v412, %v406
    %v557 = vpack.c.b16 %v419, %v413
    %v558 = vpack.c.b16 %v420, %v414
    %v559 = vpack.c.b16 %v421, %v415
    %v560 = vpack.c.b16 %v422, %v416
    %v561 = vpack.c.b16 %v423, %v417
    %v562 = vpack.c.b16 %v424, %v418
    %v563 = vpack.c.b16 %v431, %v425
    %v564 = vpack.c.b16 %v432, %v426
    %v565 = vpack.c.b16 %v433, %v427
    %v566 = vpack.c.b16 %v434, %v428
    %v567 = vpack.c.b16 %v435, %v429
    %v568 = vpack.c.b16 %v436, %v430
    %v569 = vpack.c.b16 %v443, %v437
    %v570 = vpack.c.b16 %v444, %v438
    %v571 = vpack.c.b16 %v445, %v439
    %v572 = vpack.c.b16 %v446, %v440
    %v573 = vpack.c.b16 %v447, %v441
    %v574 = vpack.c.b16 %v448, %v442
    %v575 = vpack.c.b16 %v455, %v449
    %v576 = vpack.c.b16 %v456, %v450
    %v577 = vpack.c.b16 %v457, %v451
    %v578 = vpack.c.b16 %v458, %v452
    %v579 = vpack.c.b16 %v459, %v453
    %v580 = vpack.c.b16 %v460, %v454
    %v581 = vpack.c.b16 %v467, %v461
    %v582 = vpack.c.b16 %v468, %v462
    %v583 = vpack.c.b16 %v469, %v463
    %v584 = vpack.c.b16 %v470, %v464
    %v585 = vpack.c.b16 %v471, %v465
    %v586 = vpack.c.b16 %v472, %v466
    %v587 = vpack.c.b16 %v479, %v473
    %v588 = vpack.c.b16 %v480, %v474
    %v589 = vpack.c.b16 %v481, %v475
    %v590 = vpack.c.b16 %v482, %v476
    %v591 = vpack.c.b16 %v483, %v477
    %v592 = vpack.c.b16 %v484, %v478
    %v593 = vpack.c.b16 %v491, %v485
    %v594 = vpack.c.b16 %v492, %v486
    %v595 = vpack.c.b16 %v493, %v487
    %v596 = vpack.c.b16 %v494, %v488
    %v597 = vpack.c.b16 %v495, %v489
    %v598 = vpack.c.b16 %v496, %v490
    %v599 = vpack.c.b16 %v503, %v497
    %v600 = vpack.c.b16 %v504, %v498
    %v601 = vpack.c.b16 %v505, %v499
    %v602 = vpack.c.b16 %v506, %v500
    %v603 = vpack.c.b16 %v507, %v501
    %v604 = vpack.c.b16 %v508, %v502
    %701 = vmatprep.subr.bf16.mxu0 %v510
    %702 = vmatpush1.bf16.msra.mxu0 %v509
    %703 = vmatprep.subr.bf16.mxu0 %v516
    %704 = vmatpush1.bf16.msra.mxu0 %v515
    %705 = vmatprep.subr.bf16.mxu0 %v522
    %706 = vmatpush1.bf16.msra.mxu0 %v521
    %707 = vmatprep.subr.bf16.mxu0 %v528
    %708 = vmatpush1.bf16.msra.mxu0 %v527
    %709 = vmatprep.subr.bf16.mxu0 %v534
    %710 = vmatpush1.bf16.msra.mxu0 %v533
    %711 = vmatprep.subr.bf16.mxu0 %v540
    %712 = vmatpush1.bf16.msra.mxu0 %v539
    %713 = vmatprep.subr.bf16.mxu0 %v546
    %714 = vmatpush1.bf16.msra.mxu0 %v545
    %715 = vmatprep.subr.bf16.mxu0 %v552
    %716 = vmatpush1.bf16.msra.mxu0 %v551
    %717 = vmatprep.subr.bf16.mxu0 %v558
    %718 = vmatpush1.bf16.msra.mxu0 %v557
    %719 = vmatprep.subr.bf16.mxu0 %v564
    %720 = vmatpush1.bf16.msra.mxu0 %v563
    %721 = vmatprep.subr.bf16.mxu0 %v570
    %722 = vmatpush1.bf16.msra.mxu0 %v569
    %723 = vmatprep.subr.bf16.mxu0 %v576
    %724 = vmatpush1.bf16.msra.mxu0 %v575
    %725 = vmatprep.subr.bf16.mxu0 %v582
    %726 = vmatpush1.bf16.msra.mxu0 %v581
    %727 = vmatprep.subr.bf16.mxu0 %v588
    %728 = vmatpush1.bf16.msra.mxu0 %v587
    %729 = vmatprep.subr.bf16.mxu0 %v594
    %730 = vmatpush1.bf16.msra.mxu0 %v593
    %731 = vmatprep.subr.bf16.mxu0 %v600
    %732 = vmatpush1.bf16.msra.mxu0 %v599
    %733 = vmatprep.mubr.bf16.mxu0 %v92
    %734 = vmatmul.mubr.bf16.gmra.mrb[0].mxu0 %v91
    %v735 = vpop.f32.mrb[0].mxu0
    %v736 = vadd.f32 %v194, %v735
    %v737 = vpop.f32.mrb[0].mxu0
    %v738 = vadd.f32 %v198, %v737
    %v739 = vpop.f32.mrb[0].mxu0
    %v740 = vpop.f32.mrb[0].mxu0
    %741 = vdwg.mxu0
    %742 = vmatprep.subr.bf16.mxu0 %v512
    %743 = vmatpush1.bf16.msra.mxu0 %v511
    %744 = vmatprep.subr.bf16.mxu0 %v518
    %745 = vmatpush1.bf16.msra.mxu0 %v517
    %746 = vmatprep.subr.bf16.mxu0 %v524
    %747 = vmatpush1.bf16.msra.mxu0 %v523
    %748 = vmatprep.subr.bf16.mxu0 %v530
    %749 = vmatpush1.bf16.msra.mxu0 %v529
    %750 = vmatprep.subr.bf16.mxu0 %v536
    %751 = vmatpush1.bf16.msra.mxu0 %v535
    %752 = vmatprep.subr.bf16.mxu0 %v542
    %753 = vmatpush1.bf16.msra.mxu0 %v541
    %754 = vmatprep.subr.bf16.mxu0 %v548
    %755 = vmatpush1.bf16.msra.mxu0 %v547
    %756 = vmatprep.subr.bf16.mxu0 %v554
    %757 = vmatpush1.bf16.msra.mxu0 %v553
    %758 = vmatprep.subr.bf16.mxu0 %v560
    %759 = vmatpush1.bf16.msra.mxu0 %v559
    %760 = vmatprep.subr.bf16.mxu0 %v566
    %761 = vmatpush1.bf16.msra.mxu0 %v565
    %762 = vmatprep.subr.bf16.mxu0 %v572
    %763 = vmatpush1.bf16.msra.mxu0 %v571
    %764 = vmatprep.subr.bf16.mxu0 %v578
    %765 = vmatpush1.bf16.msra.mxu0 %v577
    %766 = vmatprep.subr.bf16.mxu0 %v584
    %767 = vmatpush1.bf16.msra.mxu0 %v583
    %768 = vmatprep.subr.bf16.mxu0 %v590
    %769 = vmatpush1.bf16.msra.mxu0 %v589
    %770 = vmatprep.subr.bf16.mxu0 %v596
    %771 = vmatpush1.bf16.msra.mxu0 %v595
    %772 = vmatprep.subr.bf16.mxu0 %v602
    %773 = vmatpush1.bf16.msra.mxu0 %v601
    %774 = vmatprep.mubr.bf16.mxu0 %v92
    %775 = vmatmul.mubr.bf16.gmra.mrb[0].mxu0 %v91
    %v776 = vpop.f32.mrb[0].mxu0
    %v777 = vadd.f32 %v202, %v776
    %v778 = vpop.f32.mrb[0].mxu0
    %v779 = vadd.f32 %v206, %v778
    %v780 = vpop.f32.mrb[0].mxu0
    %v781 = vpop.f32.mrb[0].mxu0
    %782 = vdwg.mxu0
    %783 = vmatprep.subr.bf16.mxu0 %v514
    %784 = vmatpush1.bf16.msra.mxu0 %v513
    %785 = vmatprep.subr.bf16.mxu0 %v520
    %786 = vmatpush1.bf16.msra.mxu0 %v519
    %787 = vmatprep.subr.bf16.mxu0 %v526
    %788 = vmatpush1.bf16.msra.mxu0 %v525
    %789 = vmatprep.subr.bf16.mxu0 %v532
    %790 = vmatpush1.bf16.msra.mxu0 %v531
    %791 = vmatprep.subr.bf16.mxu0 %v538
    %792 = vmatpush1.bf16.msra.mxu0 %v537
    %793 = vmatprep.subr.bf16.mxu0 %v544
    %794 = vmatpush1.bf16.msra.mxu0 %v543
    %795 = vmatprep.subr.bf16.mxu0 %v550
    %796 = vmatpush1.bf16.msra.mxu0 %v549
    %797 = vmatprep.subr.bf16.mxu0 %v556
    %798 = vmatpush1.bf16.msra.mxu0 %v555
    %799 = vmatprep.subr.bf16.mxu0 %v562
    %800 = vmatpush1.bf16.msra.mxu0 %v561
    %801 = vmatprep.subr.bf16.mxu0 %v568
    %802 = vmatpush1.bf16.msra.mxu0 %v567
    %803 = vmatprep.subr.bf16.mxu0 %v574
    %804 = vmatpush1.bf16.msra.mxu0 %v573
    %805 = vmatprep.subr.bf16.mxu0 %v580
    %806 = vmatpush1.bf16.msra.mxu0 %v579
    %807 = vmatprep.subr.bf16.mxu0 %v586
    %808 = vmatpush1.bf16.msra.mxu0 %v585
    %809 = vmatprep.subr.bf16.mxu0 %v592
    %810 = vmatpush1.bf16.msra.mxu0 %v591
    %811 = vmatprep.subr.bf16.mxu0 %v598
    %812 = vmatpush1.bf16.msra.mxu0 %v597
    %813 = vmatprep.subr.bf16.mxu0 %v604
    %814 = vmatpush1.bf16.msra.mxu0 %v603
    %815 = vmatprep.mubr.bf16.mxu0 %v92
    %816 = vmatmul.mubr.bf16.gmra.mrb[0].mxu0 %v91
    %v817 = vpop.f32.mrb[0].mxu0
    %v818 = vadd.f32 %v210, %v817
    %v819 = vpop.f32.mrb[0].mxu0
    %v820 = vadd.f32 %v214, %v819
    %v821 = vpop.f32.mrb[0].mxu0
    %v822 = vpop.f32.mrb[0].mxu0
    %823 = vdwg.mxu0
    %vm824 = vcmask 523264
    %v826 = vsel %vm824, %v736, 0
    %v829 = vsel %vm824, %v777, 0
    %831 = vmatprep.subr.mxu0 0.0
    %832 = vmatpush1.xpose.msra.mxu0 %v829
    %833 = vmatprep.subr.mxu0 0.0
    %834 = vmatpush1.xpose.msra.mxu0 0.0
    %835 = vmatprep.subr.mxu0 0.0
    %836 = vmatpush1.xpose.msra.mxu0 0.0
    %837 = vmatprep.subr.mxu0 0.0
    %838 = vmatpush1.xpose.msra.mxu0 0.0
    %839 = vmatprep.subr.mxu0 0.0
    %840 = vmatpush1.xpose.msra.mxu0 0.0
    %841 = vmatprep.subr.mxu0 0.0
    %842 = vmatpush1.xpose.msra.mxu0 0.0
    %843 = vmatprep.subr.mxu0 0.0
    %844 = vmatpush1.xpose.msra.mxu0 0.0
    %845 = vmatprep.subr.mxu0 0.0
    %846 = vmatpush1.xpose.msra.mxu0 0.0
    %847 = vmatprep.subr.mxu0 0.0
    %848 = vmatpush1.xpose.msra.mxu0 0.0
    %849 = vmatprep.subr.mxu0 0.0
    %850 = vmatpush1.xpose.msra.mxu0 0.0
    %851 = vmatprep.subr.mxu0 0.0
    %852 = vmatpush1.xpose.msra.mxu0 0.0
    %853 = vmatprep.subr.mxu0 0.0
    %854 = vmatpush1.xpose.msra.mxu0 0.0
    %855 = vmatprep.subr.mxu0 0.0
    %856 = vmatpush1.xpose.msra.mxu0 0.0
    %857 = vmatprep.subr.mxu0 0.0
    %858 = vmatpush1.xpose.msra.mxu0 0.0
    %859 = vmatprep.subr.mxu0 0.0
    %860 = vmatpush1.xpose.msra.mxu0 0.0
    %861 = vmatprep.subr.mxu0 0.0
    %862 = vmatpush1.xpose.msra.mxu0 0.0
    %863 = vmatprep.subr.mxu0 0.0
    %864 = vmatpush1.xpose.msra.mxu0 0.0
    %865 = vmatprep.subr.mxu0 0.0
    %866 = vmatpush1.xpose.msra.mxu0 0.0
    %867 = vmatprep.subr.mxu0 0.0
    %868 = vmatpush1.xpose.msra.mxu0 0.0
    %869 = vmatprep.subr.mxu0 0.0
    %870 = vmatpush1.xpose.msra.mxu0 0.0
    %871 = vmatprep.subr.mxu0 0.0
    %872 = vmatpush1.xpose.msra.mxu0 0.0
    %873 = vmatprep.subr.mxu0 0.0
    %874 = vmatpush1.xpose.msra.mxu0 0.0
    %875 = vmatprep.subr.mxu0 0.0
    %876 = vmatpush1.xpose.msra.mxu0 0.0
    %877 = vmatprep.subr.mxu0 0.0
    %878 = vmatpush1.xpose.msra.mxu0 0.0
    %879 = vmatprep.subr.mxu0 0.0
    %880 = vmatpush1.xpose.msra.mxu0 0.0
    %881 = vmatprep.subr.mxu0 0.0
    %882 = vmatpush1.xpose.msra.mxu0 0.0
    %883 = vmatprep.subr.mxu0 0.0
    %884 = vmatpush1.xpose.msra.mxu0 0.0
    %885 = vmatprep.subr.mxu0 0.0
    %886 = vmatpush1.xpose.msra.mxu0 0.0
    %887 = vmatprep.subr.mxu0 0.0
    %888 = vmatpush1.xpose.msra.mxu0 0.0
    %889 = vmatprep.subr.mxu0 0.0
    %890 = vmatpush1.xpose.msra.mxu0 0.0
    %891 = vmatprep.subr.mxu0 0.0
    %892 = vmatpush1.xpose.msra.mxu0 0.0
    %893 = vmatprep.subr.mxu0 0.0
    %894 = vmatpush1.xpose.msra.mxu0 0.0
    %895 = vmatprep.mubr.f32.mxu0 0.0
    %896 = vmatmul.mubr.f32.gmra.mrb[0].mxu0 %v826
    %v897 = vpop.f32.mrb[0].mxu0
    %v898 = vadd.f32 0.0, %v897
    %v899 = vpop.f32.mrb[0].mxu0
    %900 = vdwg.mxu0
    %v901 = vmul.f32 %v898, 0.125
    %v902 = vadd.f32 %v901, %v88
    %vm903 = vcmask 64512
    %v904 = vsel %vm903, %v902, -inf
    %905 = vmax.xlane.f32.xlu0 %v904
    %v906 = vpop.xlane.xlu0 %905
    %v907 = vsub.f32 %v902, %v906
    %v908 = vmul.f32 %v907, 1.442695
    %v909 = vpow.pop %v908
    %v910 = vsel %vm903, %v909, 0.0
    %911 = vadd.xlane.f32.xlu0 %v910
    %v912 = vpop.xlane.xlu0 %911
    %v913 = vrcp.pop %v912
    %v914 = vmul.f32 %v909, %v913
    %v916 = vsel %vm903, %v914, 0
    %918 = vmatprep.subr.mxu0 0.0
    %919 = vmatpush1.msra.mxu0 %v818
    %920 = vmatprep.subr.mxu0 0.0
    %921 = vmatpush1.msra.mxu0 0.0
    %922 = vmatprep.subr.mxu0 0.0
    %923 = vmatpush1.msra.mxu0 0.0
    %924 = vmatprep.subr.mxu0 0.0
    %925 = vmatpush1.msra.mxu0 0.0
    %926 = vmatprep.subr.mxu0 0.0
    %927 = vmatpush1.msra.mxu0 0.0
    %928 = vmatprep.subr.mxu0 0.0
    %929 = vmatpush1.msra.mxu0 0.0
    %930 = vmatprep.subr.mxu0 0.0
    %931 = vmatpush1.msra.mxu0 0.0
    %932 = vmatprep.subr.mxu0 0.0
    %933 = vmatpush1.msra.mxu0 0.0
    %934 = vmatprep.subr.mxu0 0.0
    %935 = vmatpush1.msra.mxu0 0.0
    %936 = vmatprep.subr.mxu0 0.0
    %937 = vmatpush1.msra.mxu0 0.0
    %938 = vmatprep.subr.mxu0 0.0
    %939 = vmatpush1.msra.mxu0 0.0
    %940 = vmatprep.subr.mxu0 0.0
    %941 = vmatpush1.msra.mxu0 0.0
    %942 = vmatprep.subr.mxu0 0.0
    %943 = vmatpush1.msra.mxu0 0.0
    %944 = vmatprep.subr.mxu0 0.0
    %945 = vmatpush1.msra.mxu0 0.0
    %946 = vmatprep.subr.mxu0 0.0
    %947 = vmatpush1.msra.mxu0 0.0
    %948 = vmatprep.subr.mxu0 0.0
    %949 = vmatpush1.msra.mxu0 0.0
    %950 = vmatprep.subr.mxu0 0.0
    %951 = vmatpush1.msra.mxu0 0.0
    %952 = vmatprep.subr.mxu0 0.0
    %953 = vmatpush1.msra.mxu0 0.0
    %954 = vmatprep.subr.mxu0 0.0
    %955 = vmatpush1.msra.mxu0 0.0
    %956 = vmatprep.subr.mxu0 0.0
    %957 = vmatpush1.msra.mxu0 0.0
    %958 = vmatprep.subr.mxu0 0.0
    %959 = vmatpush1.msra.mxu0 0.0
    %960 = vmatprep.subr.mxu0 0.0
    %961 = vmatpush1.msra.mxu0 0.0
    %962 = vmatprep.subr.mxu0 0.0
    %963 = vmatpush1.msra.mxu0 0.0
    %964 = vmatprep.subr.mxu0 0.0
    %965 = vmatpush1.msra.mxu0 0.0
    %966 = vmatprep.subr.mxu0 0.0
    %967 = vmatpush1.msra.mxu0 0.0
    %968 = vmatprep.subr.mxu0 0.0
    %969 = vmatpush1.msra.mxu0 0.0
    %970 = vmatprep.subr.mxu0 0.0
    %971 = vmatpush1.msra.mxu0 0.0
    %972 = vmatprep.subr.mxu0 0.0
    %973 = vmatpush1.msra.mxu0 0.0
    %974 = vmatprep.subr.mxu0 0.0
    %975 = vmatpush1.msra.mxu0 0.0
    %976 = vmatprep.subr.mxu0 0.0
    %977 = vmatpush1.msra.mxu0 0.0
    %978 = vmatprep.subr.mxu0 0.0
    %979 = vmatpush1.msra.mxu0 0.0
    %980 = vmatprep.subr.mxu0 0.0
    %981 = vmatpush1.msra.mxu0 0.0
    %982 = vmatprep.mubr.f32.mxu0 0.0
    %983 = vmatmul.mubr.f32.gmra.mrb[0].mxu0 %v916
    %v984 = vpop.f32.mrb[0].mxu0
    %v985 = vadd.f32 0.0, %v984
    %v986 = vpop.f32.mrb[0].mxu0
    %987 = vdwg.mxu0
    %988 = vrot.lane.b32.xlu0 %v736, 64
    %v989 = vpop.permute.xlu0 %988
    %990 = vrot.lane.b32.xlu0 %v777, 64
    %v991 = vpop.permute.xlu0 %990
    %v992 = vsel %vm824, %v989, 0
    %v994 = vsel %vm824, %v991, 0
    %996 = vmatprep.subr.mxu0 0.0
    %997 = vmatpush1.xpose.msra.mxu0 %v994
    %998 = vmatprep.subr.mxu0 0.0
    %999 = vmatpush1.xpose.msra.mxu0 0.0
    %1000 = vmatprep.subr.mxu0 0.0
    %1001 = vmatpush1.xpose.msra.mxu0 0.0
    %1002 = vmatprep.subr.mxu0 0.0
    %1003 = vmatpush1.xpose.msra.mxu0 0.0
    %1004 = vmatprep.subr.mxu0 0.0
    %1005 = vmatpush1.xpose.msra.mxu0 0.0
    %1006 = vmatprep.subr.mxu0 0.0
    %1007 = vmatpush1.xpose.msra.mxu0 0.0
    %1008 = vmatprep.subr.mxu0 0.0
    %1009 = vmatpush1.xpose.msra.mxu0 0.0
    %1010 = vmatprep.subr.mxu0 0.0
    %1011 = vmatpush1.xpose.msra.mxu0 0.0
    %1012 = vmatprep.subr.mxu0 0.0
    %1013 = vmatpush1.xpose.msra.mxu0 0.0
    %1014 = vmatprep.subr.mxu0 0.0
    %1015 = vmatpush1.xpose.msra.mxu0 0.0
    %1016 = vmatprep.subr.mxu0 0.0
    %1017 = vmatpush1.xpose.msra.mxu0 0.0
    %1018 = vmatprep.subr.mxu0 0.0
    %1019 = vmatpush1.xpose.msra.mxu0 0.0
    %1020 = vmatprep.subr.mxu0 0.0
    %1021 = vmatpush1.xpose.msra.mxu0 0.0
    %1022 = vmatprep.subr.mxu0 0.0
    %1023 = vmatpush1.xpose.msra.mxu0 0.0
    %1024 = vmatprep.subr.mxu0 0.0
    %1025 = vmatpush1.xpose.msra.mxu0 0.0
    %1026 = vmatprep.subr.mxu0 0.0
    %1027 = vmatpush1.xpose.msra.mxu0 0.0
    %1028 = vmatprep.subr.mxu0 0.0
    %1029 = vmatpush1.xpose.msra.mxu0 0.0
    %1030 = vmatprep.subr.mxu0 0.0
    %1031 = vmatpush1.xpose.msra.mxu0 0.0
    %1032 = vmatprep.subr.mxu0 0.0
    %1033 = vmatpush1.xpose.msra.mxu0 0.0
    %1034 = vmatprep.subr.mxu0 0.0
    %1035 = vmatpush1.xpose.msra.mxu0 0.0
    %1036 = vmatprep.subr.mxu0 0.0
    %1037 = vmatpush1.xpose.msra.mxu0 0.0
    %1038 = vmatprep.subr.mxu0 0.0
    %1039 = vmatpush1.xpose.msra.mxu0 0.0
    %1040 = vmatprep.subr.mxu0 0.0
    %1041 = vmatpush1.xpose.msra.mxu0 0.0
    %1042 = vmatprep.subr.mxu0 0.0
    %1043 = vmatpush1.xpose.msra.mxu0 0.0
    %1044 = vmatprep.subr.mxu0 0.0
    %1045 = vmatpush1.xpose.msra.mxu0 0.0
    %1046 = vmatprep.subr.mxu0 0.0
    %1047 = vmatpush1.xpose.msra.mxu0 0.0
    %1048 = vmatprep.subr.mxu0 0.0
    %1049 = vmatpush1.xpose.msra.mxu0 0.0
    %1050 = vmatprep.subr.mxu0 0.0
    %1051 = vmatpush1.xpose.msra.mxu0 0.0
    %1052 = vmatprep.subr.mxu0 0.0
    %1053 = vmatpush1.xpose.msra.mxu0 0.0
    %1054 = vmatprep.subr.mxu0 0.0
    %1055 = vmatpush1.xpose.msra.mxu0 0.0
    %1056 = vmatprep.subr.mxu0 0.0
    %1057 = vmatpush1.xpose.msra.mxu0 0.0
    %1058 = vmatprep.subr.mxu0 0.0
    %1059 = vmatpush1.xpose.msra.mxu0 0.0
    %1060 = vmatprep.mubr.f32.mxu0 0.0
    %1061 = vmatmul.mubr.f32.gmra.mrb[0].mxu0 %v992
    %v1062 = vpop.f32.mrb[0].mxu0
    %v1063 = vadd.f32 0.0, %v1062
    %v1064 = vpop.f32.mrb[0].mxu0
    %1065 = vdwg.mxu0
    %v1066 = vmul.f32 %v1063, 0.125
    %v1067 = vadd.f32 %v1066, %v88
    %v1068 = vsel %vm903, %v1067, -inf
    %1069 = vmax.xlane.f32.xlu0 %v1068
    %v1070 = vpop.xlane.xlu0 %1069
    %v1071 = vsub.f32 %v1067, %v1070
    %v1072 = vmul.f32 %v1071, 1.442695
    %v1073 = vpow.pop %v1072
    %v1074 = vsel %vm903, %v1073, 0.0
    %1075 = vadd.xlane.f32.xlu0 %v1074
    %v1076 = vpop.xlane.xlu0 %1075
    %v1077 = vrcp.pop %v1076
    %v1078 = vmul.f32 %v1073, %v1077
    %1080 = vrot.lane.b32.xlu0 %v818, 64
    %v1081 = vpop.permute.xlu0 %1080
    %v1084 = vsel %vm903, %v1078, 0
    %1086 = vmatprep.subr.mxu0 0.0
    %1087 = vmatpush1.msra.mxu0 %v1081
    %1088 = vmatprep.subr.mxu0 0.0
    %1089 = vmatpush1.msra.mxu0 0.0
    %1090 = vmatprep.subr.mxu0 0.0
    %1091 = vmatpush1.msra.mxu0 0.0
    %1092 = vmatprep.subr.mxu0 0.0
    %1093 = vmatpush1.msra.mxu0 0.0
    %1094 = vmatprep.subr.mxu0 0.0
    %1095 = vmatpush1.msra.mxu0 0.0
    %1096 = vmatprep.subr.mxu0 0.0
    %1097 = vmatpush1.msra.mxu0 0.0
    %1098 = vmatprep.subr.mxu0 0.0
    %1099 = vmatpush1.msra.mxu0 0.0
    %1100 = vmatprep.subr.mxu0 0.0
    %1101 = vmatpush1.msra.mxu0 0.0
    %1102 = vmatprep.subr.mxu0 0.0
    %1103 = vmatpush1.msra.mxu0 0.0
    %1104 = vmatprep.subr.mxu0 0.0
    %1105 = vmatpush1.msra.mxu0 0.0
    %1106 = vmatprep.subr.mxu0 0.0
    %1107 = vmatpush1.msra.mxu0 0.0
    %1108 = vmatprep.subr.mxu0 0.0
    %1109 = vmatpush1.msra.mxu0 0.0
    %1110 = vmatprep.subr.mxu0 0.0
    %1111 = vmatpush1.msra.mxu0 0.0
    %1112 = vmatprep.subr.mxu0 0.0
    %1113 = vmatpush1.msra.mxu0 0.0
    %1114 = vmatprep.subr.mxu0 0.0
    %1115 = vmatpush1.msra.mxu0 0.0
    %1116 = vmatprep.subr.mxu0 0.0
    %1117 = vmatpush1.msra.mxu0 0.0
    %1118 = vmatprep.subr.mxu0 0.0
    %1119 = vmatpush1.msra.mxu0 0.0
    %1120 = vmatprep.subr.mxu0 0.0
    %1121 = vmatpush1.msra.mxu0 0.0
    %1122 = vmatprep.subr.mxu0 0.0
    %1123 = vmatpush1.msra.mxu0 0.0
    %1124 = vmatprep.subr.mxu0 0.0
    %1125 = vmatpush1.msra.mxu0 0.0
    %1126 = vmatprep.subr.mxu0 0.0
    %1127 = vmatpush1.msra.mxu0 0.0
    %1128 = vmatprep.subr.mxu0 0.0
    %1129 = vmatpush1.msra.mxu0 0.0
    %1130 = vmatprep.subr.mxu0 0.0
    %1131 = vmatpush1.msra.mxu0 0.0
    %1132 = vmatprep.subr.mxu0 0.0
    %1133 = vmatpush1.msra.mxu0 0.0
    %1134 = vmatprep.subr.mxu0 0.0
    %1135 = vmatpush1.msra.mxu0 0.0
    %1136 = vmatprep.subr.mxu0 0.0
    %1137 = vmatpush1.msra.mxu0 0.0
    %1138 = vmatprep.subr.mxu0 0.0
    %1139 = vmatpush1.msra.mxu0 0.0
    %1140 = vmatprep.subr.mxu0 0.0
    %1141 = vmatpush1.msra.mxu0 0.0
    %1142 = vmatprep.subr.mxu0 0.0
    %1143 = vmatpush1.msra.mxu0 0.0
    %1144 = vmatprep.subr.mxu0 0.0
    %1145 = vmatpush1.msra.mxu0 0.0
    %1146 = vmatprep.subr.mxu0 0.0
    %1147 = vmatpush1.msra.mxu0 0.0
    %1148 = vmatprep.subr.mxu0 0.0
    %1149 = vmatpush1.msra.mxu0 0.0
    %1150 = vmatprep.mubr.f32.mxu0 0.0
    %1151 = vmatmul.mubr.f32.gmra.mrb[0].mxu0 %v1084
    %v1152 = vpop.f32.mrb[0].mxu0
    %v1153 = vadd.f32 0.0, %v1152
    %v1154 = vpop.f32.mrb[0].mxu0
    %1155 = vdwg.mxu0
    %v1157 = vsel %vm824, %v738, 0
    %v1160 = vsel %vm824, %v779, 0
    %1162 = vmatprep.subr.mxu0 0.0
    %1163 = vmatpush1.xpose.msra.mxu0 %v1160
    %1164 = vmatprep.subr.mxu0 0.0
    %1165 = vmatpush1.xpose.msra.mxu0 0.0
    %1166 = vmatprep.subr.mxu0 0.0
    %1167 = vmatpush1.xpose.msra.mxu0 0.0
    %1168 = vmatprep.subr.mxu0 0.0
    %1169 = vmatpush1.xpose.msra.mxu0 0.0
    %1170 = vmatprep.subr.mxu0 0.0
    %1171 = vmatpush1.xpose.msra.mxu0 0.0
    %1172 = vmatprep.subr.mxu0 0.0
    %1173 = vmatpush1.xpose.msra.mxu0 0.0
    %1174 = vmatprep.subr.mxu0 0.0
    %1175 = vmatpush1.xpose.msra.mxu0 0.0
    %1176 = vmatprep.subr.mxu0 0.0
    %1177 = vmatpush1.xpose.msra.mxu0 0.0
    %1178 = vmatprep.subr.mxu0 0.0
    %1179 = vmatpush1.xpose.msra.mxu0 0.0
    %1180 = vmatprep.subr.mxu0 0.0
    %1181 = vmatpush1.xpose.msra.mxu0 0.0
    %1182 = vmatprep.subr.mxu0 0.0
    %1183 = vmatpush1.xpose.msra.mxu0 0.0
    %1184 = vmatprep.subr.mxu0 0.0
    %1185 = vmatpush1.xpose.msra.mxu0 0.0
    %1186 = vmatprep.subr.mxu0 0.0
    %1187 = vmatpush1.xpose.msra.mxu0 0.0
    %1188 = vmatprep.subr.mxu0 0.0
    %1189 = vmatpush1.xpose.msra.mxu0 0.0
    %1190 = vmatprep.subr.mxu0 0.0
    %1191 = vmatpush1.xpose.msra.mxu0 0.0
    %1192 = vmatprep.subr.mxu0 0.0
    %1193 = vmatpush1.xpose.msra.mxu0 0.0
    %1194 = vmatprep.subr.mxu0 0.0
    %1195 = vmatpush1.xpose.msra.mxu0 0.0
    %1196 = vmatprep.subr.mxu0 0.0
    %1197 = vmatpush1.xpose.msra.mxu0 0.0
    %1198 = vmatprep.subr.mxu0 0.0
    %1199 = vmatpush1.xpose.msra.mxu0 0.0
    %1200 = vmatprep.subr.mxu0 0.0
    %1201 = vmatpush1.xpose.msra.mxu0 0.0
    %1202 = vmatprep.subr.mxu0 0.0
    %1203 = vmatpush1.xpose.msra.mxu0 0.0
    %1204 = vmatprep.subr.mxu0 0.0
    %1205 = vmatpush1.xpose.msra.mxu0 0.0
    %1206 = vmatprep.subr.mxu0 0.0
    %1207 = vmatpush1.xpose.msra.mxu0 0.0
    %1208 = vmatprep.subr.mxu0 0.0
    %1209 = vmatpush1.xpose.msra.mxu0 0.0
    %1210 = vmatprep.subr.mxu0 0.0
    %1211 = vmatpush1.xpose.msra.mxu0 0.0
    %1212 = vmatprep.subr.mxu0 0.0
    %1213 = vmatpush1.xpose.msra.mxu0 0.0
    %1214 = vmatprep.subr.mxu0 0.0
    %1215 = vmatpush1.xpose.msra.mxu0 0.0
    %1216 = vmatprep.subr.mxu0 0.0
    %1217 = vmatpush1.xpose.msra.mxu0 0.0
    %1218 = vmatprep.subr.mxu0 0.0
    %1219 = vmatpush1.xpose.msra.mxu0 0.0
    %1220 = vmatprep.subr.mxu0 0.0
    %1221 = vmatpush1.xpose.msra.mxu0 0.0
    %1222 = vmatprep.subr.mxu0 0.0
    %1223 = vmatpush1.xpose.msra.mxu0 0.0
    %1224 = vmatprep.subr.mxu0 0.0
    %1225 = vmatpush1.xpose.msra.mxu0 0.0
    %1226 = vmatprep.mubr.f32.mxu0 0.0
    %1227 = vmatmul.mubr.f32.gmra.mrb[0].mxu0 %v1157
    %v1228 = vpop.f32.mrb[0].mxu0
    %v1229 = vadd.f32 0.0, %v1228
    %v1230 = vpop.f32.mrb[0].mxu0
    %1231 = vdwg.mxu0
    %v1232 = vmul.f32 %v1229, 0.125
    %v1233 = vadd.f32 %v1232, %v88
    %v1234 = vsel %vm903, %v1233, -inf
    %1235 = vmax.xlane.f32.xlu0 %v1234
    %v1236 = vpop.xlane.xlu0 %1235
    %v1237 = vsub.f32 %v1233, %v1236
    %v1238 = vmul.f32 %v1237, 1.442695
    %v1239 = vpow.pop %v1238
    %v1240 = vsel %vm903, %v1239, 0.0
    %1241 = vadd.xlane.f32.xlu0 %v1240
    %v1242 = vpop.xlane.xlu0 %1241
    %v1243 = vrcp.pop %v1242
    %v1244 = vmul.f32 %v1239, %v1243
    %v1246 = vsel %vm903, %v1244, 0
    %1248 = vmatprep.subr.mxu0 0.0
    %1249 = vmatpush1.msra.mxu0 %v820
    %1250 = vmatprep.subr.mxu0 0.0
    %1251 = vmatpush1.msra.mxu0 0.0
    %1252 = vmatprep.subr.mxu0 0.0
    %1253 = vmatpush1.msra.mxu0 0.0
    %1254 = vmatprep.subr.mxu0 0.0
    %1255 = vmatpush1.msra.mxu0 0.0
    %1256 = vmatprep.subr.mxu0 0.0
    %1257 = vmatpush1.msra.mxu0 0.0
    %1258 = vmatprep.subr.mxu0 0.0
    %1259 = vmatpush1.msra.mxu0 0.0
    %1260 = vmatprep.subr.mxu0 0.0
    %1261 = vmatpush1.msra.mxu0 0.0
    %1262 = vmatprep.subr.mxu0 0.0
    %1263 = vmatpush1.msra.mxu0 0.0
    %1264 = vmatprep.subr.mxu0 0.0
    %1265 = vmatpush1.msra.mxu0 0.0
    %1266 = vmatprep.subr.mxu0 0.0
    %1267 = vmatpush1.msra.mxu0 0.0
    %1268 = vmatprep.subr.mxu0 0.0
    %1269 = vmatpush1.msra.mxu0 0.0
    %1270 = vmatprep.subr.mxu0 0.0
    %1271 = vmatpush1.msra.mxu0 0.0
    %1272 = vmatprep.subr.mxu0 0.0
    %1273 = vmatpush1.msra.mxu0 0.0
    %1274 = vmatprep.subr.mxu0 0.0
    %1275 = vmatpush1.msra.mxu0 0.0
    %1276 = vmatprep.subr.mxu0 0.0
    %1277 = vmatpush1.msra.mxu0 0.0
    %1278 = vmatprep.subr.mxu0 0.0
    %1279 = vmatpush1.msra.mxu0 0.0
    %1280 = vmatprep.subr.mxu0 0.0
    %1281 = vmatpush1.msra.mxu0 0.0
    %1282 = vmatprep.subr.mxu0 0.0
    %1283 = vmatpush1.msra.mxu0 0.0
    %1284 = vmatprep.subr.mxu0 0.0
    %1285 = vmatpush1.msra.mxu0 0.0
    %1286 = vmatprep.subr.mxu0 0.0
    %1287 = vmatpush1.msra.mxu0 0.0
    %1288 = vmatprep.subr.mxu0 0.0
    %1289 = vmatpush1.msra.mxu0 0.0
    %1290 = vmatprep.subr.mxu0 0.0
    %1291 = vmatpush1.msra.mxu0 0.0
    %1292 = vmatprep.subr.mxu0 0.0
    %1293 = vmatpush1.msra.mxu0 0.0
    %1294 = vmatprep.subr.mxu0 0.0
    %1295 = vmatpush1.msra.mxu0 0.0
    %1296 = vmatprep.subr.mxu0 0.0
    %1297 = vmatpush1.msra.mxu0 0.0
    %1298 = vmatprep.subr.mxu0 0.0
    %1299 = vmatpush1.msra.mxu0 0.0
    %1300 = vmatprep.subr.mxu0 0.0
    %1301 = vmatpush1.msra.mxu0 0.0
    %1302 = vmatprep.subr.mxu0 0.0
    %1303 = vmatpush1.msra.mxu0 0.0
    %1304 = vmatprep.subr.mxu0 0.0
    %1305 = vmatpush1.msra.mxu0 0.0
    %1306 = vmatprep.subr.mxu0 0.0
    %1307 = vmatpush1.msra.mxu0 0.0
    %1308 = vmatprep.subr.mxu0 0.0
    %1309 = vmatpush1.msra.mxu0 0.0
    %1310 = vmatprep.subr.mxu0 0.0
    %1311 = vmatpush1.msra.mxu0 0.0
    %1312 = vmatprep.mubr.f32.mxu0 0.0
    %1313 = vmatmul.mubr.f32.gmra.mrb[0].mxu0 %v1246
    %v1314 = vpop.f32.mrb[0].mxu0
    %v1315 = vadd.f32 0.0, %v1314
    %v1316 = vpop.f32.mrb[0].mxu0
    %1317 = vdwg.mxu0
    %1318 = vrot.lane.b32.xlu0 %v738, 64
    %v1319 = vpop.permute.xlu0 %1318
    %1320 = vrot.lane.b32.xlu0 %v779, 64
    %v1321 = vpop.permute.xlu0 %1320
    %v1322 = vsel %vm824, %v1319, 0
    %v1324 = vsel %vm824, %v1321, 0
    %1326 = vmatprep.subr.mxu0 0.0
    %1327 = vmatpush1.xpose.msra.mxu0 %v1324
    %1328 = vmatprep.subr.mxu0 0.0
    %1329 = vmatpush1.xpose.msra.mxu0 0.0
    %1330 = vmatprep.subr.mxu0 0.0
    %1331 = vmatpush1.xpose.msra.mxu0 0.0
    %1332 = vmatprep.subr.mxu0 0.0
    %1333 = vmatpush1.xpose.msra.mxu0 0.0
    %1334 = vmatprep.subr.mxu0 0.0
    %1335 = vmatpush1.xpose.msra.mxu0 0.0
    %1336 = vmatprep.subr.mxu0 0.0
    %1337 = vmatpush1.xpose.msra.mxu0 0.0
    %1338 = vmatprep.subr.mxu0 0.0
    %1339 = vmatpush1.xpose.msra.mxu0 0.0
    %1340 = vmatprep.subr.mxu0 0.0
    %1341 = vmatpush1.xpose.msra.mxu0 0.0
    %1342 = vmatprep.subr.mxu0 0.0
    %1343 = vmatpush1.xpose.msra.mxu0 0.0
    %1344 = vmatprep.subr.mxu0 0.0
    %1345 = vmatpush1.xpose.msra.mxu0 0.0
    %1346 = vmatprep.subr.mxu0 0.0
    %1347 = vmatpush1.xpose.msra.mxu0 0.0
    %1348 = vmatprep.subr.mxu0 0.0
    %1349 = vmatpush1.xpose.msra.mxu0 0.0
    %1350 = vmatprep.subr.mxu0 0.0
    %1351 = vmatpush1.xpose.msra.mxu0 0.0
    %1352 = vmatprep.subr.mxu0 0.0
    %1353 = vmatpush1.xpose.msra.mxu0 0.0
    %1354 = vmatprep.subr.mxu0 0.0
    %1355 = vmatpush1.xpose.msra.mxu0 0.0
    %1356 = vmatprep.subr.mxu0 0.0
    %1357 = vmatpush1.xpose.msra.mxu0 0.0
    %1358 = vmatprep.subr.mxu0 0.0
    %1359 = vmatpush1.xpose.msra.mxu0 0.0
    %1360 = vmatprep.subr.mxu0 0.0
    %1361 = vmatpush1.xpose.msra.mxu0 0.0
    %1362 = vmatprep.subr.mxu0 0.0
    %1363 = vmatpush1.xpose.msra.mxu0 0.0
    %1364 = vmatprep.subr.mxu0 0.0
    %1365 = vmatpush1.xpose.msra.mxu0 0.0
    %1366 = vmatprep.subr.mxu0 0.0
    %1367 = vmatpush1.xpose.msra.mxu0 0.0
    %1368 = vmatprep.subr.mxu0 0.0
    %1369 = vmatpush1.xpose.msra.mxu0 0.0
    %1370 = vmatprep.subr.mxu0 0.0
    %1371 = vmatpush1.xpose.msra.mxu0 0.0
    %1372 = vmatprep.subr.mxu0 0.0
    %1373 = vmatpush1.xpose.msra.mxu0 0.0
    %1374 = vmatprep.subr.mxu0 0.0
    %1375 = vmatpush1.xpose.msra.mxu0 0.0
    %1376 = vmatprep.subr.mxu0 0.0
    %1377 = vmatpush1.xpose.msra.mxu0 0.0
    %1378 = vmatprep.subr.mxu0 0.0
    %1379 = vmatpush1.xpose.msra.mxu0 0.0
    %1380 = vmatprep.subr.mxu0 0.0
    %1381 = vmatpush1.xpose.msra.mxu0 0.0
    %1382 = vmatprep.subr.mxu0 0.0
    %1383 = vmatpush1.xpose.msra.mxu0 0.0
    %1384 = vmatprep.subr.mxu0 0.0
    %1385 = vmatpush1.xpose.msra.mxu0 0.0
    %1386 = vmatprep.subr.mxu0 0.0
    %1387 = vmatpush1.xpose.msra.mxu0 0.0
    %1388 = vmatprep.subr.mxu0 0.0
    %1389 = vmatpush1.xpose.msra.mxu0 0.0
    %1390 = vmatprep.mubr.f32.mxu0 0.0
    %1391 = vmatmul.mubr.f32.gmra.mrb[0].mxu0 %v1322
    %v1392 = vpop.f32.mrb[0].mxu0
    %v1393 = vadd.f32 0.0, %v1392
    %v1394 = vpop.f32.mrb[0].mxu0
    %1395 = vdwg.mxu0
    %v1396 = vmul.f32 %v1393, 0.125
    %v1397 = vadd.f32 %v1396, %v88
    %v1398 = vsel %vm903, %v1397, -inf
    %1399 = vmax.xlane.f32.xlu0 %v1398
    %v1400 = vpop.xlane.xlu0 %1399
    %v1401 = vsub.f32 %v1397, %v1400
    %v1402 = vmul.f32 %v1401, 1.442695
    %v1403 = vpow.pop %v1402
    %v1404 = vsel %vm903, %v1403, 0.0
    %1405 = vadd.xlane.f32.xlu0 %v1404
    %v1406 = vpop.xlane.xlu0 %1405
    %v1407 = vrcp.pop %v1406
    %v1408 = vmul.f32 %v1403, %v1407
    %1410 = vrot.lane.b32.xlu0 %v820, 64
    %v1411 = vpop.permute.xlu0 %1410
    %v1414 = vsel %vm903, %v1408, 0
    %1416 = vmatprep.subr.mxu0 0.0
    %1417 = vmatpush1.msra.mxu0 %v1411
    %1418 = vmatprep.subr.mxu0 0.0
    %1419 = vmatpush1.msra.mxu0 0.0
    %1420 = vmatprep.subr.mxu0 0.0
    %1421 = vmatpush1.msra.mxu0 0.0
    %1422 = vmatprep.subr.mxu0 0.0
    %1423 = vmatpush1.msra.mxu0 0.0
    %1424 = vmatprep.subr.mxu0 0.0
    %1425 = vmatpush1.msra.mxu0 0.0
    %1426 = vmatprep.subr.mxu0 0.0
    %1427 = vmatpush1.msra.mxu0 0.0
    %1428 = vmatprep.subr.mxu0 0.0
    %1429 = vmatpush1.msra.mxu0 0.0
    %1430 = vmatprep.subr.mxu0 0.0
    %1431 = vmatpush1.msra.mxu0 0.0
    %1432 = vmatprep.subr.mxu0 0.0
    %1433 = vmatpush1.msra.mxu0 0.0
    %1434 = vmatprep.subr.mxu0 0.0
    %1435 = vmatpush1.msra.mxu0 0.0
    %1436 = vmatprep.subr.mxu0 0.0
    %1437 = vmatpush1.msra.mxu0 0.0
    %1438 = vmatprep.subr.mxu0 0.0
    %1439 = vmatpush1.msra.mxu0 0.0
    %1440 = vmatprep.subr.mxu0 0.0
    %1441 = vmatpush1.msra.mxu0 0.0
    %1442 = vmatprep.subr.mxu0 0.0
    %1443 = vmatpush1.msra.mxu0 0.0
    %1444 = vmatprep.subr.mxu0 0.0
    %1445 = vmatpush1.msra.mxu0 0.0
    %1446 = vmatprep.subr.mxu0 0.0
    %1447 = vmatpush1.msra.mxu0 0.0
    %1448 = vmatprep.subr.mxu0 0.0
    %1449 = vmatpush1.msra.mxu0 0.0
    %1450 = vmatprep.subr.mxu0 0.0
    %1451 = vmatpush1.msra.mxu0 0.0
    %1452 = vmatprep.subr.mxu0 0.0
    %1453 = vmatpush1.msra.mxu0 0.0
    %1454 = vmatprep.subr.mxu0 0.0
    %1455 = vmatpush1.msra.mxu0 0.0
    %1456 = vmatprep.subr.mxu0 0.0
    %1457 = vmatpush1.msra.mxu0 0.0
    %1458 = vmatprep.subr.mxu0 0.0
    %1459 = vmatpush1.msra.mxu0 0.0
    %1460 = vmatprep.subr.mxu0 0.0
    %1461 = vmatpush1.msra.mxu0 0.0
    %1462 = vmatprep.subr.mxu0 0.0
    %1463 = vmatpush1.msra.mxu0 0.0
    %1464 = vmatprep.subr.mxu0 0.0
    %1465 = vmatpush1.msra.mxu0 0.0
    %1466 = vmatprep.subr.mxu0 0.0
    %1467 = vmatpush1.msra.mxu0 0.0
    %1468 = vmatprep.subr.mxu0 0.0
    %1469 = vmatpush1.msra.mxu0 0.0
    %1470 = vmatprep.subr.mxu0 0.0
    %1471 = vmatpush1.msra.mxu0 0.0
    %1472 = vmatprep.subr.mxu0 0.0
    %1473 = vmatpush1.msra.mxu0 0.0
    %1474 = vmatprep.subr.mxu0 0.0
    %1475 = vmatpush1.msra.mxu0 0.0
    %1476 = vmatprep.subr.mxu0 0.0
    %1477 = vmatpush1.msra.mxu0 0.0
    %1478 = vmatprep.subr.mxu0 0.0
    %1479 = vmatpush1.msra.mxu0 0.0
    %1480 = vmatprep.mubr.f32.mxu0 0.0
    %1481 = vmatmul.mubr.f32.gmra.mrb[0].mxu0 %v1414
    %v1482 = vpop.f32.mrb[0].mxu0
    %v1483 = vadd.f32 0.0, %v1482
    %v1484 = vpop.f32.mrb[0].mxu0
    %1485 = vdwg.mxu0
    %1487 = vrot.lane.b32.xlu0 %v1153, 64
    %v1488 = vpop.permute.xlu0 %1487
    %1491 = vrot.lane.b32.xlu0 %v1483, 64
    %v1492 = vpop.permute.xlu0 %1491
    %v1494 = vsel %vm824, %v985, %v1488
    %v1495 = vsel %vm824, %v1315, %v1492
    %v1496 = vpack.c.bf16 %v1494, %v1494
    %v1497 = vpack.c.bf16 %v1495, %v1495
    %v1498 = vld [vmem:[#allocation7] sm:$0xff]
    %v1499 = vld [vmem:[#allocation7 + $0x8] sm:$0xff]
    %v1500 = vld [vmem:[#allocation7 + $0x10] sm:$0xff]
    %v1501 = vld [vmem:[#allocation7 + $0x18] sm:$0xff]
    %v1502 = vld [vmem:[#allocation7 + $0x20] sm:$0xff]
    %v1503 = vld [vmem:[#allocation7 + $0x28] sm:$0xff]
    %v1504 = vld [vmem:[#allocation7 + $0x30] sm:$0xff]
    %v1505 = vld [vmem:[#allocation7 + $0x38] sm:$0xff]
    %v1506 = vld [vmem:[#allocation7 + $0x40] sm:$0xff]
    %v1507 = vld [vmem:[#allocation7 + $0x48] sm:$0xff]
    %v1508 = vld [vmem:[#allocation7 + $0x50] sm:$0xff]
    %v1509 = vld [vmem:[#allocation7 + $0x58] sm:$0xff]
    %v1510 = vld [vmem:[#allocation7 + $0x60] sm:$0xff]
    %v1511 = vld [vmem:[#allocation7 + $0x68] sm:$0xff]
    %v1512 = vld [vmem:[#allocation7 + $0x70] sm:$0xff]
    %v1513 = vld [vmem:[#allocation7 + $0x78] sm:$0xff]
    %v1514 = vld [vmem:[#allocation7 + $0x80] sm:$0xff]
    %v1515 = vld [vmem:[#allocation7 + $0x88] sm:$0xff]
    %v1516 = vld [vmem:[#allocation7 + $0x90] sm:$0xff]
    %v1517 = vld [vmem:[#allocation7 + $0x98] sm:$0xff]
    %v1518 = vld [vmem:[#allocation7 + $0xa0] sm:$0xff]
    %v1519 = vld [vmem:[#allocation7 + $0xa8] sm:$0xff]
    %v1520 = vld [vmem:[#allocation7 + $0xb0] sm:$0xff]
    %v1521 = vld [vmem:[#allocation7 + $0xb8] sm:$0xff]
    %v1522 = vld [vmem:[#allocation7 + $0xc0] sm:$0xff]
    %v1523 = vld [vmem:[#allocation7 + $0xc8] sm:$0xff]
    %v1524 = vld [vmem:[#allocation7 + $0xd0] sm:$0xff]
    %v1525 = vld [vmem:[#allocation7 + $0xd8] sm:$0xff]
    %v1526 = vld [vmem:[#allocation7 + $0xe0] sm:$0xff]
    %v1527 = vld [vmem:[#allocation7 + $0xe8] sm:$0xff]
    %v1528 = vld [vmem:[#allocation7 + $0xf0] sm:$0xff]
    %v1529 = vld [vmem:[#allocation7 + $0xf8] sm:$0xff]
    %v1530 = vld [vmem:[#allocation8] sm:$0x3]
    %v1532 = vlaneseq
    %v1533 = vshrl.u32 %v1532, 7
    %v1534 = vsub.s32 0, %v1533
    %v1535 = vrot.slane %v1530, %v1534
    %v1536 = vlaneseq
    %v1537 = vshrl.u32 %v1536, 7
    %v1538 = vsub.s32 1, %v1537
    %v1539 = vrot.slane %v1530, %v1538
    %v1574 = vunpack.c.l.b16 %v1498
    %v1575 = vunpack.c.h.b16 %v1498
    %v1576 = vunpack.c.l.b16 %v1499
    %v1577 = vunpack.c.h.b16 %v1499
    %v1578 = vunpack.c.l.b16 %v1500
    %v1579 = vunpack.c.h.b16 %v1500
    %v1580 = vunpack.c.l.b16 %v1501
    %v1581 = vunpack.c.h.b16 %v1501
    %v1582 = vunpack.c.l.b16 %v1502
    %v1583 = vunpack.c.h.b16 %v1502
    %v1584 = vunpack.c.l.b16 %v1503
    %v1585 = vunpack.c.h.b16 %v1503
    %v1586 = vunpack.c.l.b16 %v1504
    %v1587 = vunpack.c.h.b16 %v1504
    %v1588 = vunpack.c.l.b16 %v1505
    %v1589 = vunpack.c.h.b16 %v1505
    %v1590 = vunpack.c.l.b16 %v1506
    %v1591 = vunpack.c.h.b16 %v1506
    %v1592 = vunpack.c.l.b16 %v1507
    %v1593 = vunpack.c.h.b16 %v1507
    %v1594 = vunpack.c.l.b16 %v1508
    %v1595 = vunpack.c.h.b16 %v1508
    %v1596 = vunpack.c.l.b16 %v1509
    %v1597 = vunpack.c.h.b16 %v1509
    %v1598 = vunpack.c.l.b16 %v1510
    %v1599 = vunpack.c.h.b16 %v1510
    %v1600 = vunpack.c.l.b16 %v1511
    %v1601 = vunpack.c.h.b16 %v1511
    %v1602 = vunpack.c.l.b16 %v1512
    %v1603 = vunpack.c.h.b16 %v1512
    %v1604 = vunpack.c.l.b16 %v1513
    %v1605 = vunpack.c.h.b16 %v1513
    %v1606 = vunpack.c.l.b16 %v1514
    %v1607 = vunpack.c.h.b16 %v1514
    %v1608 = vunpack.c.l.b16 %v1515
    %v1609 = vunpack.c.h.b16 %v1515
    %v1610 = vunpack.c.l.b16 %v1516
    %v1611 = vunpack.c.h.b16 %v1516
    %v1612 = vunpack.c.l.b16 %v1517
    %v1613 = vunpack.c.h.b16 %v1517
    %v1614 = vunpack.c.l.b16 %v1518
    %v1615 = vunpack.c.h.b16 %v1518
    %v1616 = vunpack.c.l.b16 %v1519
    %v1617 = vunpack.c.h.b16 %v1519
    %v1618 = vunpack.c.l.b16 %v1520
    %v1619 = vunpack.c.h.b16 %v1520
    %v1620 = vunpack.c.l.b16 %v1521
    %v1621 = vunpack.c.h.b16 %v1521
    %v1622 = vunpack.c.l.b16 %v1522
    %v1623 = vunpack.c.h.b16 %v1522
    %v1624 = vunpack.c.l.b16 %v1523
    %v1625 = vunpack.c.h.b16 %v1523
    %v1626 = vunpack.c.l.b16 %v1524
    %v1627 = vunpack.c.h.b16 %v1524
    %v1628 = vunpack.c.l.b16 %v1525
    %v1629 = vunpack.c.h.b16 %v1525
    %v1630 = vunpack.c.l.b16 %v1526
    %v1631 = vunpack.c.h.b16 %v1526
    %v1632 = vunpack.c.l.b16 %v1527
    %v1633 = vunpack.c.h.b16 %v1527
    %v1634 = vunpack.c.l.b16 %v1528
    %v1635 = vunpack.c.h.b16 %v1528
    %v1636 = vunpack.c.l.b16 %v1529
    %v1637 = vunpack.c.h.b16 %v1529
    %v1638 = vpack.c.b16 %v1576, %v1574
    %v1639 = vpack.c.b16 %v1577, %v1575
    %v1640 = vpack.c.b16 %v1580, %v1578
    %v1641 = vpack.c.b16 %v1581, %v1579
    %v1642 = vpack.c.b16 %v1584, %v1582
    %v1643 = vpack.c.b16 %v1585, %v1583
    %v1644 = vpack.c.b16 %v1588, %v1586
    %v1645 = vpack.c.b16 %v1589, %v1587
    %v1646 = vpack.c.b16 %v1592, %v1590
    %v1647 = vpack.c.b16 %v1593, %v1591
    %v1648 = vpack.c.b16 %v1596, %v1594
    %v1649 = vpack.c.b16 %v1597, %v1595
    %v1650 = vpack.c.b16 %v1600, %v1598
    %v1651 = vpack.c.b16 %v1601, %v1599
    %v1652 = vpack.c.b16 %v1604, %v1602
    %v1653 = vpack.c.b16 %v1605, %v1603
    %v1654 = vpack.c.b16 %v1608, %v1606
    %v1655 = vpack.c.b16 %v1609, %v1607
    %v1656 = vpack.c.b16 %v1612, %v1610
    %v1657 = vpack.c.b16 %v1613, %v1611
    %v1658 = vpack.c.b16 %v1616, %v1614
    %v1659 = vpack.c.b16 %v1617, %v1615
    %v1660 = vpack.c.b16 %v1620, %v1618
    %v1661 = vpack.c.b16 %v1621, %v1619
    %v1662 = vpack.c.b16 %v1624, %v1622
    %v1663 = vpack.c.b16 %v1625, %v1623
    %v1664 = vpack.c.b16 %v1628, %v1626
    %v1665 = vpack.c.b16 %v1629, %v1627
    %v1666 = vpack.c.b16 %v1632, %v1630
    %v1667 = vpack.c.b16 %v1633, %v1631
    %v1668 = vpack.c.b16 %v1636, %v1634
    %v1669 = vpack.c.b16 %v1637, %v1635
    %1702 = vmatprep.subr.bf16.mxu0 %v1639
    %1703 = vmatpush1.bf16.msra.mxu0 %v1638
    %1704 = vmatprep.subr.bf16.mxu0 %v1641
    %1705 = vmatpush1.bf16.msra.mxu0 %v1640
    %1706 = vmatprep.subr.bf16.mxu0 %v1643
    %1707 = vmatpush1.bf16.msra.mxu0 %v1642
    %1708 = vmatprep.subr.bf16.mxu0 %v1645
    %1709 = vmatpush1.bf16.msra.mxu0 %v1644
    %1710 = vmatprep.subr.bf16.mxu0 %v1647
    %1711 = vmatpush1.bf16.msra.mxu0 %v1646
    %1712 = vmatprep.subr.bf16.mxu0 %v1649
    %1713 = vmatpush1.bf16.msra.mxu0 %v1648
    %1714 = vmatprep.subr.bf16.mxu0 %v1651
    %1715 = vmatpush1.bf16.msra.mxu0 %v1650
    %1716 = vmatprep.subr.bf16.mxu0 %v1653
    %1717 = vmatpush1.bf16.msra.mxu0 %v1652
    %1718 = vmatprep.subr.bf16.mxu0 %v1655
    %1719 = vmatpush1.bf16.msra.mxu0 %v1654
    %1720 = vmatprep.subr.bf16.mxu0 %v1657
    %1721 = vmatpush1.bf16.msra.mxu0 %v1656
    %1722 = vmatprep.subr.bf16.mxu0 %v1659
    %1723 = vmatpush1.bf16.msra.mxu0 %v1658
    %1724 = vmatprep.subr.bf16.mxu0 %v1661
    %1725 = vmatpush1.bf16.msra.mxu0 %v1660
    %1726 = vmatprep.subr.bf16.mxu0 %v1663
    %1727 = vmatpush1.bf16.msra.mxu0 %v1662
    %1728 = vmatprep.subr.bf16.mxu0 %v1665
    %1729 = vmatpush1.bf16.msra.mxu0 %v1664
    %1730 = vmatprep.subr.bf16.mxu0 %v1667
    %1731 = vmatpush1.bf16.msra.mxu0 %v1666
    %1732 = vmatprep.subr.bf16.mxu0 %v1669
    %1733 = vmatpush1.bf16.msra.mxu0 %v1668
    %1734 = vmatprep.mubr.bf16.mxu0 %v1497
    %1735 = vmatmul.mubr.bf16.gmra.mrb[0].mxu0 %v1496
    %v1736 = vpop.f32.mrb[0].mxu0
    %v1737 = vadd.f32 %v1535, %v1736
    %v1738 = vpop.f32.mrb[0].mxu0
    %v1739 = vadd.f32 %v1539, %v1738
    %v1740 = vpop.f32.mrb[0].mxu0
    %v1741 = vpop.f32.mrb[0].mxu0
    %1742 = vdwg.mxu0
    %v1743 = vpack.c.bf16 %v1737, %v1737
    %v1744 = vpack.c.bf16 %v1739, %v1739
    %s1745 = scalar_lea.vmem [#allocation2], 768
    %v1746 = vld [vmem:[%s1745] sm:$0xff]
    %v1747 = vld [vmem:[%s1745 + $0x8] sm:$0xff]
    %v1748 = vld [vmem:[%s1745 + $0x10] sm:$0xff]
    %v1749 = vld [vmem:[%s1745 + $0x18] sm:$0xff]
    %v1750 = vld [vmem:[%s1745 + $0x20] sm:$0xff]
    %v1751 = vld [vmem:[%s1745 + $0x28] sm:$0xff]
    %v1752 = vld [vmem:[%s1745 + $0x30] sm:$0xff]
    %v1753 = vld [vmem:[%s1745 + $0x38] sm:$0xff]
    %v1754 = vld [vmem:[%s1745 + $0x40] sm:$0xff]
    %v1755 = vld [vmem:[%s1745 + $0x48] sm:$0xff]
    %v1756 = vld [vmem:[%s1745 + $0x50] sm:$0xff]
    %v1757 = vld [vmem:[%s1745 + $0x58] sm:$0xff]
    %v1758 = vld [vmem:[%s1745 + $0x60] sm:$0xff]
    %v1759 = vld [vmem:[%s1745 + $0x68] sm:$0xff]
    %v1760 = vld [vmem:[%s1745 + $0x70] sm:$0xff]
    %v1761 = vld [vmem:[%s1745 + $0x78] sm:$0xff]
    %v1762 = vld [vmem:[%s1745 + $0x80] sm:$0xff]
    %v1763 = vld [vmem:[%s1745 + $0x88] sm:$0xff]
    %v1764 = vld [vmem:[%s1745 + $0x90] sm:$0xff]
    %v1765 = vld [vmem:[%s1745 + $0x98] sm:$0xff]
    %v1766 = vld [vmem:[%s1745 + $0xa0] sm:$0xff]
    %v1767 = vld [vmem:[%s1745 + $0xa8] sm:$0xff]
    %v1768 = vld [vmem:[%s1745 + $0xb0] sm:$0xff]
    %v1769 = vld [vmem:[%s1745 + $0xb8] sm:$0xff]
    %v1770 = vld [vmem:[%s1745 + $0xc0] sm:$0xff]
    %v1771 = vld [vmem:[%s1745 + $0xc8] sm:$0xff]
    %v1772 = vld [vmem:[%s1745 + $0xd0] sm:$0xff]
    %v1773 = vld [vmem:[%s1745 + $0xd8] sm:$0xff]
    %v1774 = vld [vmem:[%s1745 + $0xe0] sm:$0xff]
    %v1775 = vld [vmem:[%s1745 + $0xe8] sm:$0xff]
    %v1776 = vld [vmem:[%s1745 + $0xf0] sm:$0xff]
    %v1777 = vld [vmem:[%s1745 + $0xf8] sm:$0xff]
    %v1778 = vld [vmem:[%s1745 + $0x100] sm:$0xff]
    %v1779 = vld [vmem:[%s1745 + $0x108] sm:$0xff]
    %v1780 = vld [vmem:[%s1745 + $0x110] sm:$0xff]
    %v1781 = vld [vmem:[%s1745 + $0x118] sm:$0xff]
    %v1782 = vld [vmem:[%s1745 + $0x120] sm:$0xff]
    %v1783 = vld [vmem:[%s1745 + $0x128] sm:$0xff]
    %v1784 = vld [vmem:[%s1745 + $0x130] sm:$0xff]
    %v1785 = vld [vmem:[%s1745 + $0x138] sm:$0xff]
    %v1786 = vld [vmem:[%s1745 + $0x140] sm:$0xff]
    %v1787 = vld [vmem:[%s1745 + $0x148] sm:$0xff]
    %v1788 = vld [vmem:[%s1745 + $0x150] sm:$0xff]
    %v1789 = vld [vmem:[%s1745 + $0x158] sm:$0xff]
    %v1790 = vld [vmem:[%s1745 + $0x160] sm:$0xff]
    %v1791 = vld [vmem:[%s1745 + $0x168] sm:$0xff]
    %v1792 = vld [vmem:[%s1745 + $0x170] sm:$0xff]
    %v1793 = vld [vmem:[%s1745 + $0x178] sm:$0xff]
    %v1794 = vld [vmem:[%s1745 + $0x180] sm:$0xff]
    %v1795 = vld [vmem:[%s1745 + $0x188] sm:$0xff]
    %v1796 = vld [vmem:[%s1745 + $0x190] sm:$0xff]
    %v1797 = vld [vmem:[%s1745 + $0x198] sm:$0xff]
    %v1798 = vld [vmem:[%s1745 + $0x1a0] sm:$0xff]
    %v1799 = vld [vmem:[%s1745 + $0x1a8] sm:$0xff]
    %v1800 = vld [vmem:[%s1745 + $0x1b0] sm:$0xff]
    %v1801 = vld [vmem:[%s1745 + $0x1b8] sm:$0xff]
    %v1802 = vld [vmem:[%s1745 + $0x1c0] sm:$0xff]
    %v1803 = vld [vmem:[%s1745 + $0x1c8] sm:$0xff]
    %v1804 = vld [vmem:[%s1745 + $0x1d0] sm:$0xff]
    %v1805 = vld [vmem:[%s1745 + $0x1d8] sm:$0xff]
    %v1806 = vld [vmem:[%s1745 + $0x1e0] sm:$0xff]
    %v1807 = vld [vmem:[%s1745 + $0x1e8] sm:$0xff]
    %v1808 = vld [vmem:[%s1745 + $0x1f0] sm:$0xff]
    %v1809 = vld [vmem:[%s1745 + $0x1f8] sm:$0xff]
    %v1810 = vld [vmem:[%s1745 + $0x200] sm:$0xff]
    %v1811 = vld [vmem:[%s1745 + $0x208] sm:$0xff]
    %v1812 = vld [vmem:[%s1745 + $0x210] sm:$0xff]
    %v1813 = vld [vmem:[%s1745 + $0x218] sm:$0xff]
    %v1814 = vld [vmem:[%s1745 + $0x220] sm:$0xff]
    %v1815 = vld [vmem:[%s1745 + $0x228] sm:$0xff]
    %v1816 = vld [vmem:[%s1745 + $0x230] sm:$0xff]
    %v1817 = vld [vmem:[%s1745 + $0x238] sm:$0xff]
    %v1818 = vld [vmem:[%s1745 + $0x240] sm:$0xff]
    %v1819 = vld [vmem:[%s1745 + $0x248] sm:$0xff]
    %v1820 = vld [vmem:[%s1745 + $0x250] sm:$0xff]
    %v1821 = vld [vmem:[%s1745 + $0x258] sm:$0xff]
    %v1822 = vld [vmem:[%s1745 + $0x260] sm:$0xff]
    %v1823 = vld [vmem:[%s1745 + $0x268] sm:$0xff]
    %v1824 = vld [vmem:[%s1745 + $0x270] sm:$0xff]
    %v1825 = vld [vmem:[%s1745 + $0x278] sm:$0xff]
    %v1826 = vld [vmem:[%s1745 + $0x280] sm:$0xff]
    %v1827 = vld [vmem:[%s1745 + $0x288] sm:$0xff]
    %v1828 = vld [vmem:[%s1745 + $0x290] sm:$0xff]
    %v1829 = vld [vmem:[%s1745 + $0x298] sm:$0xff]
    %v1830 = vld [vmem:[%s1745 + $0x2a0] sm:$0xff]
    %v1831 = vld [vmem:[%s1745 + $0x2a8] sm:$0xff]
    %v1832 = vld [vmem:[%s1745 + $0x2b0] sm:$0xff]
    %v1833 = vld [vmem:[%s1745 + $0x2b8] sm:$0xff]
    %v1834 = vld [vmem:[%s1745 + $0x2c0] sm:$0xff]
    %v1835 = vld [vmem:[%s1745 + $0x2c8] sm:$0xff]
    %v1836 = vld [vmem:[%s1745 + $0x2d0] sm:$0xff]
    %v1837 = vld [vmem:[%s1745 + $0x2d8] sm:$0xff]
    %v1838 = vld [vmem:[%s1745 + $0x2e0] sm:$0xff]
    %v1839 = vld [vmem:[%s1745 + $0x2e8] sm:$0xff]
    %v1840 = vld [vmem:[%s1745 + $0x2f0] sm:$0xff]
    %v1841 = vld [vmem:[%s1745 + $0x2f8] sm:$0xff]
    %s1842 = scalar_lea.vmem [#allocation5], 6
    %v1843 = vld [vmem:[%s1842] sm:$0x3f]
    %v1845 = vlaneseq
    %v1846 = vshrl.u32 %v1845, 7
    %v1847 = vsub.s32 0, %v1846
    %v1848 = vrot.slane %v1843, %v1847
    %v1849 = vlaneseq
    %v1850 = vshrl.u32 %v1849, 7
    %v1851 = vsub.s32 1, %v1850
    %v1852 = vrot.slane %v1843, %v1851
    %v1853 = vlaneseq
    %v1854 = vshrl.u32 %v1853, 7
    %v1855 = vsub.s32 2, %v1854
    %v1856 = vrot.slane %v1843, %v1855
    %v1857 = vlaneseq
    %v1858 = vshrl.u32 %v1857, 7
    %v1859 = vsub.s32 3, %v1858
    %v1860 = vrot.slane %v1843, %v1859
    %v1861 = vlaneseq
    %v1862 = vshrl.u32 %v1861, 7
    %v1863 = vsub.s32 4, %v1862
    %v1864 = vrot.slane %v1843, %v1863
    %v1865 = vlaneseq
    %v1866 = vshrl.u32 %v1865, 7
    %v1867 = vsub.s32 5, %v1866
    %v1868 = vrot.slane %v1843, %v1867
    %v1971 = vunpack.c.l.b16 %v1746
    %v1972 = vunpack.c.h.b16 %v1746
    %v1973 = vunpack.c.l.b16 %v1747
    %v1974 = vunpack.c.h.b16 %v1747
    %v1975 = vunpack.c.l.b16 %v1748
    %v1976 = vunpack.c.h.b16 %v1748
    %v1977 = vunpack.c.l.b16 %v1749
    %v1978 = vunpack.c.h.b16 %v1749
    %v1979 = vunpack.c.l.b16 %v1750
    %v1980 = vunpack.c.h.b16 %v1750
    %v1981 = vunpack.c.l.b16 %v1751
    %v1982 = vunpack.c.h.b16 %v1751
    %v1983 = vunpack.c.l.b16 %v1752
    %v1984 = vunpack.c.h.b16 %v1752
    %v1985 = vunpack.c.l.b16 %v1753
    %v1986 = vunpack.c.h.b16 %v1753
    %v1987 = vunpack.c.l.b16 %v1754
    %v1988 = vunpack.c.h.b16 %v1754
    %v1989 = vunpack.c.l.b16 %v1755
    %v1990 = vunpack.c.h.b16 %v1755
    %v1991 = vunpack.c.l.b16 %v1756
    %v1992 = vunpack.c.h.b16 %v1756
    %v1993 = vunpack.c.l.b16 %v1757
    %v1994 = vunpack.c.h.b16 %v1757
    %v1995 = vunpack.c.l.b16 %v1758
    %v1996 = vunpack.c.h.b16 %v1758
    %v1997 = vunpack.c.l.b16 %v1759
    %v1998 = vunpack.c.h.b16 %v1759
    %v1999 = vunpack.c.l.b16 %v1760
    %v2000 = vunpack.c.h.b16 %v1760
    %v2001 = vunpack.c.l.b16 %v1761
    %v2002 = vunpack.c.h.b16 %v1761
    %v2003 = vunpack.c.l.b16 %v1762
    %v2004 = vunpack.c.h.b16 %v1762
    %v2005 = vunpack.c.l.b16 %v1763
    %v2006 = vunpack.c.h.b16 %v1763
    %v2007 = vunpack.c.l.b16 %v1764
    %v2008 = vunpack.c.h.b16 %v1764
    %v2009 = vunpack.c.l.b16 %v1765
    %v2010 = vunpack.c.h.b16 %v1765
    %v2011 = vunpack.c.l.b16 %v1766
    %v2012 = vunpack.c.h.b16 %v1766
    %v2013 = vunpack.c.l.b16 %v1767
    %v2014 = vunpack.c.h.b16 %v1767
    %v2015 = vunpack.c.l.b16 %v1768
    %v2016 = vunpack.c.h.b16 %v1768
    %v2017 = vunpack.c.l.b16 %v1769
    %v2018 = vunpack.c.h.b16 %v1769
    %v2019 = vunpack.c.l.b16 %v1770
    %v2020 = vunpack.c.h.b16 %v1770
    %v2021 = vunpack.c.l.b16 %v1771
    %v2022 = vunpack.c.h.b16 %v1771
    %v2023 = vunpack.c.l.b16 %v1772
    %v2024 = vunpack.c.h.b16 %v1772
    %v2025 = vunpack.c.l.b16 %v1773
    %v2026 = vunpack.c.h.b16 %v1773
    %v2027 = vunpack.c.l.b16 %v1774
    %v2028 = vunpack.c.h.b16 %v1774
    %v2029 = vunpack.c.l.b16 %v1775
    %v2030 = vunpack.c.h.b16 %v1775
    %v2031 = vunpack.c.l.b16 %v1776
    %v2032 = vunpack.c.h.b16 %v1776
    %v2033 = vunpack.c.l.b16 %v1777
    %v2034 = vunpack.c.h.b16 %v1777
    %v2035 = vunpack.c.l.b16 %v1778
    %v2036 = vunpack.c.h.b16 %v1778
    %v2037 = vunpack.c.l.b16 %v1779
    %v2038 = vunpack.c.h.b16 %v1779
    %v2039 = vunpack.c.l.b16 %v1780
    %v2040 = vunpack.c.h.b16 %v1780
    %v2041 = vunpack.c.l.b16 %v1781
    %v2042 = vunpack.c.h.b16 %v1781
    %v2043 = vunpack.c.l.b16 %v1782
    %v2044 = vunpack.c.h.b16 %v1782
    %v2045 = vunpack.c.l.b16 %v1783
    %v2046 = vunpack.c.h.b16 %v1783
    %v2047 = vunpack.c.l.b16 %v1784
    %v2048 = vunpack.c.h.b16 %v1784
    %v2049 = vunpack.c.l.b16 %v1785
    %v2050 = vunpack.c.h.b16 %v1785
    %v2051 = vunpack.c.l.b16 %v1786
    %v2052 = vunpack.c.h.b16 %v1786
    %v2053 = vunpack.c.l.b16 %v1787
    %v2054 = vunpack.c.h.b16 %v1787
    %v2055 = vunpack.c.l.b16 %v1788
    %v2056 = vunpack.c.h.b16 %v1788
    %v2057 = vunpack.c.l.b16 %v1789
    %v2058 = vunpack.c.h.b16 %v1789
    %v2059 = vunpack.c.l.b16 %v1790
    %v2060 = vunpack.c.h.b16 %v1790
    %v2061 = vunpack.c.l.b16 %v1791
    %v2062 = vunpack.c.h.b16 %v1791
    %v2063 = vunpack.c.l.b16 %v1792
    %v2064 = vunpack.c.h.b16 %v1792
    %v2065 = vunpack.c.l.b16 %v1793
    %v2066 = vunpack.c.h.b16 %v1793
    %v2067 = vunpack.c.l.b16 %v1794
    %v2068 = vunpack.c.h.b16 %v1794
    %v2069 = vunpack.c.l.b16 %v1795
    %v2070 = vunpack.c.h.b16 %v1795
    %v2071 = vunpack.c.l.b16 %v1796
    %v2072 = vunpack.c.h.b16 %v1796
    %v2073 = vunpack.c.l.b16 %v1797
    %v2074 = vunpack.c.h.b16 %v1797
    %v2075 = vunpack.c.l.b16 %v1798
    %v2076 = vunpack.c.h.b16 %v1798
    %v2077 = vunpack.c.l.b16 %v1799
    %v2078 = vunpack.c.h.b16 %v1799
    %v2079 = vunpack.c.l.b16 %v1800
    %v2080 = vunpack.c.h.b16 %v1800
    %v2081 = vunpack.c.l.b16 %v1801
    %v2082 = vunpack.c.h.b16 %v1801
    %v2083 = vunpack.c.l.b16 %v1802
    %v2084 = vunpack.c.h.b16 %v1802
    %v2085 = vunpack.c.l.b16 %v1803
    %v2086 = vunpack.c.h.b16 %v1803
    %v2087 = vunpack.c.l.b16 %v1804
    %v2088 = vunpack.c.h.b16 %v1804
    %v2089 = vunpack.c.l.b16 %v1805
    %v2090 = vunpack.c.h.b16 %v1805
    %v2091 = vunpack.c.l.b16 %v1806
    %v2092 = vunpack.c.h.b16 %v1806
    %v2093 = vunpack.c.l.b16 %v1807
    %v2094 = vunpack.c.h.b16 %v1807
    %v2095 = vunpack.c.l.b16 %v1808
    %v2096 = vunpack.c.h.b16 %v1808
    %v2097 = vunpack.c.l.b16 %v1809
    %v2098 = vunpack.c.h.b16 %v1809
    %v2099 = vunpack.c.l.b16 %v1810
    %v2100 = vunpack.c.h.b16 %v1810
    %v2101 = vunpack.c.l.b16 %v1811
    %v2102 = vunpack.c.h.b16 %v1811
    %v2103 = vunpack.c.l.b16 %v1812
    %v2104 = vunpack.c.h.b16 %v1812
    %v2105 = vunpack.c.l.b16 %v1813
    %v2106 = vunpack.c.h.b16 %v1813
    %v2107 = vunpack.c.l.b16 %v1814
    %v2108 = vunpack.c.h.b16 %v1814
    %v2109 = vunpack.c.l.b16 %v1815
    %v2110 = vunpack.c.h.b16 %v1815
    %v2111 = vunpack.c.l.b16 %v1816
    %v2112 = vunpack.c.h.b16 %v1816
    %v2113 = vunpack.c.l.b16 %v1817
    %v2114 = vunpack.c.h.b16 %v1817
    %v2115 = vunpack.c.l.b16 %v1818
    %v2116 = vunpack.c.h.b16 %v1818
    %v2117 = vunpack.c.l.b16 %v1819
    %v2118 = vunpack.c.h.b16 %v1819
    %v2119 = vunpack.c.l.b16 %v1820
    %v2120 = vunpack.c.h.b16 %v1820
    %v2121 = vunpack.c.l.b16 %v1821
    %v2122 = vunpack.c.h.b16 %v1821
    %v2123 = vunpack.c.l.b16 %v1822
    %v2124 = vunpack.c.h.b16 %v1822
    %v2125 = vunpack.c.l.b16 %v1823
    %v2126 = vunpack.c.h.b16 %v1823
    %v2127 = vunpack.c.l.b16 %v1824
    %v2128 = vunpack.c.h.b16 %v1824
    %v2129 = vunpack.c.l.b16 %v1825
    %v2130 = vunpack.c.h.b16 %v1825
    %v2131 = vunpack.c.l.b16 %v1826
    %v2132 = vunpack.c.h.b16 %v1826
    %v2133 = vunpack.c.l.b16 %v1827
    %v2134 = vunpack.c.h.b16 %v1827
    %v2135 = vunpack.c.l.b16 %v1828
    %v2136 = vunpack.c.h.b16 %v1828
    %v2137 = vunpack.c.l.b16 %v1829
    %v2138 = vunpack.c.h.b16 %v1829
    %v2139 = vunpack.c.l.b16 %v1830
    %v2140 = vunpack.c.h.b16 %v1830
    %v2141 = vunpack.c.l.b16 %v1831
    %v2142 = vunpack.c.h.b16 %v1831
    %v2143 = vunpack.c.l.b16 %v1832
    %v2144 = vunpack.c.h.b16 %v1832
    %v2145 = vunpack.c.l.b16 %v1833
    %v2146 = vunpack.c.h.b16 %v1833
    %v2147 = vunpack.c.l.b16 %v1834
    %v2148 = vunpack.c.h.b16 %v1834
    %v2149 = vunpack.c.l.b16 %v1835
    %v2150 = vunpack.c.h.b16 %v1835
    %v2151 = vunpack.c.l.b16 %v1836
    %v2152 = vunpack.c.h.b16 %v1836
    %v2153 = vunpack.c.l.b16 %v1837
    %v2154 = vunpack.c.h.b16 %v1837
    %v2155 = vunpack.c.l.b16 %v1838
    %v2156 = vunpack.c.h.b16 %v1838
    %v2157 = vunpack.c.l.b16 %v1839
    %v2158 = vunpack.c.h.b16 %v1839
    %v2159 = vunpack.c.l.b16 %v1840
    %v2160 = vunpack.c.h.b16 %v1840
    %v2161 = vunpack.c.l.b16 %v1841
    %v2162 = vunpack.c.h.b16 %v1841
    %v2163 = vpack.c.b16 %v1977, %v1971
    %v2164 = vpack.c.b16 %v1978, %v1972
    %v2165 = vpack.c.b16 %v1979, %v1973
    %v2166 = vpack.c.b16 %v1980, %v1974
    %v2167 = vpack.c.b16 %v1981, %v1975
    %v2168 = vpack.c.b16 %v1982, %v1976
    %v2169 = vpack.c.b16 %v1989, %v1983
    %v2170 = vpack.c.b16 %v1990, %v1984
    %v2171 = vpack.c.b16 %v1991, %v1985
    %v2172 = vpack.c.b16 %v1992, %v1986
    %v2173 = vpack.c.b16 %v1993, %v1987
    %v2174 = vpack.c.b16 %v1994, %v1988
    %v2175 = vpack.c.b16 %v2001, %v1995
    %v2176 = vpack.c.b16 %v2002, %v1996
    %v2177 = vpack.c.b16 %v2003, %v1997
    %v2178 = vpack.c.b16 %v2004, %v1998
    %v2179 = vpack.c.b16 %v2005, %v1999
    %v2180 = vpack.c.b16 %v2006, %v2000
    %v2181 = vpack.c.b16 %v2013, %v2007
    %v2182 = vpack.c.b16 %v2014, %v2008
    %v2183 = vpack.c.b16 %v2015, %v2009
    %v2184 = vpack.c.b16 %v2016, %v2010
    %v2185 = vpack.c.b16 %v2017, %v2011
    %v2186 = vpack.c.b16 %v2018, %v2012
    %v2187 = vpack.c.b16 %v2025, %v2019
    %v2188 = vpack.c.b16 %v2026, %v2020
    %v2189 = vpack.c.b16 %v2027, %v2021
    %v2190 = vpack.c.b16 %v2028, %v2022
    %v2191 = vpack.c.b16 %v2029, %v2023
    %v2192 = vpack.c.b16 %v2030, %v2024
    %v2193 = vpack.c.b16 %v2037, %v2031
    %v2194 = vpack.c.b16 %v2038, %v2032
    %v2195 = vpack.c.b16 %v2039, %v2033
    %v2196 = vpack.c.b16 %v2040, %v2034
    %v2197 = vpack.c.b16 %v2041, %v2035
    %v2198 = vpack.c.b16 %v2042, %v2036
    %v2199 = vpack.c.b16 %v2049, %v2043
    %v2200 = vpack.c.b16 %v2050, %v2044
    %v2201 = vpack.c.b16 %v2051, %v2045
    %v2202 = vpack.c.b16 %v2052, %v2046
    %v2203 = vpack.c.b16 %v2053, %v2047
    %v2204 = vpack.c.b16 %v2054, %v2048
    %v2205 = vpack.c.b16 %v2061, %v2055
    %v2206 = vpack.c.b16 %v2062, %v2056
    %v2207 = vpack.c.b16 %v2063, %v2057
    %v2208 = vpack.c.b16 %v2064, %v2058
    %v2209 = vpack.c.b16 %v2065, %v2059
    %v2210 = vpack.c.b16 %v2066, %v2060
    %v2211 = vpack.c.b16 %v2073, %v2067
    %v2212 = vpack.c.b16 %v2074, %v2068
    %v2213 = vpack.c.b16 %v2075, %v2069
    %v2214 = vpack.c.b16 %v2076, %v2070
    %v2215 = vpack.c.b16 %v2077, %v2071
    %v2216 = vpack.c.b16 %v2078, %v2072
    %v2217 = vpack.c.b16 %v2085, %v2079
    %v2218 = vpack.c.b16 %v2086, %v2080
    %v2219 = vpack.c.b16 %v2087, %v2081
    %v2220 = vpack.c.b16 %v2088, %v2082
    %v2221 = vpack.c.b16 %v2089, %v2083
    %v2222 = vpack.c.b16 %v2090, %v2084
    %v2223 = vpack.c.b16 %v2097, %v2091
    %v2224 = vpack.c.b16 %v2098, %v2092
    %v2225 = vpack.c.b16 %v2099, %v2093
    %v2226 = vpack.c.b16 %v2100, %v2094
    %v2227 = vpack.c.b16 %v2101, %v2095
    %v2228 = vpack.c.b16 %v2102, %v2096
    %v2229 = vpack.c.b16 %v2109, %v2103
    %v2230 = vpack.c.b16 %v2110, %v2104
    %v2231 = vpack.c.b16 %v2111, %v2105
    %v2232 = vpack.c.b16 %v2112, %v2106
    %v2233 = vpack.c.b16 %v2113, %v2107
    %v2234 = vpack.c.b16 %v2114, %v2108
    %v2235 = vpack.c.b16 %v2121, %v2115
    %v2236 = vpack.c.b16 %v2122, %v2116
    %v2237 = vpack.c.b16 %v2123, %v2117
    %v2238 = vpack.c.b16 %v2124, %v2118
    %v2239 = vpack.c.b16 %v2125, %v2119
    %v2240 = vpack.c.b16 %v2126, %v2120
    %v2241 = vpack.c.b16 %v2133, %v2127
    %v2242 = vpack.c.b16 %v2134, %v2128
    %v2243 = vpack.c.b16 %v2135, %v2129
    %v2244 = vpack.c.b16 %v2136, %v2130
    %v2245 = vpack.c.b16 %v2137, %v2131
    %v2246 = vpack.c.b16 %v2138, %v2132
    %v2247 = vpack.c.b16 %v2145, %v2139
    %v2248 = vpack.c.b16 %v2146, %v2140
    %v2249 = vpack.c.b16 %v2147, %v2141
    %v2250 = vpack.c.b16 %v2148, %v2142
    %v2251 = vpack.c.b16 %v2149, %v2143
    %v2252 = vpack.c.b16 %v2150, %v2144
    %v2253 = vpack.c.b16 %v2157, %v2151
    %v2254 = vpack.c.b16 %v2158, %v2152
    %v2255 = vpack.c.b16 %v2159, %v2153
    %v2256 = vpack.c.b16 %v2160, %v2154
    %v2257 = vpack.c.b16 %v2161, %v2155
    %v2258 = vpack.c.b16 %v2162, %v2156
    %2355 = vmatprep.subr.bf16.mxu0 %v2164
    %2356 = vmatpush1.bf16.msra.mxu0 %v2163
    %2357 = vmatprep.subr.bf16.mxu0 %v2170
    %2358 = vmatpush1.bf16.msra.mxu0 %v2169
    %2359 = vmatprep.subr.bf16.mxu0 %v2176
    %2360 = vmatpush1.bf16.msra.mxu0 %v2175
    %2361 = vmatprep.subr.bf16.mxu0 %v2182
    %2362 = vmatpush1.bf16.msra.mxu0 %v2181
    %2363 = vmatprep.subr.bf16.mxu0 %v2188
    %2364 = vmatpush1.bf16.msra.mxu0 %v2187
    %2365 = vmatprep.subr.bf16.mxu0 %v2194
    %2366 = vmatpush1.bf16.msra.mxu0 %v2193
    %2367 = vmatprep.subr.bf16.mxu0 %v2200
    %2368 = vmatpush1.bf16.msra.mxu0 %v2199
    %2369 = vmatprep.subr.bf16.mxu0 %v2206
    %2370 = vmatpush1.bf16.msra.mxu0 %v2205
    %2371 = vmatprep.subr.bf16.mxu0 %v2212
    %2372 = vmatpush1.bf16.msra.mxu0 %v2211
    %2373 = vmatprep.subr.bf16.mxu0 %v2218
    %2374 = vmatpush1.bf16.msra.mxu0 %v2217
    %2375 = vmatprep.subr.bf16.mxu0 %v2224
    %2376 = vmatpush1.bf16.msra.mxu0 %v2223
    %2377 = vmatprep.subr.bf16.mxu0 %v2230
    %2378 = vmatpush1.bf16.msra.mxu0 %v2229
    %2379 = vmatprep.subr.bf16.mxu0 %v2236
    %2380 = vmatpush1.bf16.msra.mxu0 %v2235
    %2381 = vmatprep.subr.bf16.mxu0 %v2242
    %2382 = vmatpush1.bf16.msra.mxu0 %v2241
    %2383 = vmatprep.subr.bf16.mxu0 %v2248
    %2384 = vmatpush1.bf16.msra.mxu0 %v2247
    %2385 = vmatprep.subr.bf16.mxu0 %v2254
    %2386 = vmatpush1.bf16.msra.mxu0 %v2253
    %2387 = vmatprep.mubr.bf16.mxu0 %v1744
    %2388 = vmatmul.mubr.bf16.gmra.mrb[0].mxu0 %v1743
    %v2389 = vpop.f32.mrb[0].mxu0
    %v2390 = vadd.f32 %v1848, %v2389
    %v2391 = vpop.f32.mrb[0].mxu0
    %v2392 = vadd.f32 %v1852, %v2391
    %v2393 = vpop.f32.mrb[0].mxu0
    %v2394 = vpop.f32.mrb[0].mxu0
    %2395 = vdwg.mxu0
    %2396 = vmatprep.subr.bf16.mxu0 %v2166
    %2397 = vmatpush1.bf16.msra.mxu0 %v2165
    %2398 = vmatprep.subr.bf16.mxu0 %v2172
    %2399 = vmatpush1.bf16.msra.mxu0 %v2171
    %2400 = vmatprep.subr.bf16.mxu0 %v2178
    %2401 = vmatpush1.bf16.msra.mxu0 %v2177
    %2402 = vmatprep.subr.bf16.mxu0 %v2184
    %2403 = vmatpush1.bf16.msra.mxu0 %v2183
    %2404 = vmatprep.subr.bf16.mxu0 %v2190
    %2405 = vmatpush1.bf16.msra.mxu0 %v2189
    %2406 = vmatprep.subr.bf16.mxu0 %v2196
    %2407 = vmatpush1.bf16.msra.mxu0 %v2195
    %2408 = vmatprep.subr.bf16.mxu0 %v2202
    %2409 = vmatpush1.bf16.msra.mxu0 %v2201
    %2410 = vmatprep.subr.bf16.mxu0 %v2208
    %2411 = vmatpush1.bf16.msra.mxu0 %v2207
    %2412 = vmatprep.subr.bf16.mxu0 %v2214
    %2413 = vmatpush1.bf16.msra.mxu0 %v2213
    %2414 = vmatprep.subr.bf16.mxu0 %v2220
    %2415 = vmatpush1.bf16.msra.mxu0 %v2219
    %2416 = vmatprep.subr.bf16.mxu0 %v2226
    %2417 = vmatpush1.bf16.msra.mxu0 %v2225
    %2418 = vmatprep.subr.bf16.mxu0 %v2232
    %2419 = vmatpush1.bf16.msra.mxu0 %v2231
    %2420 = vmatprep.subr.bf16.mxu0 %v2238
    %2421 = vmatpush1.bf16.msra.mxu0 %v2237
    %2422 = vmatprep.subr.bf16.mxu0 %v2244
    %2423 = vmatpush1.bf16.msra.mxu0 %v2243
    %2424 = vmatprep.subr.bf16.mxu0 %v2250
    %2425 = vmatpush1.bf16.msra.mxu0 %v2249
    %2426 = vmatprep.subr.bf16.mxu0 %v2256
    %2427 = vmatpush1.bf16.msra.mxu0 %v2255
    %2428 = vmatprep.mubr.bf16.mxu0 %v1744
    %2429 = vmatmul.mubr.bf16.gmra.mrb[0].mxu0 %v1743
    %v2430 = vpop.f32.mrb[0].mxu0
    %v2431 = vadd.f32 %v1856, %v2430
    %v2432 = vpop.f32.mrb[0].mxu0
    %v2433 = vadd.f32 %v1860, %v2432
    %v2434 = vpop.f32.mrb[0].mxu0
    %v2435 = vpop.f32.mrb[0].mxu0
    %2436 = vdwg.mxu0
    %2437 = vmatprep.subr.bf16.mxu0 %v2168
    %2438 = vmatpush1.bf16.msra.mxu0 %v2167
    %2439 = vmatprep.subr.bf16.mxu0 %v2174
    %2440 = vmatpush1.bf16.msra.mxu0 %v2173
    %2441 = vmatprep.subr.bf16.mxu0 %v2180
    %2442 = vmatpush1.bf16.msra.mxu0 %v2179
    %2443 = vmatprep.subr.bf16.mxu0 %v2186
    %2444 = vmatpush1.bf16.msra.mxu0 %v2185
    %2445 = vmatprep.subr.bf16.mxu0 %v2192
    %2446 = vmatpush1.bf16.msra.mxu0 %v2191
    %2447 = vmatprep.subr.bf16.mxu0 %v2198
    %2448 = vmatpush1.bf16.msra.mxu0 %v2197
    %2449 = vmatprep.subr.bf16.mxu0 %v2204
    %2450 = vmatpush1.bf16.msra.mxu0 %v2203
    %2451 = vmatprep.subr.bf16.mxu0 %v2210
    %2452 = vmatpush1.bf16.msra.mxu0 %v2209
    %2453 = vmatprep.subr.bf16.mxu0 %v2216
    %2454 = vmatpush1.bf16.msra.mxu0 %v2215
    %2455 = vmatprep.subr.bf16.mxu0 %v2222
    %2456 = vmatpush1.bf16.msra.mxu0 %v2221
    %2457 = vmatprep.subr.bf16.mxu0 %v2228
    %2458 = vmatpush1.bf16.msra.mxu0 %v2227
    %2459 = vmatprep.subr.bf16.mxu0 %v2234
    %2460 = vmatpush1.bf16.msra.mxu0 %v2233
    %2461 = vmatprep.subr.bf16.mxu0 %v2240
    %2462 = vmatpush1.bf16.msra.mxu0 %v2239
    %2463 = vmatprep.subr.bf16.mxu0 %v2246
    %2464 = vmatpush1.bf16.msra.mxu0 %v2245
    %2465 = vmatprep.subr.bf16.mxu0 %v2252
    %2466 = vmatpush1.bf16.msra.mxu0 %v2251
    %2467 = vmatprep.subr.bf16.mxu0 %v2258
    %2468 = vmatpush1.bf16.msra.mxu0 %v2257
    %2469 = vmatprep.mubr.bf16.mxu0 %v1744
    %2470 = vmatmul.mubr.bf16.gmra.mrb[0].mxu0 %v1743
    %v2471 = vpop.f32.mrb[0].mxu0
    %v2472 = vadd.f32 %v1864, %v2471
    %v2473 = vpop.f32.mrb[0].mxu0
    %v2474 = vadd.f32 %v1868, %v2473
    %v2475 = vpop.f32.mrb[0].mxu0
    %v2476 = vpop.f32.mrb[0].mxu0
    %2477 = vdwg.mxu0
    %v2479 = vsel %vm824, %v2390, 0
    %v2482 = vsel %vm824, %v2431, 0
    %2484 = vmatprep.subr.mxu0 0.0
    %2485 = vmatpush1.xpose.msra.mxu0 %v2482
    %2486 = vmatprep.subr.mxu0 0.0
    %2487 = vmatpush1.xpose.msra.mxu0 0.0
    %2488 = vmatprep.subr.mxu0 0.0
    %2489 = vmatpush1.xpose.msra.mxu0 0.0
    %2490 = vmatprep.subr.mxu0 0.0
    %2491 = vmatpush1.xpose.msra.mxu0 0.0
    %2492 = vmatprep.subr.mxu0 0.0
    %2493 = vmatpush1.xpose.msra.mxu0 0.0
    %2494 = vmatprep.subr.mxu0 0.0
    %2495 = vmatpush1.xpose.msra.mxu0 0.0
    %2496 = vmatprep.subr.mxu0 0.0
    %2497 = vmatpush1.xpose.msra.mxu0 0.0
    %2498 = vmatprep.subr.mxu0 0.0
    %2499 = vmatpush1.xpose.msra.mxu0 0.0
    %2500 = vmatprep.subr.mxu0 0.0
    %2501 = vmatpush1.xpose.msra.mxu0 0.0
    %2502 = vmatprep.subr.mxu0 0.0
    %2503 = vmatpush1.xpose.msra.mxu0 0.0
    %2504 = vmatprep.subr.mxu0 0.0
    %2505 = vmatpush1.xpose.msra.mxu0 0.0
    %2506 = vmatprep.subr.mxu0 0.0
    %2507 = vmatpush1.xpose.msra.mxu0 0.0
    %2508 = vmatprep.subr.mxu0 0.0
    %2509 = vmatpush1.xpose.msra.mxu0 0.0
    %2510 = vmatprep.subr.mxu0 0.0
    %2511 = vmatpush1.xpose.msra.mxu0 0.0
    %2512 = vmatprep.subr.mxu0 0.0
    %2513 = vmatpush1.xpose.msra.mxu0 0.0
    %2514 = vmatprep.subr.mxu0 0.0
    %2515 = vmatpush1.xpose.msra.mxu0 0.0
    %2516 = vmatprep.subr.mxu0 0.0
    %2517 = vmatpush1.xpose.msra.mxu0 0.0
    %2518 = vmatprep.subr.mxu0 0.0
    %2519 = vmatpush1.xpose.msra.mxu0 0.0
    %2520 = vmatprep.subr.mxu0 0.0
    %2521 = vmatpush1.xpose.msra.mxu0 0.0
    %2522 = vmatprep.subr.mxu0 0.0
    %2523 = vmatpush1.xpose.msra.mxu0 0.0
    %2524 = vmatprep.subr.mxu0 0.0
    %2525 = vmatpush1.xpose.msra.mxu0 0.0
    %2526 = vmatprep.subr.mxu0 0.0
    %2527 = vmatpush1.xpose.msra.mxu0 0.0
    %2528 = vmatprep.subr.mxu0 0.0
    %2529 = vmatpush1.xpose.msra.mxu0 0.0
    %2530 = vmatprep.subr.mxu0 0.0
    %2531 = vmatpush1.xpose.msra.mxu0 0.0
    %2532 = vmatprep.subr.mxu0 0.0
    %2533 = vmatpush1.xpose.msra.mxu0 0.0
    %2534 = vmatprep.subr.mxu0 0.0
    %2535 = vmatpush1.xpose.msra.mxu0 0.0
    %2536 = vmatprep.subr.mxu0 0.0
    %2537 = vmatpush1.xpose.msra.mxu0 0.0
    %2538 = vmatprep.subr.mxu0 0.0
    %2539 = vmatpush1.xpose.msra.mxu0 0.0
    %2540 = vmatprep.subr.mxu0 0.0
    %2541 = vmatpush1.xpose.msra.mxu0 0.0
    %2542 = vmatprep.subr.mxu0 0.0
    %2543 = vmatpush1.xpose.msra.mxu0 0.0
    %2544 = vmatprep.subr.mxu0 0.0
    %2545 = vmatpush1.xpose.msra.mxu0 0.0
    %2546 = vmatprep.subr.mxu0 0.0
    %2547 = vmatpush1.xpose.msra.mxu0 0.0
    %2548 = vmatprep.mubr.f32.mxu0 0.0
    %2549 = vmatmul.mubr.f32.gmra.mrb[0].mxu0 %v2479
    %v2550 = vpop.f32.mrb[0].mxu0
    %v2551 = vadd.f32 0.0, %v2550
    %v2552 = vpop.f32.mrb[0].mxu0
    %2553 = vdwg.mxu0
    %v2554 = vmul.f32 %v2551, 0.125
    %v2555 = vadd.f32 %v2554, %v88
    %v2556 = vsel %vm903, %v2555, -inf
    %2557 = vmax.xlane.f32.xlu0 %v2556
    %v2558 = vpop.xlane.xlu0 %2557
    %v2559 = vsub.f32 %v2555, %v2558
    %v2560 = vmul.f32 %v2559, 1.442695
    %v2561 = vpow.pop %v2560
    %v2562 = vsel %vm903, %v2561, 0.0
    %2563 = vadd.xlane.f32.xlu0 %v2562
    %v2564 = vpop.xlane.xlu0 %2563
    %v2565 = vrcp.pop %v2564
    %v2566 = vmul.f32 %v2561, %v2565
    %v2568 = vsel %vm903, %v2566, 0
    %2570 = vmatprep.subr.mxu0 0.0
    %2571 = vmatpush1.msra.mxu0 %v2472
    %2572 = vmatprep.subr.mxu0 0.0
    %2573 = vmatpush1.msra.mxu0 0.0
    %2574 = vmatprep.subr.mxu0 0.0
    %2575 = vmatpush1.msra.mxu0 0.0
    %2576 = vmatprep.subr.mxu0 0.0
    %2577 = vmatpush1.msra.mxu0 0.0
    %2578 = vmatprep.subr.mxu0 0.0
    %2579 = vmatpush1.msra.mxu0 0.0
    %2580 = vmatprep.subr.mxu0 0.0
    %2581 = vmatpush1.msra.mxu0 0.0
    %2582 = vmatprep.subr.mxu0 0.0
    %2583 = vmatpush1.msra.mxu0 0.0
    %2584 = vmatprep.subr.mxu0 0.0
    %2585 = vmatpush1.msra.mxu0 0.0
    %2586 = vmatprep.subr.mxu0 0.0
    %2587 = vmatpush1.msra.mxu0 0.0
    %2588 = vmatprep.subr.mxu0 0.0
    %2589 = vmatpush1.msra.mxu0 0.0
    %2590 = vmatprep.subr.mxu0 0.0
    %2591 = vmatpush1.msra.mxu0 0.0
    %2592 = vmatprep.subr.mxu0 0.0
    %2593 = vmatpush1.msra.mxu0 0.0
    %2594 = vmatprep.subr.mxu0 0.0
    %2595 = vmatpush1.msra.mxu0 0.0
    %2596 = vmatprep.subr.mxu0 0.0
    %2597 = vmatpush1.msra.mxu0 0.0
    %2598 = vmatprep.subr.mxu0 0.0
    %2599 = vmatpush1.msra.mxu0 0.0
    %2600 = vmatprep.subr.mxu0 0.0
    %2601 = vmatpush1.msra.mxu0 0.0
    %2602 = vmatprep.subr.mxu0 0.0
    %2603 = vmatpush1.msra.mxu0 0.0
    %2604 = vmatprep.subr.mxu0 0.0
    %2605 = vmatpush1.msra.mxu0 0.0
    %2606 = vmatprep.subr.mxu0 0.0
    %2607 = vmatpush1.msra.mxu0 0.0
    %2608 = vmatprep.subr.mxu0 0.0
    %2609 = vmatpush1.msra.mxu0 0.0
    %2610 = vmatprep.subr.mxu0 0.0
    %2611 = vmatpush1.msra.mxu0 0.0
    %2612 = vmatprep.subr.mxu0 0.0
    %2613 = vmatpush1.msra.mxu0 0.0
    %2614 = vmatprep.subr.mxu0 0.0
    %2615 = vmatpush1.msra.mxu0 0.0
    %2616 = vmatprep.subr.mxu0 0.0
    %2617 = vmatpush1.msra.mxu0 0.0
    %2618 = vmatprep.subr.mxu0 0.0
    %2619 = vmatpush1.msra.mxu0 0.0
    %2620 = vmatprep.subr.mxu0 0.0
    %2621 = vmatpush1.msra.mxu0 0.0
    %2622 = vmatprep.subr.mxu0 0.0
    %2623 = vmatpush1.msra.mxu0 0.0
    %2624 = vmatprep.subr.mxu0 0.0
    %2625 = vmatpush1.msra.mxu0 0.0
    %2626 = vmatprep.subr.mxu0 0.0
    %2627 = vmatpush1.msra.mxu0 0.0
    %2628 = vmatprep.subr.mxu0 0.0
    %2629 = vmatpush1.msra.mxu0 0.0
    %2630 = vmatprep.subr.mxu0 0.0
    %2631 = vmatpush1.msra.mxu0 0.0
    %2632 = vmatprep.subr.mxu0 0.0
    %2633 = vmatpush1.msra.mxu0 0.0
    %2634 = vmatprep.mubr.f32.mxu0 0.0
    %2635 = vmatmul.mubr.f32.gmra.mrb[0].mxu0 %v2568
    %v2636 = vpop.f32.mrb[0].mxu0
    %v2637 = vadd.f32 0.0, %v2636
    %v2638 = vpop.f32.mrb[0].mxu0
    %2639 = vdwg.mxu0
    %2640 = vrot.lane.b32.xlu0 %v2390, 64
    %v2641 = vpop.permute.xlu0 %2640
    %2642 = vrot.lane.b32.xlu0 %v2431, 64
    %v2643 = vpop.permute.xlu0 %2642
    %v2644 = vsel %vm824, %v2641, 0
    %v2646 = vsel %vm824, %v2643, 0
    %2648 = vmatprep.subr.mxu0 0.0
    %2649 = vmatpush1.xpose.msra.mxu0 %v2646
    %2650 = vmatprep.subr.mxu0 0.0
    %2651 = vmatpush1.xpose.msra.mxu0 0.0
    %2652 = vmatprep.subr.mxu0 0.0
    %2653 = vmatpush1.xpose.msra.mxu0 0.0
    %2654 = vmatprep.subr.mxu0 0.0
    %2655 = vmatpush1.xpose.msra.mxu0 0.0
    %2656 = vmatprep.subr.mxu0 0.0
    %2657 = vmatpush1.xpose.msra.mxu0 0.0
    %2658 = vmatprep.subr.mxu0 0.0
    %2659 = vmatpush1.xpose.msra.mxu0 0.0
    %2660 = vmatprep.subr.mxu0 0.0
    %2661 = vmatpush1.xpose.msra.mxu0 0.0
    %2662 = vmatprep.subr.mxu0 0.0
    %2663 = vmatpush1.xpose.msra.mxu0 0.0
    %2664 = vmatprep.subr.mxu0 0.0
    %2665 = vmatpush1.xpose.msra.mxu0 0.0
    %2666 = vmatprep.subr.mxu0 0.0
    %2667 = vmatpush1.xpose.msra.mxu0 0.0
    %2668 = vmatprep.subr.mxu0 0.0
    %2669 = vmatpush1.xpose.msra.mxu0 0.0
    %2670 = vmatprep.subr.mxu0 0.0
    %2671 = vmatpush1.xpose.msra.mxu0 0.0
    %2672 = vmatprep.subr.mxu0 0.0
    %2673 = vmatpush1.xpose.msra.mxu0 0.0
    %2674 = vmatprep.subr.mxu0 0.0
    %2675 = vmatpush1.xpose.msra.mxu0 0.0
    %2676 = vmatprep.subr.mxu0 0.0
    %2677 = vmatpush1.xpose.msra.mxu0 0.0
    %2678 = vmatprep.subr.mxu0 0.0
    %2679 = vmatpush1.xpose.msra.mxu0 0.0
    %2680 = vmatprep.subr.mxu0 0.0
    %2681 = vmatpush1.xpose.msra.mxu0 0.0
    %2682 = vmatprep.subr.mxu0 0.0
    %2683 = vmatpush1.xpose.msra.mxu0 0.0
    %2684 = vmatprep.subr.mxu0 0.0
    %2685 = vmatpush1.xpose.msra.mxu0 0.0
    %2686 = vmatprep.subr.mxu0 0.0
    %2687 = vmatpush1.xpose.msra.mxu0 0.0
    %2688 = vmatprep.subr.mxu0 0.0
    %2689 = vmatpush1.xpose.msra.mxu0 0.0
    %2690 = vmatprep.subr.mxu0 0.0
    %2691 = vmatpush1.xpose.msra.mxu0 0.0
    %2692 = vmatprep.subr.mxu0 0.0
    %2693 = vmatpush1.xpose.msra.mxu0 0.0
    %2694 = vmatprep.subr.mxu0 0.0
    %2695 = vmatpush1.xpose.msra.mxu0 0.0
    %2696 = vmatprep.subr.mxu0 0.0
    %2697 = vmatpush1.xpose.msra.mxu0 0.0
    %2698 = vmatprep.subr.mxu0 0.0
    %2699 = vmatpush1.xpose.msra.mxu0 0.0
    %2700 = vmatprep.subr.mxu0 0.0
    %2701 = vmatpush1.xpose.msra.mxu0 0.0
    %2702 = vmatprep.subr.mxu0 0.0
    %2703 = vmatpush1.xpose.msra.mxu0 0.0
    %2704 = vmatprep.subr.mxu0 0.0
    %2705 = vmatpush1.xpose.msra.mxu0 0.0
    %2706 = vmatprep.subr.mxu0 0.0
    %2707 = vmatpush1.xpose.msra.mxu0 0.0
    %2708 = vmatprep.subr.mxu0 0.0
    %2709 = vmatpush1.xpose.msra.mxu0 0.0
    %2710 = vmatprep.subr.mxu0 0.0
    %2711 = vmatpush1.xpose.msra.mxu0 0.0
    %2712 = vmatprep.mubr.f32.mxu0 0.0
    %2713 = vmatmul.mubr.f32.gmra.mrb[0].mxu0 %v2644
    %v2714 = vpop.f32.mrb[0].mxu0
    %v2715 = vadd.f32 0.0, %v2714
    %v2716 = vpop.f32.mrb[0].mxu0
    %2717 = vdwg.mxu0
    %v2718 = vmul.f32 %v2715, 0.125
    %v2719 = vadd.f32 %v2718, %v88
    %v2720 = vsel %vm903, %v2719, -inf
    %2721 = vmax.xlane.f32.xlu0 %v2720
    %v2722 = vpop.xlane.xlu0 %2721
    %v2723 = vsub.f32 %v2719, %v2722
    %v2724 = vmul.f32 %v2723, 1.442695
    %v2725 = vpow.pop %v2724
    %v2726 = vsel %vm903, %v2725, 0.0
    %2727 = vadd.xlane.f32.xlu0 %v2726
    %v2728 = vpop.xlane.xlu0 %2727
    %v2729 = vrcp.pop %v2728
    %v2730 = vmul.f32 %v2725, %v2729
    %2732 = vrot.lane.b32.xlu0 %v2472, 64
    %v2733 = vpop.permute.xlu0 %2732
    %v2736 = vsel %vm903, %v2730, 0
    %2738 = vmatprep.subr.mxu0 0.0
    %2739 = vmatpush1.msra.mxu0 %v2733
    %2740 = vmatprep.subr.mxu0 0.0
    %2741 = vmatpush1.msra.mxu0 0.0
    %2742 = vmatprep.subr.mxu0 0.0
    %2743 = vmatpush1.msra.mxu0 0.0
    %2744 = vmatprep.subr.mxu0 0.0
    %2745 = vmatpush1.msra.mxu0 0.0
    %2746 = vmatprep.subr.mxu0 0.0
    %2747 = vmatpush1.msra.mxu0 0.0
    %2748 = vmatprep.subr.mxu0 0.0
    %2749 = vmatpush1.msra.mxu0 0.0
    %2750 = vmatprep.subr.mxu0 0.0
    %2751 = vmatpush1.msra.mxu0 0.0
    %2752 = vmatprep.subr.mxu0 0.0
    %2753 = vmatpush1.msra.mxu0 0.0
    %2754 = vmatprep.subr.mxu0 0.0
    %2755 = vmatpush1.msra.mxu0 0.0
    %2756 = vmatprep.subr.mxu0 0.0
    %2757 = vmatpush1.msra.mxu0 0.0
    %2758 = vmatprep.subr.mxu0 0.0
    %2759 = vmatpush1.msra.mxu0 0.0
    %2760 = vmatprep.subr.mxu0 0.0
    %2761 = vmatpush1.msra.mxu0 0.0
    %2762 = vmatprep.subr.mxu0 0.0
    %2763 = vmatpush1.msra.mxu0 0.0
    %2764 = vmatprep.subr.mxu0 0.0
    %2765 = vmatpush1.msra.mxu0 0.0
    %2766 = vmatprep.subr.mxu0 0.0
    %2767 = vmatpush1.msra.mxu0 0.0
    %2768 = vmatprep.subr.mxu0 0.0
    %2769 = vmatpush1.msra.mxu0 0.0
    %2770 = vmatprep.subr.mxu0 0.0
    %2771 = vmatpush1.msra.mxu0 0.0
    %2772 = vmatprep.subr.mxu0 0.0
    %2773 = vmatpush1.msra.mxu0 0.0
    %2774 = vmatprep.subr.mxu0 0.0
    %2775 = vmatpush1.msra.mxu0 0.0
    %2776 = vmatprep.subr.mxu0 0.0
    %2777 = vmatpush1.msra.mxu0 0.0
    %2778 = vmatprep.subr.mxu0 0.0
    %2779 = vmatpush1.msra.mxu0 0.0
    %2780 = vmatprep.subr.mxu0 0.0
    %2781 = vmatpush1.msra.mxu0 0.0
    %2782 = vmatprep.subr.mxu0 0.0
    %2783 = vmatpush1.msra.mxu0 0.0
    %2784 = vmatprep.subr.mxu0 0.0
    %2785 = vmatpush1.msra.mxu0 0.0
    %2786 = vmatprep.subr.mxu0 0.0
    %2787 = vmatpush1.msra.mxu0 0.0
    %2788 = vmatprep.subr.mxu0 0.0
    %2789 = vmatpush1.msra.mxu0 0.0
    %2790 = vmatprep.subr.mxu0 0.0
    %2791 = vmatpush1.msra.mxu0 0.0
    %2792 = vmatprep.subr.mxu0 0.0
    %2793 = vmatpush1.msra.mxu0 0.0
    %2794 = vmatprep.subr.mxu0 0.0
    %2795 = vmatpush1.msra.mxu0 0.0
    %2796 = vmatprep.subr.mxu0 0.0
    %2797 = vmatpush1.msra.mxu0 0.0
    %2798 = vmatprep.subr.mxu0 0.0
    %2799 = vmatpush1.msra.mxu0 0.0
    %2800 = vmatprep.subr.mxu0 0.0
    %2801 = vmatpush1.msra.mxu0 0.0
    %2802 = vmatprep.mubr.f32.mxu0 0.0
    %2803 = vmatmul.mubr.f32.gmra.mrb[0].mxu0 %v2736
    %v2804 = vpop.f32.mrb[0].mxu0
    %v2805 = vadd.f32 0.0, %v2804
    %v2806 = vpop.f32.mrb[0].mxu0
    %2807 = vdwg.mxu0
    %v2809 = vsel %vm824, %v2392, 0
    %v2812 = vsel %vm824, %v2433, 0
    %2814 = vmatprep.subr.mxu0 0.0
    %2815 = vmatpush1.xpose.msra.mxu0 %v2812
    %2816 = vmatprep.subr.mxu0 0.0
    %2817 = vmatpush1.xpose.msra.mxu0 0.0
    %2818 = vmatprep.subr.mxu0 0.0
    %2819 = vmatpush1.xpose.msra.mxu0 0.0
    %2820 = vmatprep.subr.mxu0 0.0
    %2821 = vmatpush1.xpose.msra.mxu0 0.0
    %2822 = vmatprep.subr.mxu0 0.0
    %2823 = vmatpush1.xpose.msra.mxu0 0.0
    %2824 = vmatprep.subr.mxu0 0.0
    %2825 = vmatpush1.xpose.msra.mxu0 0.0
    %2826 = vmatprep.subr.mxu0 0.0
    %2827 = vmatpush1.xpose.msra.mxu0 0.0
    %2828 = vmatprep.subr.mxu0 0.0
    %2829 = vmatpush1.xpose.msra.mxu0 0.0
    %2830 = vmatprep.subr.mxu0 0.0
    %2831 = vmatpush1.xpose.msra.mxu0 0.0
    %2832 = vmatprep.subr.mxu0 0.0
    %2833 = vmatpush1.xpose.msra.mxu0 0.0
    %2834 = vmatprep.subr.mxu0 0.0
    %2835 = vmatpush1.xpose.msra.mxu0 0.0
    %2836 = vmatprep.subr.mxu0 0.0
    %2837 = vmatpush1.xpose.msra.mxu0 0.0
    %2838 = vmatprep.subr.mxu0 0.0
    %2839 = vmatpush1.xpose.msra.mxu0 0.0
    %2840 = vmatprep.subr.mxu0 0.0
    %2841 = vmatpush1.xpose.msra.mxu0 0.0
    %2842 = vmatprep.subr.mxu0 0.0
    %2843 = vmatpush1.xpose.msra.mxu0 0.0
    %2844 = vmatprep.subr.mxu0 0.0
    %2845 = vmatpush1.xpose.msra.mxu0 0.0
    %2846 = vmatprep.subr.mxu0 0.0
    %2847 = vmatpush1.xpose.msra.mxu0 0.0
    %2848 = vmatprep.subr.mxu0 0.0
    %2849 = vmatpush1.xpose.msra.mxu0 0.0
    %2850 = vmatprep.subr.mxu0 0.0
    %2851 = vmatpush1.xpose.msra.mxu0 0.0
    %2852 = vmatprep.subr.mxu0 0.0
    %2853 = vmatpush1.xpose.msra.mxu0 0.0
    %2854 = vmatprep.subr.mxu0 0.0
    %2855 = vmatpush1.xpose.msra.mxu0 0.0
    %2856 = vmatprep.subr.mxu0 0.0
    %2857 = vmatpush1.xpose.msra.mxu0 0.0
    %2858 = vmatprep.subr.mxu0 0.0
    %2859 = vmatpush1.xpose.msra.mxu0 0.0
    %2860 = vmatprep.subr.mxu0 0.0
    %2861 = vmatpush1.xpose.msra.mxu0 0.0
    %2862 = vmatprep.subr.mxu0 0.0
    %2863 = vmatpush1.xpose.msra.mxu0 0.0
    %2864 = vmatprep.subr.mxu0 0.0
    %2865 = vmatpush1.xpose.msra.mxu0 0.0
    %2866 = vmatprep.subr.mxu0 0.0
    %2867 = vmatpush1.xpose.msra.mxu0 0.0
    %2868 = vmatprep.subr.mxu0 0.0
    %2869 = vmatpush1.xpose.msra.mxu0 0.0
    %2870 = vmatprep.subr.mxu0 0.0
    %2871 = vmatpush1.xpose.msra.mxu0 0.0
    %2872 = vmatprep.subr.mxu0 0.0
    %2873 = vmatpush1.xpose.msra.mxu0 0.0
    %2874 = vmatprep.subr.mxu0 0.0
    %2875 = vmatpush1.xpose.msra.mxu0 0.0
    %2876 = vmatprep.subr.mxu0 0.0
    %2877 = vmatpush1.xpose.msra.mxu0 0.0
    %2878 = vmatprep.mubr.f32.mxu0 0.0
    %2879 = vmatmul.mubr.f32.gmra.mrb[0].mxu0 %v2809
    %v2880 = vpop.f32.mrb[0].mxu0
    %v2881 = vadd.f32 0.0, %v2880
    %v2882 = vpop.f32.mrb[0].mxu0
    %2883 = vdwg.mxu0
    %v2884 = vmul.f32 %v2881, 0.125
    %v2885 = vadd.f32 %v2884, %v88
    %v2886 = vsel %vm903, %v2885, -inf
    %2887 = vmax.xlane.f32.xlu0 %v2886
    %v2888 = vpop.xlane.xlu0 %2887
    %v2889 = vsub.f32 %v2885, %v2888
    %v2890 = vmul.f32 %v2889, 1.442695
    %v2891 = vpow.pop %v2890
    %v2892 = vsel %vm903, %v2891, 0.0
    %2893 = vadd.xlane.f32.xlu0 %v2892
    %v2894 = vpop.xlane.xlu0 %2893
    %v2895 = vrcp.pop %v2894
    %v2896 = vmul.f32 %v2891, %v2895
    %v2898 = vsel %vm903, %v2896, 0
    %2900 = vmatprep.subr.mxu0 0.0
    %2901 = vmatpush1.msra.mxu0 %v2474
    %2902 = vmatprep.subr.mxu0 0.0
    %2903 = vmatpush1.msra.mxu0 0.0
    %2904 = vmatprep.subr.mxu0 0.0
    %2905 = vmatpush1.msra.mxu0 0.0
    %2906 = vmatprep.subr.mxu0 0.0
    %2907 = vmatpush1.msra.mxu0 0.0
    %2908 = vmatprep.subr.mxu0 0.0
    %2909 = vmatpush1.msra.mxu0 0.0
    %2910 = vmatprep.subr.mxu0 0.0
    %2911 = vmatpush1.msra.mxu0 0.0
    %2912 = vmatprep.subr.mxu0 0.0
    %2913 = vmatpush1.msra.mxu0 0.0
    %2914 = vmatprep.subr.mxu0 0.0
    %2915 = vmatpush1.msra.mxu0 0.0
    %2916 = vmatprep.subr.mxu0 0.0
    %2917 = vmatpush1.msra.mxu0 0.0
    %2918 = vmatprep.subr.mxu0 0.0
    %2919 = vmatpush1.msra.mxu0 0.0
    %2920 = vmatprep.subr.mxu0 0.0
    %2921 = vmatpush1.msra.mxu0 0.0
    %2922 = vmatprep.subr.mxu0 0.0
    %2923 = vmatpush1.msra.mxu0 0.0
    %2924 = vmatprep.subr.mxu0 0.0
    %2925 = vmatpush1.msra.mxu0 0.0
    %2926 = vmatprep.subr.mxu0 0.0
    %2927 = vmatpush1.msra.mxu0 0.0
    %2928 = vmatprep.subr.mxu0 0.0
    %2929 = vmatpush1.msra.mxu0 0.0
    %2930 = vmatprep.subr.mxu0 0.0
    %2931 = vmatpush1.msra.mxu0 0.0
    %2932 = vmatprep.subr.mxu0 0.0
    %2933 = vmatpush1.msra.mxu0 0.0
    %2934 = vmatprep.subr.mxu0 0.0
    %2935 = vmatpush1.msra.mxu0 0.0
    %2936 = vmatprep.subr.mxu0 0.0
    %2937 = vmatpush1.msra.mxu0 0.0
    %2938 = vmatprep.subr.mxu0 0.0
    %2939 = vmatpush1.msra.mxu0 0.0
    %2940 = vmatprep.subr.mxu0 0.0
    %2941 = vmatpush1.msra.mxu0 0.0
    %2942 = vmatprep.subr.mxu0 0.0
    %2943 = vmatpush1.msra.mxu0 0.0
    %2944 = vmatprep.subr.mxu0 0.0
    %2945 = vmatpush1.msra.mxu0 0.0
    %2946 = vmatprep.subr.mxu0 0.0
    %2947 = vmatpush1.msra.mxu0 0.0
    %2948 = vmatprep.subr.mxu0 0.0
    %2949 = vmatpush1.msra.mxu0 0.0
    %2950 = vmatprep.subr.mxu0 0.0
    %2951 = vmatpush1.msra.mxu0 0.0
    %2952 = vmatprep.subr.mxu0 0.0
    %2953 = vmatpush1.msra.mxu0 0.0
    %2954 = vmatprep.subr.mxu0 0.0
    %2955 = vmatpush1.msra.mxu0 0.0
    %2956 = vmatprep.subr.mxu0 0.0
    %2957 = vmatpush1.msra.mxu0 0.0
    %2958 = vmatprep.subr.mxu0 0.0
    %2959 = vmatpush1.msra.mxu0 0.0
    %2960 = vmatprep.subr.mxu0 0.0
    %2961 = vmatpush1.msra.mxu0 0.0
    %2962 = vmatprep.subr.mxu0 0.0
    %2963 = vmatpush1.msra.mxu0 0.0
    %2964 = vmatprep.mubr.f32.mxu0 0.0
    %2965 = vmatmul.mubr.f32.gmra.mrb[0].mxu0 %v2898
    %v2966 = vpop.f32.mrb[0].mxu0
    %v2967 = vadd.f32 0.0, %v2966
    %v2968 = vpop.f32.mrb[0].mxu0
    %2969 = vdwg.mxu0
    %2970 = vrot.lane.b32.xlu0 %v2392, 64
    %v2971 = vpop.permute.xlu0 %2970
    %2972 = vrot.lane.b32.xlu0 %v2433, 64
    %v2973 = vpop.permute.xlu0 %2972
    %v2974 = vsel %vm824, %v2971, 0
    %v2976 = vsel %vm824, %v2973, 0
    %2978 = vmatprep.subr.mxu0 0.0
    %2979 = vmatpush1.xpose.msra.mxu0 %v2976
    %2980 = vmatprep.subr.mxu0 0.0
    %2981 = vmatpush1.xpose.msra.mxu0 0.0
    %2982 = vmatprep.subr.mxu0 0.0
    %2983 = vmatpush1.xpose.msra.mxu0 0.0
    %2984 = vmatprep.subr.mxu0 0.0
    %2985 = vmatpush1.xpose.msra.mxu0 0.0
    %2986 = vmatprep.subr.mxu0 0.0
    %2987 = vmatpush1.xpose.msra.mxu0 0.0
    %2988 = vmatprep.subr.mxu0 0.0
    %2989 = vmatpush1.xpose.msra.mxu0 0.0
    %2990 = vmatprep.subr.mxu0 0.0
    %2991 = vmatpush1.xpose.msra.mxu0 0.0
    %2992 = vmatprep.subr.mxu0 0.0
    %2993 = vmatpush1.xpose.msra.mxu0 0.0
    %2994 = vmatprep.subr.mxu0 0.0
    %2995 = vmatpush1.xpose.msra.mxu0 0.0
    %2996 = vmatprep.subr.mxu0 0.0
    %2997 = vmatpush1.xpose.msra.mxu0 0.0
    %2998 = vmatprep.subr.mxu0 0.0
    %2999 = vmatpush1.xpose.msra.mxu0 0.0
    %3000 = vmatprep.subr.mxu0 0.0
    %3001 = vmatpush1.xpose.msra.mxu0 0.0
    %3002 = vmatprep.subr.mxu0 0.0
    %3003 = vmatpush1.xpose.msra.mxu0 0.0
    %3004 = vmatprep.subr.mxu0 0.0
    %3005 = vmatpush1.xpose.msra.mxu0 0.0
    %3006 = vmatprep.subr.mxu0 0.0
    %3007 = vmatpush1.xpose.msra.mxu0 0.0
    %3008 = vmatprep.subr.mxu0 0.0
    %3009 = vmatpush1.xpose.msra.mxu0 0.0
    %3010 = vmatprep.subr.mxu0 0.0
    %3011 = vmatpush1.xpose.msra.mxu0 0.0
    %3012 = vmatprep.subr.mxu0 0.0
    %3013 = vmatpush1.xpose.msra.mxu0 0.0
    %3014 = vmatprep.subr.mxu0 0.0
    %3015 = vmatpush1.xpose.msra.mxu0 0.0
    %3016 = vmatprep.subr.mxu0 0.0
    %3017 = vmatpush1.xpose.msra.mxu0 0.0
    %3018 = vmatprep.subr.mxu0 0.0
    %3019 = vmatpush1.xpose.msra.mxu0 0.0
    %3020 = vmatprep.subr.mxu0 0.0
    %3021 = vmatpush1.xpose.msra.mxu0 0.0
    %3022 = vmatprep.subr.mxu0 0.0
    %3023 = vmatpush1.xpose.msra.mxu0 0.0
    %3024 = vmatprep.subr.mxu0 0.0
    %3025 = vmatpush1.xpose.msra.mxu0 0.0
    %3026 = vmatprep.subr.mxu0 0.0
    %3027 = vmatpush1.xpose.msra.mxu0 0.0
    %3028 = vmatprep.subr.mxu0 0.0
    %3029 = vmatpush1.xpose.msra.mxu0 0.0
    %3030 = vmatprep.subr.mxu0 0.0
    %3031 = vmatpush1.xpose.msra.mxu0 0.0
    %3032 = vmatprep.subr.mxu0 0.0
    %3033 = vmatpush1.xpose.msra.mxu0 0.0
    %3034 = vmatprep.subr.mxu0 0.0
    %3035 = vmatpush1.xpose.msra.mxu0 0.0
    %3036 = vmatprep.subr.mxu0 0.0
    %3037 = vmatpush1.xpose.msra.mxu0 0.0
    %3038 = vmatprep.subr.mxu0 0.0
    %3039 = vmatpush1.xpose.msra.mxu0 0.0
    %3040 = vmatprep.subr.mxu0 0.0
    %3041 = vmatpush1.xpose.msra.mxu0 0.0
    %3042 = vmatprep.mubr.f32.mxu0 0.0
    %3043 = vmatmul.mubr.f32.gmra.mrb[0].mxu0 %v2974
    %v3044 = vpop.f32.mrb[0].mxu0
    %v3045 = vadd.f32 0.0, %v3044
    %v3046 = vpop.f32.mrb[0].mxu0
    %3047 = vdwg.mxu0
    %v3048 = vmul.f32 %v3045, 0.125
    %v3049 = vadd.f32 %v3048, %v88
    %v3050 = vsel %vm903, %v3049, -inf
    %3051 = vmax.xlane.f32.xlu0 %v3050
    %v3052 = vpop.xlane.xlu0 %3051
    %v3053 = vsub.f32 %v3049, %v3052
    %v3054 = vmul.f32 %v3053, 1.442695
    %v3055 = vpow.pop %v3054
    %v3056 = vsel %vm903, %v3055, 0.0
    %3057 = vadd.xlane.f32.xlu0 %v3056
    %v3058 = vpop.xlane.xlu0 %3057
    %v3059 = vrcp.pop %v3058
    %v3060 = vmul.f32 %v3055, %v3059
    %3062 = vrot.lane.b32.xlu0 %v2474, 64
    %v3063 = vpop.permute.xlu0 %3062
    %v3066 = vsel %vm903, %v3060, 0
    %3068 = vmatprep.subr.mxu0 0.0
    %3069 = vmatpush1.msra.mxu0 %v3063
    %3070 = vmatprep.subr.mxu0 0.0
    %3071 = vmatpush1.msra.mxu0 0.0
    %3072 = vmatprep.subr.mxu0 0.0
    %3073 = vmatpush1.msra.mxu0 0.0
    %3074 = vmatprep.subr.mxu0 0.0
    %3075 = vmatpush1.msra.mxu0 0.0
    %3076 = vmatprep.subr.mxu0 0.0
    %3077 = vmatpush1.msra.mxu0 0.0
    %3078 = vmatprep.subr.mxu0 0.0
    %3079 = vmatpush1.msra.mxu0 0.0
    %3080 = vmatprep.subr.mxu0 0.0
    %3081 = vmatpush1.msra.mxu0 0.0
    %3082 = vmatprep.subr.mxu0 0.0
    %3083 = vmatpush1.msra.mxu0 0.0
    %3084 = vmatprep.subr.mxu0 0.0
    %3085 = vmatpush1.msra.mxu0 0.0
    %3086 = vmatprep.subr.mxu0 0.0
    %3087 = vmatpush1.msra.mxu0 0.0
    %3088 = vmatprep.subr.mxu0 0.0
    %3089 = vmatpush1.msra.mxu0 0.0
    %3090 = vmatprep.subr.mxu0 0.0
    %3091 = vmatpush1.msra.mxu0 0.0
    %3092 = vmatprep.subr.mxu0 0.0
    %3093 = vmatpush1.msra.mxu0 0.0
    %3094 = vmatprep.subr.mxu0 0.0
    %3095 = vmatpush1.msra.mxu0 0.0
    %3096 = vmatprep.subr.mxu0 0.0
    %3097 = vmatpush1.msra.mxu0 0.0
    %3098 = vmatprep.subr.mxu0 0.0
    %3099 = vmatpush1.msra.mxu0 0.0
    %3100 = vmatprep.subr.mxu0 0.0
    %3101 = vmatpush1.msra.mxu0 0.0
    %3102 = vmatprep.subr.mxu0 0.0
    %3103 = vmatpush1.msra.mxu0 0.0
    %3104 = vmatprep.subr.mxu0 0.0
    %3105 = vmatpush1.msra.mxu0 0.0
    %3106 = vmatprep.subr.mxu0 0.0
    %3107 = vmatpush1.msra.mxu0 0.0
    %3108 = vmatprep.subr.mxu0 0.0
    %3109 = vmatpush1.msra.mxu0 0.0
    %3110 = vmatprep.subr.mxu0 0.0
    %3111 = vmatpush1.msra.mxu0 0.0
    %3112 = vmatprep.subr.mxu0 0.0
    %3113 = vmatpush1.msra.mxu0 0.0
    %3114 = vmatprep.subr.mxu0 0.0
    %3115 = vmatpush1.msra.mxu0 0.0
    %3116 = vmatprep.subr.mxu0 0.0
    %3117 = vmatpush1.msra.mxu0 0.0
    %3118 = vmatprep.subr.mxu0 0.0
    %3119 = vmatpush1.msra.mxu0 0.0
    %3120 = vmatprep.subr.mxu0 0.0
    %3121 = vmatpush1.msra.mxu0 0.0
    %3122 = vmatprep.subr.mxu0 0.0
    %3123 = vmatpush1.msra.mxu0 0.0
    %3124 = vmatprep.subr.mxu0 0.0
    %3125 = vmatpush1.msra.mxu0 0.0
    %3126 = vmatprep.subr.mxu0 0.0
    %3127 = vmatpush1.msra.mxu0 0.0
    %3128 = vmatprep.subr.mxu0 0.0
    %3129 = vmatpush1.msra.mxu0 0.0
    %3130 = vmatprep.subr.mxu0 0.0
    %3131 = vmatpush1.msra.mxu0 0.0
    %3132 = vmatprep.mubr.f32.mxu0 0.0
    %3133 = vmatmul.mubr.f32.gmra.mrb[0].mxu0 %v3066
    %v3134 = vpop.f32.mrb[0].mxu0
    %v3135 = vadd.f32 0.0, %v3134
    %v3136 = vpop.f32.mrb[0].mxu0
    %3137 = vdwg.mxu0
    %3139 = vrot.lane.b32.xlu0 %v2805, 64
    %v3140 = vpop.permute.xlu0 %3139
    %3143 = vrot.lane.b32.xlu0 %v3135, 64
    %v3144 = vpop.permute.xlu0 %3143
    %v3146 = vsel %vm824, %v2637, %v3140
    %v3147 = vsel %vm824, %v2967, %v3144
    %v3148 = vpack.c.bf16 %v3146, %v3146
    %v3149 = vpack.c.bf16 %v3147, %v3147
    %s3150 = scalar_lea.vmem [#allocation7], 256
    %v3151 = vld [vmem:[%s3150] sm:$0xff]
    %v3152 = vld [vmem:[%s3150 + $0x8] sm:$0xff]
    %v3153 = vld [vmem:[%s3150 + $0x10] sm:$0xff]
    %v3154 = vld [vmem:[%s3150 + $0x18] sm:$0xff]
    %v3155 = vld [vmem:[%s3150 + $0x20] sm:$0xff]
    %v3156 = vld [vmem:[%s3150 + $0x28] sm:$0xff]
    %v3157 = vld [vmem:[%s3150 + $0x30] sm:$0xff]
    %v3158 = vld [vmem:[%s3150 + $0x38] sm:$0xff]
    %v3159 = vld [vmem:[%s3150 + $0x40] sm:$0xff]
    %v3160 = vld [vmem:[%s3150 + $0x48] sm:$0xff]
    %v3161 = vld [vmem:[%s3150 + $0x50] sm:$0xff]
    %v3162 = vld [vmem:[%s3150 + $0x58] sm:$0xff]
    %v3163 = vld [vmem:[%s3150 + $0x60] sm:$0xff]
    %v3164 = vld [vmem:[%s3150 + $0x68] sm:$0xff]
    %v3165 = vld [vmem:[%s3150 + $0x70] sm:$0xff]
    %v3166 = vld [vmem:[%s3150 + $0x78] sm:$0xff]
    %v3167 = vld [vmem:[%s3150 + $0x80] sm:$0xff]
    %v3168 = vld [vmem:[%s3150 + $0x88] sm:$0xff]
    %v3169 = vld [vmem:[%s3150 + $0x90] sm:$0xff]
    %v3170 = vld [vmem:[%s3150 + $0x98] sm:$0xff]
    %v3171 = vld [vmem:[%s3150 + $0xa0] sm:$0xff]
    %v3172 = vld [vmem:[%s3150 + $0xa8] sm:$0xff]
    %v3173 = vld [vmem:[%s3150 + $0xb0] sm:$0xff]
    %v3174 = vld [vmem:[%s3150 + $0xb8] sm:$0xff]
    %v3175 = vld [vmem:[%s3150 + $0xc0] sm:$0xff]
    %v3176 = vld [vmem:[%s3150 + $0xc8] sm:$0xff]
    %v3177 = vld [vmem:[%s3150 + $0xd0] sm:$0xff]
    %v3178 = vld [vmem:[%s3150 + $0xd8] sm:$0xff]
    %v3179 = vld [vmem:[%s3150 + $0xe0] sm:$0xff]
    %v3180 = vld [vmem:[%s3150 + $0xe8] sm:$0xff]
    %v3181 = vld [vmem:[%s3150 + $0xf0] sm:$0xff]
    %v3182 = vld [vmem:[%s3150 + $0xf8] sm:$0xff]
    %s3183 = scalar_lea.vmem [#allocation8], 2
    %v3184 = vld [vmem:[%s3183] sm:$0x3]
    %v3186 = vlaneseq
    %v3187 = vshrl.u32 %v3186, 7
    %v3188 = vsub.s32 0, %v3187
    %v3189 = vrot.slane %v3184, %v3188
    %v3190 = vlaneseq
    %v3191 = vshrl.u32 %v3190, 7
    %v3192 = vsub.s32 1, %v3191
    %v3193 = vrot.slane %v3184, %v3192
    %v3228 = vunpack.c.l.b16 %v3151
    %v3229 = vunpack.c.h.b16 %v3151
    %v3230 = vunpack.c.l.b16 %v3152
    %v3231 = vunpack.c.h.b16 %v3152
    %v3232 = vunpack.c.l.b16 %v3153
    %v3233 = vunpack.c.h.b16 %v3153
    %v3234 = vunpack.c.l.b16 %v3154
    %v3235 = vunpack.c.h.b16 %v3154
    %v3236 = vunpack.c.l.b16 %v3155
    %v3237 = vunpack.c.h.b16 %v3155
    %v3238 = vunpack.c.l.b16 %v3156
    %v3239 = vunpack.c.h.b16 %v3156
    %v3240 = vunpack.c.l.b16 %v3157
    %v3241 = vunpack.c.h.b16 %v3157
    %v3242 = vunpack.c.l.b16 %v3158
    %v3243 = vunpack.c.h.b16 %v3158
    %v3244 = vunpack.c.l.b16 %v3159
    %v3245 = vunpack.c.h.b16 %v3159
    %v3246 = vunpack.c.l.b16 %v3160
    %v3247 = vunpack.c.h.b16 %v3160
    %v3248 = vunpack.c.l.b16 %v3161
    %v3249 = vunpack.c.h.b16 %v3161
    %v3250 = vunpack.c.l.b16 %v3162
    %v3251 = vunpack.c.h.b16 %v3162
    %v3252 = vunpack.c.l.b16 %v3163
    %v3253 = vunpack.c.h.b16 %v3163
    %v3254 = vunpack.c.l.b16 %v3164
    %v3255 = vunpack.c.h.b16 %v3164
    %v3256 = vunpack.c.l.b16 %v3165
    %v3257 = vunpack.c.h.b16 %v3165
    %v3258 = vunpack.c.l.b16 %v3166
    %v3259 = vunpack.c.h.b16 %v3166
    %v3260 = vunpack.c.l.b16 %v3167
    %v3261 = vunpack.c.h.b16 %v3167
    %v3262 = vunpack.c.l.b16 %v3168
    %v3263 = vunpack.c.h.b16 %v3168
    %v3264 = vunpack.c.l.b16 %v3169
    %v3265 = vunpack.c.h.b16 %v3169
    %v3266 = vunpack.c.l.b16 %v3170
    %v3267 = vunpack.c.h.b16 %v3170
    %v3268 = vunpack.c.l.b16 %v3171
    %v3269 = vunpack.c.h.b16 %v3171
    %v3270 = vunpack.c.l.b16 %v3172
    %v3271 = vunpack.c.h.b16 %v3172
    %v3272 = vunpack.c.l.b16 %v3173
    %v3273 = vunpack.c.h.b16 %v3173
    %v3274 = vunpack.c.l.b16 %v3174
    %v3275 = vunpack.c.h.b16 %v3174
    %v3276 = vunpack.c.l.b16 %v3175
    %v3277 = vunpack.c.h.b16 %v3175
    %v3278 = vunpack.c.l.b16 %v3176
    %v3279 = vunpack.c.h.b16 %v3176
    %v3280 = vunpack.c.l.b16 %v3177
    %v3281 = vunpack.c.h.b16 %v3177
    %v3282 = vunpack.c.l.b16 %v3178
    %v3283 = vunpack.c.h.b16 %v3178
    %v3284 = vunpack.c.l.b16 %v3179
    %v3285 = vunpack.c.h.b16 %v3179
    %v3286 = vunpack.c.l.b16 %v3180
    %v3287 = vunpack.c.h.b16 %v3180
    %v3288 = vunpack.c.l.b16 %v3181
    %v3289 = vunpack.c.h.b16 %v3181
    %v3290 = vunpack.c.l.b16 %v3182
    %v3291 = vunpack.c.h.b16 %v3182
    %v3292 = vpack.c.b16 %v3230, %v3228
    %v3293 = vpack.c.b16 %v3231, %v3229
    %v3294 = vpack.c.b16 %v3234, %v3232
    %v3295 = vpack.c.b16 %v3235, %v3233
    %v3296 = vpack.c.b16 %v3238, %v3236
    %v3297 = vpack.c.b16 %v3239, %v3237
    %v3298 = vpack.c.b16 %v3242, %v3240
    %v3299 = vpack.c.b16 %v3243, %v3241
    %v3300 = vpack.c.b16 %v3246, %v3244
    %v3301 = vpack.c.b16 %v3247, %v3245
    %v3302 = vpack.c.b16 %v3250, %v3248
    %v3303 = vpack.c.b16 %v3251, %v3249
    %v3304 = vpack.c.b16 %v3254, %v3252
    %v3305 = vpack.c.b16 %v3255, %v3253
    %v3306 = vpack.c.b16 %v3258, %v3256
    %v3307 = vpack.c.b16 %v3259, %v3257
    %v3308 = vpack.c.b16 %v3262, %v3260
    %v3309 = vpack.c.b16 %v3263, %v3261
    %v3310 = vpack.c.b16 %v3266, %v3264
    %v3311 = vpack.c.b16 %v3267, %v3265
    %v3312 = vpack.c.b16 %v3270, %v3268
    %v3313 = vpack.c.b16 %v3271, %v3269
    %v3314 = vpack.c.b16 %v3274, %v3272
    %v3315 = vpack.c.b16 %v3275, %v3273
    %v3316 = vpack.c.b16 %v3278, %v3276
    %v3317 = vpack.c.b16 %v3279, %v3277
    %v3318 = vpack.c.b16 %v3282, %v3280
    %v3319 = vpack.c.b16 %v3283, %v3281
    %v3320 = vpack.c.b16 %v3286, %v3284
    %v3321 = vpack.c.b16 %v3287, %v3285
    %v3322 = vpack.c.b16 %v3290, %v3288
    %v3323 = vpack.c.b16 %v3291, %v3289
    %3356 = vmatprep.subr.bf16.mxu0 %v3293
    %3357 = vmatpush1.bf16.msra.mxu0 %v3292
    %3358 = vmatprep.subr.bf16.mxu0 %v3295
    %3359 = vmatpush1.bf16.msra.mxu0 %v3294
    %3360 = vmatprep.subr.bf16.mxu0 %v3297
    %3361 = vmatpush1.bf16.msra.mxu0 %v3296
    %3362 = vmatprep.subr.bf16.mxu0 %v3299
    %3363 = vmatpush1.bf16.msra.mxu0 %v3298
    %3364 = vmatprep.subr.bf16.mxu0 %v3301
    %3365 = vmatpush1.bf16.msra.mxu0 %v3300
    %3366 = vmatprep.subr.bf16.mxu0 %v3303
    %3367 = vmatpush1.bf16.msra.mxu0 %v3302
    %3368 = vmatprep.subr.bf16.mxu0 %v3305
    %3369 = vmatpush1.bf16.msra.mxu0 %v3304
    %3370 = vmatprep.subr.bf16.mxu0 %v3307
    %3371 = vmatpush1.bf16.msra.mxu0 %v3306
    %3372 = vmatprep.subr.bf16.mxu0 %v3309
    %3373 = vmatpush1.bf16.msra.mxu0 %v3308
    %3374 = vmatprep.subr.bf16.mxu0 %v3311
    %3375 = vmatpush1.bf16.msra.mxu0 %v3310
    %3376 = vmatprep.subr.bf16.mxu0 %v3313
    %3377 = vmatpush1.bf16.msra.mxu0 %v3312
    %3378 = vmatprep.subr.bf16.mxu0 %v3315
    %3379 = vmatpush1.bf16.msra.mxu0 %v3314
    %3380 = vmatprep.subr.bf16.mxu0 %v3317
    %3381 = vmatpush1.bf16.msra.mxu0 %v3316
    %3382 = vmatprep.subr.bf16.mxu0 %v3319
    %3383 = vmatpush1.bf16.msra.mxu0 %v3318
    %3384 = vmatprep.subr.bf16.mxu0 %v3321
    %3385 = vmatpush1.bf16.msra.mxu0 %v3320
    %3386 = vmatprep.subr.bf16.mxu0 %v3323
    %3387 = vmatpush1.bf16.msra.mxu0 %v3322
    %3388 = vmatprep.mubr.bf16.mxu0 %v3149
    %3389 = vmatmul.mubr.bf16.gmra.mrb[0].mxu0 %v3148
    %v3390 = vpop.f32.mrb[0].mxu0
    %v3391 = vadd.f32 %v3189, %v3390
    %v3392 = vpop.f32.mrb[0].mxu0
    %v3393 = vadd.f32 %v3193, %v3392
    %v3394 = vpop.f32.mrb[0].mxu0
    %v3395 = vpop.f32.mrb[0].mxu0
    %3396 = vdwg.mxu0
    %v3397 = vpack.c.bf16 %v3391, %v3391
    %v3398 = vpack.c.bf16 %v3393, %v3393
    %s3399 = scalar_lea.vmem [#allocation2], 1536
    %v3400 = vld [vmem:[%s3399] sm:$0xff]
    %v3401 = vld [vmem:[%s3399 + $0x8] sm:$0xff]
    %v3402 = vld [vmem:[%s3399 + $0x10] sm:$0xff]
    %v3403 = vld [vmem:[%s3399 + $0x18] sm:$0xff]
    %v3404 = vld [vmem:[%s3399 + $0x20] sm:$0xff]
    %v3405 = vld [vmem:[%s3399 + $0x28] sm:$0xff]
    %v3406 = vld [vmem:[%s3399 + $0x30] sm:$0xff]
    %v3407 = vld [vmem:[%s3399 + $0x38] sm:$0xff]
    %v3408 = vld [vmem:[%s3399 + $0x40] sm:$0xff]
    %v3409 = vld [vmem:[%s3399 + $0x48] sm:$0xff]
    %v3410 = vld [vmem:[%s3399 + $0x50] sm:$0xff]
    %v3411 = vld [vmem:[%s3399 + $0x58] sm:$0xff]
    %v3412 = vld [vmem:[%s3399 + $0x60] sm:$0xff]
    %v3413 = vld [vmem:[%s3399 + $0x68] sm:$0xff]
    %v3414 = vld [vmem:[%s3399 + $0x70] sm:$0xff]
    %v3415 = vld [vmem:[%s3399 + $0x78] sm:$0xff]
    %v3416 = vld [vmem:[%s3399 + $0x80] sm:$0xff]
    %v3417 = vld [vmem:[%s3399 + $0x88] sm:$0xff]
    %v3418 = vld [vmem:[%s3399 + $0x90] sm:$0xff]
    %v3419 = vld [vmem:[%s3399 + $0x98] sm:$0xff]
    %v3420 = vld [vmem:[%s3399 + $0xa0] sm:$0xff]
    %v3421 = vld [vmem:[%s3399 + $0xa8] sm:$0xff]
    %v3422 = vld [vmem:[%s3399 + $0xb0] sm:$0xff]
    %v3423 = vld [vmem:[%s3399 + $0xb8] sm:$0xff]
    %v3424 = vld [vmem:[%s3399 + $0xc0] sm:$0xff]
    %v3425 = vld [vmem:[%s3399 + $0xc8] sm:$0xff]
    %v3426 = vld [vmem:[%s3399 + $0xd0] sm:$0xff]
    %v3427 = vld [vmem:[%s3399 + $0xd8] sm:$0xff]
    %v3428 = vld [vmem:[%s3399 + $0xe0] sm:$0xff]
    %v3429 = vld [vmem:[%s3399 + $0xe8] sm:$0xff]
    %v3430 = vld [vmem:[%s3399 + $0xf0] sm:$0xff]
    %v3431 = vld [vmem:[%s3399 + $0xf8] sm:$0xff]
    %v3432 = vld [vmem:[%s3399 + $0x100] sm:$0xff]
    %v3433 = vld [vmem:[%s3399 + $0x108] sm:$0xff]
    %v3434 = vld [vmem:[%s3399 + $0x110] sm:$0xff]
    %v3435 = vld [vmem:[%s3399 + $0x118] sm:$0xff]
    %v3436 = vld [vmem:[%s3399 + $0x120] sm:$0xff]
    %v3437 = vld [vmem:[%s3399 + $0x128] sm:$0xff]
    %v3438 = vld [vmem:[%s3399 + $0x130] sm:$0xff]
    %v3439 = vld [vmem:[%s3399 + $0x138] sm:$0xff]
    %v3440 = vld [vmem:[%s3399 + $0x140] sm:$0xff]
    %v3441 = vld [vmem:[%s3399 + $0x148] sm:$0xff]
    %v3442 = vld [vmem:[%s3399 + $0x150] sm:$0xff]
    %v3443 = vld [vmem:[%s3399 + $0x158] sm:$0xff]
    %v3444 = vld [vmem:[%s3399 + $0x160] sm:$0xff]
    %v3445 = vld [vmem:[%s3399 + $0x168] sm:$0xff]
    %v3446 = vld [vmem:[%s3399 + $0x170] sm:$0xff]
    %v3447 = vld [vmem:[%s3399 + $0x178] sm:$0xff]
    %v3448 = vld [vmem:[%s3399 + $0x180] sm:$0xff]
    %v3449 = vld [vmem:[%s3399 + $0x188] sm:$0xff]
    %v3450 = vld [vmem:[%s3399 + $0x190] sm:$0xff]
    %v3451 = vld [vmem:[%s3399 + $0x198] sm:$0xff]
    %v3452 = vld [vmem:[%s3399 + $0x1a0] sm:$0xff]
    %v3453 = vld [vmem:[%s3399 + $0x1a8] sm:$0xff]
    %v3454 = vld [vmem:[%s3399 + $0x1b0] sm:$0xff]
    %v3455 = vld [vmem:[%s3399 + $0x1b8] sm:$0xff]
    %v3456 = vld [vmem:[%s3399 + $0x1c0] sm:$0xff]
    %v3457 = vld [vmem:[%s3399 + $0x1c8] sm:$0xff]
    %v3458 = vld [vmem:[%s3399 + $0x1d0] sm:$0xff]
    %v3459 = vld [vmem:[%s3399 + $0x1d8] sm:$0xff]
    %v3460 = vld [vmem:[%s3399 + $0x1e0] sm:$0xff]
    %v3461 = vld [vmem:[%s3399 + $0x1e8] sm:$0xff]
    %v3462 = vld [vmem:[%s3399 + $0x1f0] sm:$0xff]
    %v3463 = vld [vmem:[%s3399 + $0x1f8] sm:$0xff]
    %v3464 = vld [vmem:[%s3399 + $0x200] sm:$0xff]
    %v3465 = vld [vmem:[%s3399 + $0x208] sm:$0xff]
    %v3466 = vld [vmem:[%s3399 + $0x210] sm:$0xff]
    %v3467 = vld [vmem:[%s3399 + $0x218] sm:$0xff]
    %v3468 = vld [vmem:[%s3399 + $0x220] sm:$0xff]
    %v3469 = vld [vmem:[%s3399 + $0x228] sm:$0xff]
    %v3470 = vld [vmem:[%s3399 + $0x230] sm:$0xff]
    %v3471 = vld [vmem:[%s3399 + $0x238] sm:$0xff]
    %v3472 = vld [vmem:[%s3399 + $0x240] sm:$0xff]
    %v3473 = vld [vmem:[%s3399 + $0x248] sm:$0xff]
    %v3474 = vld [vmem:[%s3399 + $0x250] sm:$0xff]
    %v3475 = vld [vmem:[%s3399 + $0x258] sm:$0xff]
    %v3476 = vld [vmem:[%s3399 + $0x260] sm:$0xff]
    %v3477 = vld [vmem:[%s3399 + $0x268] sm:$0xff]
    %v3478 = vld [vmem:[%s3399 + $0x270] sm:$0xff]
    %v3479 = vld [vmem:[%s3399 + $0x278] sm:$0xff]
    %v3480 = vld [vmem:[%s3399 + $0x280] sm:$0xff]
    %v3481 = vld [vmem:[%s3399 + $0x288] sm:$0xff]
    %v3482 = vld [vmem:[%s3399 + $0x290] sm:$0xff]
    %v3483 = vld [vmem:[%s3399 + $0x298] sm:$0xff]
    %v3484 = vld [vmem:[%s3399 + $0x2a0] sm:$0xff]
    %v3485 = vld [vmem:[%s3399 + $0x2a8] sm:$0xff]
    %v3486 = vld [vmem:[%s3399 + $0x2b0] sm:$0xff]
    %v3487 = vld [vmem:[%s3399 + $0x2b8] sm:$0xff]
    %v3488 = vld [vmem:[%s3399 + $0x2c0] sm:$0xff]
    %v3489 = vld [vmem:[%s3399 + $0x2c8] sm:$0xff]
    %v3490 = vld [vmem:[%s3399 + $0x2d0] sm:$0xff]
    %v3491 = vld [vmem:[%s3399 + $0x2d8] sm:$0xff]
    %v3492 = vld [vmem:[%s3399 + $0x2e0] sm:$0xff]
    %v3493 = vld [vmem:[%s3399 + $0x2e8] sm:$0xff]
    %v3494 = vld [vmem:[%s3399 + $0x2f0] sm:$0xff]
    %v3495 = vld [vmem:[%s3399 + $0x2f8] sm:$0xff]
    %s3496 = scalar_lea.vmem [#allocation5], 12
    %v3497 = vld [vmem:[%s3496] sm:$0x3f]
    %v3499 = vlaneseq
    %v3500 = vshrl.u32 %v3499, 7
    %v3501 = vsub.s32 0, %v3500
    %v3502 = vrot.slane %v3497, %v3501
    %v3503 = vlaneseq
    %v3504 = vshrl.u32 %v3503, 7
    %v3505 = vsub.s32 1, %v3504
    %v3506 = vrot.slane %v3497, %v3505
    %v3507 = vlaneseq
    %v3508 = vshrl.u32 %v3507, 7
    %v3509 = vsub.s32 2, %v3508
    %v3510 = vrot.slane %v3497, %v3509
    %v3511 = vlaneseq
    %v3512 = vshrl.u32 %v3511, 7
    %v3513 = vsub.s32 3, %v3512
    %v3514 = vrot.slane %v3497, %v3513
    %v3515 = vlaneseq
    %v3516 = vshrl.u32 %v3515, 7
    %v3517 = vsub.s32 4, %v3516
    %v3518 = vrot.slane %v3497, %v3517
    %v3519 = vlaneseq
    %v3520 = vshrl.u32 %v3519, 7
    %v3521 = vsub.s32 5, %v3520
    %v3522 = vrot.slane %v3497, %v3521
    %v3625 = vunpack.c.l.b16 %v3400
    %v3626 = vunpack.c.h.b16 %v3400
    %v3627 = vunpack.c.l.b16 %v3401
    %v3628 = vunpack.c.h.b16 %v3401
    %v3629 = vunpack.c.l.b16 %v3402
    %v3630 = vunpack.c.h.b16 %v3402
    %v3631 = vunpack.c.l.b16 %v3403
    %v3632 = vunpack.c.h.b16 %v3403
    %v3633 = vunpack.c.l.b16 %v3404
    %v3634 = vunpack.c.h.b16 %v3404
    %v3635 = vunpack.c.l.b16 %v3405
    %v3636 = vunpack.c.h.b16 %v3405
    %v3637 = vunpack.c.l.b16 %v3406
    %v3638 = vunpack.c.h.b16 %v3406
    %v3639 = vunpack.c.l.b16 %v3407
    %v3640 = vunpack.c.h.b16 %v3407
    %v3641 = vunpack.c.l.b16 %v3408
    %v3642 = vunpack.c.h.b16 %v3408
    %v3643 = vunpack.c.l.b16 %v3409
    %v3644 = vunpack.c.h.b16 %v3409
    %v3645 = vunpack.c.l.b16 %v3410
    %v3646 = vunpack.c.h.b16 %v3410
    %v3647 = vunpack.c.l.b16 %v3411
    %v3648 = vunpack.c.h.b16 %v3411
    %v3649 = vunpack.c.l.b16 %v3412
    %v3650 = vunpack.c.h.b16 %v3412
    %v3651 = vunpack.c.l.b16 %v3413
    %v3652 = vunpack.c.h.b16 %v3413
    %v3653 = vunpack.c.l.b16 %v3414
    %v3654 = vunpack.c.h.b16 %v3414
    %v3655 = vunpack.c.l.b16 %v3415
    %v3656 = vunpack.c.h.b16 %v3415
    %v3657 = vunpack.c.l.b16 %v3416
    %v3658 = vunpack.c.h.b16 %v3416
    %v3659 = vunpack.c.l.b16 %v3417
    %v3660 = vunpack.c.h.b16 %v3417
    %v3661 = vunpack.c.l.b16 %v3418
    %v3662 = vunpack.c.h.b16 %v3418
    %v3663 = vunpack.c.l.b16 %v3419
    %v3664 = vunpack.c.h.b16 %v3419
    %v3665 = vunpack.c.l.b16 %v3420
    %v3666 = vunpack.c.h.b16 %v3420
    %v3667 = vunpack.c.l.b16 %v3421
    %v3668 = vunpack.c.h.b16 %v3421
    %v3669 = vunpack.c.l.b16 %v3422
    %v3670 = vunpack.c.h.b16 %v3422
    %v3671 = vunpack.c.l.b16 %v3423
    %v3672 = vunpack.c.h.b16 %v3423
    %v3673 = vunpack.c.l.b16 %v3424
    %v3674 = vunpack.c.h.b16 %v3424
    %v3675 = vunpack.c.l.b16 %v3425
    %v3676 = vunpack.c.h.b16 %v3425
    %v3677 = vunpack.c.l.b16 %v3426
    %v3678 = vunpack.c.h.b16 %v3426
    %v3679 = vunpack.c.l.b16 %v3427
    %v3680 = vunpack.c.h.b16 %v3427
    %v3681 = vunpack.c.l.b16 %v3428
    %v3682 = vunpack.c.h.b16 %v3428
    %v3683 = vunpack.c.l.b16 %v3429
    %v3684 = vunpack.c.h.b16 %v3429
    %v3685 = vunpack.c.l.b16 %v3430
    %v3686 = vunpack.c.h.b16 %v3430
    %v3687 = vunpack.c.l.b16 %v3431
    %v3688 = vunpack.c.h.b16 %v3431
    %v3689 = vunpack.c.l.b16 %v3432
    %v3690 = vunpack.c.h.b16 %v3432
    %v3691 = vunpack.c.l.b16 %v3433
    %v3692 = vunpack.c.h.b16 %v3433
    %v3693 = vunpack.c.l.b16 %v3434
    %v3694 = vunpack.c.h.b16 %v3434
    %v3695 = vunpack.c.l.b16 %v3435
    %v3696 = vunpack.c.h.b16 %v3435
    %v3697 = vunpack.c.l.b16 %v3436
    %v3698 = vunpack.c.h.b16 %v3436
    %v3699 = vunpack.c.l.b16 %v3437
    %v3700 = vunpack.c.h.b16 %v3437
    %v3701 = vunpack.c.l.b16 %v3438
    %v3702 = vunpack.c.h.b16 %v3438
    %v3703 = vunpack.c.l.b16 %v3439
    %v3704 = vunpack.c.h.b16 %v3439
    %v3705 = vunpack.c.l.b16 %v3440
    %v3706 = vunpack.c.h.b16 %v3440
    %v3707 = vunpack.c.l.b16 %v3441
    %v3708 = vunpack.c.h.b16 %v3441
    %v3709 = vunpack.c.l.b16 %v3442
    %v3710 = vunpack.c.h.b16 %v3442
    %v3711 = vunpack.c.l.b16 %v3443
    %v3712 = vunpack.c.h.b16 %v3443
    %v3713 = vunpack.c.l.b16 %v3444
    %v3714 = vunpack.c.h.b16 %v3444
    %v3715 = vunpack.c.l.b16 %v3445
    %v3716 = vunpack.c.h.b16 %v3445
    %v3717 = vunpack.c.l.b16 %v3446
    %v3718 = vunpack.c.h.b16 %v3446
    %v3719 = vunpack.c.l.b16 %v3447
    %v3720 = vunpack.c.h.b16 %v3447
    %v3721 = vunpack.c.l.b16 %v3448
    %v3722 = vunpack.c.h.b16 %v3448
    %v3723 = vunpack.c.l.b16 %v3449
    %v3724 = vunpack.c.h.b16 %v3449
    %v3725 = vunpack.c.l.b16 %v3450
    %v3726 = vunpack.c.h.b16 %v3450
    %v3727 = vunpack.c.l.b16 %v3451
    %v3728 = vunpack.c.h.b16 %v3451
    %v3729 = vunpack.c.l.b16 %v3452
    %v3730 = vunpack.c.h.b16 %v3452
    %v3731 = vunpack.c.l.b16 %v3453
    %v3732 = vunpack.c.h.b16 %v3453
    %v3733 = vunpack.c.l.b16 %v3454
    %v3734 = vunpack.c.h.b16 %v3454
    %v3735 = vunpack.c.l.b16 %v3455
    %v3736 = vunpack.c.h.b16 %v3455
    %v3737 = vunpack.c.l.b16 %v3456
    %v3738 = vunpack.c.h.b16 %v3456
    %v3739 = vunpack.c.l.b16 %v3457
    %v3740 = vunpack.c.h.b16 %v3457
    %v3741 = vunpack.c.l.b16 %v3458
    %v3742 = vunpack.c.h.b16 %v3458
    %v3743 = vunpack.c.l.b16 %v3459
    %v3744 = vunpack.c.h.b16 %v3459
    %v3745 = vunpack.c.l.b16 %v3460
    %v3746 = vunpack.c.h.b16 %v3460
    %v3747 = vunpack.c.l.b16 %v3461
    %v3748 = vunpack.c.h.b16 %v3461
    %v3749 = vunpack.c.l.b16 %v3462
    %v3750 = vunpack.c.h.b16 %v3462
    %v3751 = vunpack.c.l.b16 %v3463
    %v3752 = vunpack.c.h.b16 %v3463
    %v3753 = vunpack.c.l.b16 %v3464
    %v3754 = vunpack.c.h.b16 %v3464
    %v3755 = vunpack.c.l.b16 %v3465
    %v3756 = vunpack.c.h.b16 %v3465
    %v3757 = vunpack.c.l.b16 %v3466
    %v3758 = vunpack.c.h.b16 %v3466
    %v3759 = vunpack.c.l.b16 %v3467
    %v3760 = vunpack.c.h.b16 %v3467
    %v3761 = vunpack.c.l.b16 %v3468
    %v3762 = vunpack.c.h.b16 %v3468
    %v3763 = vunpack.c.l.b16 %v3469
    %v3764 = vunpack.c.h.b16 %v3469
    %v3765 = vunpack.c.l.b16 %v3470
    %v3766 = vunpack.c.h.b16 %v3470
    %v3767 = vunpack.c.l.b16 %v3471
    %v3768 = vunpack.c.h.b16 %v3471
    %v3769 = vunpack.c.l.b16 %v3472
    %v3770 = vunpack.c.h.b16 %v3472
    %v3771 = vunpack.c.l.b16 %v3473
    %v3772 = vunpack.c.h.b16 %v3473
    %v3773 = vunpack.c.l.b16 %v3474
    %v3774 = vunpack.c.h.b16 %v3474
    %v3775 = vunpack.c.l.b16 %v3475
    %v3776 = vunpack.c.h.b16 %v3475
    %v3777 = vunpack.c.l.b16 %v3476
    %v3778 = vunpack.c.h.b16 %v3476
    %v3779 = vunpack.c.l.b16 %v3477
    %v3780 = vunpack.c.h.b16 %v3477
    %v3781 = vunpack.c.l.b16 %v3478
    %v3782 = vunpack.c.h.b16 %v3478
    %v3783 = vunpack.c.l.b16 %v3479
    %v3784 = vunpack.c.h.b16 %v3479
    %v3785 = vunpack.c.l.b16 %v3480
    %v3786 = vunpack.c.h.b16 %v3480
    %v3787 = vunpack.c.l.b16 %v3481
    %v3788 = vunpack.c.h.b16 %v3481
    %v3789 = vunpack.c.l.b16 %v3482
    %v3790 = vunpack.c.h.b16 %v3482
    %v3791 = vunpack.c.l.b16 %v3483
    %v3792 = vunpack.c.h.b16 %v3483
    %v3793 = vunpack.c.l.b16 %v3484
    %v3794 = vunpack.c.h.b16 %v3484
    %v3795 = vunpack.c.l.b16 %v3485
    %v3796 = vunpack.c.h.b16 %v3485
    %v3797 = vunpack.c.l.b16 %v3486
    %v3798 = vunpack.c.h.b16 %v3486
    %v3799 = vunpack.c.l.b16 %v3487
    %v3800 = vunpack.c.h.b16 %v3487
    %v3801 = vunpack.c.l.b16 %v3488
    %v3802 = vunpack.c.h.b16 %v3488
    %v3803 = vunpack.c.l.b16 %v3489
    %v3804 = vunpack.c.h.b16 %v3489
    %v3805 = vunpack.c.l.b16 %v3490
    %v3806 = vunpack.c.h.b16 %v3490
    %v3807 = vunpack.c.l.b16 %v3491
    %v3808 = vunpack.c.h.b16 %v3491
    %v3809 = vunpack.c.l.b16 %v3492
    %v3810 = vunpack.c.h.b16 %v3492
    %v3811 = vunpack.c.l.b16 %v3493
    %v3812 = vunpack.c.h.b16 %v3493
    %v3813 = vunpack.c.l.b16 %v3494
    %v3814 = vunpack.c.h.b16 %v3494
    %v3815 = vunpack.c.l.b16 %v3495
    %v3816 = vunpack.c.h.b16 %v3495
    %v3817 = vpack.c.b16 %v3631, %v3625
    %v3818 = vpack.c.b16 %v3632, %v3626
    %v3819 = vpack.c.b16 %v3633, %v3627
    %v3820 = vpack.c.b16 %v3634, %v3628
    %v3821 = vpack.c.b16 %v3635, %v3629
    %v3822 = vpack.c.b16 %v3636, %v3630
    %v3823 = vpack.c.b16 %v3643, %v3637
    %v3824 = vpack.c.b16 %v3644, %v3638
    %v3825 = vpack.c.b16 %v3645, %v3639
    %v3826 = vpack.c.b16 %v3646, %v3640
    %v3827 = vpack.c.b16 %v3647, %v3641
    %v3828 = vpack.c.b16 %v3648, %v3642
    %v3829 = vpack.c.b16 %v3655, %v3649
    %v3830 = vpack.c.b16 %v3656, %v3650
    %v3831 = vpack.c.b16 %v3657, %v3651
    %v3832 = vpack.c.b16 %v3658, %v3652
    %v3833 = vpack.c.b16 %v3659, %v3653
    %v3834 = vpack.c.b16 %v3660, %v3654
    %v3835 = vpack.c.b16 %v3667, %v3661
    %v3836 = vpack.c.b16 %v3668, %v3662
    %v3837 = vpack.c.b16 %v3669, %v3663
    %v3838 = vpack.c.b16 %v3670, %v3664
    %v3839 = vpack.c.b16 %v3671, %v3665
    %v3840 = vpack.c.b16 %v3672, %v3666
    %v3841 = vpack.c.b16 %v3679, %v3673
    %v3842 = vpack.c.b16 %v3680, %v3674
    %v3843 = vpack.c.b16 %v3681, %v3675
    %v3844 = vpack.c.b16 %v3682, %v3676
    %v3845 = vpack.c.b16 %v3683, %v3677
    %v3846 = vpack.c.b16 %v3684, %v3678
    %v3847 = vpack.c.b16 %v3691, %v3685
    %v3848 = vpack.c.b16 %v3692, %v3686
    %v3849 = vpack.c.b16 %v3693, %v3687
    %v3850 = vpack.c.b16 %v3694, %v3688
    %v3851 = vpack.c.b16 %v3695, %v3689
    %v3852 = vpack.c.b16 %v3696, %v3690
    %v3853 = vpack.c.b16 %v3703, %v3697
    %v3854 = vpack.c.b16 %v3704, %v3698
    %v3855 = vpack.c.b16 %v3705, %v3699
    %v3856 = vpack.c.b16 %v3706, %v3700
    %v3857 = vpack.c.b16 %v3707, %v3701
    %v3858 = vpack.c.b16 %v3708, %v3702
    %v3859 = vpack.c.b16 %v3715, %v3709
    %v3860 = vpack.c.b16 %v3716, %v3710
    %v3861 = vpack.c.b16 %v3717, %v3711
    %v3862 = vpack.c.b16 %v3718, %v3712
    %v3863 = vpack.c.b16 %v3719, %v3713
    %v3864 = vpack.c.b16 %v3720, %v3714
    %v3865 = vpack.c.b16 %v3727, %v3721
    %v3866 = vpack.c.b16 %v3728, %v3722
    %v3867 = vpack.c.b16 %v3729, %v3723
    %v3868 = vpack.c.b16 %v3730, %v3724
    %v3869 = vpack.c.b16 %v3731, %v3725
    %v3870 = vpack.c.b16 %v3732, %v3726
    %v3871 = vpack.c.b16 %v3739, %v3733
    %v3872 = vpack.c.b16 %v3740, %v3734
    %v3873 = vpack.c.b16 %v3741, %v3735
    %v3874 = vpack.c.b16 %v3742, %v3736
    %v3875 = vpack.c.b16 %v3743, %v3737
    %v3876 = vpack.c.b16 %v3744, %v3738
    %v3877 = vpack.c.b16 %v3751, %v3745
    %v3878 = vpack.c.b16 %v3752, %v3746
    %v3879 = vpack.c.b16 %v3753, %v3747
    %v3880 = vpack.c.b16 %v3754, %v3748
    %v3881 = vpack.c.b16 %v3755, %v3749
    %v3882 = vpack.c.b16 %v3756, %v3750
    %v3883 = vpack.c.b16 %v3763, %v3757
    %v3884 = vpack.c.b16 %v3764, %v3758
    %v3885 = vpack.c.b16 %v3765, %v3759
    %v3886 = vpack.c.b16 %v3766, %v3760
    %v3887 = vpack.c.b16 %v3767, %v3761
    %v3888 = vpack.c.b16 %v3768, %v3762
    %v3889 = vpack.c.b16 %v3775, %v3769
    %v3890 = vpack.c.b16 %v3776, %v3770
    %v3891 = vpack.c.b16 %v3777, %v3771
    %v3892 = vpack.c.b16 %v3778, %v3772
    %v3893 = vpack.c.b16 %v3779, %v3773
    %v3894 = vpack.c.b16 %v3780, %v3774
    %v3895 = vpack.c.b16 %v3787, %v3781
    %v3896 = vpack.c.b16 %v3788, %v3782
    %v3897 = vpack.c.b16 %v3789, %v3783
    %v3898 = vpack.c.b16 %v3790, %v3784
    %v3899 = vpack.c.b16 %v3791, %v3785
    %v3900 = vpack.c.b16 %v3792, %v3786
    %v3901 = vpack.c.b16 %v3799, %v3793
    %v3902 = vpack.c.b16 %v3800, %v3794
    %v3903 = vpack.c.b16 %v3801, %v3795
    %v3904 = vpack.c.b16 %v3802, %v3796
    %v3905 = vpack.c.b16 %v3803, %v3797
    %v3906 = vpack.c.b16 %v3804, %v3798
    %v3907 = vpack.c.b16 %v3811, %v3805
    %v3908 = vpack.c.b16 %v3812, %v3806
    %v3909 = vpack.c.b16 %v3813, %v3807
    %v3910 = vpack.c.b16 %v3814, %v3808
    %v3911 = vpack.c.b16 %v3815, %v3809
    %v3912 = vpack.c.b16 %v3816, %v3810
    %4009 = vmatprep.subr.bf16.mxu0 %v3818
    %4010 = vmatpush1.bf16.msra.mxu0 %v3817
    %4011 = vmatprep.subr.bf16.mxu0 %v3824
    %4012 = vmatpush1.bf16.msra.mxu0 %v3823
    %4013 = vmatprep.subr.bf16.mxu0 %v3830
    %4014 = vmatpush1.bf16.msra.mxu0 %v3829
    %4015 = vmatprep.subr.bf16.mxu0 %v3836
    %4016 = vmatpush1.bf16.msra.mxu0 %v3835
    %4017 = vmatprep.subr.bf16.mxu0 %v3842
    %4018 = vmatpush1.bf16.msra.mxu0 %v3841
    %4019 = vmatprep.subr.bf16.mxu0 %v3848
    %4020 = vmatpush1.bf16.msra.mxu0 %v3847
    %4021 = vmatprep.subr.bf16.mxu0 %v3854
    %4022 = vmatpush1.bf16.msra.mxu0 %v3853
    %4023 = vmatprep.subr.bf16.mxu0 %v3860
    %4024 = vmatpush1.bf16.msra.mxu0 %v3859
    %4025 = vmatprep.subr.bf16.mxu0 %v3866
    %4026 = vmatpush1.bf16.msra.mxu0 %v3865
    %4027 = vmatprep.subr.bf16.mxu0 %v3872
    %4028 = vmatpush1.bf16.msra.mxu0 %v3871
    %4029 = vmatprep.subr.bf16.mxu0 %v3878
    %4030 = vmatpush1.bf16.msra.mxu0 %v3877
    %4031 = vmatprep.subr.bf16.mxu0 %v3884
    %4032 = vmatpush1.bf16.msra.mxu0 %v3883
    %4033 = vmatprep.subr.bf16.mxu0 %v3890
    %4034 = vmatpush1.bf16.msra.mxu0 %v3889
    %4035 = vmatprep.subr.bf16.mxu0 %v3896
    %4036 = vmatpush1.bf16.msra.mxu0 %v3895
    %4037 = vmatprep.subr.bf16.mxu0 %v3902
    %4038 = vmatpush1.bf16.msra.mxu0 %v3901
    %4039 = vmatprep.subr.bf16.mxu0 %v3908
    %4040 = vmatpush1.bf16.msra.mxu0 %v3907
    %4041 = vmatprep.mubr.bf16.mxu0 %v3398
    %4042 = vmatmul.mubr.bf16.gmra.mrb[0].mxu0 %v3397
    %v4043 = vpop.f32.mrb[0].mxu0
    %v4044 = vadd.f32 %v3502, %v4043
    %v4045 = vpop.f32.mrb[0].mxu0
    %v4046 = vadd.f32 %v3506, %v4045
    %v4047 = vpop.f32.mrb[0].mxu0
    %v4048 = vpop.f32.mrb[0].mxu0
    %4049 = vdwg.mxu0
    %4050 = vmatprep.subr.bf16.mxu0 %v3820
    %4051 = vmatpush1.bf16.msra.mxu0 %v3819
    %4052 = vmatprep.subr.bf16.mxu0 %v3826
    %4053 = vmatpush1.bf16.msra.mxu0 %v3825
    %4054 = vmatprep.subr.bf16.mxu0 %v3832
    %4055 = vmatpush1.bf16.msra.mxu0 %v3831
    %4056 = vmatprep.subr.bf16.mxu0 %v3838
    %4057 = vmatpush1.bf16.msra.mxu0 %v3837
    %4058 = vmatprep.subr.bf16.mxu0 %v3844
    %4059 = vmatpush1.bf16.msra.mxu0 %v3843
    %4060 = vmatprep.subr.bf16.mxu0 %v3850
    %4061 = vmatpush1.bf16.msra.mxu0 %v3849
    %4062 = vmatprep.subr.bf16.mxu0 %v3856
    %4063 = vmatpush1.bf16.msra.mxu0 %v3855
    %4064 = vmatprep.subr.bf16.mxu0 %v3862
    %4065 = vmatpush1.bf16.msra.mxu0 %v3861
    %4066 = vmatprep.subr.bf16.mxu0 %v3868
    %4067 = vmatpush1.bf16.msra.mxu0 %v3867
    %4068 = vmatprep.subr.bf16.mxu0 %v3874
    %4069 = vmatpush1.bf16.msra.mxu0 %v3873
    %4070 = vmatprep.subr.bf16.mxu0 %v3880
    %4071 = vmatpush1.bf16.msra.mxu0 %v3879
    %4072 = vmatprep.subr.bf16.mxu0 %v3886
    %4073 = vmatpush1.bf16.msra.mxu0 %v3885
    %4074 = vmatprep.subr.bf16.mxu0 %v3892
    %4075 = vmatpush1.bf16.msra.mxu0 %v3891
    %4076 = vmatprep.subr.bf16.mxu0 %v3898
    %4077 = vmatpush1.bf16.msra.mxu0 %v3897
    %4078 = vmatprep.subr.bf16.mxu0 %v3904
    %4079 = vmatpush1.bf16.msra.mxu0 %v3903
    %4080 = vmatprep.subr.bf16.mxu0 %v3910
    %4081 = vmatpush1.bf16.msra.mxu0 %v3909
    %4082 = vmatprep.mubr.bf16.mxu0 %v3398
    %4083 = vmatmul.mubr.bf16.gmra.mrb[0].mxu0 %v3397
    %v4084 = vpop.f32.mrb[0].mxu0
    %v4085 = vadd.f32 %v3510, %v4084
    %v4086 = vpop.f32.mrb[0].mxu0
    %v4087 = vadd.f32 %v3514, %v4086
    %v4088 = vpop.f32.mrb[0].mxu0
    %v4089 = vpop.f32.mrb[0].mxu0
    %4090 = vdwg.mxu0
    %4091 = vmatprep.subr.bf16.mxu0 %v3822
    %4092 = vmatpush1.bf16.msra.mxu0 %v3821
    %4093 = vmatprep.subr.bf16.mxu0 %v3828
    %4094 = vmatpush1.bf16.msra.mxu0 %v3827
    %4095 = vmatprep.subr.bf16.mxu0 %v3834
    %4096 = vmatpush1.bf16.msra.mxu0 %v3833
    %4097 = vmatprep.subr.bf16.mxu0 %v3840
    %4098 = vmatpush1.bf16.msra.mxu0 %v3839
    %4099 = vmatprep.subr.bf16.mxu0 %v3846
    %4100 = vmatpush1.bf16.msra.mxu0 %v3845
    %4101 = vmatprep.subr.bf16.mxu0 %v3852
    %4102 = vmatpush1.bf16.msra.mxu0 %v3851
    %4103 = vmatprep.subr.bf16.mxu0 %v3858
    %4104 = vmatpush1.bf16.msra.mxu0 %v3857
    %4105 = vmatprep.subr.bf16.mxu0 %v3864
    %4106 = vmatpush1.bf16.msra.mxu0 %v3863
    %4107 = vmatprep.subr.bf16.mxu0 %v3870
    %4108 = vmatpush1.bf16.msra.mxu0 %v3869
    %4109 = vmatprep.subr.bf16.mxu0 %v3876
    %4110 = vmatpush1.bf16.msra.mxu0 %v3875
    %4111 = vmatprep.subr.bf16.mxu0 %v3882
    %4112 = vmatpush1.bf16.msra.mxu0 %v3881
    %4113 = vmatprep.subr.bf16.mxu0 %v3888
    %4114 = vmatpush1.bf16.msra.mxu0 %v3887
    %4115 = vmatprep.subr.bf16.mxu0 %v3894
    %4116 = vmatpush1.bf16.msra.mxu0 %v3893
    %4117 = vmatprep.subr.bf16.mxu0 %v3900
    %4118 = vmatpush1.bf16.msra.mxu0 %v3899
    %4119 = vmatprep.subr.bf16.mxu0 %v3906
    %4120 = vmatpush1.bf16.msra.mxu0 %v3905
    %4121 = vmatprep.subr.bf16.mxu0 %v3912
    %4122 = vmatpush1.bf16.msra.mxu0 %v3911
    %4123 = vmatprep.mubr.bf16.mxu0 %v3398
    %4124 = vmatmul.mubr.bf16.gmra.mrb[0].mxu0 %v3397
    %v4125 = vpop.f32.mrb[0].mxu0
    %v4126 = vadd.f32 %v3518, %v4125
    %v4127 = vpop.f32.mrb[0].mxu0
    %v4128 = vadd.f32 %v3522, %v4127
    %v4129 = vpop.f32.mrb[0].mxu0
    %v4130 = vpop.f32.mrb[0].mxu0
    %4131 = vdwg.mxu0
    %v4133 = vsel %vm824, %v4044, 0
    %v4136 = vsel %vm824, %v4085, 0
    %4138 = vmatprep.subr.mxu0 0.0
    %4139 = vmatpush1.xpose.msra.mxu0 %v4136
    %4140 = vmatprep.subr.mxu0 0.0
    %4141 = vmatpush1.xpose.msra.mxu0 0.0
    %4142 = vmatprep.subr.mxu0 0.0
    %4143 = vmatpush1.xpose.msra.mxu0 0.0
    %4144 = vmatprep.subr.mxu0 0.0
    %4145 = vmatpush1.xpose.msra.mxu0 0.0
    %4146 = vmatprep.subr.mxu0 0.0
    %4147 = vmatpush1.xpose.msra.mxu0 0.0
    %4148 = vmatprep.subr.mxu0 0.0
    %4149 = vmatpush1.xpose.msra.mxu0 0.0
    %4150 = vmatprep.subr.mxu0 0.0
    %4151 = vmatpush1.xpose.msra.mxu0 0.0
    %4152 = vmatprep.subr.mxu0 0.0
    %4153 = vmatpush1.xpose.msra.mxu0 0.0
    %4154 = vmatprep.subr.mxu0 0.0
    %4155 = vmatpush1.xpose.msra.mxu0 0.0
    %4156 = vmatprep.subr.mxu0 0.0
    %4157 = vmatpush1.xpose.msra.mxu0 0.0
    %4158 = vmatprep.subr.mxu0 0.0
    %4159 = vmatpush1.xpose.msra.mxu0 0.0
    %4160 = vmatprep.subr.mxu0 0.0
    %4161 = vmatpush1.xpose.msra.mxu0 0.0
    %4162 = vmatprep.subr.mxu0 0.0
    %4163 = vmatpush1.xpose.msra.mxu0 0.0
    %4164 = vmatprep.subr.mxu0 0.0
    %4165 = vmatpush1.xpose.msra.mxu0 0.0
    %4166 = vmatprep.subr.mxu0 0.0
    %4167 = vmatpush1.xpose.msra.mxu0 0.0
    %4168 = vmatprep.subr.mxu0 0.0
    %4169 = vmatpush1.xpose.msra.mxu0 0.0
    %4170 = vmatprep.subr.mxu0 0.0
    %4171 = vmatpush1.xpose.msra.mxu0 0.0
    %4172 = vmatprep.subr.mxu0 0.0
    %4173 = vmatpush1.xpose.msra.mxu0 0.0
    %4174 = vmatprep.subr.mxu0 0.0
    %4175 = vmatpush1.xpose.msra.mxu0 0.0
    %4176 = vmatprep.subr.mxu0 0.0
    %4177 = vmatpush1.xpose.msra.mxu0 0.0
    %4178 = vmatprep.subr.mxu0 0.0
    %4179 = vmatpush1.xpose.msra.mxu0 0.0
    %4180 = vmatprep.subr.mxu0 0.0
    %4181 = vmatpush1.xpose.msra.mxu0 0.0
    %4182 = vmatprep.subr.mxu0 0.0
    %4183 = vmatpush1.xpose.msra.mxu0 0.0
    %4184 = vmatprep.subr.mxu0 0.0
    %4185 = vmatpush1.xpose.msra.mxu0 0.0
    %4186 = vmatprep.subr.mxu0 0.0
    %4187 = vmatpush1.xpose.msra.mxu0 0.0
    %4188 = vmatprep.subr.mxu0 0.0
    %4189 = vmatpush1.xpose.msra.mxu0 0.0
    %4190 = vmatprep.subr.mxu0 0.0
    %4191 = vmatpush1.xpose.msra.mxu0 0.0
    %4192 = vmatprep.subr.mxu0 0.0
    %4193 = vmatpush1.xpose.msra.mxu0 0.0
    %4194 = vmatprep.subr.mxu0 0.0
    %4195 = vmatpush1.xpose.msra.mxu0 0.0
    %4196 = vmatprep.subr.mxu0 0.0
    %4197 = vmatpush1.xpose.msra.mxu0 0.0
    %4198 = vmatprep.subr.mxu0 0.0
    %4199 = vmatpush1.xpose.msra.mxu0 0.0
    %4200 = vmatprep.subr.mxu0 0.0
    %4201 = vmatpush1.xpose.msra.mxu0 0.0
    %4202 = vmatprep.mubr.f32.mxu0 0.0
    %4203 = vmatmul.mubr.f32.gmra.mrb[0].mxu0 %v4133
    %v4204 = vpop.f32.mrb[0].mxu0
    %v4205 = vadd.f32 0.0, %v4204
    %v4206 = vpop.f32.mrb[0].mxu0
    %4207 = vdwg.mxu0
    %v4208 = vmul.f32 %v4205, 0.125
    %v4209 = vadd.f32 %v4208, %v88
    %v4210 = vsel %vm903, %v4209, -inf
    %4211 = vmax.xlane.f32.xlu0 %v4210
    %v4212 = vpop.xlane.xlu0 %4211
    %v4213 = vsub.f32 %v4209, %v4212
    %v4214 = vmul.f32 %v4213, 1.442695
    %v4215 = vpow.pop %v4214
    %v4216 = vsel %vm903, %v4215, 0.0
    %4217 = vadd.xlane.f32.xlu0 %v4216
    %v4218 = vpop.xlane.xlu0 %4217
    %v4219 = vrcp.pop %v4218
    %v4220 = vmul.f32 %v4215, %v4219
    %v4222 = vsel %vm903, %v4220, 0
    %4224 = vmatprep.subr.mxu0 0.0
    %4225 = vmatpush1.msra.mxu0 %v4126
    %4226 = vmatprep.subr.mxu0 0.0
    %4227 = vmatpush1.msra.mxu0 0.0
    %4228 = vmatprep.subr.mxu0 0.0
    %4229 = vmatpush1.msra.mxu0 0.0
    %4230 = vmatprep.subr.mxu0 0.0
    %4231 = vmatpush1.msra.mxu0 0.0
    %4232 = vmatprep.subr.mxu0 0.0
    %4233 = vmatpush1.msra.mxu0 0.0
    %4234 = vmatprep.subr.mxu0 0.0
    %4235 = vmatpush1.msra.mxu0 0.0
    %4236 = vmatprep.subr.mxu0 0.0
    %4237 = vmatpush1.msra.mxu0 0.0
    %4238 = vmatprep.subr.mxu0 0.0
    %4239 = vmatpush1.msra.mxu0 0.0
    %4240 = vmatprep.subr.mxu0 0.0
    %4241 = vmatpush1.msra.mxu0 0.0
    %4242 = vmatprep.subr.mxu0 0.0
    %4243 = vmatpush1.msra.mxu0 0.0
    %4244 = vmatprep.subr.mxu0 0.0
    %4245 = vmatpush1.msra.mxu0 0.0
    %4246 = vmatprep.subr.mxu0 0.0
    %4247 = vmatpush1.msra.mxu0 0.0
    %4248 = vmatprep.subr.mxu0 0.0
    %4249 = vmatpush1.msra.mxu0 0.0
    %4250 = vmatprep.subr.mxu0 0.0
    %4251 = vmatpush1.msra.mxu0 0.0
    %4252 = vmatprep.subr.mxu0 0.0
    %4253 = vmatpush1.msra.mxu0 0.0
    %4254 = vmatprep.subr.mxu0 0.0
    %4255 = vmatpush1.msra.mxu0 0.0
    %4256 = vmatprep.subr.mxu0 0.0
    %4257 = vmatpush1.msra.mxu0 0.0
    %4258 = vmatprep.subr.mxu0 0.0
    %4259 = vmatpush1.msra.mxu0 0.0
    %4260 = vmatprep.subr.mxu0 0.0
    %4261 = vmatpush1.msra.mxu0 0.0
    %4262 = vmatprep.subr.mxu0 0.0
    %4263 = vmatpush1.msra.mxu0 0.0
    %4264 = vmatprep.subr.mxu0 0.0
    %4265 = vmatpush1.msra.mxu0 0.0
    %4266 = vmatprep.subr.mxu0 0.0
    %4267 = vmatpush1.msra.mxu0 0.0
    %4268 = vmatprep.subr.mxu0 0.0
    %4269 = vmatpush1.msra.mxu0 0.0
    %4270 = vmatprep.subr.mxu0 0.0
    %4271 = vmatpush1.msra.mxu0 0.0
    %4272 = vmatprep.subr.mxu0 0.0
    %4273 = vmatpush1.msra.mxu0 0.0
    %4274 = vmatprep.subr.mxu0 0.0
    %4275 = vmatpush1.msra.mxu0 0.0
    %4276 = vmatprep.subr.mxu0 0.0
    %4277 = vmatpush1.msra.mxu0 0.0
    %4278 = vmatprep.subr.mxu0 0.0
    %4279 = vmatpush1.msra.mxu0 0.0
    %4280 = vmatprep.subr.mxu0 0.0
    %4281 = vmatpush1.msra.mxu0 0.0
    %4282 = vmatprep.subr.mxu0 0.0
    %4283 = vmatpush1.msra.mxu0 0.0
    %4284 = vmatprep.subr.mxu0 0.0
    %4285 = vmatpush1.msra.mxu0 0.0
    %4286 = vmatprep.subr.mxu0 0.0
    %4287 = vmatpush1.msra.mxu0 0.0
    %4288 = vmatprep.mubr.f32.mxu0 0.0
    %4289 = vmatmul.mubr.f32.gmra.mrb[0].mxu0 %v4222
    %v4290 = vpop.f32.mrb[0].mxu0
    %v4291 = vadd.f32 0.0, %v4290
    %v4292 = vpop.f32.mrb[0].mxu0
    %4293 = vdwg.mxu0
    %4294 = vrot.lane.b32.xlu0 %v4044, 64
    %v4295 = vpop.permute.xlu0 %4294
    %4296 = vrot.lane.b32.xlu0 %v4085, 64
    %v4297 = vpop.permute.xlu0 %4296
    %v4298 = vsel %vm824, %v4295, 0
    %v4300 = vsel %vm824, %v4297, 0
    %4302 = vmatprep.subr.mxu0 0.0
    %4303 = vmatpush1.xpose.msra.mxu0 %v4300
    %4304 = vmatprep.subr.mxu0 0.0
    %4305 = vmatpush1.xpose.msra.mxu0 0.0
    %4306 = vmatprep.subr.mxu0 0.0
    %4307 = vmatpush1.xpose.msra.mxu0 0.0
    %4308 = vmatprep.subr.mxu0 0.0
    %4309 = vmatpush1.xpose.msra.mxu0 0.0
    %4310 = vmatprep.subr.mxu0 0.0
    %4311 = vmatpush1.xpose.msra.mxu0 0.0
    %4312 = vmatprep.subr.mxu0 0.0
    %4313 = vmatpush1.xpose.msra.mxu0 0.0
    %4314 = vmatprep.subr.mxu0 0.0
    %4315 = vmatpush1.xpose.msra.mxu0 0.0
    %4316 = vmatprep.subr.mxu0 0.0
    %4317 = vmatpush1.xpose.msra.mxu0 0.0
    %4318 = vmatprep.subr.mxu0 0.0
    %4319 = vmatpush1.xpose.msra.mxu0 0.0
    %4320 = vmatprep.subr.mxu0 0.0
    %4321 = vmatpush1.xpose.msra.mxu0 0.0
    %4322 = vmatprep.subr.mxu0 0.0
    %4323 = vmatpush1.xpose.msra.mxu0 0.0
    %4324 = vmatprep.subr.mxu0 0.0
    %4325 = vmatpush1.xpose.msra.mxu0 0.0
    %4326 = vmatprep.subr.mxu0 0.0
    %4327 = vmatpush1.xpose.msra.mxu0 0.0
    %4328 = vmatprep.subr.mxu0 0.0
    %4329 = vmatpush1.xpose.msra.mxu0 0.0
    %4330 = vmatprep.subr.mxu0 0.0
    %4331 = vmatpush1.xpose.msra.mxu0 0.0
    %4332 = vmatprep.subr.mxu0 0.0
    %4333 = vmatpush1.xpose.msra.mxu0 0.0
    %4334 = vmatprep.subr.mxu0 0.0
    %4335 = vmatpush1.xpose.msra.mxu0 0.0
    %4336 = vmatprep.subr.mxu0 0.0
    %4337 = vmatpush1.xpose.msra.mxu0 0.0
    %4338 = vmatprep.subr.mxu0 0.0
    %4339 = vmatpush1.xpose.msra.mxu0 0.0
    %4340 = vmatprep.subr.mxu0 0.0
    %4341 = vmatpush1.xpose.msra.mxu0 0.0
    %4342 = vmatprep.subr.mxu0 0.0
    %4343 = vmatpush1.xpose.msra.mxu0 0.0
    %4344 = vmatprep.subr.mxu0 0.0
    %4345 = vmatpush1.xpose.msra.mxu0 0.0
    %4346 = vmatprep.subr.mxu0 0.0
    %4347 = vmatpush1.xpose.msra.mxu0 0.0
    %4348 = vmatprep.subr.mxu0 0.0
    %4349 = vmatpush1.xpose.msra.mxu0 0.0
    %4350 = vmatprep.subr.mxu0 0.0
    %4351 = vmatpush1.xpose.msra.mxu0 0.0
    %4352 = vmatprep.subr.mxu0 0.0
    %4353 = vmatpush1.xpose.msra.mxu0 0.0
    %4354 = vmatprep.subr.mxu0 0.0
    %4355 = vmatpush1.xpose.msra.mxu0 0.0
    %4356 = vmatprep.subr.mxu0 0.0
    %4357 = vmatpush1.xpose.msra.mxu0 0.0
    %4358 = vmatprep.subr.mxu0 0.0
    %4359 = vmatpush1.xpose.msra.mxu0 0.0
    %4360 = vmatprep.subr.mxu0 0.0
    %4361 = vmatpush1.xpose.msra.mxu0 0.0
    %4362 = vmatprep.subr.mxu0 0.0
    %4363 = vmatpush1.xpose.msra.mxu0 0.0
    %4364 = vmatprep.subr.mxu0 0.0
    %4365 = vmatpush1.xpose.msra.mxu0 0.0
    %4366 = vmatprep.mubr.f32.mxu0 0.0
    %4367 = vmatmul.mubr.f32.gmra.mrb[0].mxu0 %v4298
    %v4368 = vpop.f32.mrb[0].mxu0
    %v4369 = vadd.f32 0.0, %v4368
    %v4370 = vpop.f32.mrb[0].mxu0
    %4371 = vdwg.mxu0
    %v4372 = vmul.f32 %v4369, 0.125
    %v4373 = vadd.f32 %v4372, %v88
    %v4374 = vsel %vm903, %v4373, -inf
    %4375 = vmax.xlane.f32.xlu0 %v4374
    %v4376 = vpop.xlane.xlu0 %4375
    %v4377 = vsub.f32 %v4373, %v4376
    %v4378 = vmul.f32 %v4377, 1.442695
    %v4379 = vpow.pop %v4378
    %v4380 = vsel %vm903, %v4379, 0.0
    %4381 = vadd.xlane.f32.xlu0 %v4380
    %v4382 = vpop.xlane.xlu0 %4381
    %v4383 = vrcp.pop %v4382
    %v4384 = vmul.f32 %v4379, %v4383
    %4386 = vrot.lane.b32.xlu0 %v4126, 64
    %v4387 = vpop.permute.xlu0 %4386
    %v4390 = vsel %vm903, %v4384, 0
    %4392 = vmatprep.subr.mxu0 0.0
    %4393 = vmatpush1.msra.mxu0 %v4387
    %4394 = vmatprep.subr.mxu0 0.0
    %4395 = vmatpush1.msra.mxu0 0.0
    %4396 = vmatprep.subr.mxu0 0.0
    %4397 = vmatpush1.msra.mxu0 0.0
    %4398 = vmatprep.subr.mxu0 0.0
    %4399 = vmatpush1.msra.mxu0 0.0
    %4400 = vmatprep.subr.mxu0 0.0
    %4401 = vmatpush1.msra.mxu0 0.0
    %4402 = vmatprep.subr.mxu0 0.0
    %4403 = vmatpush1.msra.mxu0 0.0
    %4404 = vmatprep.subr.mxu0 0.0
    %4405 = vmatpush1.msra.mxu0 0.0
    %4406 = vmatprep.subr.mxu0 0.0
    %4407 = vmatpush1.msra.mxu0 0.0
    %4408 = vmatprep.subr.mxu0 0.0
    %4409 = vmatpush1.msra.mxu0 0.0
    %4410 = vmatprep.subr.mxu0 0.0
    %4411 = vmatpush1.msra.mxu0 0.0
    %4412 = vmatprep.subr.mxu0 0.0
    %4413 = vmatpush1.msra.mxu0 0.0
    %4414 = vmatprep.subr.mxu0 0.0
    %4415 = vmatpush1.msra.mxu0 0.0
    %4416 = vmatprep.subr.mxu0 0.0
    %4417 = vmatpush1.msra.mxu0 0.0
    %4418 = vmatprep.subr.mxu0 0.0
    %4419 = vmatpush1.msra.mxu0 0.0
    %4420 = vmatprep.subr.mxu0 0.0
    %4421 = vmatpush1.msra.mxu0 0.0
    %4422 = vmatprep.subr.mxu0 0.0
    %4423 = vmatpush1.msra.mxu0 0.0
    %4424 = vmatprep.subr.mxu0 0.0
    %4425 = vmatpush1.msra.mxu0 0.0
    %4426 = vmatprep.subr.mxu0 0.0
    %4427 = vmatpush1.msra.mxu0 0.0
    %4428 = vmatprep.subr.mxu0 0.0
    %4429 = vmatpush1.msra.mxu0 0.0
    %4430 = vmatprep.subr.mxu0 0.0
    %4431 = vmatpush1.msra.mxu0 0.0
    %4432 = vmatprep.subr.mxu0 0.0
    %4433 = vmatpush1.msra.mxu0 0.0
    %4434 = vmatprep.subr.mxu0 0.0
    %4435 = vmatpush1.msra.mxu0 0.0
    %4436 = vmatprep.subr.mxu0 0.0
    %4437 = vmatpush1.msra.mxu0 0.0
    %4438 = vmatprep.subr.mxu0 0.0
    %4439 = vmatpush1.msra.mxu0 0.0
    %4440 = vmatprep.subr.mxu0 0.0
    %4441 = vmatpush1.msra.mxu0 0.0
    %4442 = vmatprep.subr.mxu0 0.0
    %4443 = vmatpush1.msra.mxu0 0.0
    %4444 = vmatprep.subr.mxu0 0.0
    %4445 = vmatpush1.msra.mxu0 0.0
    %4446 = vmatprep.subr.mxu0 0.0
    %4447 = vmatpush1.msra.mxu0 0.0
    %4448 = vmatprep.subr.mxu0 0.0
    %4449 = vmatpush1.msra.mxu0 0.0
    %4450 = vmatprep.subr.mxu0 0.0
    %4451 = vmatpush1.msra.mxu0 0.0
    %4452 = vmatprep.subr.mxu0 0.0
    %4453 = vmatpush1.msra.mxu0 0.0
    %4454 = vmatprep.subr.mxu0 0.0
    %4455 = vmatpush1.msra.mxu0 0.0
    %4456 = vmatprep.mubr.f32.mxu0 0.0
    %4457 = vmatmul.mubr.f32.gmra.mrb[0].mxu0 %v4390
    %v4458 = vpop.f32.mrb[0].mxu0
    %v4459 = vadd.f32 0.0, %v4458
    %v4460 = vpop.f32.mrb[0].mxu0
    %4461 = vdwg.mxu0
    %v4463 = vsel %vm824, %v4046, 0
    %v4466 = vsel %vm824, %v4087, 0
    %4468 = vmatprep.subr.mxu0 0.0
    %4469 = vmatpush1.xpose.msra.mxu0 %v4466
    %4470 = vmatprep.subr.mxu0 0.0
    %4471 = vmatpush1.xpose.msra.mxu0 0.0
    %4472 = vmatprep.subr.mxu0 0.0
    %4473 = vmatpush1.xpose.msra.mxu0 0.0
    %4474 = vmatprep.subr.mxu0 0.0
    %4475 = vmatpush1.xpose.msra.mxu0 0.0
    %4476 = vmatprep.subr.mxu0 0.0
    %4477 = vmatpush1.xpose.msra.mxu0 0.0
    %4478 = vmatprep.subr.mxu0 0.0
    %4479 = vmatpush1.xpose.msra.mxu0 0.0
    %4480 = vmatprep.subr.mxu0 0.0
    %4481 = vmatpush1.xpose.msra.mxu0 0.0
    %4482 = vmatprep.subr.mxu0 0.0
    %4483 = vmatpush1.xpose.msra.mxu0 0.0
    %4484 = vmatprep.subr.mxu0 0.0
    %4485 = vmatpush1.xpose.msra.mxu0 0.0
    %4486 = vmatprep.subr.mxu0 0.0
    %4487 = vmatpush1.xpose.msra.mxu0 0.0
    %4488 = vmatprep.subr.mxu0 0.0
    %4489 = vmatpush1.xpose.msra.mxu0 0.0
    %4490 = vmatprep.subr.mxu0 0.0
    %4491 = vmatpush1.xpose.msra.mxu0 0.0
    %4492 = vmatprep.subr.mxu0 0.0
    %4493 = vmatpush1.xpose.msra.mxu0 0.0
    %4494 = vmatprep.subr.mxu0 0.0
    %4495 = vmatpush1.xpose.msra.mxu0 0.0
    %4496 = vmatprep.subr.mxu0 0.0
    %4497 = vmatpush1.xpose.msra.mxu0 0.0
    %4498 = vmatprep.subr.mxu0 0.0
    %4499 = vmatpush1.xpose.msra.mxu0 0.0
    %4500 = vmatprep.subr.mxu0 0.0
    %4501 = vmatpush1.xpose.msra.mxu0 0.0
    %4502 = vmatprep.subr.mxu0 0.0
    %4503 = vmatpush1.xpose.msra.mxu0 0.0
    %4504 = vmatprep.subr.mxu0 0.0
    %4505 = vmatpush1.xpose.msra.mxu0 0.0
    %4506 = vmatprep.subr.mxu0 0.0
    %4507 = vmatpush1.xpose.msra.mxu0 0.0
    %4508 = vmatprep.subr.mxu0 0.0
    %4509 = vmatpush1.xpose.msra.mxu0 0.0
    %4510 = vmatprep.subr.mxu0 0.0
    %4511 = vmatpush1.xpose.msra.mxu0 0.0
    %4512 = vmatprep.subr.mxu0 0.0
    %4513 = vmatpush1.xpose.msra.mxu0 0.0
    %4514 = vmatprep.subr.mxu0 0.0
    %4515 = vmatpush1.xpose.msra.mxu0 0.0
    %4516 = vmatprep.subr.mxu0 0.0
    %4517 = vmatpush1.xpose.msra.mxu0 0.0
    %4518 = vmatprep.subr.mxu0 0.0
    %4519 = vmatpush1.xpose.msra.mxu0 0.0
    %4520 = vmatprep.subr.mxu0 0.0
    %4521 = vmatpush1.xpose.msra.mxu0 0.0
    %4522 = vmatprep.subr.mxu0 0.0
    %4523 = vmatpush1.xpose.msra.mxu0 0.0
    %4524 = vmatprep.subr.mxu0 0.0
    %4525 = vmatpush1.xpose.msra.mxu0 0.0
    %4526 = vmatprep.subr.mxu0 0.0
    %4527 = vmatpush1.xpose.msra.mxu0 0.0
    %4528 = vmatprep.subr.mxu0 0.0
    %4529 = vmatpush1.xpose.msra.mxu0 0.0
    %4530 = vmatprep.subr.mxu0 0.0
    %4531 = vmatpush1.xpose.msra.mxu0 0.0
    %4532 = vmatprep.mubr.f32.mxu0 0.0
    %4533 = vmatmul.mubr.f32.gmra.mrb[0].mxu0 %v4463
    %v4534 = vpop.f32.mrb[0].mxu0
    %v4535 = vadd.f32 0.0, %v4534
    %v4536 = vpop.f32.mrb[0].mxu0
    %4537 = vdwg.mxu0
    %v4538 = vmul.f32 %v4535, 0.125
    %v4539 = vadd.f32 %v4538, %v88
    %v4540 = vsel %vm903, %v4539, -inf
    %4541 = vmax.xlane.f32.xlu0 %v4540
    %v4542 = vpop.xlane.xlu0 %4541
    %v4543 = vsub.f32 %v4539, %v4542
    %v4544 = vmul.f32 %v4543, 1.442695
    %v4545 = vpow.pop %v4544
    %v4546 = vsel %vm903, %v4545, 0.0
    %4547 = vadd.xlane.f32.xlu0 %v4546
    %v4548 = vpop.xlane.xlu0 %4547
    %v4549 = vrcp.pop %v4548
    %v4550 = vmul.f32 %v4545, %v4549
    %v4552 = vsel %vm903, %v4550, 0
    %4554 = vmatprep.subr.mxu0 0.0
    %4555 = vmatpush1.msra.mxu0 %v4128
    %4556 = vmatprep.subr.mxu0 0.0
    %4557 = vmatpush1.msra.mxu0 0.0
    %4558 = vmatprep.subr.mxu0 0.0
    %4559 = vmatpush1.msra.mxu0 0.0
    %4560 = vmatprep.subr.mxu0 0.0
    %4561 = vmatpush1.msra.mxu0 0.0
    %4562 = vmatprep.subr.mxu0 0.0
    %4563 = vmatpush1.msra.mxu0 0.0
    %4564 = vmatprep.subr.mxu0 0.0
    %4565 = vmatpush1.msra.mxu0 0.0
    %4566 = vmatprep.subr.mxu0 0.0
    %4567 = vmatpush1.msra.mxu0 0.0
    %4568 = vmatprep.subr.mxu0 0.0
    %4569 = vmatpush1.msra.mxu0 0.0
    %4570 = vmatprep.subr.mxu0 0.0
    %4571 = vmatpush1.msra.mxu0 0.0
    %4572 = vmatprep.subr.mxu0 0.0
    %4573 = vmatpush1.msra.mxu0 0.0
    %4574 = vmatprep.subr.mxu0 0.0
    %4575 = vmatpush1.msra.mxu0 0.0
    %4576 = vmatprep.subr.mxu0 0.0
    %4577 = vmatpush1.msra.mxu0 0.0
    %4578 = vmatprep.subr.mxu0 0.0
    %4579 = vmatpush1.msra.mxu0 0.0
    %4580 = vmatprep.subr.mxu0 0.0
    %4581 = vmatpush1.msra.mxu0 0.0
    %4582 = vmatprep.subr.mxu0 0.0
    %4583 = vmatpush1.msra.mxu0 0.0
    %4584 = vmatprep.subr.mxu0 0.0
    %4585 = vmatpush1.msra.mxu0 0.0
    %4586 = vmatprep.subr.mxu0 0.0
    %4587 = vmatpush1.msra.mxu0 0.0
    %4588 = vmatprep.subr.mxu0 0.0
    %4589 = vmatpush1.msra.mxu0 0.0
    %4590 = vmatprep.subr.mxu0 0.0
    %4591 = vmatpush1.msra.mxu0 0.0
    %4592 = vmatprep.subr.mxu0 0.0
    %4593 = vmatpush1.msra.mxu0 0.0
    %4594 = vmatprep.subr.mxu0 0.0
    %4595 = vmatpush1.msra.mxu0 0.0
    %4596 = vmatprep.subr.mxu0 0.0
    %4597 = vmatpush1.msra.mxu0 0.0
    %4598 = vmatprep.subr.mxu0 0.0
    %4599 = vmatpush1.msra.mxu0 0.0
    %4600 = vmatprep.subr.mxu0 0.0
    %4601 = vmatpush1.msra.mxu0 0.0
    %4602 = vmatprep.subr.mxu0 0.0
    %4603 = vmatpush1.msra.mxu0 0.0
    %4604 = vmatprep.subr.mxu0 0.0
    %4605 = vmatpush1.msra.mxu0 0.0
    %4606 = vmatprep.subr.mxu0 0.0
    %4607 = vmatpush1.msra.mxu0 0.0
    %4608 = vmatprep.subr.mxu0 0.0
    %4609 = vmatpush1.msra.mxu0 0.0
    %4610 = vmatprep.subr.mxu0 0.0
    %4611 = vmatpush1.msra.mxu0 0.0
    %4612 = vmatprep.subr.mxu0 0.0
    %4613 = vmatpush1.msra.mxu0 0.0
    %4614 = vmatprep.subr.mxu0 0.0
    %4615 = vmatpush1.msra.mxu0 0.0
    %4616 = vmatprep.subr.mxu0 0.0
    %4617 = vmatpush1.msra.mxu0 0.0
    %4618 = vmatprep.mubr.f32.mxu0 0.0
    %4619 = vmatmul.mubr.f32.gmra.mrb[0].mxu0 %v4552
    %v4620 = vpop.f32.mrb[0].mxu0
    %v4621 = vadd.f32 0.0, %v4620
    %v4622 = vpop.f32.mrb[0].mxu0
    %4623 = vdwg.mxu0
    %4624 = vrot.lane.b32.xlu0 %v4046, 64
    %v4625 = vpop.permute.xlu0 %4624
    %4626 = vrot.lane.b32.xlu0 %v4087, 64
    %v4627 = vpop.permute.xlu0 %4626
    %v4628 = vsel %vm824, %v4625, 0
    %v4630 = vsel %vm824, %v4627, 0
    %4632 = vmatprep.subr.mxu0 0.0
    %4633 = vmatpush1.xpose.msra.mxu0 %v4630
    %4634 = vmatprep.subr.mxu0 0.0
    %4635 = vmatpush1.xpose.msra.mxu0 0.0
    %4636 = vmatprep.subr.mxu0 0.0
    %4637 = vmatpush1.xpose.msra.mxu0 0.0
    %4638 = vmatprep.subr.mxu0 0.0
    %4639 = vmatpush1.xpose.msra.mxu0 0.0
    %4640 = vmatprep.subr.mxu0 0.0
    %4641 = vmatpush1.xpose.msra.mxu0 0.0
    %4642 = vmatprep.subr.mxu0 0.0
    %4643 = vmatpush1.xpose.msra.mxu0 0.0
    %4644 = vmatprep.subr.mxu0 0.0
    %4645 = vmatpush1.xpose.msra.mxu0 0.0
    %4646 = vmatprep.subr.mxu0 0.0
    %4647 = vmatpush1.xpose.msra.mxu0 0.0
    %4648 = vmatprep.subr.mxu0 0.0
    %4649 = vmatpush1.xpose.msra.mxu0 0.0
    %4650 = vmatprep.subr.mxu0 0.0
    %4651 = vmatpush1.xpose.msra.mxu0 0.0
    %4652 = vmatprep.subr.mxu0 0.0
    %4653 = vmatpush1.xpose.msra.mxu0 0.0
    %4654 = vmatprep.subr.mxu0 0.0
    %4655 = vmatpush1.xpose.msra.mxu0 0.0
    %4656 = vmatprep.subr.mxu0 0.0
    %4657 = vmatpush1.xpose.msra.mxu0 0.0
    %4658 = vmatprep.subr.mxu0 0.0
    %4659 = vmatpush1.xpose.msra.mxu0 0.0
    %4660 = vmatprep.subr.mxu0 0.0
    %4661 = vmatpush1.xpose.msra.mxu0 0.0
    %4662 = vmatprep.subr.mxu0 0.0
    %4663 = vmatpush1.xpose.msra.mxu0 0.0
    %4664 = vmatprep.subr.mxu0 0.0
    %4665 = vmatpush1.xpose.msra.mxu0 0.0
    %4666 = vmatprep.subr.mxu0 0.0
    %4667 = vmatpush1.xpose.msra.mxu0 0.0
    %4668 = vmatprep.subr.mxu0 0.0
    %4669 = vmatpush1.xpose.msra.mxu0 0.0
    %4670 = vmatprep.subr.mxu0 0.0
    %4671 = vmatpush1.xpose.msra.mxu0 0.0
    %4672 = vmatprep.subr.mxu0 0.0
    %4673 = vmatpush1.xpose.msra.mxu0 0.0
    %4674 = vmatprep.subr.mxu0 0.0
    %4675 = vmatpush1.xpose.msra.mxu0 0.0
    %4676 = vmatprep.subr.mxu0 0.0
    %4677 = vmatpush1.xpose.msra.mxu0 0.0
    %4678 = vmatprep.subr.mxu0 0.0
    %4679 = vmatpush1.xpose.msra.mxu0 0.0
    %4680 = vmatprep.subr.mxu0 0.0
    %4681 = vmatpush1.xpose.msra.mxu0 0.0
    %4682 = vmatprep.subr.mxu0 0.0
    %4683 = vmatpush1.xpose.msra.mxu0 0.0
    %4684 = vmatprep.subr.mxu0 0.0
    %4685 = vmatpush1.xpose.msra.mxu0 0.0
    %4686 = vmatprep.subr.mxu0 0.0
    %4687 = vmatpush1.xpose.msra.mxu0 0.0
    %4688 = vmatprep.subr.mxu0 0.0
    %4689 = vmatpush1.xpose.msra.mxu0 0.0
    %4690 = vmatprep.subr.mxu0 0.0
    %4691 = vmatpush1.xpose.msra.mxu0 0.0
    %4692 = vmatprep.subr.mxu0 0.0
    %4693 = vmatpush1.xpose.msra.mxu0 0.0
    %4694 = vmatprep.subr.mxu0 0.0
    %4695 = vmatpush1.xpose.msra.mxu0 0.0
    %4696 = vmatprep.mubr.f32.mxu0 0.0
    %4697 = vmatmul.mubr.f32.gmra.mrb[0].mxu0 %v4628
    %v4698 = vpop.f32.mrb[0].mxu0
    %v4699 = vadd.f32 0.0, %v4698
    %v4700 = vpop.f32.mrb[0].mxu0
    %4701 = vdwg.mxu0
    %v4702 = vmul.f32 %v4699, 0.125
    %v4703 = vadd.f32 %v4702, %v88
    %v4704 = vsel %vm903, %v4703, -inf
    %4705 = vmax.xlane.f32.xlu0 %v4704
    %v4706 = vpop.xlane.xlu0 %4705
    %v4707 = vsub.f32 %v4703, %v4706
    %v4708 = vmul.f32 %v4707, 1.442695
    %v4709 = vpow.pop %v4708
    %v4710 = vsel %vm903, %v4709, 0.0
    %4711 = vadd.xlane.f32.xlu0 %v4710
    %v4712 = vpop.xlane.xlu0 %4711
    %v4713 = vrcp.pop %v4712
    %v4714 = vmul.f32 %v4709, %v4713
    %4716 = vrot.lane.b32.xlu0 %v4128, 64
    %v4717 = vpop.permute.xlu0 %4716
    %v4720 = vsel %vm903, %v4714, 0
    %4722 = vmatprep.subr.mxu0 0.0
    %4723 = vmatpush1.msra.mxu0 %v4717
    %4724 = vmatprep.subr.mxu0 0.0
    %4725 = vmatpush1.msra.mxu0 0.0
    %4726 = vmatprep.subr.mxu0 0.0
    %4727 = vmatpush1.msra.mxu0 0.0
    %4728 = vmatprep.subr.mxu0 0.0
    %4729 = vmatpush1.msra.mxu0 0.0
    %4730 = vmatprep.subr.mxu0 0.0
    %4731 = vmatpush1.msra.mxu0 0.0
    %4732 = vmatprep.subr.mxu0 0.0
    %4733 = vmatpush1.msra.mxu0 0.0
    %4734 = vmatprep.subr.mxu0 0.0
    %4735 = vmatpush1.msra.mxu0 0.0
    %4736 = vmatprep.subr.mxu0 0.0
    %4737 = vmatpush1.msra.mxu0 0.0
    %4738 = vmatprep.subr.mxu0 0.0
    %4739 = vmatpush1.msra.mxu0 0.0
    %4740 = vmatprep.subr.mxu0 0.0
    %4741 = vmatpush1.msra.mxu0 0.0
    %4742 = vmatprep.subr.mxu0 0.0
    %4743 = vmatpush1.msra.mxu0 0.0
    %4744 = vmatprep.subr.mxu0 0.0
    %4745 = vmatpush1.msra.mxu0 0.0
    %4746 = vmatprep.subr.mxu0 0.0
    %4747 = vmatpush1.msra.mxu0 0.0
    %4748 = vmatprep.subr.mxu0 0.0
    %4749 = vmatpush1.msra.mxu0 0.0
    %4750 = vmatprep.subr.mxu0 0.0
    %4751 = vmatpush1.msra.mxu0 0.0
    %4752 = vmatprep.subr.mxu0 0.0
    %4753 = vmatpush1.msra.mxu0 0.0
    %4754 = vmatprep.subr.mxu0 0.0
    %4755 = vmatpush1.msra.mxu0 0.0
    %4756 = vmatprep.subr.mxu0 0.0
    %4757 = vmatpush1.msra.mxu0 0.0
    %4758 = vmatprep.subr.mxu0 0.0
    %4759 = vmatpush1.msra.mxu0 0.0
    %4760 = vmatprep.subr.mxu0 0.0
    %4761 = vmatpush1.msra.mxu0 0.0
    %4762 = vmatprep.subr.mxu0 0.0
    %4763 = vmatpush1.msra.mxu0 0.0
    %4764 = vmatprep.subr.mxu0 0.0
    %4765 = vmatpush1.msra.mxu0 0.0
    %4766 = vmatprep.subr.mxu0 0.0
    %4767 = vmatpush1.msra.mxu0 0.0
    %4768 = vmatprep.subr.mxu0 0.0
    %4769 = vmatpush1.msra.mxu0 0.0
    %4770 = vmatprep.subr.mxu0 0.0
    %4771 = vmatpush1.msra.mxu0 0.0
    %4772 = vmatprep.subr.mxu0 0.0
    %4773 = vmatpush1.msra.mxu0 0.0
    %4774 = vmatprep.subr.mxu0 0.0
    %4775 = vmatpush1.msra.mxu0 0.0
    %4776 = vmatprep.subr.mxu0 0.0
    %4777 = vmatpush1.msra.mxu0 0.0
    %4778 = vmatprep.subr.mxu0 0.0
    %4779 = vmatpush1.msra.mxu0 0.0
    %4780 = vmatprep.subr.mxu0 0.0
    %4781 = vmatpush1.msra.mxu0 0.0
    %4782 = vmatprep.subr.mxu0 0.0
    %4783 = vmatpush1.msra.mxu0 0.0
    %4784 = vmatprep.subr.mxu0 0.0
    %4785 = vmatpush1.msra.mxu0 0.0
    %4786 = vmatprep.mubr.f32.mxu0 0.0
    %4787 = vmatmul.mubr.f32.gmra.mrb[0].mxu0 %v4720
    %v4788 = vpop.f32.mrb[0].mxu0
    %v4789 = vadd.f32 0.0, %v4788
    %v4790 = vpop.f32.mrb[0].mxu0
    %4791 = vdwg.mxu0
    %4793 = vrot.lane.b32.xlu0 %v4459, 64
    %v4794 = vpop.permute.xlu0 %4793
    %4797 = vrot.lane.b32.xlu0 %v4789, 64
    %v4798 = vpop.permute.xlu0 %4797
    %v4800 = vsel %vm824, %v4291, %v4794
    %v4801 = vsel %vm824, %v4621, %v4798
    %v4802 = vpack.c.bf16 %v4800, %v4800
    %v4803 = vpack.c.bf16 %v4801, %v4801
    %s4804 = scalar_lea.vmem [#allocation7], 512
    %v4805 = vld [vmem:[%s4804] sm:$0xff]
    %v4806 = vld [vmem:[%s4804 + $0x8] sm:$0xff]
    %v4807 = vld [vmem:[%s4804 + $0x10] sm:$0xff]
    %v4808 = vld [vmem:[%s4804 + $0x18] sm:$0xff]
    %v4809 = vld [vmem:[%s4804 + $0x20] sm:$0xff]
    %v4810 = vld [vmem:[%s4804 + $0x28] sm:$0xff]
    %v4811 = vld [vmem:[%s4804 + $0x30] sm:$0xff]
    %v4812 = vld [vmem:[%s4804 + $0x38] sm:$0xff]
    %v4813 = vld [vmem:[%s4804 + $0x40] sm:$0xff]
    %v4814 = vld [vmem:[%s4804 + $0x48] sm:$0xff]
    %v4815 = vld [vmem:[%s4804 + $0x50] sm:$0xff]
    %v4816 = vld [vmem:[%s4804 + $0x58] sm:$0xff]
    %v4817 = vld [vmem:[%s4804 + $0x60] sm:$0xff]
    %v4818 = vld [vmem:[%s4804 + $0x68] sm:$0xff]
    %v4819 = vld [vmem:[%s4804 + $0x70] sm:$0xff]
    %v4820 = vld [vmem:[%s4804 + $0x78] sm:$0xff]
    %v4821 = vld [vmem:[%s4804 + $0x80] sm:$0xff]
    %v4822 = vld [vmem:[%s4804 + $0x88] sm:$0xff]
    %v4823 = vld [vmem:[%s4804 + $0x90] sm:$0xff]
    %v4824 = vld [vmem:[%s4804 + $0x98] sm:$0xff]
    %v4825 = vld [vmem:[%s4804 + $0xa0] sm:$0xff]
    %v4826 = vld [vmem:[%s4804 + $0xa8] sm:$0xff]
    %v4827 = vld [vmem:[%s4804 + $0xb0] sm:$0xff]
    %v4828 = vld [vmem:[%s4804 + $0xb8] sm:$0xff]
    %v4829 = vld [vmem:[%s4804 + $0xc0] sm:$0xff]
    %v4830 = vld [vmem:[%s4804 + $0xc8] sm:$0xff]
    %v4831 = vld [vmem:[%s4804 + $0xd0] sm:$0xff]
    %v4832 = vld [vmem:[%s4804 + $0xd8] sm:$0xff]
    %v4833 = vld [vmem:[%s4804 + $0xe0] sm:$0xff]
    %v4834 = vld [vmem:[%s4804 + $0xe8] sm:$0xff]
    %v4835 = vld [vmem:[%s4804 + $0xf0] sm:$0xff]
    %v4836 = vld [vmem:[%s4804 + $0xf8] sm:$0xff]
    %s4837 = scalar_lea.vmem [#allocation8], 4
    %v4838 = vld [vmem:[%s4837] sm:$0x3]
    %v4840 = vlaneseq
    %v4841 = vshrl.u32 %v4840, 7
    %v4842 = vsub.s32 0, %v4841
    %v4843 = vrot.slane %v4838, %v4842
    %v4844 = vlaneseq
    %v4845 = vshrl.u32 %v4844, 7
    %v4846 = vsub.s32 1, %v4845
    %v4847 = vrot.slane %v4838, %v4846
    %v4882 = vunpack.c.l.b16 %v4805
    %v4883 = vunpack.c.h.b16 %v4805
    %v4884 = vunpack.c.l.b16 %v4806
    %v4885 = vunpack.c.h.b16 %v4806
    %v4886 = vunpack.c.l.b16 %v4807
    %v4887 = vunpack.c.h.b16 %v4807
    %v4888 = vunpack.c.l.b16 %v4808
    %v4889 = vunpack.c.h.b16 %v4808
    %v4890 = vunpack.c.l.b16 %v4809
    %v4891 = vunpack.c.h.b16 %v4809
    %v4892 = vunpack.c.l.b16 %v4810
    %v4893 = vunpack.c.h.b16 %v4810
    %v4894 = vunpack.c.l.b16 %v4811
    %v4895 = vunpack.c.h.b16 %v4811
    %v4896 = vunpack.c.l.b16 %v4812
    %v4897 = vunpack.c.h.b16 %v4812
    %v4898 = vunpack.c.l.b16 %v4813
    %v4899 = vunpack.c.h.b16 %v4813
    %v4900 = vunpack.c.l.b16 %v4814
    %v4901 = vunpack.c.h.b16 %v4814
    %v4902 = vunpack.c.l.b16 %v4815
    %v4903 = vunpack.c.h.b16 %v4815
    %v4904 = vunpack.c.l.b16 %v4816
    %v4905 = vunpack.c.h.b16 %v4816
    %v4906 = vunpack.c.l.b16 %v4817
    %v4907 = vunpack.c.h.b16 %v4817
    %v4908 = vunpack.c.l.b16 %v4818
    %v4909 = vunpack.c.h.b16 %v4818
    %v4910 = vunpack.c.l.b16 %v4819
    %v4911 = vunpack.c.h.b16 %v4819
    %v4912 = vunpack.c.l.b16 %v4820
    %v4913 = vunpack.c.h.b16 %v4820
    %v4914 = vunpack.c.l.b16 %v4821
    %v4915 = vunpack.c.h.b16 %v4821
    %v4916 = vunpack.c.l.b16 %v4822
    %v4917 = vunpack.c.h.b16 %v4822
    %v4918 = vunpack.c.l.b16 %v4823
    %v4919 = vunpack.c.h.b16 %v4823
    %v4920 = vunpack.c.l.b16 %v4824
    %v4921 = vunpack.c.h.b16 %v4824
    %v4922 = vunpack.c.l.b16 %v4825
    %v4923 = vunpack.c.h.b16 %v4825
    %v4924 = vunpack.c.l.b16 %v4826
    %v4925 = vunpack.c.h.b16 %v4826
    %v4926 = vunpack.c.l.b16 %v4827
    %v4927 = vunpack.c.h.b16 %v4827
    %v4928 = vunpack.c.l.b16 %v4828
    %v4929 = vunpack.c.h.b16 %v4828
    %v4930 = vunpack.c.l.b16 %v4829
    %v4931 = vunpack.c.h.b16 %v4829
    %v4932 = vunpack.c.l.b16 %v4830
    %v4933 = vunpack.c.h.b16 %v4830
    %v4934 = vunpack.c.l.b16 %v4831
    %v4935 = vunpack.c.h.b16 %v4831
    %v4936 = vunpack.c.l.b16 %v4832
    %v4937 = vunpack.c.h.b16 %v4832
    %v4938 = vunpack.c.l.b16 %v4833
    %v4939 = vunpack.c.h.b16 %v4833
    %v4940 = vunpack.c.l.b16 %v4834
    %v4941 = vunpack.c.h.b16 %v4834
    %v4942 = vunpack.c.l.b16 %v4835
    %v4943 = vunpack.c.h.b16 %v4835
    %v4944 = vunpack.c.l.b16 %v4836
    %v4945 = vunpack.c.h.b16 %v4836
    %v4946 = vpack.c.b16 %v4884, %v4882
    %v4947 = vpack.c.b16 %v4885, %v4883
    %v4948 = vpack.c.b16 %v4888, %v4886
    %v4949 = vpack.c.b16 %v4889, %v4887
    %v4950 = vpack.c.b16 %v4892, %v4890
    %v4951 = vpack.c.b16 %v4893, %v4891
    %v4952 = vpack.c.b16 %v4896, %v4894
    %v4953 = vpack.c.b16 %v4897, %v4895
    %v4954 = vpack.c.b16 %v4900, %v4898
    %v4955 = vpack.c.b16 %v4901, %v4899
    %v4956 = vpack.c.b16 %v4904, %v4902
    %v4957 = vpack.c.b16 %v4905, %v4903
    %v4958 = vpack.c.b16 %v4908, %v4906
    %v4959 = vpack.c.b16 %v4909, %v4907
    %v4960 = vpack.c.b16 %v4912, %v4910
    %v4961 = vpack.c.b16 %v4913, %v4911
    %v4962 = vpack.c.b16 %v4916, %v4914
    %v4963 = vpack.c.b16 %v4917, %v4915
    %v4964 = vpack.c.b16 %v4920, %v4918
    %v4965 = vpack.c.b16 %v4921, %v4919
    %v4966 = vpack.c.b16 %v4924, %v4922
    %v4967 = vpack.c.b16 %v4925, %v4923
    %v4968 = vpack.c.b16 %v4928, %v4926
    %v4969 = vpack.c.b16 %v4929, %v4927
    %v4970 = vpack.c.b16 %v4932, %v4930
    %v4971 = vpack.c.b16 %v4933, %v4931
    %v4972 = vpack.c.b16 %v4936, %v4934
    %v4973 = vpack.c.b16 %v4937, %v4935
    %v4974 = vpack.c.b16 %v4940, %v4938
    %v4975 = vpack.c.b16 %v4941, %v4939
    %v4976 = vpack.c.b16 %v4944, %v4942
    %v4977 = vpack.c.b16 %v4945, %v4943
    %5010 = vmatprep.subr.bf16.mxu0 %v4947
    %5011 = vmatpush1.bf16.msra.mxu0 %v4946
    %5012 = vmatprep.subr.bf16.mxu0 %v4949
    %5013 = vmatpush1.bf16.msra.mxu0 %v4948
    %5014 = vmatprep.subr.bf16.mxu0 %v4951
    %5015 = vmatpush1.bf16.msra.mxu0 %v4950
    %5016 = vmatprep.subr.bf16.mxu0 %v4953
    %5017 = vmatpush1.bf16.msra.mxu0 %v4952
    %5018 = vmatprep.subr.bf16.mxu0 %v4955
    %5019 = vmatpush1.bf16.msra.mxu0 %v4954
    %5020 = vmatprep.subr.bf16.mxu0 %v4957
    %5021 = vmatpush1.bf16.msra.mxu0 %v4956
    %5022 = vmatprep.subr.bf16.mxu0 %v4959
    %5023 = vmatpush1.bf16.msra.mxu0 %v4958
    %5024 = vmatprep.subr.bf16.mxu0 %v4961
    %5025 = vmatpush1.bf16.msra.mxu0 %v4960
    %5026 = vmatprep.subr.bf16.mxu0 %v4963
    %5027 = vmatpush1.bf16.msra.mxu0 %v4962
    %5028 = vmatprep.subr.bf16.mxu0 %v4965
    %5029 = vmatpush1.bf16.msra.mxu0 %v4964
    %5030 = vmatprep.subr.bf16.mxu0 %v4967
    %5031 = vmatpush1.bf16.msra.mxu0 %v4966
    %5032 = vmatprep.subr.bf16.mxu0 %v4969
    %5033 = vmatpush1.bf16.msra.mxu0 %v4968
    %5034 = vmatprep.subr.bf16.mxu0 %v4971
    %5035 = vmatpush1.bf16.msra.mxu0 %v4970
    %5036 = vmatprep.subr.bf16.mxu0 %v4973
    %5037 = vmatpush1.bf16.msra.mxu0 %v4972
    %5038 = vmatprep.subr.bf16.mxu0 %v4975
    %5039 = vmatpush1.bf16.msra.mxu0 %v4974
    %5040 = vmatprep.subr.bf16.mxu0 %v4977
    %5041 = vmatpush1.bf16.msra.mxu0 %v4976
    %5042 = vmatprep.mubr.bf16.mxu0 %v4803
    %5043 = vmatmul.mubr.bf16.gmra.mrb[0].mxu0 %v4802
    %v5044 = vpop.f32.mrb[0].mxu0
    %v5045 = vadd.f32 %v4843, %v5044
    %v5046 = vpop.f32.mrb[0].mxu0
    %v5047 = vadd.f32 %v4847, %v5046
    %v5048 = vpop.f32.mrb[0].mxu0
    %v5049 = vpop.f32.mrb[0].mxu0
    %5050 = vdwg.mxu0
    %v5051 = vpack.c.bf16 %v5045, %v5045
    %v5052 = vpack.c.bf16 %v5047, %v5047
    %s5053 = scalar_lea.vmem [#allocation2], 2304
    %v5054 = vld [vmem:[%s5053] sm:$0xff]
    %v5055 = vld [vmem:[%s5053 + $0x8] sm:$0xff]
    %v5056 = vld [vmem:[%s5053 + $0x10] sm:$0xff]
    %v5057 = vld [vmem:[%s5053 + $0x18] sm:$0xff]
    %v5058 = vld [vmem:[%s5053 + $0x20] sm:$0xff]
    %v5059 = vld [vmem:[%s5053 + $0x28] sm:$0xff]
    %v5060 = vld [vmem:[%s5053 + $0x30] sm:$0xff]
    %v5061 = vld [vmem:[%s5053 + $0x38] sm:$0xff]
    %v5062 = vld [vmem:[%s5053 + $0x40] sm:$0xff]
    %v5063 = vld [vmem:[%s5053 + $0x48] sm:$0xff]
    %v5064 = vld [vmem:[%s5053 + $0x50] sm:$0xff]
    %v5065 = vld [vmem:[%s5053 + $0x58] sm:$0xff]
    %v5066 = vld [vmem:[%s5053 + $0x60] sm:$0xff]
    %v5067 = vld [vmem:[%s5053 + $0x68] sm:$0xff]
    %v5068 = vld [vmem:[%s5053 + $0x70] sm:$0xff]
    %v5069 = vld [vmem:[%s5053 + $0x78] sm:$0xff]
    %v5070 = vld [vmem:[%s5053 + $0x80] sm:$0xff]
    %v5071 = vld [vmem:[%s5053 + $0x88] sm:$0xff]
    %v5072 = vld [vmem:[%s5053 + $0x90] sm:$0xff]
    %v5073 = vld [vmem:[%s5053 + $0x98] sm:$0xff]
    %v5074 = vld [vmem:[%s5053 + $0xa0] sm:$0xff]
    %v5075 = vld [vmem:[%s5053 + $0xa8] sm:$0xff]
    %v5076 = vld [vmem:[%s5053 + $0xb0] sm:$0xff]
    %v5077 = vld [vmem:[%s5053 + $0xb8] sm:$0xff]
    %v5078 = vld [vmem:[%s5053 + $0xc0] sm:$0xff]
    %v5079 = vld [vmem:[%s5053 + $0xc8] sm:$0xff]
    %v5080 = vld [vmem:[%s5053 + $0xd0] sm:$0xff]
    %v5081 = vld [vmem:[%s5053 + $0xd8] sm:$0xff]
    %v5082 = vld [vmem:[%s5053 + $0xe0] sm:$0xff]
    %v5083 = vld [vmem:[%s5053 + $0xe8] sm:$0xff]
    %v5084 = vld [vmem:[%s5053 + $0xf0] sm:$0xff]
    %v5085 = vld [vmem:[%s5053 + $0xf8] sm:$0xff]
    %v5086 = vld [vmem:[%s5053 + $0x100] sm:$0xff]
    %v5087 = vld [vmem:[%s5053 + $0x108] sm:$0xff]
    %v5088 = vld [vmem:[%s5053 + $0x110] sm:$0xff]
    %v5089 = vld [vmem:[%s5053 + $0x118] sm:$0xff]
    %v5090 = vld [vmem:[%s5053 + $0x120] sm:$0xff]
    %v5091 = vld [vmem:[%s5053 + $0x128] sm:$0xff]
    %v5092 = vld [vmem:[%s5053 + $0x130] sm:$0xff]
    %v5093 = vld [vmem:[%s5053 + $0x138] sm:$0xff]
    %v5094 = vld [vmem:[%s5053 + $0x140] sm:$0xff]
    %v5095 = vld [vmem:[%s5053 + $0x148] sm:$0xff]
    %v5096 = vld [vmem:[%s5053 + $0x150] sm:$0xff]
    %v5097 = vld [vmem:[%s5053 + $0x158] sm:$0xff]
    %v5098 = vld [vmem:[%s5053 + $0x160] sm:$0xff]
    %v5099 = vld [vmem:[%s5053 + $0x168] sm:$0xff]
    %v5100 = vld [vmem:[%s5053 + $0x170] sm:$0xff]
    %v5101 = vld [vmem:[%s5053 + $0x178] sm:$0xff]
    %v5102 = vld [vmem:[%s5053 + $0x180] sm:$0xff]
    %v5103 = vld [vmem:[%s5053 + $0x188] sm:$0xff]
    %v5104 = vld [vmem:[%s5053 + $0x190] sm:$0xff]
    %v5105 = vld [vmem:[%s5053 + $0x198] sm:$0xff]
    %v5106 = vld [vmem:[%s5053 + $0x1a0] sm:$0xff]
    %v5107 = vld [vmem:[%s5053 + $0x1a8] sm:$0xff]
    %v5108 = vld [vmem:[%s5053 + $0x1b0] sm:$0xff]
    %v5109 = vld [vmem:[%s5053 + $0x1b8] sm:$0xff]
    %v5110 = vld [vmem:[%s5053 + $0x1c0] sm:$0xff]
    %v5111 = vld [vmem:[%s5053 + $0x1c8] sm:$0xff]
    %v5112 = vld [vmem:[%s5053 + $0x1d0] sm:$0xff]
    %v5113 = vld [vmem:[%s5053 + $0x1d8] sm:$0xff]
    %v5114 = vld [vmem:[%s5053 + $0x1e0] sm:$0xff]
    %v5115 = vld [vmem:[%s5053 + $0x1e8] sm:$0xff]
    %v5116 = vld [vmem:[%s5053 + $0x1f0] sm:$0xff]
    %v5117 = vld [vmem:[%s5053 + $0x1f8] sm:$0xff]
    %v5118 = vld [vmem:[%s5053 + $0x200] sm:$0xff]
    %v5119 = vld [vmem:[%s5053 + $0x208] sm:$0xff]
    %v5120 = vld [vmem:[%s5053 + $0x210] sm:$0xff]
    %v5121 = vld [vmem:[%s5053 + $0x218] sm:$0xff]
    %v5122 = vld [vmem:[%s5053 + $0x220] sm:$0xff]
    %v5123 = vld [vmem:[%s5053 + $0x228] sm:$0xff]
    %v5124 = vld [vmem:[%s5053 + $0x230] sm:$0xff]
    %v5125 = vld [vmem:[%s5053 + $0x238] sm:$0xff]
    %v5126 = vld [vmem:[%s5053 + $0x240] sm:$0xff]
    %v5127 = vld [vmem:[%s5053 + $0x248] sm:$0xff]
    %v5128 = vld [vmem:[%s5053 + $0x250] sm:$0xff]
    %v5129 = vld [vmem:[%s5053 + $0x258] sm:$0xff]
    %v5130 = vld [vmem:[%s5053 + $0x260] sm:$0xff]
    %v5131 = vld [vmem:[%s5053 + $0x268] sm:$0xff]
    %v5132 = vld [vmem:[%s5053 + $0x270] sm:$0xff]
    %v5133 = vld [vmem:[%s5053 + $0x278] sm:$0xff]
    %v5134 = vld [vmem:[%s5053 + $0x280] sm:$0xff]
    %v5135 = vld [vmem:[%s5053 + $0x288] sm:$0xff]
    %v5136 = vld [vmem:[%s5053 + $0x290] sm:$0xff]
    %v5137 = vld [vmem:[%s5053 + $0x298] sm:$0xff]
    %v5138 = vld [vmem:[%s5053 + $0x2a0] sm:$0xff]
    %v5139 = vld [vmem:[%s5053 + $0x2a8] sm:$0xff]
    %v5140 = vld [vmem:[%s5053 + $0x2b0] sm:$0xff]
    %v5141 = vld [vmem:[%s5053 + $0x2b8] sm:$0xff]
    %v5142 = vld [vmem:[%s5053 + $0x2c0] sm:$0xff]
    %v5143 = vld [vmem:[%s5053 + $0x2c8] sm:$0xff]
    %v5144 = vld [vmem:[%s5053 + $0x2d0] sm:$0xff]
    %v5145 = vld [vmem:[%s5053 + $0x2d8] sm:$0xff]
    %v5146 = vld [vmem:[%s5053 + $0x2e0] sm:$0xff]
    %v5147 = vld [vmem:[%s5053 + $0x2e8] sm:$0xff]
    %v5148 = vld [vmem:[%s5053 + $0x2f0] sm:$0xff]
    %v5149 = vld [vmem:[%s5053 + $0x2f8] sm:$0xff]
    %s5150 = scalar_lea.vmem [#allocation5], 18
    %v5151 = vld [vmem:[%s5150] sm:$0x3f]
    %v5153 = vlaneseq
    %v5154 = vshrl.u32 %v5153, 7
    %v5155 = vsub.s32 0, %v5154
    %v5156 = vrot.slane %v5151, %v5155
    %v5157 = vlaneseq
    %v5158 = vshrl.u32 %v5157, 7
    %v5159 = vsub.s32 1, %v5158
    %v5160 = vrot.slane %v5151, %v5159
    %v5161 = vlaneseq
    %v5162 = vshrl.u32 %v5161, 7
    %v5163 = vsub.s32 2, %v5162
    %v5164 = vrot.slane %v5151, %v5163
    %v5165 = vlaneseq
    %v5166 = vshrl.u32 %v5165, 7
    %v5167 = vsub.s32 3, %v5166
    %v5168 = vrot.slane %v5151, %v5167
    %v5169 = vlaneseq
    %v5170 = vshrl.u32 %v5169, 7
    %v5171 = vsub.s32 4, %v5170
    %v5172 = vrot.slane %v5151, %v5171
    %v5173 = vlaneseq
    %v5174 = vshrl.u32 %v5173, 7
    %v5175 = vsub.s32 5, %v5174
    %v5176 = vrot.slane %v5151, %v5175
    %v5279 = vunpack.c.l.b16 %v5054
    %v5280 = vunpack.c.h.b16 %v5054
    %v5281 = vunpack.c.l.b16 %v5055
    %v5282 = vunpack.c.h.b16 %v5055
    %v5283 = vunpack.c.l.b16 %v5056
    %v5284 = vunpack.c.h.b16 %v5056
    %v5285 = vunpack.c.l.b16 %v5057
    %v5286 = vunpack.c.h.b16 %v5057
    %v5287 = vunpack.c.l.b16 %v5058
    %v5288 = vunpack.c.h.b16 %v5058
    %v5289 = vunpack.c.l.b16 %v5059
    %v5290 = vunpack.c.h.b16 %v5059
    %v5291 = vunpack.c.l.b16 %v5060
    %v5292 = vunpack.c.h.b16 %v5060
    %v5293 = vunpack.c.l.b16 %v5061
    %v5294 = vunpack.c.h.b16 %v5061
    %v5295 = vunpack.c.l.b16 %v5062
    %v5296 = vunpack.c.h.b16 %v5062
    %v5297 = vunpack.c.l.b16 %v5063
    %v5298 = vunpack.c.h.b16 %v5063
    %v5299 = vunpack.c.l.b16 %v5064
    %v5300 = vunpack.c.h.b16 %v5064
    %v5301 = vunpack.c.l.b16 %v5065
    %v5302 = vunpack.c.h.b16 %v5065
    %v5303 = vunpack.c.l.b16 %v5066
    %v5304 = vunpack.c.h.b16 %v5066
    %v5305 = vunpack.c.l.b16 %v5067
    %v5306 = vunpack.c.h.b16 %v5067
    %v5307 = vunpack.c.l.b16 %v5068
    %v5308 = vunpack.c.h.b16 %v5068
    %v5309 = vunpack.c.l.b16 %v5069
    %v5310 = vunpack.c.h.b16 %v5069
    %v5311 = vunpack.c.l.b16 %v5070
    %v5312 = vunpack.c.h.b16 %v5070
    %v5313 = vunpack.c.l.b16 %v5071
    %v5314 = vunpack.c.h.b16 %v5071
    %v5315 = vunpack.c.l.b16 %v5072
    %v5316 = vunpack.c.h.b16 %v5072
    %v5317 = vunpack.c.l.b16 %v5073
    %v5318 = vunpack.c.h.b16 %v5073
    %v5319 = vunpack.c.l.b16 %v5074
    %v5320 = vunpack.c.h.b16 %v5074
    %v5321 = vunpack.c.l.b16 %v5075
    %v5322 = vunpack.c.h.b16 %v5075
    %v5323 = vunpack.c.l.b16 %v5076
    %v5324 = vunpack.c.h.b16 %v5076
    %v5325 = vunpack.c.l.b16 %v5077
    %v5326 = vunpack.c.h.b16 %v5077
    %v5327 = vunpack.c.l.b16 %v5078
    %v5328 = vunpack.c.h.b16 %v5078
    %v5329 = vunpack.c.l.b16 %v5079
    %v5330 = vunpack.c.h.b16 %v5079
    %v5331 = vunpack.c.l.b16 %v5080
    %v5332 = vunpack.c.h.b16 %v5080
    %v5333 = vunpack.c.l.b16 %v5081
    %v5334 = vunpack.c.h.b16 %v5081
    %v5335 = vunpack.c.l.b16 %v5082
    %v5336 = vunpack.c.h.b16 %v5082
    %v5337 = vunpack.c.l.b16 %v5083
    %v5338 = vunpack.c.h.b16 %v5083
    %v5339 = vunpack.c.l.b16 %v5084
    %v5340 = vunpack.c.h.b16 %v5084
    %v5341 = vunpack.c.l.b16 %v5085
    %v5342 = vunpack.c.h.b16 %v5085
    %v5343 = vunpack.c.l.b16 %v5086
    %v5344 = vunpack.c.h.b16 %v5086
    %v5345 = vunpack.c.l.b16 %v5087
    %v5346 = vunpack.c.h.b16 %v5087
    %v5347 = vunpack.c.l.b16 %v5088
    %v5348 = vunpack.c.h.b16 %v5088
    %v5349 = vunpack.c.l.b16 %v5089
    %v5350 = vunpack.c.h.b16 %v5089
    %v5351 = vunpack.c.l.b16 %v5090
    %v5352 = vunpack.c.h.b16 %v5090
    %v5353 = vunpack.c.l.b16 %v5091
    %v5354 = vunpack.c.h.b16 %v5091
    %v5355 = vunpack.c.l.b16 %v5092
    %v5356 = vunpack.c.h.b16 %v5092
    %v5357 = vunpack.c.l.b16 %v5093
    %v5358 = vunpack.c.h.b16 %v5093
    %v5359 = vunpack.c.l.b16 %v5094
    %v5360 = vunpack.c.h.b16 %v5094
    %v5361 = vunpack.c.l.b16 %v5095
    %v5362 = vunpack.c.h.b16 %v5095
    %v5363 = vunpack.c.l.b16 %v5096
    %v5364 = vunpack.c.h.b16 %v5096
    %v5365 = vunpack.c.l.b16 %v5097
    %v5366 = vunpack.c.h.b16 %v5097
    %v5367 = vunpack.c.l.b16 %v5098
    %v5368 = vunpack.c.h.b16 %v5098
    %v5369 = vunpack.c.l.b16 %v5099
    %v5370 = vunpack.c.h.b16 %v5099
    %v5371 = vunpack.c.l.b16 %v5100
    %v5372 = vunpack.c.h.b16 %v5100
    %v5373 = vunpack.c.l.b16 %v5101
    %v5374 = vunpack.c.h.b16 %v5101
    %v5375 = vunpack.c.l.b16 %v5102
    %v5376 = vunpack.c.h.b16 %v5102
    %v5377 = vunpack.c.l.b16 %v5103
    %v5378 = vunpack.c.h.b16 %v5103
    %v5379 = vunpack.c.l.b16 %v5104
    %v5380 = vunpack.c.h.b16 %v5104
    %v5381 = vunpack.c.l.b16 %v5105
    %v5382 = vunpack.c.h.b16 %v5105
    %v5383 = vunpack.c.l.b16 %v5106
    %v5384 = vunpack.c.h.b16 %v5106
    %v5385 = vunpack.c.l.b16 %v5107
    %v5386 = vunpack.c.h.b16 %v5107
    %v5387 = vunpack.c.l.b16 %v5108
    %v5388 = vunpack.c.h.b16 %v5108
    %v5389 = vunpack.c.l.b16 %v5109
    %v5390 = vunpack.c.h.b16 %v5109
    %v5391 = vunpack.c.l.b16 %v5110
    %v5392 = vunpack.c.h.b16 %v5110
    %v5393 = vunpack.c.l.b16 %v5111
    %v5394 = vunpack.c.h.b16 %v5111
    %v5395 = vunpack.c.l.b16 %v5112
    %v5396 = vunpack.c.h.b16 %v5112
    %v5397 = vunpack.c.l.b16 %v5113
    %v5398 = vunpack.c.h.b16 %v5113
    %v5399 = vunpack.c.l.b16 %v5114
    %v5400 = vunpack.c.h.b16 %v5114
    %v5401 = vunpack.c.l.b16 %v5115
    %v5402 = vunpack.c.h.b16 %v5115
    %v5403 = vunpack.c.l.b16 %v5116
    %v5404 = vunpack.c.h.b16 %v5116
    %v5405 = vunpack.c.l.b16 %v5117
    %v5406 = vunpack.c.h.b16 %v5117
    %v5407 = vunpack.c.l.b16 %v5118
    %v5408 = vunpack.c.h.b16 %v5118
    %v5409 = vunpack.c.l.b16 %v5119
    %v5410 = vunpack.c.h.b16 %v5119
    %v5411 = vunpack.c.l.b16 %v5120
    %v5412 = vunpack.c.h.b16 %v5120
    %v5413 = vunpack.c.l.b16 %v5121
    %v5414 = vunpack.c.h.b16 %v5121
    %v5415 = vunpack.c.l.b16 %v5122
    %v5416 = vunpack.c.h.b16 %v5122
    %v5417 = vunpack.c.l.b16 %v5123
    %v5418 = vunpack.c.h.b16 %v5123
    %v5419 = vunpack.c.l.b16 %v5124
    %v5420 = vunpack.c.h.b16 %v5124
    %v5421 = vunpack.c.l.b16 %v5125
    %v5422 = vunpack.c.h.b16 %v5125
    %v5423 = vunpack.c.l.b16 %v5126
    %v5424 = vunpack.c.h.b16 %v5126
    %v5425 = vunpack.c.l.b16 %v5127
    %v5426 = vunpack.c.h.b16 %v5127
    %v5427 = vunpack.c.l.b16 %v5128
    %v5428 = vunpack.c.h.b16 %v5128
    %v5429 = vunpack.c.l.b16 %v5129
    %v5430 = vunpack.c.h.b16 %v5129
    %v5431 = vunpack.c.l.b16 %v5130
    %v5432 = vunpack.c.h.b16 %v5130
    %v5433 = vunpack.c.l.b16 %v5131
    %v5434 = vunpack.c.h.b16 %v5131
    %v5435 = vunpack.c.l.b16 %v5132
    %v5436 = vunpack.c.h.b16 %v5132
    %v5437 = vunpack.c.l.b16 %v5133
    %v5438 = vunpack.c.h.b16 %v5133
    %v5439 = vunpack.c.l.b16 %v5134
    %v5440 = vunpack.c.h.b16 %v5134
    %v5441 = vunpack.c.l.b16 %v5135
    %v5442 = vunpack.c.h.b16 %v5135
    %v5443 = vunpack.c.l.b16 %v5136
    %v5444 = vunpack.c.h.b16 %v5136
    %v5445 = vunpack.c.l.b16 %v5137
    %v5446 = vunpack.c.h.b16 %v5137
    %v5447 = vunpack.c.l.b16 %v5138
    %v5448 = vunpack.c.h.b16 %v5138
    %v5449 = vunpack.c.l.b16 %v5139
    %v5450 = vunpack.c.h.b16 %v5139
    %v5451 = vunpack.c.l.b16 %v5140
    %v5452 = vunpack.c.h.b16 %v5140
    %v5453 = vunpack.c.l.b16 %v5141
    %v5454 = vunpack.c.h.b16 %v5141
    %v5455 = vunpack.c.l.b16 %v5142
    %v5456 = vunpack.c.h.b16 %v5142
    %v5457 = vunpack.c.l.b16 %v5143
    %v5458 = vunpack.c.h.b16 %v5143
    %v5459 = vunpack.c.l.b16 %v5144
    %v5460 = vunpack.c.h.b16 %v5144
    %v5461 = vunpack.c.l.b16 %v5145
    %v5462 = vunpack.c.h.b16 %v5145
    %v5463 = vunpack.c.l.b16 %v5146
    %v5464 = vunpack.c.h.b16 %v5146
    %v5465 = vunpack.c.l.b16 %v5147
    %v5466 = vunpack.c.h.b16 %v5147
    %v5467 = vunpack.c.l.b16 %v5148
    %v5468 = vunpack.c.h.b16 %v5148
    %v5469 = vunpack.c.l.b16 %v5149
    %v5470 = vunpack.c.h.b16 %v5149
    %v5471 = vpack.c.b16 %v5285, %v5279
    %v5472 = vpack.c.b16 %v5286, %v5280
    %v5473 = vpack.c.b16 %v5287, %v5281
    %v5474 = vpack.c.b16 %v5288, %v5282
    %v5475 = vpack.c.b16 %v5289, %v5283
    %v5476 = vpack.c.b16 %v5290, %v5284
    %v5477 = vpack.c.b16 %v5297, %v5291
    %v5478 = vpack.c.b16 %v5298, %v5292
    %v5479 = vpack.c.b16 %v5299, %v5293
    %v5480 = vpack.c.b16 %v5300, %v5294
    %v5481 = vpack.c.b16 %v5301, %v5295
    %v5482 = vpack.c.b16 %v5302, %v5296
    %v5483 = vpack.c.b16 %v5309, %v5303
    %v5484 = vpack.c.b16 %v5310, %v5304
    %v5485 = vpack.c.b16 %v5311, %v5305
    %v5486 = vpack.c.b16 %v5312, %v5306
    %v5487 = vpack.c.b16 %v5313, %v5307
    %v5488 = vpack.c.b16 %v5314, %v5308
    %v5489 = vpack.c.b16 %v5321, %v5315
    %v5490 = vpack.c.b16 %v5322, %v5316
    %v5491 = vpack.c.b16 %v5323, %v5317
    %v5492 = vpack.c.b16 %v5324, %v5318
    %v5493 = vpack.c.b16 %v5325, %v5319
    %v5494 = vpack.c.b16 %v5326, %v5320
    %v5495 = vpack.c.b16 %v5333, %v5327
    %v5496 = vpack.c.b16 %v5334, %v5328
    %v5497 = vpack.c.b16 %v5335, %v5329
    %v5498 = vpack.c.b16 %v5336, %v5330
    %v5499 = vpack.c.b16 %v5337, %v5331
    %v5500 = vpack.c.b16 %v5338, %v5332
    %v5501 = vpack.c.b16 %v5345, %v5339
    %v5502 = vpack.c.b16 %v5346, %v5340
    %v5503 = vpack.c.b16 %v5347, %v5341
    %v5504 = vpack.c.b16 %v5348, %v5342
    %v5505 = vpack.c.b16 %v5349, %v5343
    %v5506 = vpack.c.b16 %v5350, %v5344
    %v5507 = vpack.c.b16 %v5357, %v5351
    %v5508 = vpack.c.b16 %v5358, %v5352
    %v5509 = vpack.c.b16 %v5359, %v5353
    %v5510 = vpack.c.b16 %v5360, %v5354
    %v5511 = vpack.c.b16 %v5361, %v5355
    %v5512 = vpack.c.b16 %v5362, %v5356
    %v5513 = vpack.c.b16 %v5369, %v5363
    %v5514 = vpack.c.b16 %v5370, %v5364
    %v5515 = vpack.c.b16 %v5371, %v5365
    %v5516 = vpack.c.b16 %v5372, %v5366
    %v5517 = vpack.c.b16 %v5373, %v5367
    %v5518 = vpack.c.b16 %v5374, %v5368
    %v5519 = vpack.c.b16 %v5381, %v5375
    %v5520 = vpack.c.b16 %v5382, %v5376
    %v5521 = vpack.c.b16 %v5383, %v5377
    %v5522 = vpack.c.b16 %v5384, %v5378
    %v5523 = vpack.c.b16 %v5385, %v5379
    %v5524 = vpack.c.b16 %v5386, %v5380
    %v5525 = vpack.c.b16 %v5393, %v5387
    %v5526 = vpack.c.b16 %v5394, %v5388
    %v5527 = vpack.c.b16 %v5395, %v5389
    %v5528 = vpack.c.b16 %v5396, %v5390
    %v5529 = vpack.c.b16 %v5397, %v5391
    %v5530 = vpack.c.b16 %v5398, %v5392
    %v5531 = vpack.c.b16 %v5405, %v5399
    %v5532 = vpack.c.b16 %v5406, %v5400
    %v5533 = vpack.c.b16 %v5407, %v5401
    %v5534 = vpack.c.b16 %v5408, %v5402
    %v5535 = vpack.c.b16 %v5409, %v5403
    %v5536 = vpack.c.b16 %v5410, %v5404
    %v5537 = vpack.c.b16 %v5417, %v5411
    %v5538 = vpack.c.b16 %v5418, %v5412
    %v5539 = vpack.c.b16 %v5419, %v5413
    %v5540 = vpack.c.b16 %v5420, %v5414
    %v5541 = vpack.c.b16 %v5421, %v5415
    %v5542 = vpack.c.b16 %v5422, %v5416
    %v5543 = vpack.c.b16 %v5429, %v5423
    %v5544 = vpack.c.b16 %v5430, %v5424
    %v5545 = vpack.c.b16 %v5431, %v5425
    %v5546 = vpack.c.b16 %v5432, %v5426
    %v5547 = vpack.c.b16 %v5433, %v5427
    %v5548 = vpack.c.b16 %v5434, %v5428
    %v5549 = vpack.c.b16 %v5441, %v5435
    %v5550 = vpack.c.b16 %v5442, %v5436
    %v5551 = vpack.c.b16 %v5443, %v5437
    %v5552 = vpack.c.b16 %v5444, %v5438
    %v5553 = vpack.c.b16 %v5445, %v5439
    %v5554 = vpack.c.b16 %v5446, %v5440
    %v5555 = vpack.c.b16 %v5453, %v5447
    %v5556 = vpack.c.b16 %v5454, %v5448
    %v5557 = vpack.c.b16 %v5455, %v5449
    %v5558 = vpack.c.b16 %v5456, %v5450
    %v5559 = vpack.c.b16 %v5457, %v5451
    %v5560 = vpack.c.b16 %v5458, %v5452
    %v5561 = vpack.c.b16 %v5465, %v5459
    %v5562 = vpack.c.b16 %v5466, %v5460
    %v5563 = vpack.c.b16 %v5467, %v5461
    %v5564 = vpack.c.b16 %v5468, %v5462
    %v5565 = vpack.c.b16 %v5469, %v5463
    %v5566 = vpack.c.b16 %v5470, %v5464
    %5663 = vmatprep.subr.bf16.mxu0 %v5472
    %5664 = vmatpush1.bf16.msra.mxu0 %v5471
    %5665 = vmatprep.subr.bf16.mxu0 %v5478
    %5666 = vmatpush1.bf16.msra.mxu0 %v5477
    %5667 = vmatprep.subr.bf16.mxu0 %v5484
    %5668 = vmatpush1.bf16.msra.mxu0 %v5483
    %5669 = vmatprep.subr.bf16.mxu0 %v5490
    %5670 = vmatpush1.bf16.msra.mxu0 %v5489
    %5671 = vmatprep.subr.bf16.mxu0 %v5496
    %5672 = vmatpush1.bf16.msra.mxu0 %v5495
    %5673 = vmatprep.subr.bf16.mxu0 %v5502
    %5674 = vmatpush1.bf16.msra.mxu0 %v5501
    %5675 = vmatprep.subr.bf16.mxu0 %v5508
    %5676 = vmatpush1.bf16.msra.mxu0 %v5507
    %5677 = vmatprep.subr.bf16.mxu0 %v5514
    %5678 = vmatpush1.bf16.msra.mxu0 %v5513
    %5679 = vmatprep.subr.bf16.mxu0 %v5520
    %5680 = vmatpush1.bf16.msra.mxu0 %v5519
    %5681 = vmatprep.subr.bf16.mxu0 %v5526
    %5682 = vmatpush1.bf16.msra.mxu0 %v5525
    %5683 = vmatprep.subr.bf16.mxu0 %v5532
    %5684 = vmatpush1.bf16.msra.mxu0 %v5531
    %5685 = vmatprep.subr.bf16.mxu0 %v5538
    %5686 = vmatpush1.bf16.msra.mxu0 %v5537
    %5687 = vmatprep.subr.bf16.mxu0 %v5544
    %5688 = vmatpush1.bf16.msra.mxu0 %v5543
    %5689 = vmatprep.subr.bf16.mxu0 %v5550
    %5690 = vmatpush1.bf16.msra.mxu0 %v5549
    %5691 = vmatprep.subr.bf16.mxu0 %v5556
    %5692 = vmatpush1.bf16.msra.mxu0 %v5555
    %5693 = vmatprep.subr.bf16.mxu0 %v5562
    %5694 = vmatpush1.bf16.msra.mxu0 %v5561
    %5695 = vmatprep.mubr.bf16.mxu0 %v5052
    %5696 = vmatmul.mubr.bf16.gmra.mrb[0].mxu0 %v5051
    %v5697 = vpop.f32.mrb[0].mxu0
    %v5698 = vadd.f32 %v5156, %v5697
    %v5699 = vpop.f32.mrb[0].mxu0
    %v5700 = vadd.f32 %v5160, %v5699
    %v5701 = vpop.f32.mrb[0].mxu0
    %v5702 = vpop.f32.mrb[0].mxu0
    %5703 = vdwg.mxu0
    %5704 = vmatprep.subr.bf16.mxu0 %v5474
    %5705 = vmatpush1.bf16.msra.mxu0 %v5473
    %5706 = vmatprep.subr.bf16.mxu0 %v5480
    %5707 = vmatpush1.bf16.msra.mxu0 %v5479
    %5708 = vmatprep.subr.bf16.mxu0 %v5486
    %5709 = vmatpush1.bf16.msra.mxu0 %v5485
    %5710 = vmatprep.subr.bf16.mxu0 %v5492
    %5711 = vmatpush1.bf16.msra.mxu0 %v5491
    %5712 = vmatprep.subr.bf16.mxu0 %v5498
    %5713 = vmatpush1.bf16.msra.mxu0 %v5497
    %5714 = vmatprep.subr.bf16.mxu0 %v5504
    %5715 = vmatpush1.bf16.msra.mxu0 %v5503
    %5716 = vmatprep.subr.bf16.mxu0 %v5510
    %5717 = vmatpush1.bf16.msra.mxu0 %v5509
    %5718 = vmatprep.subr.bf16.mxu0 %v5516
    %5719 = vmatpush1.bf16.msra.mxu0 %v5515
    %5720 = vmatprep.subr.bf16.mxu0 %v5522
    %5721 = vmatpush1.bf16.msra.mxu0 %v5521
    %5722 = vmatprep.subr.bf16.mxu0 %v5528
    %5723 = vmatpush1.bf16.msra.mxu0 %v5527
    %5724 = vmatprep.subr.bf16.mxu0 %v5534
    %5725 = vmatpush1.bf16.msra.mxu0 %v5533
    %5726 = vmatprep.subr.bf16.mxu0 %v5540
    %5727 = vmatpush1.bf16.msra.mxu0 %v5539
    %5728 = vmatprep.subr.bf16.mxu0 %v5546
    %5729 = vmatpush1.bf16.msra.mxu0 %v5545
    %5730 = vmatprep.subr.bf16.mxu0 %v5552
    %5731 = vmatpush1.bf16.msra.mxu0 %v5551
    %5732 = vmatprep.subr.bf16.mxu0 %v5558
    %5733 = vmatpush1.bf16.msra.mxu0 %v5557
    %5734 = vmatprep.subr.bf16.mxu0 %v5564
    %5735 = vmatpush1.bf16.msra.mxu0 %v5563
    %5736 = vmatprep.mubr.bf16.mxu0 %v5052
    %5737 = vmatmul.mubr.bf16.gmra.mrb[0].mxu0 %v5051
    %v5738 = vpop.f32.mrb[0].mxu0
    %v5739 = vadd.f32 %v5164, %v5738
    %v5740 = vpop.f32.mrb[0].mxu0
    %v5741 = vadd.f32 %v5168, %v5740
    %v5742 = vpop.f32.mrb[0].mxu0
    %v5743 = vpop.f32.mrb[0].mxu0
    %5744 = vdwg.mxu0
    %5745 = vmatprep.subr.bf16.mxu0 %v5476
    %5746 = vmatpush1.bf16.msra.mxu0 %v5475
    %5747 = vmatprep.subr.bf16.mxu0 %v5482
    %5748 = vmatpush1.bf16.msra.mxu0 %v5481
    %5749 = vmatprep.subr.bf16.mxu0 %v5488
    %5750 = vmatpush1.bf16.msra.mxu0 %v5487
    %5751 = vmatprep.subr.bf16.mxu0 %v5494
    %5752 = vmatpush1.bf16.msra.mxu0 %v5493
    %5753 = vmatprep.subr.bf16.mxu0 %v5500
    %5754 = vmatpush1.bf16.msra.mxu0 %v5499
    %5755 = vmatprep.subr.bf16.mxu0 %v5506
    %5756 = vmatpush1.bf16.msra.mxu0 %v5505
    %5757 = vmatprep.subr.bf16.mxu0 %v5512
    %5758 = vmatpush1.bf16.msra.mxu0 %v5511
    %5759 = vmatprep.subr.bf16.mxu0 %v5518
    %5760 = vmatpush1.bf16.msra.mxu0 %v5517
    %5761 = vmatprep.subr.bf16.mxu0 %v5524
    %5762 = vmatpush1.bf16.msra.mxu0 %v5523
    %5763 = vmatprep.subr.bf16.mxu0 %v5530
    %5764 = vmatpush1.bf16.msra.mxu0 %v5529
    %5765 = vmatprep.subr.bf16.mxu0 %v5536
    %5766 = vmatpush1.bf16.msra.mxu0 %v5535
    %5767 = vmatprep.subr.bf16.mxu0 %v5542
    %5768 = vmatpush1.bf16.msra.mxu0 %v5541
    %5769 = vmatprep.subr.bf16.mxu0 %v5548
    %5770 = vmatpush1.bf16.msra.mxu0 %v5547
    %5771 = vmatprep.subr.bf16.mxu0 %v5554
    %5772 = vmatpush1.bf16.msra.mxu0 %v5553
    %5773 = vmatprep.subr.bf16.mxu0 %v5560
    %5774 = vmatpush1.bf16.msra.mxu0 %v5559
    %5775 = vmatprep.subr.bf16.mxu0 %v5566
    %5776 = vmatpush1.bf16.msra.mxu0 %v5565
    %5777 = vmatprep.mubr.bf16.mxu0 %v5052
    %5778 = vmatmul.mubr.bf16.gmra.mrb[0].mxu0 %v5051
    %v5779 = vpop.f32.mrb[0].mxu0
    %v5780 = vadd.f32 %v5172, %v5779
    %v5781 = vpop.f32.mrb[0].mxu0
    %v5782 = vadd.f32 %v5176, %v5781
    %v5783 = vpop.f32.mrb[0].mxu0
    %v5784 = vpop.f32.mrb[0].mxu0
    %5785 = vdwg.mxu0
    %v5787 = vsel %vm824, %v5698, 0
    %v5790 = vsel %vm824, %v5739, 0
    %5792 = vmatprep.subr.mxu0 0.0
    %5793 = vmatpush1.xpose.msra.mxu0 %v5790
    %5794 = vmatprep.subr.mxu0 0.0
    %5795 = vmatpush1.xpose.msra.mxu0 0.0
    %5796 = vmatprep.subr.mxu0 0.0
    %5797 = vmatpush1.xpose.msra.mxu0 0.0
    %5798 = vmatprep.subr.mxu0 0.0
    %5799 = vmatpush1.xpose.msra.mxu0 0.0
    %5800 = vmatprep.subr.mxu0 0.0
    %5801 = vmatpush1.xpose.msra.mxu0 0.0
    %5802 = vmatprep.subr.mxu0 0.0
    %5803 = vmatpush1.xpose.msra.mxu0 0.0
    %5804 = vmatprep.subr.mxu0 0.0
    %5805 = vmatpush1.xpose.msra.mxu0 0.0
    %5806 = vmatprep.subr.mxu0 0.0
    %5807 = vmatpush1.xpose.msra.mxu0 0.0
    %5808 = vmatprep.subr.mxu0 0.0
    %5809 = vmatpush1.xpose.msra.mxu0 0.0
    %5810 = vmatprep.subr.mxu0 0.0
    %5811 = vmatpush1.xpose.msra.mxu0 0.0
    %5812 = vmatprep.subr.mxu0 0.0
    %5813 = vmatpush1.xpose.msra.mxu0 0.0
    %5814 = vmatprep.subr.mxu0 0.0
    %5815 = vmatpush1.xpose.msra.mxu0 0.0
    %5816 = vmatprep.subr.mxu0 0.0
    %5817 = vmatpush1.xpose.msra.mxu0 0.0
    %5818 = vmatprep.subr.mxu0 0.0
    %5819 = vmatpush1.xpose.msra.mxu0 0.0
    %5820 = vmatprep.subr.mxu0 0.0
    %5821 = vmatpush1.xpose.msra.mxu0 0.0
    %5822 = vmatprep.subr.mxu0 0.0
    %5823 = vmatpush1.xpose.msra.mxu0 0.0
    %5824 = vmatprep.subr.mxu0 0.0
    %5825 = vmatpush1.xpose.msra.mxu0 0.0
    %5826 = vmatprep.subr.mxu0 0.0
    %5827 = vmatpush1.xpose.msra.mxu0 0.0
    %5828 = vmatprep.subr.mxu0 0.0
    %5829 = vmatpush1.xpose.msra.mxu0 0.0
    %5830 = vmatprep.subr.mxu0 0.0
    %5831 = vmatpush1.xpose.msra.mxu0 0.0
    %5832 = vmatprep.subr.mxu0 0.0
    %5833 = vmatpush1.xpose.msra.mxu0 0.0
    %5834 = vmatprep.subr.mxu0 0.0
    %5835 = vmatpush1.xpose.msra.mxu0 0.0
    %5836 = vmatprep.subr.mxu0 0.0
    %5837 = vmatpush1.xpose.msra.mxu0 0.0
    %5838 = vmatprep.subr.mxu0 0.0
    %5839 = vmatpush1.xpose.msra.mxu0 0.0
    %5840 = vmatprep.subr.mxu0 0.0
    %5841 = vmatpush1.xpose.msra.mxu0 0.0
    %5842 = vmatprep.subr.mxu0 0.0
    %5843 = vmatpush1.xpose.msra.mxu0 0.0
    %5844 = vmatprep.subr.mxu0 0.0
    %5845 = vmatpush1.xpose.msra.mxu0 0.0
    %5846 = vmatprep.subr.mxu0 0.0
    %5847 = vmatpush1.xpose.msra.mxu0 0.0
    %5848 = vmatprep.subr.mxu0 0.0
    %5849 = vmatpush1.xpose.msra.mxu0 0.0
    %5850 = vmatprep.subr.mxu0 0.0
    %5851 = vmatpush1.xpose.msra.mxu0 0.0
    %5852 = vmatprep.subr.mxu0 0.0
    %5853 = vmatpush1.xpose.msra.mxu0 0.0
    %5854 = vmatprep.subr.mxu0 0.0
    %5855 = vmatpush1.xpose.msra.mxu0 0.0
    %5856 = vmatprep.mubr.f32.mxu0 0.0
    %5857 = vmatmul.mubr.f32.gmra.mrb[0].mxu0 %v5787
    %v5858 = vpop.f32.mrb[0].mxu0
    %v5859 = vadd.f32 0.0, %v5858
    %v5860 = vpop.f32.mrb[0].mxu0
    %5861 = vdwg.mxu0
    %v5862 = vmul.f32 %v5859, 0.125
    %v5863 = vadd.f32 %v5862, %v88
    %v5864 = vsel %vm903, %v5863, -inf
    %5865 = vmax.xlane.f32.xlu0 %v5864
    %v5866 = vpop.xlane.xlu0 %5865
    %v5867 = vsub.f32 %v5863, %v5866
    %v5868 = vmul.f32 %v5867, 1.442695
    %v5869 = vpow.pop %v5868
    %v5870 = vsel %vm903, %v5869, 0.0
    %5871 = vadd.xlane.f32.xlu0 %v5870
    %v5872 = vpop.xlane.xlu0 %5871
    %v5873 = vrcp.pop %v5872
    %v5874 = vmul.f32 %v5869, %v5873
    %v5876 = vsel %vm903, %v5874, 0
    %5878 = vmatprep.subr.mxu0 0.0
    %5879 = vmatpush1.msra.mxu0 %v5780
    %5880 = vmatprep.subr.mxu0 0.0
    %5881 = vmatpush1.msra.mxu0 0.0
    %5882 = vmatprep.subr.mxu0 0.0
    %5883 = vmatpush1.msra.mxu0 0.0
    %5884 = vmatprep.subr.mxu0 0.0
    %5885 = vmatpush1.msra.mxu0 0.0
    %5886 = vmatprep.subr.mxu0 0.0
    %5887 = vmatpush1.msra.mxu0 0.0
    %5888 = vmatprep.subr.mxu0 0.0
    %5889 = vmatpush1.msra.mxu0 0.0
    %5890 = vmatprep.subr.mxu0 0.0
    %5891 = vmatpush1.msra.mxu0 0.0
    %5892 = vmatprep.subr.mxu0 0.0
    %5893 = vmatpush1.msra.mxu0 0.0
    %5894 = vmatprep.subr.mxu0 0.0
    %5895 = vmatpush1.msra.mxu0 0.0
    %5896 = vmatprep.subr.mxu0 0.0
    %5897 = vmatpush1.msra.mxu0 0.0
    %5898 = vmatprep.subr.mxu0 0.0
    %5899 = vmatpush1.msra.mxu0 0.0
    %5900 = vmatprep.subr.mxu0 0.0
    %5901 = vmatpush1.msra.mxu0 0.0
    %5902 = vmatprep.subr.mxu0 0.0
    %5903 = vmatpush1.msra.mxu0 0.0
    %5904 = vmatprep.subr.mxu0 0.0
    %5905 = vmatpush1.msra.mxu0 0.0
    %5906 = vmatprep.subr.mxu0 0.0
    %5907 = vmatpush1.msra.mxu0 0.0
    %5908 = vmatprep.subr.mxu0 0.0
    %5909 = vmatpush1.msra.mxu0 0.0
    %5910 = vmatprep.subr.mxu0 0.0
    %5911 = vmatpush1.msra.mxu0 0.0
    %5912 = vmatprep.subr.mxu0 0.0
    %5913 = vmatpush1.msra.mxu0 0.0
    %5914 = vmatprep.subr.mxu0 0.0
    %5915 = vmatpush1.msra.mxu0 0.0
    %5916 = vmatprep.subr.mxu0 0.0
    %5917 = vmatpush1.msra.mxu0 0.0
    %5918 = vmatprep.subr.mxu0 0.0
    %5919 = vmatpush1.msra.mxu0 0.0
    %5920 = vmatprep.subr.mxu0 0.0
    %5921 = vmatpush1.msra.mxu0 0.0
    %5922 = vmatprep.subr.mxu0 0.0
    %5923 = vmatpush1.msra.mxu0 0.0
    %5924 = vmatprep.subr.mxu0 0.0
    %5925 = vmatpush1.msra.mxu0 0.0
    %5926 = vmatprep.subr.mxu0 0.0
    %5927 = vmatpush1.msra.mxu0 0.0
    %5928 = vmatprep.subr.mxu0 0.0
    %5929 = vmatpush1.msra.mxu0 0.0
    %5930 = vmatprep.subr.mxu0 0.0
    %5931 = vmatpush1.msra.mxu0 0.0
    %5932 = vmatprep.subr.mxu0 0.0
    %5933 = vmatpush1.msra.mxu0 0.0
    %5934 = vmatprep.subr.mxu0 0.0
    %5935 = vmatpush1.msra.mxu0 0.0
    %5936 = vmatprep.subr.mxu0 0.0
    %5937 = vmatpush1.msra.mxu0 0.0
    %5938 = vmatprep.subr.mxu0 0.0
    %5939 = vmatpush1.msra.mxu0 0.0
    %5940 = vmatprep.subr.mxu0 0.0
    %5941 = vmatpush1.msra.mxu0 0.0
    %5942 = vmatprep.mubr.f32.mxu0 0.0
    %5943 = vmatmul.mubr.f32.gmra.mrb[0].mxu0 %v5876
    %v5944 = vpop.f32.mrb[0].mxu0
    %v5945 = vadd.f32 0.0, %v5944
    %v5946 = vpop.f32.mrb[0].mxu0
    %5947 = vdwg.mxu0
    %5948 = vrot.lane.b32.xlu0 %v5698, 64
    %v5949 = vpop.permute.xlu0 %5948
    %5950 = vrot.lane.b32.xlu0 %v5739, 64
    %v5951 = vpop.permute.xlu0 %5950
    %v5952 = vsel %vm824, %v5949, 0
    %v5954 = vsel %vm824, %v5951, 0
    %5956 = vmatprep.subr.mxu0 0.0
    %5957 = vmatpush1.xpose.msra.mxu0 %v5954
    %5958 = vmatprep.subr.mxu0 0.0
    %5959 = vmatpush1.xpose.msra.mxu0 0.0
    %5960 = vmatprep.subr.mxu0 0.0
    %5961 = vmatpush1.xpose.msra.mxu0 0.0
    %5962 = vmatprep.subr.mxu0 0.0
    %5963 = vmatpush1.xpose.msra.mxu0 0.0
    %5964 = vmatprep.subr.mxu0 0.0
    %5965 = vmatpush1.xpose.msra.mxu0 0.0
    %5966 = vmatprep.subr.mxu0 0.0
    %5967 = vmatpush1.xpose.msra.mxu0 0.0
    %5968 = vmatprep.subr.mxu0 0.0
    %5969 = vmatpush1.xpose.msra.mxu0 0.0
    %5970 = vmatprep.subr.mxu0 0.0
    %5971 = vmatpush1.xpose.msra.mxu0 0.0
    %5972 = vmatprep.subr.mxu0 0.0
    %5973 = vmatpush1.xpose.msra.mxu0 0.0
    %5974 = vmatprep.subr.mxu0 0.0
    %5975 = vmatpush1.xpose.msra.mxu0 0.0
    %5976 = vmatprep.subr.mxu0 0.0
    %5977 = vmatpush1.xpose.msra.mxu0 0.0
    %5978 = vmatprep.subr.mxu0 0.0
    %5979 = vmatpush1.xpose.msra.mxu0 0.0
    %5980 = vmatprep.subr.mxu0 0.0
    %5981 = vmatpush1.xpose.msra.mxu0 0.0
    %5982 = vmatprep.subr.mxu0 0.0
    %5983 = vmatpush1.xpose.msra.mxu0 0.0
    %5984 = vmatprep.subr.mxu0 0.0
    %5985 = vmatpush1.xpose.msra.mxu0 0.0
    %5986 = vmatprep.subr.mxu0 0.0
    %5987 = vmatpush1.xpose.msra.mxu0 0.0
    %5988 = vmatprep.subr.mxu0 0.0
    %5989 = vmatpush1.xpose.msra.mxu0 0.0
    %5990 = vmatprep.subr.mxu0 0.0
    %5991 = vmatpush1.xpose.msra.mxu0 0.0
    %5992 = vmatprep.subr.mxu0 0.0
    %5993 = vmatpush1.xpose.msra.mxu0 0.0
    %5994 = vmatprep.subr.mxu0 0.0
    %5995 = vmatpush1.xpose.msra.mxu0 0.0
    %5996 = vmatprep.subr.mxu0 0.0
    %5997 = vmatpush1.xpose.msra.mxu0 0.0
    %5998 = vmatprep.subr.mxu0 0.0
    %5999 = vmatpush1.xpose.msra.mxu0 0.0
    %6000 = vmatprep.subr.mxu0 0.0
    %6001 = vmatpush1.xpose.msra.mxu0 0.0
    %6002 = vmatprep.subr.mxu0 0.0
    %6003 = vmatpush1.xpose.msra.mxu0 0.0
    %6004 = vmatprep.subr.mxu0 0.0
    %6005 = vmatpush1.xpose.msra.mxu0 0.0
    %6006 = vmatprep.subr.mxu0 0.0
    %6007 = vmatpush1.xpose.msra.mxu0 0.0
    %6008 = vmatprep.subr.mxu0 0.0
    %6009 = vmatpush1.xpose.msra.mxu0 0.0
    %6010 = vmatprep.subr.mxu0 0.0
    %6011 = vmatpush1.xpose.msra.mxu0 0.0
    %6012 = vmatprep.subr.mxu0 0.0
    %6013 = vmatpush1.xpose.msra.mxu0 0.0
    %6014 = vmatprep.subr.mxu0 0.0
    %6015 = vmatpush1.xpose.msra.mxu0 0.0
    %6016 = vmatprep.subr.mxu0 0.0
    %6017 = vmatpush1.xpose.msra.mxu0 0.0
    %6018 = vmatprep.subr.mxu0 0.0
    %6019 = vmatpush1.xpose.msra.mxu0 0.0
    %6020 = vmatprep.mubr.f32.mxu0 0.0
    %6021 = vmatmul.mubr.f32.gmra.mrb[0].mxu0 %v5952
    %v6022 = vpop.f32.mrb[0].mxu0
    %v6023 = vadd.f32 0.0, %v6022
    %v6024 = vpop.f32.mrb[0].mxu0
    %6025 = vdwg.mxu0
    %v6026 = vmul.f32 %v6023, 0.125
    %v6027 = vadd.f32 %v6026, %v88
    %v6028 = vsel %vm903, %v6027, -inf
    %6029 = vmax.xlane.f32.xlu0 %v6028
    %v6030 = vpop.xlane.xlu0 %6029
    %v6031 = vsub.f32 %v6027, %v6030
    %v6032 = vmul.f32 %v6031, 1.442695
    %v6033 = vpow.pop %v6032
    %v6034 = vsel %vm903, %v6033, 0.0
    %6035 = vadd.xlane.f32.xlu0 %v6034
    %v6036 = vpop.xlane.xlu0 %6035
    %v6037 = vrcp.pop %v6036
    %v6038 = vmul.f32 %v6033, %v6037
    %6040 = vrot.lane.b32.xlu0 %v5780, 64
    %v6041 = vpop.permute.xlu0 %6040
    %v6044 = vsel %vm903, %v6038, 0
    %6046 = vmatprep.subr.mxu0 0.0
    %6047 = vmatpush1.msra.mxu0 %v6041
    %6048 = vmatprep.subr.mxu0 0.0
    %6049 = vmatpush1.msra.mxu0 0.0
    %6050 = vmatprep.subr.mxu0 0.0
    %6051 = vmatpush1.msra.mxu0 0.0
    %6052 = vmatprep.subr.mxu0 0.0
    %6053 = vmatpush1.msra.mxu0 0.0
    %6054 = vmatprep.subr.mxu0 0.0
    %6055 = vmatpush1.msra.mxu0 0.0
    %6056 = vmatprep.subr.mxu0 0.0
    %6057 = vmatpush1.msra.mxu0 0.0
    %6058 = vmatprep.subr.mxu0 0.0
    %6059 = vmatpush1.msra.mxu0 0.0
    %6060 = vmatprep.subr.mxu0 0.0
    %6061 = vmatpush1.msra.mxu0 0.0
    %6062 = vmatprep.subr.mxu0 0.0
    %6063 = vmatpush1.msra.mxu0 0.0
    %6064 = vmatprep.subr.mxu0 0.0
    %6065 = vmatpush1.msra.mxu0 0.0
    %6066 = vmatprep.subr.mxu0 0.0
    %6067 = vmatpush1.msra.mxu0 0.0
    %6068 = vmatprep.subr.mxu0 0.0
    %6069 = vmatpush1.msra.mxu0 0.0
    %6070 = vmatprep.subr.mxu0 0.0
    %6071 = vmatpush1.msra.mxu0 0.0
    %6072 = vmatprep.subr.mxu0 0.0
    %6073 = vmatpush1.msra.mxu0 0.0
    %6074 = vmatprep.subr.mxu0 0.0
    %6075 = vmatpush1.msra.mxu0 0.0
    %6076 = vmatprep.subr.mxu0 0.0
    %6077 = vmatpush1.msra.mxu0 0.0
    %6078 = vmatprep.subr.mxu0 0.0
    %6079 = vmatpush1.msra.mxu0 0.0
    %6080 = vmatprep.subr.mxu0 0.0
    %6081 = vmatpush1.msra.mxu0 0.0
    %6082 = vmatprep.subr.mxu0 0.0
    %6083 = vmatpush1.msra.mxu0 0.0
    %6084 = vmatprep.subr.mxu0 0.0
    %6085 = vmatpush1.msra.mxu0 0.0
    %6086 = vmatprep.subr.mxu0 0.0
    %6087 = vmatpush1.msra.mxu0 0.0
    %6088 = vmatprep.subr.mxu0 0.0
    %6089 = vmatpush1.msra.mxu0 0.0
    %6090 = vmatprep.subr.mxu0 0.0
    %6091 = vmatpush1.msra.mxu0 0.0
    %6092 = vmatprep.subr.mxu0 0.0
    %6093 = vmatpush1.msra.mxu0 0.0
    %6094 = vmatprep.subr.mxu0 0.0
    %6095 = vmatpush1.msra.mxu0 0.0
    %6096 = vmatprep.subr.mxu0 0.0
    %6097 = vmatpush1.msra.mxu0 0.0
    %6098 = vmatprep.subr.mxu0 0.0
    %6099 = vmatpush1.msra.mxu0 0.0
    %6100 = vmatprep.subr.mxu0 0.0
    %6101 = vmatpush1.msra.mxu0 0.0
    %6102 = vmatprep.subr.mxu0 0.0
    %6103 = vmatpush1.msra.mxu0 0.0
    %6104 = vmatprep.subr.mxu0 0.0
    %6105 = vmatpush1.msra.mxu0 0.0
    %6106 = vmatprep.subr.mxu0 0.0
    %6107 = vmatpush1.msra.mxu0 0.0
    %6108 = vmatprep.subr.mxu0 0.0
    %6109 = vmatpush1.msra.mxu0 0.0
    %6110 = vmatprep.mubr.f32.mxu0 0.0
    %6111 = vmatmul.mubr.f32.gmra.mrb[0].mxu0 %v6044
    %v6112 = vpop.f32.mrb[0].mxu0
    %v6113 = vadd.f32 0.0, %v6112
    %v6114 = vpop.f32.mrb[0].mxu0
    %6115 = vdwg.mxu0
    %v6117 = vsel %vm824, %v5700, 0
    %v6120 = vsel %vm824, %v5741, 0
    %6122 = vmatprep.subr.mxu0 0.0
    %6123 = vmatpush1.xpose.msra.mxu0 %v6120
    %6124 = vmatprep.subr.mxu0 0.0
    %6125 = vmatpush1.xpose.msra.mxu0 0.0
    %6126 = vmatprep.subr.mxu0 0.0
    %6127 = vmatpush1.xpose.msra.mxu0 0.0
    %6128 = vmatprep.subr.mxu0 0.0
    %6129 = vmatpush1.xpose.msra.mxu0 0.0
    %6130 = vmatprep.subr.mxu0 0.0
    %6131 = vmatpush1.xpose.msra.mxu0 0.0
    %6132 = vmatprep.subr.mxu0 0.0
    %6133 = vmatpush1.xpose.msra.mxu0 0.0
    %6134 = vmatprep.subr.mxu0 0.0
    %6135 = vmatpush1.xpose.msra.mxu0 0.0
    %6136 = vmatprep.subr.mxu0 0.0
    %6137 = vmatpush1.xpose.msra.mxu0 0.0
    %6138 = vmatprep.subr.mxu0 0.0
    %6139 = vmatpush1.xpose.msra.mxu0 0.0
    %6140 = vmatprep.subr.mxu0 0.0
    %6141 = vmatpush1.xpose.msra.mxu0 0.0
    %6142 = vmatprep.subr.mxu0 0.0
    %6143 = vmatpush1.xpose.msra.mxu0 0.0
    %6144 = vmatprep.subr.mxu0 0.0
    %6145 = vmatpush1.xpose.msra.mxu0 0.0
    %6146 = vmatprep.subr.mxu0 0.0
    %6147 = vmatpush1.xpose.msra.mxu0 0.0
    %6148 = vmatprep.subr.mxu0 0.0
    %6149 = vmatpush1.xpose.msra.mxu0 0.0
    %6150 = vmatprep.subr.mxu0 0.0
    %6151 = vmatpush1.xpose.msra.mxu0 0.0
    %6152 = vmatprep.subr.mxu0 0.0
    %6153 = vmatpush1.xpose.msra.mxu0 0.0
    %6154 = vmatprep.subr.mxu0 0.0
    %6155 = vmatpush1.xpose.msra.mxu0 0.0
    %6156 = vmatprep.subr.mxu0 0.0
    %6157 = vmatpush1.xpose.msra.mxu0 0.0
    %6158 = vmatprep.subr.mxu0 0.0
    %6159 = vmatpush1.xpose.msra.mxu0 0.0
    %6160 = vmatprep.subr.mxu0 0.0
    %6161 = vmatpush1.xpose.msra.mxu0 0.0
    %6162 = vmatprep.subr.mxu0 0.0
    %6163 = vmatpush1.xpose.msra.mxu0 0.0
    %6164 = vmatprep.subr.mxu0 0.0
    %6165 = vmatpush1.xpose.msra.mxu0 0.0
    %6166 = vmatprep.subr.mxu0 0.0
    %6167 = vmatpush1.xpose.msra.mxu0 0.0
    %6168 = vmatprep.subr.mxu0 0.0
    %6169 = vmatpush1.xpose.msra.mxu0 0.0
    %6170 = vmatprep.subr.mxu0 0.0
    %6171 = vmatpush1.xpose.msra.mxu0 0.0
    %6172 = vmatprep.subr.mxu0 0.0
    %6173 = vmatpush1.xpose.msra.mxu0 0.0
    %6174 = vmatprep.subr.mxu0 0.0
    %6175 = vmatpush1.xpose.msra.mxu0 0.0
    %6176 = vmatprep.subr.mxu0 0.0
    %6177 = vmatpush1.xpose.msra.mxu0 0.0
    %6178 = vmatprep.subr.mxu0 0.0
    %6179 = vmatpush1.xpose.msra.mxu0 0.0
    %6180 = vmatprep.subr.mxu0 0.0
    %6181 = vmatpush1.xpose.msra.mxu0 0.0
    %6182 = vmatprep.subr.mxu0 0.0
    %6183 = vmatpush1.xpose.msra.mxu0 0.0
    %6184 = vmatprep.subr.mxu0 0.0
    %6185 = vmatpush1.xpose.msra.mxu0 0.0
    %6186 = vmatprep.mubr.f32.mxu0 0.0
    %6187 = vmatmul.mubr.f32.gmra.mrb[0].mxu0 %v6117
    %v6188 = vpop.f32.mrb[0].mxu0
    %v6189 = vadd.f32 0.0, %v6188
    %v6190 = vpop.f32.mrb[0].mxu0
    %6191 = vdwg.mxu0
    %v6192 = vmul.f32 %v6189, 0.125
    %v6193 = vadd.f32 %v6192, %v88
    %v6194 = vsel %vm903, %v6193, -inf
    %6195 = vmax.xlane.f32.xlu0 %v6194
    %v6196 = vpop.xlane.xlu0 %6195
    %v6197 = vsub.f32 %v6193, %v6196
    %v6198 = vmul.f32 %v6197, 1.442695
    %v6199 = vpow.pop %v6198
    %v6200 = vsel %vm903, %v6199, 0.0
    %6201 = vadd.xlane.f32.xlu0 %v6200
    %v6202 = vpop.xlane.xlu0 %6201
    %v6203 = vrcp.pop %v6202
    %v6204 = vmul.f32 %v6199, %v6203
    %v6206 = vsel %vm903, %v6204, 0
    %6208 = vmatprep.subr.mxu0 0.0
    %6209 = vmatpush1.msra.mxu0 %v5782
    %6210 = vmatprep.subr.mxu0 0.0
    %6211 = vmatpush1.msra.mxu0 0.0
    %6212 = vmatprep.subr.mxu0 0.0
    %6213 = vmatpush1.msra.mxu0 0.0
    %6214 = vmatprep.subr.mxu0 0.0
    %6215 = vmatpush1.msra.mxu0 0.0
    %6216 = vmatprep.subr.mxu0 0.0
    %6217 = vmatpush1.msra.mxu0 0.0
    %6218 = vmatprep.subr.mxu0 0.0
    %6219 = vmatpush1.msra.mxu0 0.0
    %6220 = vmatprep.subr.mxu0 0.0
    %6221 = vmatpush1.msra.mxu0 0.0
    %6222 = vmatprep.subr.mxu0 0.0
    %6223 = vmatpush1.msra.mxu0 0.0
    %6224 = vmatprep.subr.mxu0 0.0
    %6225 = vmatpush1.msra.mxu0 0.0
    %6226 = vmatprep.subr.mxu0 0.0
    %6227 = vmatpush1.msra.mxu0 0.0
    %6228 = vmatprep.subr.mxu0 0.0
    %6229 = vmatpush1.msra.mxu0 0.0
    %6230 = vmatprep.subr.mxu0 0.0
    %6231 = vmatpush1.msra.mxu0 0.0
    %6232 = vmatprep.subr.mxu0 0.0
    %6233 = vmatpush1.msra.mxu0 0.0
    %6234 = vmatprep.subr.mxu0 0.0
    %6235 = vmatpush1.msra.mxu0 0.0
    %6236 = vmatprep.subr.mxu0 0.0
    %6237 = vmatpush1.msra.mxu0 0.0
    %6238 = vmatprep.subr.mxu0 0.0
    %6239 = vmatpush1.msra.mxu0 0.0
    %6240 = vmatprep.subr.mxu0 0.0
    %6241 = vmatpush1.msra.mxu0 0.0
    %6242 = vmatprep.subr.mxu0 0.0
    %6243 = vmatpush1.msra.mxu0 0.0
    %6244 = vmatprep.subr.mxu0 0.0
    %6245 = vmatpush1.msra.mxu0 0.0
    %6246 = vmatprep.subr.mxu0 0.0
    %6247 = vmatpush1.msra.mxu0 0.0
    %6248 = vmatprep.subr.mxu0 0.0
    %6249 = vmatpush1.msra.mxu0 0.0
    %6250 = vmatprep.subr.mxu0 0.0
    %6251 = vmatpush1.msra.mxu0 0.0
    %6252 = vmatprep.subr.mxu0 0.0
    %6253 = vmatpush1.msra.mxu0 0.0
    %6254 = vmatprep.subr.mxu0 0.0
    %6255 = vmatpush1.msra.mxu0 0.0
    %6256 = vmatprep.subr.mxu0 0.0
    %6257 = vmatpush1.msra.mxu0 0.0
    %6258 = vmatprep.subr.mxu0 0.0
    %6259 = vmatpush1.msra.mxu0 0.0
    %6260 = vmatprep.subr.mxu0 0.0
    %6261 = vmatpush1.msra.mxu0 0.0
    %6262 = vmatprep.subr.mxu0 0.0
    %6263 = vmatpush1.msra.mxu0 0.0
    %6264 = vmatprep.subr.mxu0 0.0
    %6265 = vmatpush1.msra.mxu0 0.0
    %6266 = vmatprep.subr.mxu0 0.0
    %6267 = vmatpush1.msra.mxu0 0.0
    %6268 = vmatprep.subr.mxu0 0.0
    %6269 = vmatpush1.msra.mxu0 0.0
    %6270 = vmatprep.subr.mxu0 0.0
    %6271 = vmatpush1.msra.mxu0 0.0
    %6272 = vmatprep.mubr.f32.mxu0 0.0
    %6273 = vmatmul.mubr.f32.gmra.mrb[0].mxu0 %v6206
    %v6274 = vpop.f32.mrb[0].mxu0
    %v6275 = vadd.f32 0.0, %v6274
    %v6276 = vpop.f32.mrb[0].mxu0
    %6277 = vdwg.mxu0
    %6278 = vrot.lane.b32.xlu0 %v5700, 64
    %v6279 = vpop.permute.xlu0 %6278
    %6280 = vrot.lane.b32.xlu0 %v5741, 64
    %v6281 = vpop.permute.xlu0 %6280
    %v6282 = vsel %vm824, %v6279, 0
    %v6284 = vsel %vm824, %v6281, 0
    %6286 = vmatprep.subr.mxu0 0.0
    %6287 = vmatpush1.xpose.msra.mxu0 %v6284
    %6288 = vmatprep.subr.mxu0 0.0
    %6289 = vmatpush1.xpose.msra.mxu0 0.0
    %6290 = vmatprep.subr.mxu0 0.0
    %6291 = vmatpush1.xpose.msra.mxu0 0.0
    %6292 = vmatprep.subr.mxu0 0.0
    %6293 = vmatpush1.xpose.msra.mxu0 0.0
    %6294 = vmatprep.subr.mxu0 0.0
    %6295 = vmatpush1.xpose.msra.mxu0 0.0
    %6296 = vmatprep.subr.mxu0 0.0
    %6297 = vmatpush1.xpose.msra.mxu0 0.0
    %6298 = vmatprep.subr.mxu0 0.0
    %6299 = vmatpush1.xpose.msra.mxu0 0.0
    %6300 = vmatprep.subr.mxu0 0.0
    %6301 = vmatpush1.xpose.msra.mxu0 0.0
    %6302 = vmatprep.subr.mxu0 0.0
    %6303 = vmatpush1.xpose.msra.mxu0 0.0
    %6304 = vmatprep.subr.mxu0 0.0
    %6305 = vmatpush1.xpose.msra.mxu0 0.0
    %6306 = vmatprep.subr.mxu0 0.0
    %6307 = vmatpush1.xpose.msra.mxu0 0.0
    %6308 = vmatprep.subr.mxu0 0.0
    %6309 = vmatpush1.xpose.msra.mxu0 0.0
    %6310 = vmatprep.subr.mxu0 0.0
    %6311 = vmatpush1.xpose.msra.mxu0 0.0
    %6312 = vmatprep.subr.mxu0 0.0
    %6313 = vmatpush1.xpose.msra.mxu0 0.0
    %6314 = vmatprep.subr.mxu0 0.0
    %6315 = vmatpush1.xpose.msra.mxu0 0.0
    %6316 = vmatprep.subr.mxu0 0.0
    %6317 = vmatpush1.xpose.msra.mxu0 0.0
    %6318 = vmatprep.subr.mxu0 0.0
    %6319 = vmatpush1.xpose.msra.mxu0 0.0
    %6320 = vmatprep.subr.mxu0 0.0
    %6321 = vmatpush1.xpose.msra.mxu0 0.0
    %6322 = vmatprep.subr.mxu0 0.0
    %6323 = vmatpush1.xpose.msra.mxu0 0.0
    %6324 = vmatprep.subr.mxu0 0.0
    %6325 = vmatpush1.xpose.msra.mxu0 0.0
    %6326 = vmatprep.subr.mxu0 0.0
    %6327 = vmatpush1.xpose.msra.mxu0 0.0
    %6328 = vmatprep.subr.mxu0 0.0
    %6329 = vmatpush1.xpose.msra.mxu0 0.0
    %6330 = vmatprep.subr.mxu0 0.0
    %6331 = vmatpush1.xpose.msra.mxu0 0.0
    %6332 = vmatprep.subr.mxu0 0.0
    %6333 = vmatpush1.xpose.msra.mxu0 0.0
    %6334 = vmatprep.subr.mxu0 0.0
    %6335 = vmatpush1.xpose.msra.mxu0 0.0
    %6336 = vmatprep.subr.mxu0 0.0
    %6337 = vmatpush1.xpose.msra.mxu0 0.0
    %6338 = vmatprep.subr.mxu0 0.0
    %6339 = vmatpush1.xpose.msra.mxu0 0.0
    %6340 = vmatprep.subr.mxu0 0.0
    %6341 = vmatpush1.xpose.msra.mxu0 0.0
    %6342 = vmatprep.subr.mxu0 0.0
    %6343 = vmatpush1.xpose.msra.mxu0 0.0
    %6344 = vmatprep.subr.mxu0 0.0
    %6345 = vmatpush1.xpose.msra.mxu0 0.0
    %6346 = vmatprep.subr.mxu0 0.0
    %6347 = vmatpush1.xpose.msra.mxu0 0.0
    %6348 = vmatprep.subr.mxu0 0.0
    %6349 = vmatpush1.xpose.msra.mxu0 0.0
    %6350 = vmatprep.mubr.f32.mxu0 0.0
    %6351 = vmatmul.mubr.f32.gmra.mrb[0].mxu0 %v6282
    %v6352 = vpop.f32.mrb[0].mxu0
    %v6353 = vadd.f32 0.0, %v6352
    %v6354 = vpop.f32.mrb[0].mxu0
    %6355 = vdwg.mxu0
    %v6356 = vmul.f32 %v6353, 0.125
    %v6357 = vadd.f32 %v6356, %v88
    %v6358 = vsel %vm903, %v6357, -inf
    %6359 = vmax.xlane.f32.xlu0 %v6358
    %v6360 = vpop.xlane.xlu0 %6359
    %v6361 = vsub.f32 %v6357, %v6360
    %v6362 = vmul.f32 %v6361, 1.442695
    %v6363 = vpow.pop %v6362
    %v6364 = vsel %vm903, %v6363, 0.0
    %6365 = vadd.xlane.f32.xlu0 %v6364
    %v6366 = vpop.xlane.xlu0 %6365
    %v6367 = vrcp.pop %v6366
    %v6368 = vmul.f32 %v6363, %v6367
    %6370 = vrot.lane.b32.xlu0 %v5782, 64
    %v6371 = vpop.permute.xlu0 %6370
    %v6374 = vsel %vm903, %v6368, 0
    %6376 = vmatprep.subr.mxu0 0.0
    %6377 = vmatpush1.msra.mxu0 %v6371
    %6378 = vmatprep.subr.mxu0 0.0
    %6379 = vmatpush1.msra.mxu0 0.0
    %6380 = vmatprep.subr.mxu0 0.0
    %6381 = vmatpush1.msra.mxu0 0.0
    %6382 = vmatprep.subr.mxu0 0.0
    %6383 = vmatpush1.msra.mxu0 0.0
    %6384 = vmatprep.subr.mxu0 0.0
    %6385 = vmatpush1.msra.mxu0 0.0
    %6386 = vmatprep.subr.mxu0 0.0
    %6387 = vmatpush1.msra.mxu0 0.0
    %6388 = vmatprep.subr.mxu0 0.0
    %6389 = vmatpush1.msra.mxu0 0.0
    %6390 = vmatprep.subr.mxu0 0.0
    %6391 = vmatpush1.msra.mxu0 0.0
    %6392 = vmatprep.subr.mxu0 0.0
    %6393 = vmatpush1.msra.mxu0 0.0
    %6394 = vmatprep.subr.mxu0 0.0
    %6395 = vmatpush1.msra.mxu0 0.0
    %6396 = vmatprep.subr.mxu0 0.0
    %6397 = vmatpush1.msra.mxu0 0.0
    %6398 = vmatprep.subr.mxu0 0.0
    %6399 = vmatpush1.msra.mxu0 0.0
    %6400 = vmatprep.subr.mxu0 0.0
    %6401 = vmatpush1.msra.mxu0 0.0
    %6402 = vmatprep.subr.mxu0 0.0
    %6403 = vmatpush1.msra.mxu0 0.0
    %6404 = vmatprep.subr.mxu0 0.0
    %6405 = vmatpush1.msra.mxu0 0.0
    %6406 = vmatprep.subr.mxu0 0.0
    %6407 = vmatpush1.msra.mxu0 0.0
    %6408 = vmatprep.subr.mxu0 0.0
    %6409 = vmatpush1.msra.mxu0 0.0
    %6410 = vmatprep.subr.mxu0 0.0
    %6411 = vmatpush1.msra.mxu0 0.0
    %6412 = vmatprep.subr.mxu0 0.0
    %6413 = vmatpush1.msra.mxu0 0.0
    %6414 = vmatprep.subr.mxu0 0.0
    %6415 = vmatpush1.msra.mxu0 0.0
    %6416 = vmatprep.subr.mxu0 0.0
    %6417 = vmatpush1.msra.mxu0 0.0
    %6418 = vmatprep.subr.mxu0 0.0
    %6419 = vmatpush1.msra.mxu0 0.0
    %6420 = vmatprep.subr.mxu0 0.0
    %6421 = vmatpush1.msra.mxu0 0.0
    %6422 = vmatprep.subr.mxu0 0.0
    %6423 = vmatpush1.msra.mxu0 0.0
    %6424 = vmatprep.subr.mxu0 0.0
    %6425 = vmatpush1.msra.mxu0 0.0
    %6426 = vmatprep.subr.mxu0 0.0
    %6427 = vmatpush1.msra.mxu0 0.0
    %6428 = vmatprep.subr.mxu0 0.0
    %6429 = vmatpush1.msra.mxu0 0.0
    %6430 = vmatprep.subr.mxu0 0.0
    %6431 = vmatpush1.msra.mxu0 0.0
    %6432 = vmatprep.subr.mxu0 0.0
    %6433 = vmatpush1.msra.mxu0 0.0
    %6434 = vmatprep.subr.mxu0 0.0
    %6435 = vmatpush1.msra.mxu0 0.0
    %6436 = vmatprep.subr.mxu0 0.0
    %6437 = vmatpush1.msra.mxu0 0.0
    %6438 = vmatprep.subr.mxu0 0.0
    %6439 = vmatpush1.msra.mxu0 0.0
    %6440 = vmatprep.mubr.f32.mxu0 0.0
    %6441 = vmatmul.mubr.f32.gmra.mrb[0].mxu0 %v6374
    %v6442 = vpop.f32.mrb[0].mxu0
    %v6443 = vadd.f32 0.0, %v6442
    %v6444 = vpop.f32.mrb[0].mxu0
    %6445 = vdwg.mxu0
    %6447 = vrot.lane.b32.xlu0 %v6113, 64
    %v6448 = vpop.permute.xlu0 %6447
    %6451 = vrot.lane.b32.xlu0 %v6443, 64
    %v6452 = vpop.permute.xlu0 %6451
    %v6454 = vsel %vm824, %v5945, %v6448
    %v6455 = vsel %vm824, %v6275, %v6452
    %v6456 = vpack.c.bf16 %v6454, %v6454
    %v6457 = vpack.c.bf16 %v6455, %v6455
    %s6458 = scalar_lea.vmem [#allocation7], 768
    %v6459 = vld [vmem:[%s6458] sm:$0xff]
    %v6460 = vld [vmem:[%s6458 + $0x8] sm:$0xff]
    %v6461 = vld [vmem:[%s6458 + $0x10] sm:$0xff]
    %v6462 = vld [vmem:[%s6458 + $0x18] sm:$0xff]
    %v6463 = vld [vmem:[%s6458 + $0x20] sm:$0xff]
    %v6464 = vld [vmem:[%s6458 + $0x28] sm:$0xff]
    %v6465 = vld [vmem:[%s6458 + $0x30] sm:$0xff]
    %v6466 = vld [vmem:[%s6458 + $0x38] sm:$0xff]
    %v6467 = vld [vmem:[%s6458 + $0x40] sm:$0xff]
    %v6468 = vld [vmem:[%s6458 + $0x48] sm:$0xff]
    %v6469 = vld [vmem:[%s6458 + $0x50] sm:$0xff]
    %v6470 = vld [vmem:[%s6458 + $0x58] sm:$0xff]
    %v6471 = vld [vmem:[%s6458 + $0x60] sm:$0xff]
    %v6472 = vld [vmem:[%s6458 + $0x68] sm:$0xff]
    %v6473 = vld [vmem:[%s6458 + $0x70] sm:$0xff]
    %v6474 = vld [vmem:[%s6458 + $0x78] sm:$0xff]
    %v6475 = vld [vmem:[%s6458 + $0x80] sm:$0xff]
    %v6476 = vld [vmem:[%s6458 + $0x88] sm:$0xff]
    %v6477 = vld [vmem:[%s6458 + $0x90] sm:$0xff]
    %v6478 = vld [vmem:[%s6458 + $0x98] sm:$0xff]
    %v6479 = vld [vmem:[%s6458 + $0xa0] sm:$0xff]
    %v6480 = vld [vmem:[%s6458 + $0xa8] sm:$0xff]
    %v6481 = vld [vmem:[%s6458 + $0xb0] sm:$0xff]
    %v6482 = vld [vmem:[%s6458 + $0xb8] sm:$0xff]
    %v6483 = vld [vmem:[%s6458 + $0xc0] sm:$0xff]
    %v6484 = vld [vmem:[%s6458 + $0xc8] sm:$0xff]
    %v6485 = vld [vmem:[%s6458 + $0xd0] sm:$0xff]
    %v6486 = vld [vmem:[%s6458 + $0xd8] sm:$0xff]
    %v6487 = vld [vmem:[%s6458 + $0xe0] sm:$0xff]
    %v6488 = vld [vmem:[%s6458 + $0xe8] sm:$0xff]
    %v6489 = vld [vmem:[%s6458 + $0xf0] sm:$0xff]
    %v6490 = vld [vmem:[%s6458 + $0xf8] sm:$0xff]
    %s6491 = scalar_lea.vmem [#allocation8], 6
    %v6492 = vld [vmem:[%s6491] sm:$0x3]
    %v6494 = vlaneseq
    %v6495 = vshrl.u32 %v6494, 7
    %v6496 = vsub.s32 0, %v6495
    %v6497 = vrot.slane %v6492, %v6496
    %v6498 = vlaneseq
    %v6499 = vshrl.u32 %v6498, 7
    %v6500 = vsub.s32 1, %v6499
    %v6501 = vrot.slane %v6492, %v6500
    %v6536 = vunpack.c.l.b16 %v6459
    %v6537 = vunpack.c.h.b16 %v6459
    %v6538 = vunpack.c.l.b16 %v6460
    %v6539 = vunpack.c.h.b16 %v6460
    %v6540 = vunpack.c.l.b16 %v6461
    %v6541 = vunpack.c.h.b16 %v6461
    %v6542 = vunpack.c.l.b16 %v6462
    %v6543 = vunpack.c.h.b16 %v6462
    %v6544 = vunpack.c.l.b16 %v6463
    %v6545 = vunpack.c.h.b16 %v6463
    %v6546 = vunpack.c.l.b16 %v6464
    %v6547 = vunpack.c.h.b16 %v6464
    %v6548 = vunpack.c.l.b16 %v6465
    %v6549 = vunpack.c.h.b16 %v6465
    %v6550 = vunpack.c.l.b16 %v6466
    %v6551 = vunpack.c.h.b16 %v6466
    %v6552 = vunpack.c.l.b16 %v6467
    %v6553 = vunpack.c.h.b16 %v6467
    %v6554 = vunpack.c.l.b16 %v6468
    %v6555 = vunpack.c.h.b16 %v6468
    %v6556 = vunpack.c.l.b16 %v6469
    %v6557 = vunpack.c.h.b16 %v6469
    %v6558 = vunpack.c.l.b16 %v6470
    %v6559 = vunpack.c.h.b16 %v6470
    %v6560 = vunpack.c.l.b16 %v6471
    %v6561 = vunpack.c.h.b16 %v6471
    %v6562 = vunpack.c.l.b16 %v6472
    %v6563 = vunpack.c.h.b16 %v6472
    %v6564 = vunpack.c.l.b16 %v6473
    %v6565 = vunpack.c.h.b16 %v6473
    %v6566 = vunpack.c.l.b16 %v6474
    %v6567 = vunpack.c.h.b16 %v6474
    %v6568 = vunpack.c.l.b16 %v6475
    %v6569 = vunpack.c.h.b16 %v6475
    %v6570 = vunpack.c.l.b16 %v6476
    %v6571 = vunpack.c.h.b16 %v6476
    %v6572 = vunpack.c.l.b16 %v6477
    %v6573 = vunpack.c.h.b16 %v6477
    %v6574 = vunpack.c.l.b16 %v6478
    %v6575 = vunpack.c.h.b16 %v6478
    %v6576 = vunpack.c.l.b16 %v6479
    %v6577 = vunpack.c.h.b16 %v6479
    %v6578 = vunpack.c.l.b16 %v6480
    %v6579 = vunpack.c.h.b16 %v6480
    %v6580 = vunpack.c.l.b16 %v6481
    %v6581 = vunpack.c.h.b16 %v6481
    %v6582 = vunpack.c.l.b16 %v6482
    %v6583 = vunpack.c.h.b16 %v6482
    %v6584 = vunpack.c.l.b16 %v6483
    %v6585 = vunpack.c.h.b16 %v6483
    %v6586 = vunpack.c.l.b16 %v6484
    %v6587 = vunpack.c.h.b16 %v6484
    %v6588 = vunpack.c.l.b16 %v6485
    %v6589 = vunpack.c.h.b16 %v6485
    %v6590 = vunpack.c.l.b16 %v6486
    %v6591 = vunpack.c.h.b16 %v6486
    %v6592 = vunpack.c.l.b16 %v6487
    %v6593 = vunpack.c.h.b16 %v6487
    %v6594 = vunpack.c.l.b16 %v6488
    %v6595 = vunpack.c.h.b16 %v6488
    %v6596 = vunpack.c.l.b16 %v6489
    %v6597 = vunpack.c.h.b16 %v6489
    %v6598 = vunpack.c.l.b16 %v6490
    %v6599 = vunpack.c.h.b16 %v6490
    %v6600 = vpack.c.b16 %v6538, %v6536
    %v6601 = vpack.c.b16 %v6539, %v6537
    %v6602 = vpack.c.b16 %v6542, %v6540
    %v6603 = vpack.c.b16 %v6543, %v6541
    %v6604 = vpack.c.b16 %v6546, %v6544
    %v6605 = vpack.c.b16 %v6547, %v6545
    %v6606 = vpack.c.b16 %v6550, %v6548
    %v6607 = vpack.c.b16 %v6551, %v6549
    %v6608 = vpack.c.b16 %v6554, %v6552
    %v6609 = vpack.c.b16 %v6555, %v6553
    %v6610 = vpack.c.b16 %v6558, %v6556
    %v6611 = vpack.c.b16 %v6559, %v6557
    %v6612 = vpack.c.b16 %v6562, %v6560
    %v6613 = vpack.c.b16 %v6563, %v6561
    %v6614 = vpack.c.b16 %v6566, %v6564
    %v6615 = vpack.c.b16 %v6567, %v6565
    %v6616 = vpack.c.b16 %v6570, %v6568
    %v6617 = vpack.c.b16 %v6571, %v6569
    %v6618 = vpack.c.b16 %v6574, %v6572
    %v6619 = vpack.c.b16 %v6575, %v6573
    %v6620 = vpack.c.b16 %v6578, %v6576
    %v6621 = vpack.c.b16 %v6579, %v6577
    %v6622 = vpack.c.b16 %v6582, %v6580
    %v6623 = vpack.c.b16 %v6583, %v6581
    %v6624 = vpack.c.b16 %v6586, %v6584
    %v6625 = vpack.c.b16 %v6587, %v6585
    %v6626 = vpack.c.b16 %v6590, %v6588
    %v6627 = vpack.c.b16 %v6591, %v6589
    %v6628 = vpack.c.b16 %v6594, %v6592
    %v6629 = vpack.c.b16 %v6595, %v6593
    %v6630 = vpack.c.b16 %v6598, %v6596
    %v6631 = vpack.c.b16 %v6599, %v6597
    %6664 = vmatprep.subr.bf16.mxu0 %v6601
    %6665 = vmatpush1.bf16.msra.mxu0 %v6600
    %6666 = vmatprep.subr.bf16.mxu0 %v6603
    %6667 = vmatpush1.bf16.msra.mxu0 %v6602
    %6668 = vmatprep.subr.bf16.mxu0 %v6605
    %6669 = vmatpush1.bf16.msra.mxu0 %v6604
    %6670 = vmatprep.subr.bf16.mxu0 %v6607
    %6671 = vmatpush1.bf16.msra.mxu0 %v6606
    %6672 = vmatprep.subr.bf16.mxu0 %v6609
    %6673 = vmatpush1.bf16.msra.mxu0 %v6608
    %6674 = vmatprep.subr.bf16.mxu0 %v6611
    %6675 = vmatpush1.bf16.msra.mxu0 %v6610
    %6676 = vmatprep.subr.bf16.mxu0 %v6613
    %6677 = vmatpush1.bf16.msra.mxu0 %v6612
    %6678 = vmatprep.subr.bf16.mxu0 %v6615
    %6679 = vmatpush1.bf16.msra.mxu0 %v6614
    %6680 = vmatprep.subr.bf16.mxu0 %v6617
    %6681 = vmatpush1.bf16.msra.mxu0 %v6616
    %6682 = vmatprep.subr.bf16.mxu0 %v6619
    %6683 = vmatpush1.bf16.msra.mxu0 %v6618
    %6684 = vmatprep.subr.bf16.mxu0 %v6621
    %6685 = vmatpush1.bf16.msra.mxu0 %v6620
    %6686 = vmatprep.subr.bf16.mxu0 %v6623
    %6687 = vmatpush1.bf16.msra.mxu0 %v6622
    %6688 = vmatprep.subr.bf16.mxu0 %v6625
    %6689 = vmatpush1.bf16.msra.mxu0 %v6624
    %6690 = vmatprep.subr.bf16.mxu0 %v6627
    %6691 = vmatpush1.bf16.msra.mxu0 %v6626
    %6692 = vmatprep.subr.bf16.mxu0 %v6629
    %6693 = vmatpush1.bf16.msra.mxu0 %v6628
    %6694 = vmatprep.subr.bf16.mxu0 %v6631
    %6695 = vmatpush1.bf16.msra.mxu0 %v6630
    %6696 = vmatprep.mubr.bf16.mxu0 %v6457
    %6697 = vmatmul.mubr.bf16.gmra.mrb[0].mxu0 %v6456
    %v6698 = vpop.f32.mrb[0].mxu0
    %v6699 = vadd.f32 %v6497, %v6698
    %v6700 = vpop.f32.mrb[0].mxu0
    %v6701 = vadd.f32 %v6501, %v6700
    %v6702 = vpop.f32.mrb[0].mxu0
    %v6703 = vpop.f32.mrb[0].mxu0
    %6704 = vdwg.mxu0
    %v6705 = vpack.c.bf16 %v6699, %v6699
    %v6706 = vpack.c.bf16 %v6701, %v6701
    %s6707 = scalar_lea.vmem [#allocation2], 3072
    %v6708 = vld [vmem:[%s6707] sm:$0xff]
    %v6709 = vld [vmem:[%s6707 + $0x8] sm:$0xff]
    %v6710 = vld [vmem:[%s6707 + $0x10] sm:$0xff]
    %v6711 = vld [vmem:[%s6707 + $0x18] sm:$0xff]
    %v6712 = vld [vmem:[%s6707 + $0x20] sm:$0xff]
    %v6713 = vld [vmem:[%s6707 + $0x28] sm:$0xff]
    %v6714 = vld [vmem:[%s6707 + $0x30] sm:$0xff]
    %v6715 = vld [vmem:[%s6707 + $0x38] sm:$0xff]
    %v6716 = vld [vmem:[%s6707 + $0x40] sm:$0xff]
    %v6717 = vld [vmem:[%s6707 + $0x48] sm:$0xff]
    %v6718 = vld [vmem:[%s6707 + $0x50] sm:$0xff]
    %v6719 = vld [vmem:[%s6707 + $0x58] sm:$0xff]
    %v6720 = vld [vmem:[%s6707 + $0x60] sm:$0xff]
    %v6721 = vld [vmem:[%s6707 + $0x68] sm:$0xff]
    %v6722 = vld [vmem:[%s6707 + $0x70] sm:$0xff]
    %v6723 = vld [vmem:[%s6707 + $0x78] sm:$0xff]
    %v6724 = vld [vmem:[%s6707 + $0x80] sm:$0xff]
    %v6725 = vld [vmem:[%s6707 + $0x88] sm:$0xff]
    %v6726 = vld [vmem:[%s6707 + $0x90] sm:$0xff]
    %v6727 = vld [vmem:[%s6707 + $0x98] sm:$0xff]
    %v6728 = vld [vmem:[%s6707 + $0xa0] sm:$0xff]
    %v6729 = vld [vmem:[%s6707 + $0xa8] sm:$0xff]
    %v6730 = vld [vmem:[%s6707 + $0xb0] sm:$0xff]
    %v6731 = vld [vmem:[%s6707 + $0xb8] sm:$0xff]
    %v6732 = vld [vmem:[%s6707 + $0xc0] sm:$0xff]
    %v6733 = vld [vmem:[%s6707 + $0xc8] sm:$0xff]
    %v6734 = vld [vmem:[%s6707 + $0xd0] sm:$0xff]
    %v6735 = vld [vmem:[%s6707 + $0xd8] sm:$0xff]
    %v6736 = vld [vmem:[%s6707 + $0xe0] sm:$0xff]
    %v6737 = vld [vmem:[%s6707 + $0xe8] sm:$0xff]
    %v6738 = vld [vmem:[%s6707 + $0xf0] sm:$0xff]
    %v6739 = vld [vmem:[%s6707 + $0xf8] sm:$0xff]
    %v6740 = vld [vmem:[%s6707 + $0x100] sm:$0xff]
    %v6741 = vld [vmem:[%s6707 + $0x108] sm:$0xff]
    %v6742 = vld [vmem:[%s6707 + $0x110] sm:$0xff]
    %v6743 = vld [vmem:[%s6707 + $0x118] sm:$0xff]
    %v6744 = vld [vmem:[%s6707 + $0x120] sm:$0xff]
    %v6745 = vld [vmem:[%s6707 + $0x128] sm:$0xff]
    %v6746 = vld [vmem:[%s6707 + $0x130] sm:$0xff]
    %v6747 = vld [vmem:[%s6707 + $0x138] sm:$0xff]
    %v6748 = vld [vmem:[%s6707 + $0x140] sm:$0xff]
    %v6749 = vld [vmem:[%s6707 + $0x148] sm:$0xff]
    %v6750 = vld [vmem:[%s6707 + $0x150] sm:$0xff]
    %v6751 = vld [vmem:[%s6707 + $0x158] sm:$0xff]
    %v6752 = vld [vmem:[%s6707 + $0x160] sm:$0xff]
    %v6753 = vld [vmem:[%s6707 + $0x168] sm:$0xff]
    %v6754 = vld [vmem:[%s6707 + $0x170] sm:$0xff]
    %v6755 = vld [vmem:[%s6707 + $0x178] sm:$0xff]
    %v6756 = vld [vmem:[%s6707 + $0x180] sm:$0xff]
    %v6757 = vld [vmem:[%s6707 + $0x188] sm:$0xff]
    %v6758 = vld [vmem:[%s6707 + $0x190] sm:$0xff]
    %v6759 = vld [vmem:[%s6707 + $0x198] sm:$0xff]
    %v6760 = vld [vmem:[%s6707 + $0x1a0] sm:$0xff]
    %v6761 = vld [vmem:[%s6707 + $0x1a8] sm:$0xff]
    %v6762 = vld [vmem:[%s6707 + $0x1b0] sm:$0xff]
    %v6763 = vld [vmem:[%s6707 + $0x1b8] sm:$0xff]
    %v6764 = vld [vmem:[%s6707 + $0x1c0] sm:$0xff]
    %v6765 = vld [vmem:[%s6707 + $0x1c8] sm:$0xff]
    %v6766 = vld [vmem:[%s6707 + $0x1d0] sm:$0xff]
    %v6767 = vld [vmem:[%s6707 + $0x1d8] sm:$0xff]
    %v6768 = vld [vmem:[%s6707 + $0x1e0] sm:$0xff]
    %v6769 = vld [vmem:[%s6707 + $0x1e8] sm:$0xff]
    %v6770 = vld [vmem:[%s6707 + $0x1f0] sm:$0xff]
    %v6771 = vld [vmem:[%s6707 + $0x1f8] sm:$0xff]
    %v6772 = vld [vmem:[%s6707 + $0x200] sm:$0xff]
    %v6773 = vld [vmem:[%s6707 + $0x208] sm:$0xff]
    %v6774 = vld [vmem:[%s6707 + $0x210] sm:$0xff]
    %v6775 = vld [vmem:[%s6707 + $0x218] sm:$0xff]
    %v6776 = vld [vmem:[%s6707 + $0x220] sm:$0xff]
    %v6777 = vld [vmem:[%s6707 + $0x228] sm:$0xff]
    %v6778 = vld [vmem:[%s6707 + $0x230] sm:$0xff]
    %v6779 = vld [vmem:[%s6707 + $0x238] sm:$0xff]
    %v6780 = vld [vmem:[%s6707 + $0x240] sm:$0xff]
    %v6781 = vld [vmem:[%s6707 + $0x248] sm:$0xff]
    %v6782 = vld [vmem:[%s6707 + $0x250] sm:$0xff]
    %v6783 = vld [vmem:[%s6707 + $0x258] sm:$0xff]
    %v6784 = vld [vmem:[%s6707 + $0x260] sm:$0xff]
    %v6785 = vld [vmem:[%s6707 + $0x268] sm:$0xff]
    %v6786 = vld [vmem:[%s6707 + $0x270] sm:$0xff]
    %v6787 = vld [vmem:[%s6707 + $0x278] sm:$0xff]
    %v6788 = vld [vmem:[%s6707 + $0x280] sm:$0xff]
    %v6789 = vld [vmem:[%s6707 + $0x288] sm:$0xff]
    %v6790 = vld [vmem:[%s6707 + $0x290] sm:$0xff]
    %v6791 = vld [vmem:[%s6707 + $0x298] sm:$0xff]
    %v6792 = vld [vmem:[%s6707 + $0x2a0] sm:$0xff]
    %v6793 = vld [vmem:[%s6707 + $0x2a8] sm:$0xff]
    %v6794 = vld [vmem:[%s6707 + $0x2b0] sm:$0xff]
    %v6795 = vld [vmem:[%s6707 + $0x2b8] sm:$0xff]
    %v6796 = vld [vmem:[%s6707 + $0x2c0] sm:$0xff]
    %v6797 = vld [vmem:[%s6707 + $0x2c8] sm:$0xff]
    %v6798 = vld [vmem:[%s6707 + $0x2d0] sm:$0xff]
    %v6799 = vld [vmem:[%s6707 + $0x2d8] sm:$0xff]
    %v6800 = vld [vmem:[%s6707 + $0x2e0] sm:$0xff]
    %v6801 = vld [vmem:[%s6707 + $0x2e8] sm:$0xff]
    %v6802 = vld [vmem:[%s6707 + $0x2f0] sm:$0xff]
    %v6803 = vld [vmem:[%s6707 + $0x2f8] sm:$0xff]
    %s6804 = scalar_lea.vmem [#allocation5], 24
    %v6805 = vld [vmem:[%s6804] sm:$0x3f]
    %v6807 = vlaneseq
    %v6808 = vshrl.u32 %v6807, 7
    %v6809 = vsub.s32 0, %v6808
    %v6810 = vrot.slane %v6805, %v6809
    %v6811 = vlaneseq
    %v6812 = vshrl.u32 %v6811, 7
    %v6813 = vsub.s32 1, %v6812
    %v6814 = vrot.slane %v6805, %v6813
    %v6815 = vlaneseq
    %v6816 = vshrl.u32 %v6815, 7
    %v6817 = vsub.s32 2, %v6816
    %v6818 = vrot.slane %v6805, %v6817
    %v6819 = vlaneseq
    %v6820 = vshrl.u32 %v6819, 7
    %v6821 = vsub.s32 3, %v6820
    %v6822 = vrot.slane %v6805, %v6821
    %v6823 = vlaneseq
    %v6824 = vshrl.u32 %v6823, 7
    %v6825 = vsub.s32 4, %v6824
    %v6826 = vrot.slane %v6805, %v6825
    %v6827 = vlaneseq
    %v6828 = vshrl.u32 %v6827, 7
    %v6829 = vsub.s32 5, %v6828
    %v6830 = vrot.slane %v6805, %v6829
    %v6933 = vunpack.c.l.b16 %v6708
    %v6934 = vunpack.c.h.b16 %v6708
    %v6935 = vunpack.c.l.b16 %v6709
    %v6936 = vunpack.c.h.b16 %v6709
    %v6937 = vunpack.c.l.b16 %v6710
    %v6938 = vunpack.c.h.b16 %v6710
    %v6939 = vunpack.c.l.b16 %v6711
    %v6940 = vunpack.c.h.b16 %v6711
    %v6941 = vunpack.c.l.b16 %v6712
    %v6942 = vunpack.c.h.b16 %v6712
    %v6943 = vunpack.c.l.b16 %v6713
    %v6944 = vunpack.c.h.b16 %v6713
    %v6945 = vunpack.c.l.b16 %v6714
    %v6946 = vunpack.c.h.b16 %v6714
    %v6947 = vunpack.c.l.b16 %v6715
    %v6948 = vunpack.c.h.b16 %v6715
    %v6949 = vunpack.c.l.b16 %v6716
    %v6950 = vunpack.c.h.b16 %v6716
    %v6951 = vunpack.c.l.b16 %v6717
    %v6952 = vunpack.c.h.b16 %v6717
    %v6953 = vunpack.c.l.b16 %v6718
    %v6954 = vunpack.c.h.b16 %v6718
    %v6955 = vunpack.c.l.b16 %v6719
    %v6956 = vunpack.c.h.b16 %v6719
    %v6957 = vunpack.c.l.b16 %v6720
    %v6958 = vunpack.c.h.b16 %v6720
    %v6959 = vunpack.c.l.b16 %v6721
    %v6960 = vunpack.c.h.b16 %v6721
    %v6961 = vunpack.c.l.b16 %v6722
    %v6962 = vunpack.c.h.b16 %v6722
    %v6963 = vunpack.c.l.b16 %v6723
    %v6964 = vunpack.c.h.b16 %v6723
    %v6965 = vunpack.c.l.b16 %v6724
    %v6966 = vunpack.c.h.b16 %v6724
    %v6967 = vunpack.c.l.b16 %v6725
    %v6968 = vunpack.c.h.b16 %v6725
    %v6969 = vunpack.c.l.b16 %v6726
    %v6970 = vunpack.c.h.b16 %v6726
    %v6971 = vunpack.c.l.b16 %v6727
    %v6972 = vunpack.c.h.b16 %v6727
    %v6973 = vunpack.c.l.b16 %v6728
    %v6974 = vunpack.c.h.b16 %v6728
    %v6975 = vunpack.c.l.b16 %v6729
    %v6976 = vunpack.c.h.b16 %v6729
    %v6977 = vunpack.c.l.b16 %v6730
    %v6978 = vunpack.c.h.b16 %v6730
    %v6979 = vunpack.c.l.b16 %v6731
    %v6980 = vunpack.c.h.b16 %v6731
    %v6981 = vunpack.c.l.b16 %v6732
    %v6982 = vunpack.c.h.b16 %v6732
    %v6983 = vunpack.c.l.b16 %v6733
    %v6984 = vunpack.c.h.b16 %v6733
    %v6985 = vunpack.c.l.b16 %v6734
    %v6986 = vunpack.c.h.b16 %v6734
    %v6987 = vunpack.c.l.b16 %v6735
    %v6988 = vunpack.c.h.b16 %v6735
    %v6989 = vunpack.c.l.b16 %v6736
    %v6990 = vunpack.c.h.b16 %v6736
    %v6991 = vunpack.c.l.b16 %v6737
    %v6992 = vunpack.c.h.b16 %v6737
    %v6993 = vunpack.c.l.b16 %v6738
    %v6994 = vunpack.c.h.b16 %v6738
    %v6995 = vunpack.c.l.b16 %v6739
    %v6996 = vunpack.c.h.b16 %v6739
    %v6997 = vunpack.c.l.b16 %v6740
    %v6998 = vunpack.c.h.b16 %v6740
    %v6999 = vunpack.c.l.b16 %v6741
    %v7000 = vunpack.c.h.b16 %v6741
    %v7001 = vunpack.c.l.b16 %v6742
    %v7002 = vunpack.c.h.b16 %v6742
    %v7003 = vunpack.c.l.b16 %v6743
    %v7004 = vunpack.c.h.b16 %v6743
    %v7005 = vunpack.c.l.b16 %v6744
    %v7006 = vunpack.c.h.b16 %v6744
    %v7007 = vunpack.c.l.b16 %v6745
    %v7008 = vunpack.c.h.b16 %v6745
    %v7009 = vunpack.c.l.b16 %v6746
    %v7010 = vunpack.c.h.b16 %v6746
    %v7011 = vunpack.c.l.b16 %v6747
    %v7012 = vunpack.c.h.b16 %v6747
    %v7013 = vunpack.c.l.b16 %v6748
    %v7014 = vunpack.c.h.b16 %v6748
    %v7015 = vunpack.c.l.b16 %v6749
    %v7016 = vunpack.c.h.b16 %v6749
    %v7017 = vunpack.c.l.b16 %v6750
    %v7018 = vunpack.c.h.b16 %v6750
    %v7019 = vunpack.c.l.b16 %v6751
    %v7020 = vunpack.c.h.b16 %v6751
    %v7021 = vunpack.c.l.b16 %v6752
    %v7022 = vunpack.c.h.b16 %v6752
    %v7023 = vunpack.c.l.b16 %v6753
    %v7024 = vunpack.c.h.b16 %v6753
    %v7025 = vunpack.c.l.b16 %v6754
    %v7026 = vunpack.c.h.b16 %v6754
    %v7027 = vunpack.c.l.b16 %v6755
    %v7028 = vunpack.c.h.b16 %v6755
    %v7029 = vunpack.c.l.b16 %v6756
    %v7030 = vunpack.c.h.b16 %v6756
    %v7031 = vunpack.c.l.b16 %v6757
    %v7032 = vunpack.c.h.b16 %v6757
    %v7033 = vunpack.c.l.b16 %v6758
    %v7034 = vunpack.c.h.b16 %v6758
    %v7035 = vunpack.c.l.b16 %v6759
    %v7036 = vunpack.c.h.b16 %v6759
    %v7037 = vunpack.c.l.b16 %v6760
    %v7038 = vunpack.c.h.b16 %v6760
    %v7039 = vunpack.c.l.b16 %v6761
    %v7040 = vunpack.c.h.b16 %v6761
    %v7041 = vunpack.c.l.b16 %v6762
    %v7042 = vunpack.c.h.b16 %v6762
    %v7043 = vunpack.c.l.b16 %v6763
    %v7044 = vunpack.c.h.b16 %v6763
    %v7045 = vunpack.c.l.b16 %v6764
    %v7046 = vunpack.c.h.b16 %v6764
    %v7047 = vunpack.c.l.b16 %v6765
    %v7048 = vunpack.c.h.b16 %v6765
    %v7049 = vunpack.c.l.b16 %v6766
    %v7050 = vunpack.c.h.b16 %v6766
    %v7051 = vunpack.c.l.b16 %v6767
    %v7052 = vunpack.c.h.b16 %v6767
    %v7053 = vunpack.c.l.b16 %v6768
    %v7054 = vunpack.c.h.b16 %v6768
    %v7055 = vunpack.c.l.b16 %v6769
    %v7056 = vunpack.c.h.b16 %v6769
    %v7057 = vunpack.c.l.b16 %v6770
    %v7058 = vunpack.c.h.b16 %v6770
    %v7059 = vunpack.c.l.b16 %v6771
    %v7060 = vunpack.c.h.b16 %v6771
    %v7061 = vunpack.c.l.b16 %v6772
    %v7062 = vunpack.c.h.b16 %v6772
    %v7063 = vunpack.c.l.b16 %v6773
    %v7064 = vunpack.c.h.b16 %v6773
    %v7065 = vunpack.c.l.b16 %v6774
    %v7066 = vunpack.c.h.b16 %v6774
    %v7067 = vunpack.c.l.b16 %v6775
    %v7068 = vunpack.c.h.b16 %v6775
    %v7069 = vunpack.c.l.b16 %v6776
    %v7070 = vunpack.c.h.b16 %v6776
    %v7071 = vunpack.c.l.b16 %v6777
    %v7072 = vunpack.c.h.b16 %v6777
    %v7073 = vunpack.c.l.b16 %v6778
    %v7074 = vunpack.c.h.b16 %v6778
    %v7075 = vunpack.c.l.b16 %v6779
    %v7076 = vunpack.c.h.b16 %v6779
    %v7077 = vunpack.c.l.b16 %v6780
    %v7078 = vunpack.c.h.b16 %v6780
    %v7079 = vunpack.c.l.b16 %v6781
    %v7080 = vunpack.c.h.b16 %v6781
    %v7081 = vunpack.c.l.b16 %v6782
    %v7082 = vunpack.c.h.b16 %v6782
    %v7083 = vunpack.c.l.b16 %v6783
    %v7084 = vunpack.c.h.b16 %v6783
    %v7085 = vunpack.c.l.b16 %v6784
    %v7086 = vunpack.c.h.b16 %v6784
    %v7087 = vunpack.c.l.b16 %v6785
    %v7088 = vunpack.c.h.b16 %v6785
    %v7089 = vunpack.c.l.b16 %v6786
    %v7090 = vunpack.c.h.b16 %v6786
    %v7091 = vunpack.c.l.b16 %v6787
    %v7092 = vunpack.c.h.b16 %v6787
    %v7093 = vunpack.c.l.b16 %v6788
    %v7094 = vunpack.c.h.b16 %v6788
    %v7095 = vunpack.c.l.b16 %v6789
    %v7096 = vunpack.c.h.b16 %v6789
    %v7097 = vunpack.c.l.b16 %v6790
    %v7098 = vunpack.c.h.b16 %v6790
    %v7099 = vunpack.c.l.b16 %v6791
    %v7100 = vunpack.c.h.b16 %v6791
    %v7101 = vunpack.c.l.b16 %v6792
    %v7102 = vunpack.c.h.b16 %v6792
    %v7103 = vunpack.c.l.b16 %v6793
    %v7104 = vunpack.c.h.b16 %v6793
    %v7105 = vunpack.c.l.b16 %v6794
    %v7106 = vunpack.c.h.b16 %v6794
    %v7107 = vunpack.c.l.b16 %v6795
    %v7108 = vunpack.c.h.b16 %v6795
    %v7109 = vunpack.c.l.b16 %v6796
    %v7110 = vunpack.c.h.b16 %v6796
    %v7111 = vunpack.c.l.b16 %v6797
    %v7112 = vunpack.c.h.b16 %v6797
    %v7113 = vunpack.c.l.b16 %v6798
    %v7114 = vunpack.c.h.b16 %v6798
    %v7115 = vunpack.c.l.b16 %v6799
    %v7116 = vunpack.c.h.b16 %v6799
    %v7117 = vunpack.c.l.b16 %v6800
    %v7118 = vunpack.c.h.b16 %v6800
    %v7119 = vunpack.c.l.b16 %v6801
    %v7120 = vunpack.c.h.b16 %v6801
    %v7121 = vunpack.c.l.b16 %v6802
    %v7122 = vunpack.c.h.b16 %v6802
    %v7123 = vunpack.c.l.b16 %v6803
    %v7124 = vunpack.c.h.b16 %v6803
    %v7125 = vpack.c.b16 %v6939, %v6933
    %v7126 = vpack.c.b16 %v6940, %v6934
    %v7127 = vpack.c.b16 %v6941, %v6935
    %v7128 = vpack.c.b16 %v6942, %v6936
    %v7129 = vpack.c.b16 %v6943, %v6937
    %v7130 = vpack.c.b16 %v6944, %v6938
    %v7131 = vpack.c.b16 %v6951, %v6945
    %v7132 = vpack.c.b16 %v6952, %v6946
    %v7133 = vpack.c.b16 %v6953, %v6947
    %v7134 = vpack.c.b16 %v6954, %v6948
    %v7135 = vpack.c.b16 %v6955, %v6949
    %v7136 = vpack.c.b16 %v6956, %v6950
    %v7137 = vpack.c.b16 %v6963, %v6957
    %v7138 = vpack.c.b16 %v6964, %v6958
    %v7139 = vpack.c.b16 %v6965, %v6959
    %v7140 = vpack.c.b16 %v6966, %v6960
    %v7141 = vpack.c.b16 %v6967, %v6961
    %v7142 = vpack.c.b16 %v6968, %v6962
    %v7143 = vpack.c.b16 %v6975, %v6969
    %v7144 = vpack.c.b16 %v6976, %v6970
    %v7145 = vpack.c.b16 %v6977, %v6971
    %v7146 = vpack.c.b16 %v6978, %v6972
    %v7147 = vpack.c.b16 %v6979, %v6973
    %v7148 = vpack.c.b16 %v6980, %v6974
    %v7149 = vpack.c.b16 %v6987, %v6981
    %v7150 = vpack.c.b16 %v6988, %v6982
    %v7151 = vpack.c.b16 %v6989, %v6983
    %v7152 = vpack.c.b16 %v6990, %v6984
    %v7153 = vpack.c.b16 %v6991, %v6985
    %v7154 = vpack.c.b16 %v6992, %v6986
    %v7155 = vpack.c.b16 %v6999, %v6993
    %v7156 = vpack.c.b16 %v7000, %v6994
    %v7157 = vpack.c.b16 %v7001, %v6995
    %v7158 = vpack.c.b16 %v7002, %v6996
    %v7159 = vpack.c.b16 %v7003, %v6997
    %v7160 = vpack.c.b16 %v7004, %v6998
    %v7161 = vpack.c.b16 %v7011, %v7005
    %v7162 = vpack.c.b16 %v7012, %v7006
    %v7163 = vpack.c.b16 %v7013, %v7007
    %v7164 = vpack.c.b16 %v7014, %v7008
    %v7165 = vpack.c.b16 %v7015, %v7009
    %v7166 = vpack.c.b16 %v7016, %v7010
    %v7167 = vpack.c.b16 %v7023, %v7017
    %v7168 = vpack.c.b16 %v7024, %v7018
    %v7169 = vpack.c.b16 %v7025, %v7019
    %v7170 = vpack.c.b16 %v7026, %v7020
    %v7171 = vpack.c.b16 %v7027, %v7021
    %v7172 = vpack.c.b16 %v7028, %v7022
    %v7173 = vpack.c.b16 %v7035, %v7029
    %v7174 = vpack.c.b16 %v7036, %v7030
    %v7175 = vpack.c.b16 %v7037, %v7031
    %v7176 = vpack.c.b16 %v7038, %v7032
    %v7177 = vpack.c.b16 %v7039, %v7033
    %v7178 = vpack.c.b16 %v7040, %v7034
    %v7179 = vpack.c.b16 %v7047, %v7041
    %v7180 = vpack.c.b16 %v7048, %v7042
    %v7181 = vpack.c.b16 %v7049, %v7043
    %v7182 = vpack.c.b16 %v7050, %v7044
    %v7183 = vpack.c.b16 %v7051, %v7045
    %v7184 = vpack.c.b16 %v7052, %v7046
    %v7185 = vpack.c.b16 %v7059, %v7053
    %v7186 = vpack.c.b16 %v7060, %v7054
    %v7187 = vpack.c.b16 %v7061, %v7055
    %v7188 = vpack.c.b16 %v7062, %v7056
    %v7189 = vpack.c.b16 %v7063, %v7057
    %v7190 = vpack.c.b16 %v7064, %v7058
    %v7191 = vpack.c.b16 %v7071, %v7065
    %v7192 = vpack.c.b16 %v7072, %v7066
    %v7193 = vpack.c.b16 %v7073, %v7067
    %v7194 = vpack.c.b16 %v7074, %v7068
    %v7195 = vpack.c.b16 %v7075, %v7069
    %v7196 = vpack.c.b16 %v7076, %v7070
    %v7197 = vpack.c.b16 %v7083, %v7077
    %v7198 = vpack.c.b16 %v7084, %v7078
    %v7199 = vpack.c.b16 %v7085, %v7079
    %v7200 = vpack.c.b16 %v7086, %v7080
    %v7201 = vpack.c.b16 %v7087, %v7081
    %v7202 = vpack.c.b16 %v7088, %v7082
    %v7203 = vpack.c.b16 %v7095, %v7089
    %v7204 = vpack.c.b16 %v7096, %v7090
    %v7205 = vpack.c.b16 %v7097, %v7091
    %v7206 = vpack.c.b16 %v7098, %v7092
    %v7207 = vpack.c.b16 %v7099, %v7093
    %v7208 = vpack.c.b16 %v7100, %v7094
    %v7209 = vpack.c.b16 %v7107, %v7101
    %v7210 = vpack.c.b16 %v7108, %v7102
    %v7211 = vpack.c.b16 %v7109, %v7103
    %v7212 = vpack.c.b16 %v7110, %v7104
    %v7213 = vpack.c.b16 %v7111, %v7105
    %v7214 = vpack.c.b16 %v7112, %v7106
    %v7215 = vpack.c.b16 %v7119, %v7113
    %v7216 = vpack.c.b16 %v7120, %v7114
    %v7217 = vpack.c.b16 %v7121, %v7115
    %v7218 = vpack.c.b16 %v7122, %v7116
    %v7219 = vpack.c.b16 %v7123, %v7117
    %v7220 = vpack.c.b16 %v7124, %v7118
    %7317 = vmatprep.subr.bf16.mxu0 %v7126
    %7318 = vmatpush1.bf16.msra.mxu0 %v7125
    %7319 = vmatprep.subr.bf16.mxu0 %v7132
    %7320 = vmatpush1.bf16.msra.mxu0 %v7131
    %7321 = vmatprep.subr.bf16.mxu0 %v7138
    %7322 = vmatpush1.bf16.msra.mxu0 %v7137
    %7323 = vmatprep.subr.bf16.mxu0 %v7144
    %7324 = vmatpush1.bf16.msra.mxu0 %v7143
    %7325 = vmatprep.subr.bf16.mxu0 %v7150
    %7326 = vmatpush1.bf16.msra.mxu0 %v7149
    %7327 = vmatprep.subr.bf16.mxu0 %v7156
    %7328 = vmatpush1.bf16.msra.mxu0 %v7155
    %7329 = vmatprep.subr.bf16.mxu0 %v7162
    %7330 = vmatpush1.bf16.msra.mxu0 %v7161
    %7331 = vmatprep.subr.bf16.mxu0 %v7168
    %7332 = vmatpush1.bf16.msra.mxu0 %v7167
    %7333 = vmatprep.subr.bf16.mxu0 %v7174
    %7334 = vmatpush1.bf16.msra.mxu0 %v7173
    %7335 = vmatprep.subr.bf16.mxu0 %v7180
    %7336 = vmatpush1.bf16.msra.mxu0 %v7179
    %7337 = vmatprep.subr.bf16.mxu0 %v7186
    %7338 = vmatpush1.bf16.msra.mxu0 %v7185
    %7339 = vmatprep.subr.bf16.mxu0 %v7192
    %7340 = vmatpush1.bf16.msra.mxu0 %v7191
    %7341 = vmatprep.subr.bf16.mxu0 %v7198
    %7342 = vmatpush1.bf16.msra.mxu0 %v7197
    %7343 = vmatprep.subr.bf16.mxu0 %v7204
    %7344 = vmatpush1.bf16.msra.mxu0 %v7203
    %7345 = vmatprep.subr.bf16.mxu0 %v7210
    %7346 = vmatpush1.bf16.msra.mxu0 %v7209
    %7347 = vmatprep.subr.bf16.mxu0 %v7216
    %7348 = vmatpush1.bf16.msra.mxu0 %v7215
    %7349 = vmatprep.mubr.bf16.mxu0 %v6706
    %7350 = vmatmul.mubr.bf16.gmra.mrb[0].mxu0 %v6705
    %v7351 = vpop.f32.mrb[0].mxu0
    %v7352 = vadd.f32 %v6810, %v7351
    %v7353 = vpop.f32.mrb[0].mxu0
    %v7354 = vadd.f32 %v6814, %v7353
    %v7355 = vpop.f32.mrb[0].mxu0
    %v7356 = vpop.f32.mrb[0].mxu0
    %7357 = vdwg.mxu0
    %7358 = vmatprep.subr.bf16.mxu0 %v7128
    %7359 = vmatpush1.bf16.msra.mxu0 %v7127
    %7360 = vmatprep.subr.bf16.mxu0 %v7134
    %7361 = vmatpush1.bf16.msra.mxu0 %v7133
    %7362 = vmatprep.subr.bf16.mxu0 %v7140
    %7363 = vmatpush1.bf16.msra.mxu0 %v7139
    %7364 = vmatprep.subr.bf16.mxu0 %v7146
    %7365 = vmatpush1.bf16.msra.mxu0 %v7145
    %7366 = vmatprep.subr.bf16.mxu0 %v7152
    %7367 = vmatpush1.bf16.msra.mxu0 %v7151
    %7368 = vmatprep.subr.bf16.mxu0 %v7158
    %7369 = vmatpush1.bf16.msra.mxu0 %v7157
    %7370 = vmatprep.subr.bf16.mxu0 %v7164
    %7371 = vmatpush1.bf16.msra.mxu0 %v7163
    %7372 = vmatprep.subr.bf16.mxu0 %v7170
    %7373 = vmatpush1.bf16.msra.mxu0 %v7169
    %7374 = vmatprep.subr.bf16.mxu0 %v7176
    %7375 = vmatpush1.bf16.msra.mxu0 %v7175
    %7376 = vmatprep.subr.bf16.mxu0 %v7182
    %7377 = vmatpush1.bf16.msra.mxu0 %v7181
    %7378 = vmatprep.subr.bf16.mxu0 %v7188
    %7379 = vmatpush1.bf16.msra.mxu0 %v7187
    %7380 = vmatprep.subr.bf16.mxu0 %v7194
    %7381 = vmatpush1.bf16.msra.mxu0 %v7193
    %7382 = vmatprep.subr.bf16.mxu0 %v7200
    %7383 = vmatpush1.bf16.msra.mxu0 %v7199
    %7384 = vmatprep.subr.bf16.mxu0 %v7206
    %7385 = vmatpush1.bf16.msra.mxu0 %v7205
    %7386 = vmatprep.subr.bf16.mxu0 %v7212
    %7387 = vmatpush1.bf16.msra.mxu0 %v7211
    %7388 = vmatprep.subr.bf16.mxu0 %v7218
    %7389 = vmatpush1.bf16.msra.mxu0 %v7217
    %7390 = vmatprep.mubr.bf16.mxu0 %v6706
    %7391 = vmatmul.mubr.bf16.gmra.mrb[0].mxu0 %v6705
    %v7392 = vpop.f32.mrb[0].mxu0
    %v7393 = vadd.f32 %v6818, %v7392
    %v7394 = vpop.f32.mrb[0].mxu0
    %v7395 = vadd.f32 %v6822, %v7394
    %v7396 = vpop.f32.mrb[0].mxu0
    %v7397 = vpop.f32.mrb[0].mxu0
    %7398 = vdwg.mxu0
    %7399 = vmatprep.subr.bf16.mxu0 %v7130
    %7400 = vmatpush1.bf16.msra.mxu0 %v7129
    %7401 = vmatprep.subr.bf16.mxu0 %v7136
    %7402 = vmatpush1.bf16.msra.mxu0 %v7135
    %7403 = vmatprep.subr.bf16.mxu0 %v7142
    %7404 = vmatpush1.bf16.msra.mxu0 %v7141
    %7405 = vmatprep.subr.bf16.mxu0 %v7148
    %7406 = vmatpush1.bf16.msra.mxu0 %v7147
    %7407 = vmatprep.subr.bf16.mxu0 %v7154
    %7408 = vmatpush1.bf16.msra.mxu0 %v7153
    %7409 = vmatprep.subr.bf16.mxu0 %v7160
    %7410 = vmatpush1.bf16.msra.mxu0 %v7159
    %7411 = vmatprep.subr.bf16.mxu0 %v7166
    %7412 = vmatpush1.bf16.msra.mxu0 %v7165
    %7413 = vmatprep.subr.bf16.mxu0 %v7172
    %7414 = vmatpush1.bf16.msra.mxu0 %v7171
    %7415 = vmatprep.subr.bf16.mxu0 %v7178
    %7416 = vmatpush1.bf16.msra.mxu0 %v7177
    %7417 = vmatprep.subr.bf16.mxu0 %v7184
    %7418 = vmatpush1.bf16.msra.mxu0 %v7183
    %7419 = vmatprep.subr.bf16.mxu0 %v7190
    %7420 = vmatpush1.bf16.msra.mxu0 %v7189
    %7421 = vmatprep.subr.bf16.mxu0 %v7196
    %7422 = vmatpush1.bf16.msra.mxu0 %v7195
    %7423 = vmatprep.subr.bf16.mxu0 %v7202
    %7424 = vmatpush1.bf16.msra.mxu0 %v7201
    %7425 = vmatprep.subr.bf16.mxu0 %v7208
    %7426 = vmatpush1.bf16.msra.mxu0 %v7207
    %7427 = vmatprep.subr.bf16.mxu0 %v7214
    %7428 = vmatpush1.bf16.msra.mxu0 %v7213
    %7429 = vmatprep.subr.bf16.mxu0 %v7220
    %7430 = vmatpush1.bf16.msra.mxu0 %v7219
    %7431 = vmatprep.mubr.bf16.mxu0 %v6706
    %7432 = vmatmul.mubr.bf16.gmra.mrb[0].mxu0 %v6705
    %v7433 = vpop.f32.mrb[0].mxu0
    %v7434 = vadd.f32 %v6826, %v7433
    %v7435 = vpop.f32.mrb[0].mxu0
    %v7436 = vadd.f32 %v6830, %v7435
    %v7437 = vpop.f32.mrb[0].mxu0
    %v7438 = vpop.f32.mrb[0].mxu0
    %7439 = vdwg.mxu0
    %v7441 = vsel %vm824, %v7352, 0
    %v7444 = vsel %vm824, %v7393, 0
    %7446 = vmatprep.subr.mxu0 0.0
    %7447 = vmatpush1.xpose.msra.mxu0 %v7444
    %7448 = vmatprep.subr.mxu0 0.0
    %7449 = vmatpush1.xpose.msra.mxu0 0.0
    %7450 = vmatprep.subr.mxu0 0.0
    %7451 = vmatpush1.xpose.msra.mxu0 0.0
    %7452 = vmatprep.subr.mxu0 0.0
    %7453 = vmatpush1.xpose.msra.mxu0 0.0
    %7454 = vmatprep.subr.mxu0 0.0
    %7455 = vmatpush1.xpose.msra.mxu0 0.0
    %7456 = vmatprep.subr.mxu0 0.0
    %7457 = vmatpush1.xpose.msra.mxu0 0.0
    %7458 = vmatprep.subr.mxu0 0.0
    %7459 = vmatpush1.xpose.msra.mxu0 0.0
    %7460 = vmatprep.subr.mxu0 0.0
    %7461 = vmatpush1.xpose.msra.mxu0 0.0
    %7462 = vmatprep.subr.mxu0 0.0
    %7463 = vmatpush1.xpose.msra.mxu0 0.0
    %7464 = vmatprep.subr.mxu0 0.0
    %7465 = vmatpush1.xpose.msra.mxu0 0.0
    %7466 = vmatprep.subr.mxu0 0.0
    %7467 = vmatpush1.xpose.msra.mxu0 0.0
    %7468 = vmatprep.subr.mxu0 0.0
    %7469 = vmatpush1.xpose.msra.mxu0 0.0
    %7470 = vmatprep.subr.mxu0 0.0
    %7471 = vmatpush1.xpose.msra.mxu0 0.0
    %7472 = vmatprep.subr.mxu0 0.0
    %7473 = vmatpush1.xpose.msra.mxu0 0.0
    %7474 = vmatprep.subr.mxu0 0.0
    %7475 = vmatpush1.xpose.msra.mxu0 0.0
    %7476 = vmatprep.subr.mxu0 0.0
    %7477 = vmatpush1.xpose.msra.mxu0 0.0
    %7478 = vmatprep.subr.mxu0 0.0
    %7479 = vmatpush1.xpose.msra.mxu0 0.0
    %7480 = vmatprep.subr.mxu0 0.0
    %7481 = vmatpush1.xpose.msra.mxu0 0.0
    %7482 = vmatprep.subr.mxu0 0.0
    %7483 = vmatpush1.xpose.msra.mxu0 0.0
    %7484 = vmatprep.subr.mxu0 0.0
    %7485 = vmatpush1.xpose.msra.mxu0 0.0
    %7486 = vmatprep.subr.mxu0 0.0
    %7487 = vmatpush1.xpose.msra.mxu0 0.0
    %7488 = vmatprep.subr.mxu0 0.0
    %7489 = vmatpush1.xpose.msra.mxu0 0.0
    %7490 = vmatprep.subr.mxu0 0.0
    %7491 = vmatpush1.xpose.msra.mxu0 0.0
    %7492 = vmatprep.subr.mxu0 0.0
    %7493 = vmatpush1.xpose.msra.mxu0 0.0
    %7494 = vmatprep.subr.mxu0 0.0
    %7495 = vmatpush1.xpose.msra.mxu0 0.0
    %7496 = vmatprep.subr.mxu0 0.0
    %7497 = vmatpush1.xpose.msra.mxu0 0.0
    %7498 = vmatprep.subr.mxu0 0.0
    %7499 = vmatpush1.xpose.msra.mxu0 0.0
    %7500 = vmatprep.subr.mxu0 0.0
    %7501 = vmatpush1.xpose.msra.mxu0 0.0
    %7502 = vmatprep.subr.mxu0 0.0
    %7503 = vmatpush1.xpose.msra.mxu0 0.0
    %7504 = vmatprep.subr.mxu0 0.0
    %7505 = vmatpush1.xpose.msra.mxu0 0.0
    %7506 = vmatprep.subr.mxu0 0.0
    %7507 = vmatpush1.xpose.msra.mxu0 0.0
    %7508 = vmatprep.subr.mxu0 0.0
    %7509 = vmatpush1.xpose.msra.mxu0 0.0
    %7510 = vmatprep.mubr.f32.mxu0 0.0
    %7511 = vmatmul.mubr.f32.gmra.mrb[0].mxu0 %v7441
    %v7512 = vpop.f32.mrb[0].mxu0
    %v7513 = vadd.f32 0.0, %v7512
    %v7514 = vpop.f32.mrb[0].mxu0
    %7515 = vdwg.mxu0
    %v7516 = vmul.f32 %v7513, 0.125
    %v7517 = vadd.f32 %v7516, %v88
    %v7518 = vsel %vm903, %v7517, -inf
    %7519 = vmax.xlane.f32.xlu0 %v7518
    %v7520 = vpop.xlane.xlu0 %7519
    %v7521 = vsub.f32 %v7517, %v7520
    %v7522 = vmul.f32 %v7521, 1.442695
    %v7523 = vpow.pop %v7522
    %v7524 = vsel %vm903, %v7523, 0.0
    %7525 = vadd.xlane.f32.xlu0 %v7524
    %v7526 = vpop.xlane.xlu0 %7525
    %v7527 = vrcp.pop %v7526
    %v7528 = vmul.f32 %v7523, %v7527
    %v7530 = vsel %vm903, %v7528, 0
    %7532 = vmatprep.subr.mxu0 0.0
    %7533 = vmatpush1.msra.mxu0 %v7434
    %7534 = vmatprep.subr.mxu0 0.0
    %7535 = vmatpush1.msra.mxu0 0.0
    %7536 = vmatprep.subr.mxu0 0.0
    %7537 = vmatpush1.msra.mxu0 0.0
    %7538 = vmatprep.subr.mxu0 0.0
    %7539 = vmatpush1.msra.mxu0 0.0
    %7540 = vmatprep.subr.mxu0 0.0
    %7541 = vmatpush1.msra.mxu0 0.0
    %7542 = vmatprep.subr.mxu0 0.0
    %7543 = vmatpush1.msra.mxu0 0.0
    %7544 = vmatprep.subr.mxu0 0.0
    %7545 = vmatpush1.msra.mxu0 0.0
    %7546 = vmatprep.subr.mxu0 0.0
    %7547 = vmatpush1.msra.mxu0 0.0
    %7548 = vmatprep.subr.mxu0 0.0
    %7549 = vmatpush1.msra.mxu0 0.0
    %7550 = vmatprep.subr.mxu0 0.0
    %7551 = vmatpush1.msra.mxu0 0.0
    %7552 = vmatprep.subr.mxu0 0.0
    %7553 = vmatpush1.msra.mxu0 0.0
    %7554 = vmatprep.subr.mxu0 0.0
    %7555 = vmatpush1.msra.mxu0 0.0
    %7556 = vmatprep.subr.mxu0 0.0
    %7557 = vmatpush1.msra.mxu0 0.0
    %7558 = vmatprep.subr.mxu0 0.0
    %7559 = vmatpush1.msra.mxu0 0.0
    %7560 = vmatprep.subr.mxu0 0.0
    %7561 = vmatpush1.msra.mxu0 0.0
    %7562 = vmatprep.subr.mxu0 0.0
    %7563 = vmatpush1.msra.mxu0 0.0
    %7564 = vmatprep.subr.mxu0 0.0
    %7565 = vmatpush1.msra.mxu0 0.0
    %7566 = vmatprep.subr.mxu0 0.0
    %7567 = vmatpush1.msra.mxu0 0.0
    %7568 = vmatprep.subr.mxu0 0.0
    %7569 = vmatpush1.msra.mxu0 0.0
    %7570 = vmatprep.subr.mxu0 0.0
    %7571 = vmatpush1.msra.mxu0 0.0
    %7572 = vmatprep.subr.mxu0 0.0
    %7573 = vmatpush1.msra.mxu0 0.0
    %7574 = vmatprep.subr.mxu0 0.0
    %7575 = vmatpush1.msra.mxu0 0.0
    %7576 = vmatprep.subr.mxu0 0.0
    %7577 = vmatpush1.msra.mxu0 0.0
    %7578 = vmatprep.subr.mxu0 0.0
    %7579 = vmatpush1.msra.mxu0 0.0
    %7580 = vmatprep.subr.mxu0 0.0
    %7581 = vmatpush1.msra.mxu0 0.0
    %7582 = vmatprep.subr.mxu0 0.0
    %7583 = vmatpush1.msra.mxu0 0.0
    %7584 = vmatprep.subr.mxu0 0.0
    %7585 = vmatpush1.msra.mxu0 0.0
    %7586 = vmatprep.subr.mxu0 0.0
    %7587 = vmatpush1.msra.mxu0 0.0
    %7588 = vmatprep.subr.mxu0 0.0
    %7589 = vmatpush1.msra.mxu0 0.0
    %7590 = vmatprep.subr.mxu0 0.0
    %7591 = vmatpush1.msra.mxu0 0.0
    %7592 = vmatprep.subr.mxu0 0.0
    %7593 = vmatpush1.msra.mxu0 0.0
    %7594 = vmatprep.subr.mxu0 0.0
    %7595 = vmatpush1.msra.mxu0 0.0
    %7596 = vmatprep.mubr.f32.mxu0 0.0
    %7597 = vmatmul.mubr.f32.gmra.mrb[0].mxu0 %v7530
    %v7598 = vpop.f32.mrb[0].mxu0
    %v7599 = vadd.f32 0.0, %v7598
    %v7600 = vpop.f32.mrb[0].mxu0
    %7601 = vdwg.mxu0
    %7602 = vrot.lane.b32.xlu0 %v7352, 64
    %v7603 = vpop.permute.xlu0 %7602
    %7604 = vrot.lane.b32.xlu0 %v7393, 64
    %v7605 = vpop.permute.xlu0 %7604
    %v7606 = vsel %vm824, %v7603, 0
    %v7608 = vsel %vm824, %v7605, 0
    %7610 = vmatprep.subr.mxu0 0.0
    %7611 = vmatpush1.xpose.msra.mxu0 %v7608
    %7612 = vmatprep.subr.mxu0 0.0
    %7613 = vmatpush1.xpose.msra.mxu0 0.0
    %7614 = vmatprep.subr.mxu0 0.0
    %7615 = vmatpush1.xpose.msra.mxu0 0.0
    %7616 = vmatprep.subr.mxu0 0.0
    %7617 = vmatpush1.xpose.msra.mxu0 0.0
    %7618 = vmatprep.subr.mxu0 0.0
    %7619 = vmatpush1.xpose.msra.mxu0 0.0
    %7620 = vmatprep.subr.mxu0 0.0
    %7621 = vmatpush1.xpose.msra.mxu0 0.0
    %7622 = vmatprep.subr.mxu0 0.0
    %7623 = vmatpush1.xpose.msra.mxu0 0.0
    %7624 = vmatprep.subr.mxu0 0.0
    %7625 = vmatpush1.xpose.msra.mxu0 0.0
    %7626 = vmatprep.subr.mxu0 0.0
    %7627 = vmatpush1.xpose.msra.mxu0 0.0
    %7628 = vmatprep.subr.mxu0 0.0
    %7629 = vmatpush1.xpose.msra.mxu0 0.0
    %7630 = vmatprep.subr.mxu0 0.0
    %7631 = vmatpush1.xpose.msra.mxu0 0.0
    %7632 = vmatprep.subr.mxu0 0.0
    %7633 = vmatpush1.xpose.msra.mxu0 0.0
    %7634 = vmatprep.subr.mxu0 0.0
    %7635 = vmatpush1.xpose.msra.mxu0 0.0
    %7636 = vmatprep.subr.mxu0 0.0
    %7637 = vmatpush1.xpose.msra.mxu0 0.0
    %7638 = vmatprep.subr.mxu0 0.0
    %7639 = vmatpush1.xpose.msra.mxu0 0.0
    %7640 = vmatprep.subr.mxu0 0.0
    %7641 = vmatpush1.xpose.msra.mxu0 0.0
    %7642 = vmatprep.subr.mxu0 0.0
    %7643 = vmatpush1.xpose.msra.mxu0 0.0
    %7644 = vmatprep.subr.mxu0 0.0
    %7645 = vmatpush1.xpose.msra.mxu0 0.0
    %7646 = vmatprep.subr.mxu0 0.0
    %7647 = vmatpush1.xpose.msra.mxu0 0.0
    %7648 = vmatprep.subr.mxu0 0.0
    %7649 = vmatpush1.xpose.msra.mxu0 0.0
    %7650 = vmatprep.subr.mxu0 0.0
    %7651 = vmatpush1.xpose.msra.mxu0 0.0
    %7652 = vmatprep.subr.mxu0 0.0
    %7653 = vmatpush1.xpose.msra.mxu0 0.0
    %7654 = vmatprep.subr.mxu0 0.0
    %7655 = vmatpush1.xpose.msra.mxu0 0.0
    %7656 = vmatprep.subr.mxu0 0.0
    %7657 = vmatpush1.xpose.msra.mxu0 0.0
    %7658 = vmatprep.subr.mxu0 0.0
    %7659 = vmatpush1.xpose.msra.mxu0 0.0
    %7660 = vmatprep.subr.mxu0 0.0
    %7661 = vmatpush1.xpose.msra.mxu0 0.0
    %7662 = vmatprep.subr.mxu0 0.0
    %7663 = vmatpush1.xpose.msra.mxu0 0.0
    %7664 = vmatprep.subr.mxu0 0.0
    %7665 = vmatpush1.xpose.msra.mxu0 0.0
    %7666 = vmatprep.subr.mxu0 0.0
    %7667 = vmatpush1.xpose.msra.mxu0 0.0
    %7668 = vmatprep.subr.mxu0 0.0
    %7669 = vmatpush1.xpose.msra.mxu0 0.0
    %7670 = vmatprep.subr.mxu0 0.0
    %7671 = vmatpush1.xpose.msra.mxu0 0.0
    %7672 = vmatprep.subr.mxu0 0.0
    %7673 = vmatpush1.xpose.msra.mxu0 0.0
    %7674 = vmatprep.mubr.f32.mxu0 0.0
    %7675 = vmatmul.mubr.f32.gmra.mrb[0].mxu0 %v7606
    %v7676 = vpop.f32.mrb[0].mxu0
    %v7677 = vadd.f32 0.0, %v7676
    %v7678 = vpop.f32.mrb[0].mxu0
    %7679 = vdwg.mxu0
    %v7680 = vmul.f32 %v7677, 0.125
    %v7681 = vadd.f32 %v7680, %v88
    %v7682 = vsel %vm903, %v7681, -inf
    %7683 = vmax.xlane.f32.xlu0 %v7682
    %v7684 = vpop.xlane.xlu0 %7683
    %v7685 = vsub.f32 %v7681, %v7684
    %v7686 = vmul.f32 %v7685, 1.442695
    %v7687 = vpow.pop %v7686
    %v7688 = vsel %vm903, %v7687, 0.0
    %7689 = vadd.xlane.f32.xlu0 %v7688
    %v7690 = vpop.xlane.xlu0 %7689
    %v7691 = vrcp.pop %v7690
    %v7692 = vmul.f32 %v7687, %v7691
    %7694 = vrot.lane.b32.xlu0 %v7434, 64
    %v7695 = vpop.permute.xlu0 %7694
    %v7698 = vsel %vm903, %v7692, 0
    %7700 = vmatprep.subr.mxu0 0.0
    %7701 = vmatpush1.msra.mxu0 %v7695
    %7702 = vmatprep.subr.mxu0 0.0
    %7703 = vmatpush1.msra.mxu0 0.0
    %7704 = vmatprep.subr.mxu0 0.0
    %7705 = vmatpush1.msra.mxu0 0.0
    %7706 = vmatprep.subr.mxu0 0.0
    %7707 = vmatpush1.msra.mxu0 0.0
    %7708 = vmatprep.subr.mxu0 0.0
    %7709 = vmatpush1.msra.mxu0 0.0
    %7710 = vmatprep.subr.mxu0 0.0
    %7711 = vmatpush1.msra.mxu0 0.0
    %7712 = vmatprep.subr.mxu0 0.0
    %7713 = vmatpush1.msra.mxu0 0.0
    %7714 = vmatprep.subr.mxu0 0.0
    %7715 = vmatpush1.msra.mxu0 0.0
    %7716 = vmatprep.subr.mxu0 0.0
    %7717 = vmatpush1.msra.mxu0 0.0
    %7718 = vmatprep.subr.mxu0 0.0
    %7719 = vmatpush1.msra.mxu0 0.0
    %7720 = vmatprep.subr.mxu0 0.0
    %7721 = vmatpush1.msra.mxu0 0.0
    %7722 = vmatprep.subr.mxu0 0.0
    %7723 = vmatpush1.msra.mxu0 0.0
    %7724 = vmatprep.subr.mxu0 0.0
    %7725 = vmatpush1.msra.mxu0 0.0
    %7726 = vmatprep.subr.mxu0 0.0
    %7727 = vmatpush1.msra.mxu0 0.0
    %7728 = vmatprep.subr.mxu0 0.0
    %7729 = vmatpush1.msra.mxu0 0.0
    %7730 = vmatprep.subr.mxu0 0.0
    %7731 = vmatpush1.msra.mxu0 0.0
    %7732 = vmatprep.subr.mxu0 0.0
    %7733 = vmatpush1.msra.mxu0 0.0
    %7734 = vmatprep.subr.mxu0 0.0
    %7735 = vmatpush1.msra.mxu0 0.0
    %7736 = vmatprep.subr.mxu0 0.0
    %7737 = vmatpush1.msra.mxu0 0.0
    %7738 = vmatprep.subr.mxu0 0.0
    %7739 = vmatpush1.msra.mxu0 0.0
    %7740 = vmatprep.subr.mxu0 0.0
    %7741 = vmatpush1.msra.mxu0 0.0
    %7742 = vmatprep.subr.mxu0 0.0
    %7743 = vmatpush1.msra.mxu0 0.0
    %7744 = vmatprep.subr.mxu0 0.0
    %7745 = vmatpush1.msra.mxu0 0.0
    %7746 = vmatprep.subr.mxu0 0.0
    %7747 = vmatpush1.msra.mxu0 0.0
    %7748 = vmatprep.subr.mxu0 0.0
    %7749 = vmatpush1.msra.mxu0 0.0
    %7750 = vmatprep.subr.mxu0 0.0
    %7751 = vmatpush1.msra.mxu0 0.0
    %7752 = vmatprep.subr.mxu0 0.0
    %7753 = vmatpush1.msra.mxu0 0.0
    %7754 = vmatprep.subr.mxu0 0.0
    %7755 = vmatpush1.msra.mxu0 0.0
    %7756 = vmatprep.subr.mxu0 0.0
    %7757 = vmatpush1.msra.mxu0 0.0
    %7758 = vmatprep.subr.mxu0 0.0
    %7759 = vmatpush1.msra.mxu0 0.0
    %7760 = vmatprep.subr.mxu0 0.0
    %7761 = vmatpush1.msra.mxu0 0.0
    %7762 = vmatprep.subr.mxu0 0.0
    %7763 = vmatpush1.msra.mxu0 0.0
    %7764 = vmatprep.mubr.f32.mxu0 0.0
    %7765 = vmatmul.mubr.f32.gmra.mrb[0].mxu0 %v7698
    %v7766 = vpop.f32.mrb[0].mxu0
    %v7767 = vadd.f32 0.0, %v7766
    %v7768 = vpop.f32.mrb[0].mxu0
    %7769 = vdwg.mxu0
    %v7771 = vsel %vm824, %v7354, 0
    %v7774 = vsel %vm824, %v7395, 0
    %7776 = vmatprep.subr.mxu0 0.0
    %7777 = vmatpush1.xpose.msra.mxu0 %v7774
    %7778 = vmatprep.subr.mxu0 0.0
    %7779 = vmatpush1.xpose.msra.mxu0 0.0
    %7780 = vmatprep.subr.mxu0 0.0
    %7781 = vmatpush1.xpose.msra.mxu0 0.0
    %7782 = vmatprep.subr.mxu0 0.0
    %7783 = vmatpush1.xpose.msra.mxu0 0.0
    %7784 = vmatprep.subr.mxu0 0.0
    %7785 = vmatpush1.xpose.msra.mxu0 0.0
    %7786 = vmatprep.subr.mxu0 0.0
    %7787 = vmatpush1.xpose.msra.mxu0 0.0
    %7788 = vmatprep.subr.mxu0 0.0
    %7789 = vmatpush1.xpose.msra.mxu0 0.0
    %7790 = vmatprep.subr.mxu0 0.0
    %7791 = vmatpush1.xpose.msra.mxu0 0.0
    %7792 = vmatprep.subr.mxu0 0.0
    %7793 = vmatpush1.xpose.msra.mxu0 0.0
    %7794 = vmatprep.subr.mxu0 0.0
    %7795 = vmatpush1.xpose.msra.mxu0 0.0
    %7796 = vmatprep.subr.mxu0 0.0
    %7797 = vmatpush1.xpose.msra.mxu0 0.0
    %7798 = vmatprep.subr.mxu0 0.0
    %7799 = vmatpush1.xpose.msra.mxu0 0.0
    %7800 = vmatprep.subr.mxu0 0.0
    %7801 = vmatpush1.xpose.msra.mxu0 0.0
    %7802 = vmatprep.subr.mxu0 0.0
    %7803 = vmatpush1.xpose.msra.mxu0 0.0
    %7804 = vmatprep.subr.mxu0 0.0
    %7805 = vmatpush1.xpose.msra.mxu0 0.0
    %7806 = vmatprep.subr.mxu0 0.0
    %7807 = vmatpush1.xpose.msra.mxu0 0.0
    %7808 = vmatprep.subr.mxu0 0.0
    %7809 = vmatpush1.xpose.msra.mxu0 0.0
    %7810 = vmatprep.subr.mxu0 0.0
    %7811 = vmatpush1.xpose.msra.mxu0 0.0
    %7812 = vmatprep.subr.mxu0 0.0
    %7813 = vmatpush1.xpose.msra.mxu0 0.0
    %7814 = vmatprep.subr.mxu0 0.0
    %7815 = vmatpush1.xpose.msra.mxu0 0.0
    %7816 = vmatprep.subr.mxu0 0.0
    %7817 = vmatpush1.xpose.msra.mxu0 0.0
    %7818 = vmatprep.subr.mxu0 0.0
    %7819 = vmatpush1.xpose.msra.mxu0 0.0
    %7820 = vmatprep.subr.mxu0 0.0
    %7821 = vmatpush1.xpose.msra.mxu0 0.0
    %7822 = vmatprep.subr.mxu0 0.0
    %7823 = vmatpush1.xpose.msra.mxu0 0.0
    %7824 = vmatprep.subr.mxu0 0.0
    %7825 = vmatpush1.xpose.msra.mxu0 0.0
    %7826 = vmatprep.subr.mxu0 0.0
    %7827 = vmatpush1.xpose.msra.mxu0 0.0
    %7828 = vmatprep.subr.mxu0 0.0
    %7829 = vmatpush1.xpose.msra.mxu0 0.0
    %7830 = vmatprep.subr.mxu0 0.0
    %7831 = vmatpush1.xpose.msra.mxu0 0.0
    %7832 = vmatprep.subr.mxu0 0.0
    %7833 = vmatpush1.xpose.msra.mxu0 0.0
    %7834 = vmatprep.subr.mxu0 0.0
    %7835 = vmatpush1.xpose.msra.mxu0 0.0
    %7836 = vmatprep.subr.mxu0 0.0
    %7837 = vmatpush1.xpose.msra.mxu0 0.0
    %7838 = vmatprep.subr.mxu0 0.0
    %7839 = vmatpush1.xpose.msra.mxu0 0.0
    %7840 = vmatprep.mubr.f32.mxu0 0.0
    %7841 = vmatmul.mubr.f32.gmra.mrb[0].mxu0 %v7771
    %v7842 = vpop.f32.mrb[0].mxu0
    %v7843 = vadd.f32 0.0, %v7842
    %v7844 = vpop.f32.mrb[0].mxu0
    %7845 = vdwg.mxu0
    %v7846 = vmul.f32 %v7843, 0.125
    %v7847 = vadd.f32 %v7846, %v88
    %v7848 = vsel %vm903, %v7847, -inf
    %7849 = vmax.xlane.f32.xlu0 %v7848
    %v7850 = vpop.xlane.xlu0 %7849
    %v7851 = vsub.f32 %v7847, %v7850
    %v7852 = vmul.f32 %v7851, 1.442695
    %v7853 = vpow.pop %v7852
    %v7854 = vsel %vm903, %v7853, 0.0
    %7855 = vadd.xlane.f32.xlu0 %v7854
    %v7856 = vpop.xlane.xlu0 %7855
    %v7857 = vrcp.pop %v7856
    %v7858 = vmul.f32 %v7853, %v7857
    %v7860 = vsel %vm903, %v7858, 0
    %7862 = vmatprep.subr.mxu0 0.0
    %7863 = vmatpush1.msra.mxu0 %v7436
    %7864 = vmatprep.subr.mxu0 0.0
    %7865 = vmatpush1.msra.mxu0 0.0
    %7866 = vmatprep.subr.mxu0 0.0
    %7867 = vmatpush1.msra.mxu0 0.0
    %7868 = vmatprep.subr.mxu0 0.0
    %7869 = vmatpush1.msra.mxu0 0.0
    %7870 = vmatprep.subr.mxu0 0.0
    %7871 = vmatpush1.msra.mxu0 0.0
    %7872 = vmatprep.subr.mxu0 0.0
    %7873 = vmatpush1.msra.mxu0 0.0
    %7874 = vmatprep.subr.mxu0 0.0
    %7875 = vmatpush1.msra.mxu0 0.0
    %7876 = vmatprep.subr.mxu0 0.0
    %7877 = vmatpush1.msra.mxu0 0.0
    %7878 = vmatprep.subr.mxu0 0.0
    %7879 = vmatpush1.msra.mxu0 0.0
    %7880 = vmatprep.subr.mxu0 0.0
    %7881 = vmatpush1.msra.mxu0 0.0
    %7882 = vmatprep.subr.mxu0 0.0
    %7883 = vmatpush1.msra.mxu0 0.0
    %7884 = vmatprep.subr.mxu0 0.0
    %7885 = vmatpush1.msra.mxu0 0.0
    %7886 = vmatprep.subr.mxu0 0.0
    %7887 = vmatpush1.msra.mxu0 0.0
    %7888 = vmatprep.subr.mxu0 0.0
    %7889 = vmatpush1.msra.mxu0 0.0
    %7890 = vmatprep.subr.mxu0 0.0
    %7891 = vmatpush1.msra.mxu0 0.0
    %7892 = vmatprep.subr.mxu0 0.0
    %7893 = vmatpush1.msra.mxu0 0.0
    %7894 = vmatprep.subr.mxu0 0.0
    %7895 = vmatpush1.msra.mxu0 0.0
    %7896 = vmatprep.subr.mxu0 0.0
    %7897 = vmatpush1.msra.mxu0 0.0
    %7898 = vmatprep.subr.mxu0 0.0
    %7899 = vmatpush1.msra.mxu0 0.0
    %7900 = vmatprep.subr.mxu0 0.0
    %7901 = vmatpush1.msra.mxu0 0.0
    %7902 = vmatprep.subr.mxu0 0.0
    %7903 = vmatpush1.msra.mxu0 0.0
    %7904 = vmatprep.subr.mxu0 0.0
    %7905 = vmatpush1.msra.mxu0 0.0
    %7906 = vmatprep.subr.mxu0 0.0
    %7907 = vmatpush1.msra.mxu0 0.0
    %7908 = vmatprep.subr.mxu0 0.0
    %7909 = vmatpush1.msra.mxu0 0.0
    %7910 = vmatprep.subr.mxu0 0.0
    %7911 = vmatpush1.msra.mxu0 0.0
    %7912 = vmatprep.subr.mxu0 0.0
    %7913 = vmatpush1.msra.mxu0 0.0
    %7914 = vmatprep.subr.mxu0 0.0
    %7915 = vmatpush1.msra.mxu0 0.0
    %7916 = vmatprep.subr.mxu0 0.0
    %7917 = vmatpush1.msra.mxu0 0.0
    %7918 = vmatprep.subr.mxu0 0.0
    %7919 = vmatpush1.msra.mxu0 0.0
    %7920 = vmatprep.subr.mxu0 0.0
    %7921 = vmatpush1.msra.mxu0 0.0
    %7922 = vmatprep.subr.mxu0 0.0
    %7923 = vmatpush1.msra.mxu0 0.0
    %7924 = vmatprep.subr.mxu0 0.0
    %7925 = vmatpush1.msra.mxu0 0.0
    %7926 = vmatprep.mubr.f32.mxu0 0.0
    %7927 = vmatmul.mubr.f32.gmra.mrb[0].mxu0 %v7860
    %v7928 = vpop.f32.mrb[0].mxu0
    %v7929 = vadd.f32 0.0, %v7928
    %v7930 = vpop.f32.mrb[0].mxu0
    %7931 = vdwg.mxu0
    %7932 = vrot.lane.b32.xlu0 %v7354, 64
    %v7933 = vpop.permute.xlu0 %7932
    %7934 = vrot.lane.b32.xlu0 %v7395, 64
    %v7935 = vpop.permute.xlu0 %7934
    %v7936 = vsel %vm824, %v7933, 0
    %v7938 = vsel %vm824, %v7935, 0
    %7940 = vmatprep.subr.mxu0 0.0
    %7941 = vmatpush1.xpose.msra.mxu0 %v7938
    %7942 = vmatprep.subr.mxu0 0.0
    %7943 = vmatpush1.xpose.msra.mxu0 0.0
    %7944 = vmatprep.subr.mxu0 0.0
    %7945 = vmatpush1.xpose.msra.mxu0 0.0
    %7946 = vmatprep.subr.mxu0 0.0
    %7947 = vmatpush1.xpose.msra.mxu0 0.0
    %7948 = vmatprep.subr.mxu0 0.0
    %7949 = vmatpush1.xpose.msra.mxu0 0.0
    %7950 = vmatprep.subr.mxu0 0.0
    %7951 = vmatpush1.xpose.msra.mxu0 0.0
    %7952 = vmatprep.subr.mxu0 0.0
    %7953 = vmatpush1.xpose.msra.mxu0 0.0
    %7954 = vmatprep.subr.mxu0 0.0
    %7955 = vmatpush1.xpose.msra.mxu0 0.0
    %7956 = vmatprep.subr.mxu0 0.0
    %7957 = vmatpush1.xpose.msra.mxu0 0.0
    %7958 = vmatprep.subr.mxu0 0.0
    %7959 = vmatpush1.xpose.msra.mxu0 0.0
    %7960 = vmatprep.subr.mxu0 0.0
    %7961 = vmatpush1.xpose.msra.mxu0 0.0
    %7962 = vmatprep.subr.mxu0 0.0
    %7963 = vmatpush1.xpose.msra.mxu0 0.0
    %7964 = vmatprep.subr.mxu0 0.0
    %7965 = vmatpush1.xpose.msra.mxu0 0.0
    %7966 = vmatprep.subr.mxu0 0.0
    %7967 = vmatpush1.xpose.msra.mxu0 0.0
    %7968 = vmatprep.subr.mxu0 0.0
    %7969 = vmatpush1.xpose.msra.mxu0 0.0
    %7970 = vmatprep.subr.mxu0 0.0
    %7971 = vmatpush1.xpose.msra.mxu0 0.0
    %7972 = vmatprep.subr.mxu0 0.0
    %7973 = vmatpush1.xpose.msra.mxu0 0.0
    %7974 = vmatprep.subr.mxu0 0.0
    %7975 = vmatpush1.xpose.msra.mxu0 0.0
    %7976 = vmatprep.subr.mxu0 0.0
    %7977 = vmatpush1.xpose.msra.mxu0 0.0
    %7978 = vmatprep.subr.mxu0 0.0
    %7979 = vmatpush1.xpose.msra.mxu0 0.0
    %7980 = vmatprep.subr.mxu0 0.0
    %7981 = vmatpush1.xpose.msra.mxu0 0.0
    %7982 = vmatprep.subr.mxu0 0.0
    %7983 = vmatpush1.xpose.msra.mxu0 0.0
    %7984 = vmatprep.subr.mxu0 0.0
    %7985 = vmatpush1.xpose.msra.mxu0 0.0
    %7986 = vmatprep.subr.mxu0 0.0
    %7987 = vmatpush1.xpose.msra.mxu0 0.0
    %7988 = vmatprep.subr.mxu0 0.0
    %7989 = vmatpush1.xpose.msra.mxu0 0.0
    %7990 = vmatprep.subr.mxu0 0.0
    %7991 = vmatpush1.xpose.msra.mxu0 0.0
    %7992 = vmatprep.subr.mxu0 0.0
    %7993 = vmatpush1.xpose.msra.mxu0 0.0
    %7994 = vmatprep.subr.mxu0 0.0
    %7995 = vmatpush1.xpose.msra.mxu0 0.0
    %7996 = vmatprep.subr.mxu0 0.0
    %7997 = vmatpush1.xpose.msra.mxu0 0.0
    %7998 = vmatprep.subr.mxu0 0.0
    %7999 = vmatpush1.xpose.msra.mxu0 0.0
    %8000 = vmatprep.subr.mxu0 0.0
    %8001 = vmatpush1.xpose.msra.mxu0 0.0
    %8002 = vmatprep.subr.mxu0 0.0
    %8003 = vmatpush1.xpose.msra.mxu0 0.0
    %8004 = vmatprep.mubr.f32.mxu0 0.0
    %8005 = vmatmul.mubr.f32.gmra.mrb[0].mxu0 %v7936
    %v8006 = vpop.f32.mrb[0].mxu0
    %v8007 = vadd.f32 0.0, %v8006
    %v8008 = vpop.f32.mrb[0].mxu0
    %8009 = vdwg.mxu0
    %v8010 = vmul.f32 %v8007, 0.125
    %v8011 = vadd.f32 %v8010, %v88
    %v8012 = vsel %vm903, %v8011, -inf
    %8013 = vmax.xlane.f32.xlu0 %v8012
    %v8014 = vpop.xlane.xlu0 %8013
    %v8015 = vsub.f32 %v8011, %v8014
    %v8016 = vmul.f32 %v8015, 1.442695
    %v8017 = vpow.pop %v8016
    %v8018 = vsel %vm903, %v8017, 0.0
    %8019 = vadd.xlane.f32.xlu0 %v8018
    %v8020 = vpop.xlane.xlu0 %8019
    %v8021 = vrcp.pop %v8020
    %v8022 = vmul.f32 %v8017, %v8021
    %8024 = vrot.lane.b32.xlu0 %v7436, 64
    %v8025 = vpop.permute.xlu0 %8024
    %v8028 = vsel %vm903, %v8022, 0
    %8030 = vmatprep.subr.mxu0 0.0
    %8031 = vmatpush1.msra.mxu0 %v8025
    %8032 = vmatprep.subr.mxu0 0.0
    %8033 = vmatpush1.msra.mxu0 0.0
    %8034 = vmatprep.subr.mxu0 0.0
    %8035 = vmatpush1.msra.mxu0 0.0
    %8036 = vmatprep.subr.mxu0 0.0
    %8037 = vmatpush1.msra.mxu0 0.0
    %8038 = vmatprep.subr.mxu0 0.0
    %8039 = vmatpush1.msra.mxu0 0.0
    %8040 = vmatprep.subr.mxu0 0.0
    %8041 = vmatpush1.msra.mxu0 0.0
    %8042 = vmatprep.subr.mxu0 0.0
    %8043 = vmatpush1.msra.mxu0 0.0
    %8044 = vmatprep.subr.mxu0 0.0
    %8045 = vmatpush1.msra.mxu0 0.0
    %8046 = vmatprep.subr.mxu0 0.0
    %8047 = vmatpush1.msra.mxu0 0.0
    %8048 = vmatprep.subr.mxu0 0.0
    %8049 = vmatpush1.msra.mxu0 0.0
    %8050 = vmatprep.subr.mxu0 0.0
    %8051 = vmatpush1.msra.mxu0 0.0
    %8052 = vmatprep.subr.mxu0 0.0
    %8053 = vmatpush1.msra.mxu0 0.0
    %8054 = vmatprep.subr.mxu0 0.0
    %8055 = vmatpush1.msra.mxu0 0.0
    %8056 = vmatprep.subr.mxu0 0.0
    %8057 = vmatpush1.msra.mxu0 0.0
    %8058 = vmatprep.subr.mxu0 0.0
    %8059 = vmatpush1.msra.mxu0 0.0
    %8060 = vmatprep.subr.mxu0 0.0
    %8061 = vmatpush1.msra.mxu0 0.0
    %8062 = vmatprep.subr.mxu0 0.0
    %8063 = vmatpush1.msra.mxu0 0.0
    %8064 = vmatprep.subr.mxu0 0.0
    %8065 = vmatpush1.msra.mxu0 0.0
    %8066 = vmatprep.subr.mxu0 0.0
    %8067 = vmatpush1.msra.mxu0 0.0
    %8068 = vmatprep.subr.mxu0 0.0
    %8069 = vmatpush1.msra.mxu0 0.0
    %8070 = vmatprep.subr.mxu0 0.0
    %8071 = vmatpush1.msra.mxu0 0.0
    %8072 = vmatprep.subr.mxu0 0.0
    %8073 = vmatpush1.msra.mxu0 0.0
    %8074 = vmatprep.subr.mxu0 0.0
    %8075 = vmatpush1.msra.mxu0 0.0
    %8076 = vmatprep.subr.mxu0 0.0
    %8077 = vmatpush1.msra.mxu0 0.0
    %8078 = vmatprep.subr.mxu0 0.0
    %8079 = vmatpush1.msra.mxu0 0.0
    %8080 = vmatprep.subr.mxu0 0.0
    %8081 = vmatpush1.msra.mxu0 0.0
    %8082 = vmatprep.subr.mxu0 0.0
    %8083 = vmatpush1.msra.mxu0 0.0
    %8084 = vmatprep.subr.mxu0 0.0
    %8085 = vmatpush1.msra.mxu0 0.0
    %8086 = vmatprep.subr.mxu0 0.0
    %8087 = vmatpush1.msra.mxu0 0.0
    %8088 = vmatprep.subr.mxu0 0.0
    %8089 = vmatpush1.msra.mxu0 0.0
    %8090 = vmatprep.subr.mxu0 0.0
    %8091 = vmatpush1.msra.mxu0 0.0
    %8092 = vmatprep.subr.mxu0 0.0
    %8093 = vmatpush1.msra.mxu0 0.0
    %8094 = vmatprep.mubr.f32.mxu0 0.0
    %8095 = vmatmul.mubr.f32.gmra.mrb[0].mxu0 %v8028
    %v8096 = vpop.f32.mrb[0].mxu0
    %v8097 = vadd.f32 0.0, %v8096
    %v8098 = vpop.f32.mrb[0].mxu0
    %8099 = vdwg.mxu0
    %8101 = vrot.lane.b32.xlu0 %v7767, 64
    %v8102 = vpop.permute.xlu0 %8101
    %8105 = vrot.lane.b32.xlu0 %v8097, 64
    %v8106 = vpop.permute.xlu0 %8105
    %v8108 = vsel %vm824, %v7599, %v8102
    %v8109 = vsel %vm824, %v7929, %v8106
    %v8110 = vpack.c.bf16 %v8108, %v8108
    %v8111 = vpack.c.bf16 %v8109, %v8109
    %s8112 = scalar_lea.vmem [#allocation7], 1024
    %v8113 = vld [vmem:[%s8112] sm:$0xff]
    %v8114 = vld [vmem:[%s8112 + $0x8] sm:$0xff]
    %v8115 = vld [vmem:[%s8112 + $0x10] sm:$0xff]
    %v8116 = vld [vmem:[%s8112 + $0x18] sm:$0xff]
    %v8117 = vld [vmem:[%s8112 + $0x20] sm:$0xff]
    %v8118 = vld [vmem:[%s8112 + $0x28] sm:$0xff]
    %v8119 = vld [vmem:[%s8112 + $0x30] sm:$0xff]
    %v8120 = vld [vmem:[%s8112 + $0x38] sm:$0xff]
    %v8121 = vld [vmem:[%s8112 + $0x40] sm:$0xff]
    %v8122 = vld [vmem:[%s8112 + $0x48] sm:$0xff]
    %v8123 = vld [vmem:[%s8112 + $0x50] sm:$0xff]
    %v8124 = vld [vmem:[%s8112 + $0x58] sm:$0xff]
    %v8125 = vld [vmem:[%s8112 + $0x60] sm:$0xff]
    %v8126 = vld [vmem:[%s8112 + $0x68] sm:$0xff]
    %v8127 = vld [vmem:[%s8112 + $0x70] sm:$0xff]
    %v8128 = vld [vmem:[%s8112 + $0x78] sm:$0xff]
    %v8129 = vld [vmem:[%s8112 + $0x80] sm:$0xff]
    %v8130 = vld [vmem:[%s8112 + $0x88] sm:$0xff]
    %v8131 = vld [vmem:[%s8112 + $0x90] sm:$0xff]
    %v8132 = vld [vmem:[%s8112 + $0x98] sm:$0xff]
    %v8133 = vld [vmem:[%s8112 + $0xa0] sm:$0xff]
    %v8134 = vld [vmem:[%s8112 + $0xa8] sm:$0xff]
    %v8135 = vld [vmem:[%s8112 + $0xb0] sm:$0xff]
    %v8136 = vld [vmem:[%s8112 + $0xb8] sm:$0xff]
    %v8137 = vld [vmem:[%s8112 + $0xc0] sm:$0xff]
    %v8138 = vld [vmem:[%s8112 + $0xc8] sm:$0xff]
    %v8139 = vld [vmem:[%s8112 + $0xd0] sm:$0xff]
    %v8140 = vld [vmem:[%s8112 + $0xd8] sm:$0xff]
    %v8141 = vld [vmem:[%s8112 + $0xe0] sm:$0xff]
    %v8142 = vld [vmem:[%s8112 + $0xe8] sm:$0xff]
    %v8143 = vld [vmem:[%s8112 + $0xf0] sm:$0xff]
    %v8144 = vld [vmem:[%s8112 + $0xf8] sm:$0xff]
    %s8145 = scalar_lea.vmem [#allocation8], 8
    %v8146 = vld [vmem:[%s8145] sm:$0x3]
    %v8148 = vlaneseq
    %v8149 = vshrl.u32 %v8148, 7
    %v8150 = vsub.s32 0, %v8149
    %v8151 = vrot.slane %v8146, %v8150
    %v8152 = vlaneseq
    %v8153 = vshrl.u32 %v8152, 7
    %v8154 = vsub.s32 1, %v8153
    %v8155 = vrot.slane %v8146, %v8154
    %v8190 = vunpack.c.l.b16 %v8113
    %v8191 = vunpack.c.h.b16 %v8113
    %v8192 = vunpack.c.l.b16 %v8114
    %v8193 = vunpack.c.h.b16 %v8114
    %v8194 = vunpack.c.l.b16 %v8115
    %v8195 = vunpack.c.h.b16 %v8115
    %v8196 = vunpack.c.l.b16 %v8116
    %v8197 = vunpack.c.h.b16 %v8116
    %v8198 = vunpack.c.l.b16 %v8117
    %v8199 = vunpack.c.h.b16 %v8117
    %v8200 = vunpack.c.l.b16 %v8118
    %v8201 = vunpack.c.h.b16 %v8118
    %v8202 = vunpack.c.l.b16 %v8119
    %v8203 = vunpack.c.h.b16 %v8119
    %v8204 = vunpack.c.l.b16 %v8120
    %v8205 = vunpack.c.h.b16 %v8120
    %v8206 = vunpack.c.l.b16 %v8121
    %v8207 = vunpack.c.h.b16 %v8121
    %v8208 = vunpack.c.l.b16 %v8122
    %v8209 = vunpack.c.h.b16 %v8122
    %v8210 = vunpack.c.l.b16 %v8123
    %v8211 = vunpack.c.h.b16 %v8123
    %v8212 = vunpack.c.l.b16 %v8124
    %v8213 = vunpack.c.h.b16 %v8124
    %v8214 = vunpack.c.l.b16 %v8125
    %v8215 = vunpack.c.h.b16 %v8125
    %v8216 = vunpack.c.l.b16 %v8126
    %v8217 = vunpack.c.h.b16 %v8126
    %v8218 = vunpack.c.l.b16 %v8127
    %v8219 = vunpack.c.h.b16 %v8127
    %v8220 = vunpack.c.l.b16 %v8128
    %v8221 = vunpack.c.h.b16 %v8128
    %v8222 = vunpack.c.l.b16 %v8129
    %v8223 = vunpack.c.h.b16 %v8129
    %v8224 = vunpack.c.l.b16 %v8130
    %v8225 = vunpack.c.h.b16 %v8130
    %v8226 = vunpack.c.l.b16 %v8131
    %v8227 = vunpack.c.h.b16 %v8131
    %v8228 = vunpack.c.l.b16 %v8132
    %v8229 = vunpack.c.h.b16 %v8132
    %v8230 = vunpack.c.l.b16 %v8133
    %v8231 = vunpack.c.h.b16 %v8133
    %v8232 = vunpack.c.l.b16 %v8134
    %v8233 = vunpack.c.h.b16 %v8134
    %v8234 = vunpack.c.l.b16 %v8135
    %v8235 = vunpack.c.h.b16 %v8135
    %v8236 = vunpack.c.l.b16 %v8136
    %v8237 = vunpack.c.h.b16 %v8136
    %v8238 = vunpack.c.l.b16 %v8137
    %v8239 = vunpack.c.h.b16 %v8137
    %v8240 = vunpack.c.l.b16 %v8138
    %v8241 = vunpack.c.h.b16 %v8138
    %v8242 = vunpack.c.l.b16 %v8139
    %v8243 = vunpack.c.h.b16 %v8139
    %v8244 = vunpack.c.l.b16 %v8140
    %v8245 = vunpack.c.h.b16 %v8140
    %v8246 = vunpack.c.l.b16 %v8141
    %v8247 = vunpack.c.h.b16 %v8141
    %v8248 = vunpack.c.l.b16 %v8142
    %v8249 = vunpack.c.h.b16 %v8142
    %v8250 = vunpack.c.l.b16 %v8143
    %v8251 = vunpack.c.h.b16 %v8143
    %v8252 = vunpack.c.l.b16 %v8144
    %v8253 = vunpack.c.h.b16 %v8144
    %v8254 = vpack.c.b16 %v8192, %v8190
    %v8255 = vpack.c.b16 %v8193, %v8191
    %v8256 = vpack.c.b16 %v8196, %v8194
    %v8257 = vpack.c.b16 %v8197, %v8195
    %v8258 = vpack.c.b16 %v8200, %v8198
    %v8259 = vpack.c.b16 %v8201, %v8199
    %v8260 = vpack.c.b16 %v8204, %v8202
    %v8261 = vpack.c.b16 %v8205, %v8203
    %v8262 = vpack.c.b16 %v8208, %v8206
    %v8263 = vpack.c.b16 %v8209, %v8207
    %v8264 = vpack.c.b16 %v8212, %v8210
    %v8265 = vpack.c.b16 %v8213, %v8211
    %v8266 = vpack.c.b16 %v8216, %v8214
    %v8267 = vpack.c.b16 %v8217, %v8215
    %v8268 = vpack.c.b16 %v8220, %v8218
    %v8269 = vpack.c.b16 %v8221, %v8219
    %v8270 = vpack.c.b16 %v8224, %v8222
    %v8271 = vpack.c.b16 %v8225, %v8223
    %v8272 = vpack.c.b16 %v8228, %v8226
    %v8273 = vpack.c.b16 %v8229, %v8227
    %v8274 = vpack.c.b16 %v8232, %v8230
    %v8275 = vpack.c.b16 %v8233, %v8231
    %v8276 = vpack.c.b16 %v8236, %v8234
    %v8277 = vpack.c.b16 %v8237, %v8235
    %v8278 = vpack.c.b16 %v8240, %v8238
    %v8279 = vpack.c.b16 %v8241, %v8239
    %v8280 = vpack.c.b16 %v8244, %v8242
    %v8281 = vpack.c.b16 %v8245, %v8243
    %v8282 = vpack.c.b16 %v8248, %v8246
    %v8283 = vpack.c.b16 %v8249, %v8247
    %v8284 = vpack.c.b16 %v8252, %v8250
    %v8285 = vpack.c.b16 %v8253, %v8251
    %8318 = vmatprep.subr.bf16.mxu0 %v8255
    %8319 = vmatpush1.bf16.msra.mxu0 %v8254
    %8320 = vmatprep.subr.bf16.mxu0 %v8257
    %8321 = vmatpush1.bf16.msra.mxu0 %v8256
    %8322 = vmatprep.subr.bf16.mxu0 %v8259
    %8323 = vmatpush1.bf16.msra.mxu0 %v8258
    %8324 = vmatprep.subr.bf16.mxu0 %v8261
    %8325 = vmatpush1.bf16.msra.mxu0 %v8260
    %8326 = vmatprep.subr.bf16.mxu0 %v8263
    %8327 = vmatpush1.bf16.msra.mxu0 %v8262
    %8328 = vmatprep.subr.bf16.mxu0 %v8265
    %8329 = vmatpush1.bf16.msra.mxu0 %v8264
    %8330 = vmatprep.subr.bf16.mxu0 %v8267
    %8331 = vmatpush1.bf16.msra.mxu0 %v8266
    %8332 = vmatprep.subr.bf16.mxu0 %v8269
    %8333 = vmatpush1.bf16.msra.mxu0 %v8268
    %8334 = vmatprep.subr.bf16.mxu0 %v8271
    %8335 = vmatpush1.bf16.msra.mxu0 %v8270
    %8336 = vmatprep.subr.bf16.mxu0 %v8273
    %8337 = vmatpush1.bf16.msra.mxu0 %v8272
    %8338 = vmatprep.subr.bf16.mxu0 %v8275
    %8339 = vmatpush1.bf16.msra.mxu0 %v8274
    %8340 = vmatprep.subr.bf16.mxu0 %v8277
    %8341 = vmatpush1.bf16.msra.mxu0 %v8276
    %8342 = vmatprep.subr.bf16.mxu0 %v8279
    %8343 = vmatpush1.bf16.msra.mxu0 %v8278
    %8344 = vmatprep.subr.bf16.mxu0 %v8281
    %8345 = vmatpush1.bf16.msra.mxu0 %v8280
    %8346 = vmatprep.subr.bf16.mxu0 %v8283
    %8347 = vmatpush1.bf16.msra.mxu0 %v8282
    %8348 = vmatprep.subr.bf16.mxu0 %v8285
    %8349 = vmatpush1.bf16.msra.mxu0 %v8284
    %8350 = vmatprep.mubr.bf16.mxu0 %v8111
    %8351 = vmatmul.mubr.bf16.gmra.mrb[0].mxu0 %v8110
    %v8352 = vpop.f32.mrb[0].mxu0
    %v8353 = vadd.f32 %v8151, %v8352
    %v8354 = vpop.f32.mrb[0].mxu0
    %v8355 = vadd.f32 %v8155, %v8354
    %v8356 = vpop.f32.mrb[0].mxu0
    %v8357 = vpop.f32.mrb[0].mxu0
    %8358 = vdwg.mxu0
    %v8359 = vld [vmem:[%s6] sm:$0x3]
    %v8361 = vsel %vm903, %v8359, 0
    %8363 = vmatprep.subr.mxu0 %v8355
    %8364 = vmatpush1.msra.mxu0 %v8353
    %8365 = vmatprep.subr.mxu0 0.0
    %8366 = vmatpush1.msra.mxu0 0.0
    %8367 = vmatprep.subr.mxu0 0.0
    %8368 = vmatpush1.msra.mxu0 0.0
    %8369 = vmatprep.subr.mxu0 0.0
    %8370 = vmatpush1.msra.mxu0 0.0
    %8371 = vmatprep.subr.mxu0 0.0
    %8372 = vmatpush1.msra.mxu0 0.0
    %8373 = vmatprep.subr.mxu0 0.0
    %8374 = vmatpush1.msra.mxu0 0.0
    %8375 = vmatprep.subr.mxu0 0.0
    %8376 = vmatpush1.msra.mxu0 0.0
    %8377 = vmatprep.subr.mxu0 0.0
    %8378 = vmatpush1.msra.mxu0 0.0
    %8379 = vmatprep.subr.mxu0 0.0
    %8380 = vmatpush1.msra.mxu0 0.0
    %8381 = vmatprep.subr.mxu0 0.0
    %8382 = vmatpush1.msra.mxu0 0.0
    %8383 = vmatprep.subr.mxu0 0.0
    %8384 = vmatpush1.msra.mxu0 0.0
    %8385 = vmatprep.subr.mxu0 0.0
    %8386 = vmatpush1.msra.mxu0 0.0
    %8387 = vmatprep.subr.mxu0 0.0
    %8388 = vmatpush1.msra.mxu0 0.0
    %8389 = vmatprep.subr.mxu0 0.0
    %8390 = vmatpush1.msra.mxu0 0.0
    %8391 = vmatprep.subr.mxu0 0.0
    %8392 = vmatpush1.msra.mxu0 0.0
    %8393 = vmatprep.subr.mxu0 0.0
    %8394 = vmatpush1.msra.mxu0 0.0
    %8395 = vmatprep.subr.mxu0 0.0
    %8396 = vmatpush1.msra.mxu0 0.0
    %8397 = vmatprep.subr.mxu0 0.0
    %8398 = vmatpush1.msra.mxu0 0.0
    %8399 = vmatprep.subr.mxu0 0.0
    %8400 = vmatpush1.msra.mxu0 0.0
    %8401 = vmatprep.subr.mxu0 0.0
    %8402 = vmatpush1.msra.mxu0 0.0
    %8403 = vmatprep.subr.mxu0 0.0
    %8404 = vmatpush1.msra.mxu0 0.0
    %8405 = vmatprep.subr.mxu0 0.0
    %8406 = vmatpush1.msra.mxu0 0.0
    %8407 = vmatprep.subr.mxu0 0.0
    %8408 = vmatpush1.msra.mxu0 0.0
    %8409 = vmatprep.subr.mxu0 0.0
    %8410 = vmatpush1.msra.mxu0 0.0
    %8411 = vmatprep.subr.mxu0 0.0
    %8412 = vmatpush1.msra.mxu0 0.0
    %8413 = vmatprep.subr.mxu0 0.0
    %8414 = vmatpush1.msra.mxu0 0.0
    %8415 = vmatprep.subr.mxu0 0.0
    %8416 = vmatpush1.msra.mxu0 0.0
    %8417 = vmatprep.subr.mxu0 0.0
    %8418 = vmatpush1.msra.mxu0 0.0
    %8419 = vmatprep.subr.mxu0 0.0
    %8420 = vmatpush1.msra.mxu0 0.0
    %8421 = vmatprep.subr.mxu0 0.0
    %8422 = vmatpush1.msra.mxu0 0.0
    %8423 = vmatprep.subr.mxu0 0.0
    %8424 = vmatpush1.msra.mxu0 0.0
    %8425 = vmatprep.subr.mxu0 0.0
    %8426 = vmatpush1.msra.mxu0 0.0
    %8427 = vmatprep.mubr.f32.mxu0 0.0
    %8428 = vmatmul.mubr.f32.gmra.mrb[0].mxu0 %v8361
    %v8429 = vpop.f32.mrb[0].mxu0
    %v8430 = vadd.f32 0.0, %v8429
    %v8431 = vpop.f32.mrb[0].mxu0
    %v8432 = vadd.f32 0.0, %v8431
    %8433 = vdwg.mxu0
    %v8434 = vld [vmem:[%s7] sm:$0xff]
    %v8435 = vld [vmem:[%s7 + $0x8] sm:$0xff]
    %v8436 = vld [vmem:[%s7 + $0x10] sm:$0xff]
    %v8437 = vld [vmem:[%s7 + $0x18] sm:$0xff]
    %v8438 = vld [vmem:[%s7 + $0x20] sm:$0xff]
    %v8439 = vld [vmem:[%s7 + $0x28] sm:$0xff]
    %v8440 = vld [vmem:[%s7 + $0x30] sm:$0xff]
    %v8441 = vld [vmem:[%s7 + $0x38] sm:$0xff]
    %v8442 = vld [vmem:[%s7 + $0x40] sm:$0xff]
    %v8443 = vld [vmem:[%s7 + $0x48] sm:$0xff]
    %v8444 = vld [vmem:[%s7 + $0x50] sm:$0xff]
    %v8445 = vld [vmem:[%s7 + $0x58] sm:$0xff]
    %v8446 = vld [vmem:[%s7 + $0x60] sm:$0xff]
    %v8447 = vld [vmem:[%s7 + $0x68] sm:$0xff]
    %v8448 = vld [vmem:[%s7 + $0x70] sm:$0xff]
    %v8449 = vld [vmem:[%s7 + $0x78] sm:$0xff]
    %v8450 = vld [vmem:[%s7 + $0x80] sm:$0xff]
    %v8451 = vld [vmem:[%s7 + $0x88] sm:$0xff]
    %v8452 = vld [vmem:[%s7 + $0x90] sm:$0xff]
    %v8453 = vld [vmem:[%s7 + $0x98] sm:$0xff]
    %v8454 = vld [vmem:[%s7 + $0xa0] sm:$0xff]
    %v8455 = vld [vmem:[%s7 + $0xa8] sm:$0xff]
    %v8456 = vld [vmem:[%s7 + $0xb0] sm:$0xff]
    %v8457 = vld [vmem:[%s7 + $0xb8] sm:$0xff]
    %v8458 = vld [vmem:[%s7 + $0xc0] sm:$0xff]
    %v8459 = vld [vmem:[%s7 + $0xc8] sm:$0xff]
    %v8460 = vld [vmem:[%s7 + $0xd0] sm:$0xff]
    %v8461 = vld [vmem:[%s7 + $0xd8] sm:$0xff]
    %v8462 = vld [vmem:[%s7 + $0xe0] sm:$0xff]
    %v8463 = vld [vmem:[%s7 + $0xe8] sm:$0xff]
    %v8464 = vld [vmem:[%s7 + $0xf0] sm:$0xff]
    %v8465 = vld [vmem:[%s7 + $0xf8] sm:$0xff]
    %v8466 = vld [vmem:[%s8] sm:$0x1]
    %v8468 = vlaneseq
    %v8469 = vshrl.u32 %v8468, 7
    %v8470 = vsub.s32 0, %v8469
    %v8471 = vrot.slane %v8466, %v8470
    %8473 = vmatprep.subr.mxu0 0.0
    %8474 = vmatpush1.msra.mxu0 %v8434
    %8475 = vmatprep.subr.mxu0 0.0
    %8476 = vmatpush1.msra.mxu0 %v8435
    %8477 = vmatprep.subr.mxu0 0.0
    %8478 = vmatpush1.msra.mxu0 %v8436
    %8479 = vmatprep.subr.mxu0 0.0
    %8480 = vmatpush1.msra.mxu0 %v8437
    %8481 = vmatprep.subr.mxu0 0.0
    %8482 = vmatpush1.msra.mxu0 %v8438
    %8483 = vmatprep.subr.mxu0 0.0
    %8484 = vmatpush1.msra.mxu0 %v8439
    %8485 = vmatprep.subr.mxu0 0.0
    %8486 = vmatpush1.msra.mxu0 %v8440
    %8487 = vmatprep.subr.mxu0 0.0
    %8488 = vmatpush1.msra.mxu0 %v8441
    %8489 = vmatprep.subr.mxu0 0.0
    %8490 = vmatpush1.msra.mxu0 %v8442
    %8491 = vmatprep.subr.mxu0 0.0
    %8492 = vmatpush1.msra.mxu0 %v8443
    %8493 = vmatprep.subr.mxu0 0.0
    %8494 = vmatpush1.msra.mxu0 %v8444
    %8495 = vmatprep.subr.mxu0 0.0
    %8496 = vmatpush1.msra.mxu0 %v8445
    %8497 = vmatprep.subr.mxu0 0.0
    %8498 = vmatpush1.msra.mxu0 %v8446
    %8499 = vmatprep.subr.mxu0 0.0
    %8500 = vmatpush1.msra.mxu0 %v8447
    %8501 = vmatprep.subr.mxu0 0.0
    %8502 = vmatpush1.msra.mxu0 %v8448
    %8503 = vmatprep.subr.mxu0 0.0
    %8504 = vmatpush1.msra.mxu0 %v8449
    %8505 = vmatprep.subr.mxu0 0.0
    %8506 = vmatpush1.msra.mxu0 %v8450
    %8507 = vmatprep.subr.mxu0 0.0
    %8508 = vmatpush1.msra.mxu0 %v8451
    %8509 = vmatprep.subr.mxu0 0.0
    %8510 = vmatpush1.msra.mxu0 %v8452
    %8511 = vmatprep.subr.mxu0 0.0
    %8512 = vmatpush1.msra.mxu0 %v8453
    %8513 = vmatprep.subr.mxu0 0.0
    %8514 = vmatpush1.msra.mxu0 %v8454
    %8515 = vmatprep.subr.mxu0 0.0
    %8516 = vmatpush1.msra.mxu0 %v8455
    %8517 = vmatprep.subr.mxu0 0.0
    %8518 = vmatpush1.msra.mxu0 %v8456
    %8519 = vmatprep.subr.mxu0 0.0
    %8520 = vmatpush1.msra.mxu0 %v8457
    %8521 = vmatprep.subr.mxu0 0.0
    %8522 = vmatpush1.msra.mxu0 %v8458
    %8523 = vmatprep.subr.mxu0 0.0
    %8524 = vmatpush1.msra.mxu0 %v8459
    %8525 = vmatprep.subr.mxu0 0.0
    %8526 = vmatpush1.msra.mxu0 %v8460
    %8527 = vmatprep.subr.mxu0 0.0
    %8528 = vmatpush1.msra.mxu0 %v8461
    %8529 = vmatprep.subr.mxu0 0.0
    %8530 = vmatpush1.msra.mxu0 %v8462
    %8531 = vmatprep.subr.mxu0 0.0
    %8532 = vmatpush1.msra.mxu0 %v8463
    %8533 = vmatprep.subr.mxu0 0.0
    %8534 = vmatpush1.msra.mxu0 %v8464
    %8535 = vmatprep.subr.mxu0 0.0
    %8536 = vmatpush1.msra.mxu0 %v8465
    %8537 = vmatprep.mubr.f32.mxu0 %v8432
    %8538 = vmatmul.mubr.f32.gmra.mrb[0].mxu0 %v8430
    %v8539 = vpop.f32.mrb[0].mxu0
    %v8540 = vadd.f32 %v8471, %v8539
    %v8541 = vpop.f32.mrb[0].mxu0
    %8542 = vdwg.mxu0
    %vm8543 = vcmask 254976
    %8544 = vst.msk [vmem:[#allocation10] sm:$0x3] %vm8543, %v8540
    // Predicated region
    $region54: #{self_attention_layer_forward.1} parent=1 // pred_check
      _
    $region55: #{self_attention_layer_forward.1} parent=1 // pred_check_branch
      %8546 = sbr.rel (0) target = $region57
    $region56: #{self_attention_layer_forward.1} parent=1 // pred_region
      %s8548 = ssub.s32 32, 32
      %8549 = vsyncadd [#allocation4], %s8548
      %s8551 = sshll.u32 [#allocation10], 4
      %s8552 = int_to_ptr.vmem [resolvable:$true] %s8551
      %8554 = dma.vmem_to_hbm [thread:$0]  %s8552, 32, %s9, [#allocation4]
    $region57: #{self_attention_layer_forward.1} parent=1 // pred_fallthru
      _
    // Predicated region
    $region58: #{self_attention_layer_forward.1} parent=1 // pred_check
      _
    $region59: #{self_attention_layer_forward.1} parent=1 // pred_check_branch
      %8556 = sbr.rel (0) target = $region61
    $region60: #{self_attention_layer_forward.1} parent=1 // pred_region
      %8557 = dma.done [#allocation4], 32
    $region61: #{self_attention_layer_forward.1} parent=1 // pred_fallthru
      _
    %8558 = vsyncpa [#allocation3], 1
    %8559 = vsyncpa [#allocation6], 1
    %8560 = vsyncpa [#allocation9], 1
    %8561 = vsyncpa [#allocation4], 1

</llo_original>
